<compile_context>
chip_gen: v7x
topology: tpu7x:2x2x1
jax: 0.10.0
libtpu: 0.0.40
codegen_flags: <defaults>
</compile_context>

<pallas_src>
import jax
import jax.numpy as jnp
from jax import lax
from jax.experimental import pallas as pl
from jax.experimental.pallas import tpu as pltpu

_BN_EPS = 1e-5
_LANE = 128
_VMEM_LIMIT = 48 * 1024 * 1024      # < v7x 64 MiB physical, >> 16/32 MiB defaults


def _round_up(x, m):
    return (x + m - 1) // m * m


def _pick_bn_rows(m):
    """Row tile for the memory-bound elementwise pass: big lane-dense tiles."""
    for rows in (2048, 1024, 512, 256, 128, 64, 32, 16, 8):
        if m % rows == 0 and m // rows >= 2:
            return rows
    for rows in (1024, 512, 256, 128, 64, 32, 16, 8):
        if m >= 2 * rows:
            return rows
    return _round_up(max(m, 8), 8)


# ------------------------------------------------------------------ kernels --

def _make_conv3x3_stats_kernel(H, W, Cin_p, Cout_p, fuse_pre_bn_relu):
    """One grid step = one batch element (in-kernel halo im2col + 9-tap GEMM).

    refs (in order):
      x_ref    : (H*W, Cin_p)       bf16  input activation slab (one image)
      [sc_ref, sh_ref : (1, Cin_p)  f32   folded BN scale/shift of the PREVIOUS
                                          layer, applied with ReLU before conv]
      w_ref    : (9, Cin_p, Cout_p) bf16  per-tap conv weights (resident)
      y_ref    : (H*W, Cout_p)      bf16  pre-BN conv output            (out)
      s_ref    : (1, Cout_p)        f32   per-image sum  of y (f32 acc) (out)
      q_ref    : (1, Cout_p)        f32   per-image sum  of y*y         (out)
      halo_ref : (H+2, W+9, Cin_p)  bf16  VMEM scratch; image lives at column
                                          offset 8 so the interior store is
                                          sublane-aligned (tap reads may be
                                          unaligned loads, which are cheap).
    """
    HW = H * W
    COL0 = 8                         # image column offset inside the scratch

    def kernel(*refs):
        if fuse_pre_bn_relu:
            x_ref, sc_ref, sh_ref, w_ref, y_ref, s_ref, q_ref, halo_ref = refs
        else:
            x_ref, w_ref, y_ref, s_ref, q_ref, halo_ref = refs

        x = x_ref[...]                                   # (HW, Cin_p) bf16
        if fuse_pre_bn_relu:
            xf = x.astype(jnp.float32) * sc_ref[...] + sh_ref[...]
            x = jnp.maximum(xf, 0.0).astype(jnp.bfloat16)

        # Zero-padded halo in VMEM (borders stay zero; columns 0..6 unused).
        # Zeroed every step so the kernel is correct under "parallel"
        # (megacore) grid partitioning where each core has its own scratch.
        halo_ref[...] = jnp.zeros_like(halo_ref)
        halo_ref[1:H + 1, COL0:COL0 + W, :] = x.reshape(H, W, Cin_p)

        # Nine shifted (HW, Cin_p) x (Cin_p, Cout_p) tap GEMMs, f32 accumulate.
        acc = None
        for t in range(9):
            dy, dx = divmod(t, 3)
            c0 = COL0 - 1 + dx
            patch = halo_ref[dy:dy + H, c0:c0 + W, :]    # (H, W, Cin_p)
            contrib = jnp.dot(patch.reshape(HW, Cin_p), w_ref[t],
                              preferred_element_type=jnp.float32)
            acc = contrib if acc is None else acc + contrib

        y_ref[...] = acc.astype(y_ref.dtype)             # bf16 pre-BN output
        s_ref[...] = jnp.sum(acc, axis=0, keepdims=True)         # exact f32
        q_ref[...] = jnp.sum(acc * acc, axis=0, keepdims=True)   # exact f32

    return kernel


def _bn_residual_relu_kernel(y_ref, sc_ref, sh_ref, r_ref, o_ref):
    """Fused  y*scale + shift + residual, ReLU  (bf16 in, f32 math, f32 out)."""
    out = y_ref[...].astype(jnp.float32) * sc_ref[...] + sh_ref[...]
    out = out + r_ref[...].astype(jnp.float32)
    o_ref[...] = jnp.maximum(out, 0.0)


# ----------------------------------------------------------------- wrappers --

def _conv3x3_with_stats(x_slab, w_taps, pre_scale, pre_shift, H, W):
    """3x3 conv (pad=1, stride=1, no bias) on a padded slab + BN partial stats.

    x_slab : (N, H*W, Cin_p) bf16,  w_taps : (9, Cin_p, Cout_p) bf16.
    If pre_scale/pre_shift are given, the previous layer's BN+ReLU is applied
    to x inside the kernel first.  Returns (y, sum, sum_sq).
    """
    N, HW, Cin_p = x_slab.shape
    Cout_p = w_taps.shape[-1]
    fuse = pre_scale is not None

    args = [x_slab]
    in_specs = [pl.BlockSpec((None, HW, Cin_p), lambda n: (n, 0, 0))]
    if fuse:
        args += [pre_scale, pre_shift]
        in_specs += [pl.BlockSpec((1, Cin_p), lambda n: (0, 0)),
                     pl.BlockSpec((1, Cin_p), lambda n: (0, 0))]
    args.append(w_taps)
    in_specs.append(pl.BlockSpec((9, Cin_p, Cout_p), lambda n: (0, 0, 0)))

    y, s, q = pl.pallas_call(
        _make_conv3x3_stats_kernel(H, W, Cin_p, Cout_p, fuse),
        out_shape=(jax.ShapeDtypeStruct((N, HW, Cout_p), jnp.bfloat16),
                   jax.ShapeDtypeStruct((N, 1, Cout_p), jnp.float32),
                   jax.ShapeDtypeStruct((N, 1, Cout_p), jnp.float32)),
        grid_spec=pltpu.PrefetchScalarGridSpec(
            num_scalar_prefetch=0,
            grid=(N,),
            in_specs=in_specs,
            out_specs=(
                pl.BlockSpec((None, HW, Cout_p), lambda n: (n, 0, 0)),
                pl.BlockSpec((None, 1, Cout_p), lambda n: (n, 0, 0)),
                pl.BlockSpec((None, 1, Cout_p), lambda n: (n, 0, 0))),
            scratch_shapes=[pltpu.VMEM((H + 2, W + 9, Cin_p), jnp.bfloat16)]),
        compiler_params=pltpu.CompilerParams(
            dimension_semantics=("parallel",),
            vmem_limit_bytes=_VMEM_LIMIT),
    )(*args)
    # Tiny XLA reduction of the per-image partials (exact f32 sums).
    return y, jnp.sum(s, axis=0)[0], jnp.sum(q, axis=0)[0]


def _fold_bn_scale_shift(ysum, ysq, gamma, beta, count, cp):
    """Fold train-mode batch stats (biased var) + affine into scale/shift."""
    # TODO(synk): E[y^2]-E[y]^2 in f32 can cancel for very large M or strongly
    # offset activations; switch to shifted / Welford-merged per-tile stats.
    mean = ysum / count
    var = jnp.maximum(ysq / count - mean * mean, 0.0)
    g = jnp.pad(gamma.astype(jnp.float32), (0, cp - gamma.shape[0]))
    b = jnp.pad(beta.astype(jnp.float32), (0, cp - beta.shape[0]))
    scale = g * lax.rsqrt(var + _BN_EPS)
    shift = b - mean * scale
    return scale.reshape(1, cp), shift.reshape(1, cp)


def _bn_residual_relu(y2d, scale, shift, res2d):
    """bn2 + identity residual + ReLU over the flat (M, Cp) slab (f32 out)."""
    M, Cp = y2d.shape
    rows = _pick_bn_rows(M)
    Mp = _round_up(M, rows)
    if Mp != M:                       # cheap bf16 pad; padded rows sliced off
        y2d = jnp.pad(y2d, ((0, Mp - M), (0, 0)))
        res2d = jnp.pad(res2d, ((0, Mp - M), (0, 0)))
    out = pl.pallas_call(
        _bn_residual_relu_kernel,
        out_shape=jax.ShapeDtypeStruct((Mp, Cp), jnp.float32),
        grid_spec=pltpu.PrefetchScalarGridSpec(
            num_scalar_prefetch=0,
            grid=(Mp // rows,),
            in_specs=[pl.BlockSpec((rows, Cp), lambda i: (i, 0)),
                      pl.BlockSpec((1, Cp), lambda i: (0, 0)),
                      pl.BlockSpec((1, Cp), lambda i: (0, 0)),
                      pl.BlockSpec((rows, Cp), lambda i: (i, 0))],
            out_specs=pl.BlockSpec((rows, Cp), lambda i: (i, 0))),
        compiler_params=pltpu.CompilerParams(
            dimension_semantics=("parallel",),
            vmem_limit_bytes=_VMEM_LIMIT),
    )(y2d, scale, shift, res2d)
    return out[:M]


@jax.jit
def basic_block_forward(x_nchw, w1, g1, b1, w2, g2, b2):
    """BasicBlock.forward (stride=1, downsample=None): NCHW in -> NCHW out."""
    N, C, H, W = x_nchw.shape
    planes = w1.shape[-1]
    assert planes == C and w2.shape[-1] == planes, \
        "identity residual (downsample=None) requires inplanes == planes"
    Cp = _round_up(C, _LANE)
    M = N * H * W

    # One-time NCHW -> channel-padded bf16 (N, H*W, Cp) slab; this slab also
    # serves as the bf16 identity-residual operand for the final fused pass.
    x_nhwc = jnp.transpose(x_nchw, (0, 2, 3, 1)).astype(jnp.float32)
    x_slab = jnp.pad(x_nhwc, ((0, 0), (0, 0), (0, 0), (0, Cp - C)))
    x_slab = x_slab.astype(jnp.bfloat16).reshape(N, H * W, Cp)

    # HWIO conv weights -> per-tap (9, Cin_p, Cout_p) bf16, zero channel pad.
    w1_t = jnp.pad(w1.astype(jnp.bfloat16).reshape(9, C, planes),
                   ((0, 0), (0, Cp - C), (0, Cp - planes)))
    w2_t = jnp.pad(w2.astype(jnp.bfloat16).reshape(9, planes, planes),
                   ((0, 0), (0, Cp - planes), (0, Cp - planes)))

    # conv1 -> pre-BN y1 (bf16 slab) + exact batch statistics.
    y1, s1, q1 = _conv3x3_with_stats(x_slab, w1_t, None, None, H, W)
    scale1, shift1 = _fold_bn_scale_shift(s1, q1, g1, b1, float(M), Cp)

    # bn1 + ReLU fused into conv2's input path -> pre-BN y2 + statistics
    # (the post-bn1 activation never touches HBM).
    y2, s2, q2 = _conv3x3_with_stats(y1, w2_t, scale1, shift1, H, W)
    scale2, shift2 = _fold_bn_scale_shift(s2, q2, g2, b2, float(M), Cp)

    # bn2 + identity residual + ReLU on the flat padded slab, then one
    # slice/transpose back to NCHW.
    out2d = _bn_residual_relu(y2.reshape(M, Cp), scale2, shift2,
                              x_slab.reshape(M, Cp))
    out = out2d.reshape(N, H, W, Cp)[..., :planes]
    return jnp.transpose(out, (0, 3, 1, 2))


# ---------------------------------------------------------------- reference --

def _reference_forward(x_nchw, w1, g1, b1, w2, g2, b2):
    """Pure-JAX f32 reference (lax.conv) for validation."""
    def conv_bn(x_nhwc, w, g, b, res, relu):
        y = lax.conv_general_dilated(
            x_nhwc, w, window_strides=(1, 1), padding=((1, 1), (1, 1)),
            dimension_numbers=("NHWC", "HWIO", "NHWC"))
        mean = jnp.mean(y, axis=(0, 1, 2), keepdims=True)
        var = jnp.mean((y - mean) ** 2, axis=(0, 1, 2), keepdims=True)
        y = (y - mean) * lax.rsqrt(var + _BN_EPS) * g + b
        if res is not None:
            y = y + res
        if relu:
            y = jnp.maximum(y, 0.0)
        return y

    x = jnp.transpose(x_nchw, (0, 2, 3, 1))
    out = conv_bn(x, w1, g1, b1, None, True)
    out = conv_bn(out, w2, g2, b2, x, True)
    return jnp.transpose(out, (0, 3, 1, 2))


if __name__ == "__main__":
    # Small correctness shapes (NOT for perf tuning — use channels >= 64 for
    # that; with Cp=128 padding a C=8 GEMM occupies ~6% of the MXU columns).
    N, C, H, W = 2, 8, 16, 16
    planes = C

    key = jax.random.PRNGKey(0)
    kx, kw1, kw2 = jax.random.split(key, 3)

    x = jax.random.normal(kx, (N, C, H, W), dtype=jnp.float32)

    # Deterministic parameters (HWIO conv weights, no bias as in the module).
    w1 = jax.random.normal(kw1, (3, 3, C, planes), dtype=jnp.float32) * 0.1
    w2 = jax.random.normal(kw2, (3, 3, planes, planes), dtype=jnp.float32) * 0.1
    g1 = 1.0 + 0.05 * jnp.arange(planes, dtype=jnp.float32)
    b1 = 0.02 * jnp.arange(planes, dtype=jnp.float32)
    g2 = 1.0 - 0.03 * jnp.arange(planes, dtype=jnp.float32)
    b2 = -0.01 * jnp.arange(planes, dtype=jnp.float32)

    out = basic_block_forward(x, w1, g1, b1, w2, g2, b2)
    out = jax.block_until_ready(out)

    ref = _reference_forward(x, w1, g1, b1, w2, g2, b2)
    assert out.shape == (N, C, H, W), out.shape
    # Tolerance covers bf16 MXU operands / bf16 intermediate slabs (f32
    # accumulation and f32 BN math) vs the all-f32 reference; structural
    # errors would be O(0.1..1).
    max_err = float(jnp.max(jnp.abs(out - ref)))
    assert jnp.allclose(out, ref, rtol=5e-2, atol=5e-2), max_err

    print("KERNEL_OK")
</pallas_src>

<mosaic_0001>
module attributes {stable_mosaic.version = 11 : i64} {
  func.func @kernel(%arg0: i32, %arg1: memref<1x256x128xbf16, #tpu.memory_space<vmem>>, %arg2: memref<9x128x128xbf16, #tpu.memory_space<vmem>>, %arg3: memref<1x256x128xbf16, #tpu.memory_space<vmem>>, %arg4: memref<1x1x128xf32, #tpu.memory_space<vmem>>, %arg5: memref<1x1x128xf32, #tpu.memory_space<vmem>>, %arg6: memref<18x25x128xbf16, #tpu.memory_space<vmem>>) attributes {dimension_semantics = [#tpu.dimension_semantics<parallel>], iteration_bounds = array<i64: 2>, scalar_prefetch = 0 : i64, scratch_operands = 1 : i64, tpu.core_type = #tpu.core_type<tc>, window_params = [{transform_indices = @transform_0, window_bounds = array<i64: 1, 256, 128>}, {pipeline_mode = #tpu.pipeline_mode<synchronous>, transform_indices = @transform_1, window_bounds = array<i64: 9, 128, 128>}, {transform_indices = @transform_2, window_bounds = array<i64: 1, 256, 128>}, {transform_indices = @transform_3, window_bounds = array<i64: 1, 1, 128>}, {transform_indices = @transform_4, window_bounds = array<i64: 1, 1, 128>}]} {
    %c0 = arith.constant 0 : index
    %c0_0 = arith.constant 0 : index
    %c0_1 = arith.constant 0 : index
    %0 = vector.load %arg1[%c0, %c0_0, %c0_1] : memref<1x256x128xbf16, #tpu.memory_space<vmem>>, vector<1x256x128xbf16>
    %1 = vector.shape_cast %0 : vector<1x256x128xbf16> to vector<256x128xbf16>
    %cst = arith.constant 0.000000e+00 : bf16
    %2 = vector.broadcast %cst : bf16 to vector<18x25x128xbf16>
    %c0_2 = arith.constant 0 : index
    %c0_3 = arith.constant 0 : index
    %c0_4 = arith.constant 0 : index
    %3 = vector.load %arg6[%c0_2, %c0_3, %c0_4] : memref<18x25x128xbf16, #tpu.memory_space<vmem>>, vector<18x25x128xbf16>
    tpu.vector_store %arg6[%c0_2, %c0_3, %c0_4], %2 {strides = array<i32>} : memref<18x25x128xbf16, #tpu.memory_space<vmem>>, vector<18x25x128xbf16>,
    %4 = vector.shape_cast %1 : vector<256x128xbf16> to vector<16x16x128xbf16>
    %c1 = arith.constant 1 : index
    %c8 = arith.constant 8 : index
    %c0_5 = arith.constant 0 : index
    %5 = vector.load %arg6[%c1, %c8, %c0_5] : memref<18x25x128xbf16, #tpu.memory_space<vmem>>, vector<16x16x128xbf16>
    tpu.vector_store %arg6[%c1, %c8, %c0_5], %4 {strides = array<i32>} : memref<18x25x128xbf16, #tpu.memory_space<vmem>>, vector<16x16x128xbf16>,
    %c0_6 = arith.constant 0 : index
    %c7 = arith.constant 7 : index
    %c0_7 = arith.constant 0 : index
    %6 = vector.load %arg6[%c0_6, %c7, %c0_7] : memref<18x25x128xbf16, #tpu.memory_space<vmem>>, vector<16x16x128xbf16>
    %7 = vector.shape_cast %6 : vector<16x16x128xbf16> to vector<256x128xbf16>
    %c0_8 = arith.constant 0 : index
    %c0_9 = arith.constant 0 : index
    %c0_10 = arith.constant 0 : index
    %8 = vector.load %arg2[%c0_8, %c0_9, %c0_10] : memref<9x128x128xbf16, #tpu.memory_space<vmem>>, vector<1x128x128xbf16>
    %9 = vector.shape_cast %8 : vector<1x128x128xbf16> to vector<128x128xbf16>
    %cst_11 = arith.constant dense<0.000000e+00> : vector<256x128xf32>
    %10 = tpu.matmul %7, %9, %cst_11 {dimension_numbers = #tpu.dot_dimension_numbers<[1], [0], [0], [1], [0, 0, 1, 1], [], []>} : vector<256x128xbf16>, vector<128x128xbf16>, vector<256x128xf32> -> vector<256x128xf32>
    %c0_12 = arith.constant 0 : index
    %c8_13 = arith.constant 8 : index
    %c0_14 = arith.constant 0 : index
    %11 = vector.load %arg6[%c0_12, %c8_13, %c0_14] : memref<18x25x128xbf16, #tpu.memory_space<vmem>>, vector<16x16x128xbf16>
    %12 = vector.shape_cast %11 : vector<16x16x128xbf16> to vector<256x128xbf16>
    %c1_15 = arith.constant 1 : index
    %c0_16 = arith.constant 0 : index
    %c0_17 = arith.constant 0 : index
    %13 = vector.load %arg2[%c1_15, %c0_16, %c0_17] : memref<9x128x128xbf16, #tpu.memory_space<vmem>>, vector<1x128x128xbf16>
    %14 = vector.shape_cast %13 : vector<1x128x128xbf16> to vector<128x128xbf16>
    %cst_18 = arith.constant dense<0.000000e+00> : vector<256x128xf32>
    %15 = tpu.matmul %12, %14, %cst_18 {dimension_numbers = #tpu.dot_dimension_numbers<[1], [0], [0], [1], [0, 0, 1, 1], [], []>} : vector<256x128xbf16>, vector<128x128xbf16>, vector<256x128xf32> -> vector<256x128xf32>
    %16 = arith.addf %10, %15 : vector<256x128xf32>
    %c0_19 = arith.constant 0 : index
    %c9 = arith.constant 9 : index
    %c0_20 = arith.constant 0 : index
    %17 = vector.load %arg6[%c0_19, %c9, %c0_20] : memref<18x25x128xbf16, #tpu.memory_space<vmem>>, vector<16x16x128xbf16>
    %18 = vector.shape_cast %17 : vector<16x16x128xbf16> to vector<256x128xbf16>
    %c2 = arith.constant 2 : index
    %c0_21 = arith.constant 0 : index
    %c0_22 = arith.constant 0 : index
    %19 = vector.load %arg2[%c2, %c0_21, %c0_22] : memref<9x128x128xbf16, #tpu.memory_space<vmem>>, vector<1x128x128xbf16>
    %20 = vector.shape_cast %19 : vector<1x128x128xbf16> to vector<128x128xbf16>
    %cst_23 = arith.constant dense<0.000000e+00> : vector<256x128xf32>
    %21 = tpu.matmul %18, %20, %cst_23 {dimension_numbers = #tpu.dot_dimension_numbers<[1], [0], [0], [1], [0, 0, 1, 1], [], []>} : vector<256x128xbf16>, vector<128x128xbf16>, vector<256x128xf32> -> vector<256x128xf32>
    %22 = arith.addf %16, %21 : vector<256x128xf32>
    %c1_24 = arith.constant 1 : index
    %c7_25 = arith.constant 7 : index
    %c0_26 = arith.constant 0 : index
    %23 = vector.load %arg6[%c1_24, %c7_25, %c0_26] : memref<18x25x128xbf16, #tpu.memory_space<vmem>>, vector<16x16x128xbf16>
    %24 = vector.shape_cast %23 : vector<16x16x128xbf16> to vector<256x128xbf16>
    %c3 = arith.constant 3 : index
    %c0_27 = arith.constant 0 : index
    %c0_28 = arith.constant 0 : index
    %25 = vector.load %arg2[%c3, %c0_27, %c0_28] : memref<9x128x128xbf16, #tpu.memory_space<vmem>>, vector<1x128x128xbf16>
    %26 = vector.shape_cast %25 : vector<1x128x128xbf16> to vector<128x128xbf16>
    %cst_29 = arith.constant dense<0.000000e+00> : vector<256x128xf32>
    %27 = tpu.matmul %24, %26, %cst_29 {dimension_numbers = #tpu.dot_dimension_numbers<[1], [0], [0], [1], [0, 0, 1, 1], [], []>} : vector<256x128xbf16>, vector<128x128xbf16>, vector<256x128xf32> -> vector<256x128xf32>
    %28 = arith.addf %22, %27 : vector<256x128xf32>
    %c1_30 = arith.constant 1 : index
    %c8_31 = arith.constant 8 : index
    %c0_32 = arith.constant 0 : index
    %29 = vector.load %arg6[%c1_30, %c8_31, %c0_32] : memref<18x25x128xbf16, #tpu.memory_space<vmem>>, vector<16x16x128xbf16>
    %30 = vector.shape_cast %29 : vector<16x16x128xbf16> to vector<256x128xbf16>
    %c4 = arith.constant 4 : index
    %c0_33 = arith.constant 0 : index
    %c0_34 = arith.constant 0 : index
    %31 = vector.load %arg2[%c4, %c0_33, %c0_34] : memref<9x128x128xbf16, #tpu.memory_space<vmem>>, vector<1x128x128xbf16>
    %32 = vector.shape_cast %31 : vector<1x128x128xbf16> to vector<128x128xbf16>
    %cst_35 = arith.constant dense<0.000000e+00> : vector<256x128xf32>
    %33 = tpu.matmul %30, %32, %cst_35 {dimension_numbers = #tpu.dot_dimension_numbers<[1], [0], [0], [1], [0, 0, 1, 1], [], []>} : vector<256x128xbf16>, vector<128x128xbf16>, vector<256x128xf32> -> vector<256x128xf32>
    %34 = arith.addf %28, %33 : vector<256x128xf32>
    %c1_36 = arith.constant 1 : index
    %c9_37 = arith.constant 9 : index
    %c0_38 = arith.constant 0 : index
    %35 = vector.load %arg6[%c1_36, %c9_37, %c0_38] : memref<18x25x128xbf16, #tpu.memory_space<vmem>>, vector<16x16x128xbf16>
    %36 = vector.shape_cast %35 : vector<16x16x128xbf16> to vector<256x128xbf16>
    %c5 = arith.constant 5 : index
    %c0_39 = arith.constant 0 : index
    %c0_40 = arith.constant 0 : index
    %37 = vector.load %arg2[%c5, %c0_39, %c0_40] : memref<9x128x128xbf16, #tpu.memory_space<vmem>>, vector<1x128x128xbf16>
    %38 = vector.shape_cast %37 : vector<1x128x128xbf16> to vector<128x128xbf16>
    %cst_41 = arith.constant dense<0.000000e+00> : vector<256x128xf32>
    %39 = tpu.matmul %36, %38, %cst_41 {dimension_numbers = #tpu.dot_dimension_numbers<[1], [0], [0], [1], [0, 0, 1, 1], [], []>} : vector<256x128xbf16>, vector<128x128xbf16>, vector<256x128xf32> -> vector<256x128xf32>
    %40 = arith.addf %34, %39 : vector<256x128xf32>
    %c2_42 = arith.constant 2 : index
    %c7_43 = arith.constant 7 : index
    %c0_44 = arith.constant 0 : index
    %41 = vector.load %arg6[%c2_42, %c7_43, %c0_44] : memref<18x25x128xbf16, #tpu.memory_space<vmem>>, vector<16x16x128xbf16>
    %42 = vector.shape_cast %41 : vector<16x16x128xbf16> to vector<256x128xbf16>
    %c6 = arith.constant 6 : index
    %c0_45 = arith.constant 0 : index
    %c0_46 = arith.constant 0 : index
    %43 = vector.load %arg2[%c6, %c0_45, %c0_46] : memref<9x128x128xbf16, #tpu.memory_space<vmem>>, vector<1x128x128xbf16>
    %44 = vector.shape_cast %43 : vector<1x128x128xbf16> to vector<128x128xbf16>
    %cst_47 = arith.constant dense<0.000000e+00> : vector<256x128xf32>
    %45 = tpu.matmul %42, %44, %cst_47 {dimension_numbers = #tpu.dot_dimension_numbers<[1], [0], [0], [1], [0, 0, 1, 1], [], []>} : vector<256x128xbf16>, vector<128x128xbf16>, vector<256x128xf32> -> vector<256x128xf32>
    %46 = arith.addf %40, %45 : vector<256x128xf32>
    %c2_48 = arith.constant 2 : index
    %c8_49 = arith.constant 8 : index
    %c0_50 = arith.constant 0 : index
    %47 = vector.load %arg6[%c2_48, %c8_49, %c0_50] : memref<18x25x128xbf16, #tpu.memory_space<vmem>>, vector<16x16x128xbf16>
    %48 = vector.shape_cast %47 : vector<16x16x128xbf16> to vector<256x128xbf16>
    %c7_51 = arith.constant 7 : index
    %c0_52 = arith.constant 0 : index
    %c0_53 = arith.constant 0 : index
    %49 = vector.load %arg2[%c7_51, %c0_52, %c0_53] : memref<9x128x128xbf16, #tpu.memory_space<vmem>>, vector<1x128x128xbf16>
    %50 = vector.shape_cast %49 : vector<1x128x128xbf16> to vector<128x128xbf16>
    %cst_54 = arith.constant dense<0.000000e+00> : vector<256x128xf32>
    %51 = tpu.matmul %48, %50, %cst_54 {dimension_numbers = #tpu.dot_dimension_numbers<[1], [0], [0], [1], [0, 0, 1, 1], [], []>} : vector<256x128xbf16>, vector<128x128xbf16>, vector<256x128xf32> -> vector<256x128xf32>
    %52 = arith.addf %46, %51 : vector<256x128xf32>
    %c2_55 = arith.constant 2 : index
    %c9_56 = arith.constant 9 : index
    %c0_57 = arith.constant 0 : index
    %53 = vector.load %arg6[%c2_55, %c9_56, %c0_57] : memref<18x25x128xbf16, #tpu.memory_space<vmem>>, vector<16x16x128xbf16>
    %54 = vector.shape_cast %53 : vector<16x16x128xbf16> to vector<256x128xbf16>
    %c8_58 = arith.constant 8 : index
    %c0_59 = arith.constant 0 : index
    %c0_60 = arith.constant 0 : index
    %55 = vector.load %arg2[%c8_58, %c0_59, %c0_60] : memref<9x128x128xbf16, #tpu.memory_space<vmem>>, vector<1x128x128xbf16>
    %56 = vector.shape_cast %55 : vector<1x128x128xbf16> to vector<128x128xbf16>
    %cst_61 = arith.constant dense<0.000000e+00> : vector<256x128xf32>
    %57 = tpu.matmul %54, %56, %cst_61 {dimension_numbers = #tpu.dot_dimension_numbers<[1], [0], [0], [1], [0, 0, 1, 1], [], []>} : vector<256x128xbf16>, vector<128x128xbf16>, vector<256x128xf32> -> vector<256x128xf32>
    %58 = arith.addf %52, %57 : vector<256x128xf32>
    %59 = arith.truncf %58 : vector<256x128xf32> to vector<256x128xbf16>
    %c0_62 = arith.constant 0 : index
    %c0_63 = arith.constant 0 : index
    %c0_64 = arith.constant 0 : index
    %60 = vector.load %arg3[%c0_62, %c0_63, %c0_64] : memref<1x256x128xbf16, #tpu.memory_space<vmem>>, vector<1x256x128xbf16>
    %61 = vector.shape_cast %60 : vector<1x256x128xbf16> to vector<256x128xbf16>
    %62 = vector.shape_cast %59 : vector<256x128xbf16> to vector<1x256x128xbf16>
    tpu.vector_store %arg3[%c0_62, %c0_63, %c0_64], %62 {strides = array<i32>} : memref<1x256x128xbf16, #tpu.memory_space<vmem>>, vector<1x256x128xbf16>,
    %cst_65 = arith.constant dense<0.000000e+00> : vector<128xf32>
    %63 = vector.multi_reduction <add>, %58, %cst_65 [0] : vector<256x128xf32> to vector<128xf32>
    %64 = vector.shape_cast %63 : vector<128xf32> to vector<1x128xf32>
    %c0_66 = arith.constant 0 : index
    %c0_67 = arith.constant 0 : index
    %c0_68 = arith.constant 0 : index
    %65 = vector.load %arg4[%c0_66, %c0_67, %c0_68] : memref<1x1x128xf32, #tpu.memory_space<vmem>>, vector<1x1x128xf32>
    %66 = vector.shape_cast %65 : vector<1x1x128xf32> to vector<1x128xf32>
    %67 = vector.shape_cast %64 : vector<1x128xf32> to vector<1x1x128xf32>
    tpu.vector_store %arg4[%c0_66, %c0_67, %c0_68], %67 {strides = array<i32>} : memref<1x1x128xf32, #tpu.memory_space<vmem>>, vector<1x1x128xf32>,
    %68 = arith.mulf %58, %58 : vector<256x128xf32>
    %cst_69 = arith.constant dense<0.000000e+00> : vector<128xf32>
    %69 = vector.multi_reduction <add>, %68, %cst_69 [0] : vector<256x128xf32> to vector<128xf32>
    %70 = vector.shape_cast %69 : vector<128xf32> to vector<1x128xf32>
    %c0_70 = arith.constant 0 : index
    %c0_71 = arith.constant 0 : index
    %c0_72 = arith.constant 0 : index
    %71 = vector.load %arg5[%c0_70, %c0_71, %c0_72] : memref<1x1x128xf32, #tpu.memory_space<vmem>>, vector<1x1x128xf32>
    %72 = vector.shape_cast %71 : vector<1x1x128xf32> to vector<1x128xf32>
    %73 = vector.shape_cast %70 : vector<1x128xf32> to vector<1x1x128xf32>
    tpu.vector_store %arg5[%c0_70, %c0_71, %c0_72], %73 {strides = array<i32>} : memref<1x1x128xf32, #tpu.memory_space<vmem>>, vector<1x1x128xf32>,
    return
  }
  func.func @transform_0(%arg0: i32) -> (i32, i32, i32) {
    %c0_i32 = arith.constant 0 : i32
    %c0_i32_0 = arith.constant 0 : i32
    %c0_i32_1 = arith.constant 0 : i32
    return %arg0, %c0_i32, %c0_i32_0 : i32, i32, i32
  }
  func.func @transform_1(%arg0: i32) -> (i32, i32, i32) {
    %c0_i32 = arith.constant 0 : i32
    %c0_i32_0 = arith.constant 0 : i32
    %c0_i32_1 = arith.constant 0 : i32
    %c0_i32_2 = arith.constant 0 : i32
    return %c0_i32, %c0_i32_0, %c0_i32_1 : i32, i32, i32
  }
  func.func @transform_2(%arg0: i32) -> (i32, i32, i32) {
    %c0_i32 = arith.constant 0 : i32
    %c0_i32_0 = arith.constant 0 : i32
    %c0_i32_1 = arith.constant 0 : i32
    return %arg0, %c0_i32, %c0_i32_0 : i32, i32, i32
  }
  func.func @transform_3(%arg0: i32) -> (i32, i32, i32) {
    %c0_i32 = arith.constant 0 : i32
    %c0_i32_0 = arith.constant 0 : i32
    %c0_i32_1 = arith.constant 0 : i32
    return %arg0, %c0_i32, %c0_i32_0 : i32, i32, i32
  }
  func.func @transform_4(%arg0: i32) -> (i32, i32, i32) {
    %c0_i32 = arith.constant 0 : i32
    %c0_i32_0 = arith.constant 0 : i32
    %c0_i32_1 = arith.constant 0 : i32
    return %arg0, %c0_i32, %c0_i32_0 : i32, i32, i32
  }
}

module attributes {stable_mosaic.version = 11 : i64} {
  func.func @kernel(%arg0: i32, %arg1: memref<1x256x128xbf16, #tpu.memory_space<vmem>>, %arg2: memref<1x128xf32, #tpu.memory_space<vmem>>, %arg3: memref<1x128xf32, #tpu.memory_space<vmem>>, %arg4: memref<9x128x128xbf16, #tpu.memory_space<vmem>>, %arg5: memref<1x256x128xbf16, #tpu.memory_space<vmem>>, %arg6: memref<1x1x128xf32, #tpu.memory_space<vmem>>, %arg7: memref<1x1x128xf32, #tpu.memory_space<vmem>>, %arg8: memref<18x25x128xbf16, #tpu.memory_space<vmem>>) attributes {dimension_semantics = [#tpu.dimension_semantics<parallel>], iteration_bounds = array<i64: 2>, scalar_prefetch = 0 : i64, scratch_operands = 1 : i64, tpu.core_type = #tpu.core_type<tc>, window_params = [{transform_indices = @transform_0, window_bounds = array<i64: 1, 256, 128>}, {pipeline_mode = #tpu.pipeline_mode<synchronous>, transform_indices = @transform_1, window_bounds = array<i64: 1, 128>}, {pipeline_mode = #tpu.pipeline_mode<synchronous>, transform_indices = @transform_2, window_bounds = array<i64: 1, 128>}, {pipeline_mode = #tpu.pipeline_mode<synchronous>, transform_indices = @transform_3, window_bounds = array<i64: 9, 128, 128>}, {transform_indices = @transform_4, window_bounds = array<i64: 1, 256, 128>}, {transform_indices = @transform_5, window_bounds = array<i64: 1, 1, 128>}, {transform_indices = @transform_6, window_bounds = array<i64: 1, 1, 128>}]} {
    %c0 = arith.constant 0 : index
    %c0_0 = arith.constant 0 : index
    %c0_1 = arith.constant 0 : index
    %0 = vector.load %arg1[%c0, %c0_0, %c0_1] : memref<1x256x128xbf16, #tpu.memory_space<vmem>>, vector<1x256x128xbf16>
    %1 = vector.shape_cast %0 : vector<1x256x128xbf16> to vector<256x128xbf16>
    %2 = arith.extf %1 : vector<256x128xbf16> to vector<256x128xf32>
    %c0_2 = arith.constant 0 : index
    %c0_3 = arith.constant 0 : index
    %3 = vector.load %arg2[%c0_2, %c0_3] : memref<1x128xf32, #tpu.memory_space<vmem>>, vector<1x128xf32>
    %4 = vector.broadcast %3 : vector<1x128xf32> to vector<256x128xf32>
    %5 = arith.mulf %2, %4 : vector<256x128xf32>
    %c0_4 = arith.constant 0 : index
    %c0_5 = arith.constant 0 : index
    %6 = vector.load %arg3[%c0_4, %c0_5] : memref<1x128xf32, #tpu.memory_space<vmem>>, vector<1x128xf32>
    %7 = vector.broadcast %6 : vector<1x128xf32> to vector<256x128xf32>
    %8 = arith.addf %5, %7 : vector<256x128xf32>
    %cst = arith.constant 0.000000e+00 : f32
    %9 = vector.broadcast %cst : f32 to vector<256x128xf32>
    %10 = arith.maximumf %8, %9 : vector<256x128xf32>
    %11 = arith.truncf %10 : vector<256x128xf32> to vector<256x128xbf16>
    %cst_6 = arith.constant 0.000000e+00 : bf16
    %12 = vector.broadcast %cst_6 : bf16 to vector<18x25x128xbf16>
    %c0_7 = arith.constant 0 : index
    %c0_8 = arith.constant 0 : index
    %c0_9 = arith.constant 0 : index
    %13 = vector.load %arg8[%c0_7, %c0_8, %c0_9] : memref<18x25x128xbf16, #tpu.memory_space<vmem>>, vector<18x25x128xbf16>
    tpu.vector_store %arg8[%c0_7, %c0_8, %c0_9], %12 {strides = array<i32>} : memref<18x25x128xbf16, #tpu.memory_space<vmem>>, vector<18x25x128xbf16>,
    %14 = vector.shape_cast %11 : vector<256x128xbf16> to vector<16x16x128xbf16>
    %c1 = arith.constant 1 : index
    %c8 = arith.constant 8 : index
    %c0_10 = arith.constant 0 : index
    %15 = vector.load %arg8[%c1, %c8, %c0_10] : memref<18x25x128xbf16, #tpu.memory_space<vmem>>, vector<16x16x128xbf16>
    tpu.vector_store %arg8[%c1, %c8, %c0_10], %14 {strides = array<i32>} : memref<18x25x128xbf16, #tpu.memory_space<vmem>>, vector<16x16x128xbf16>,
    %c0_11 = arith.constant 0 : index
    %c7 = arith.constant 7 : index
    %c0_12 = arith.constant 0 : index
    %16 = vector.load %arg8[%c0_11, %c7, %c0_12] : memref<18x25x128xbf16, #tpu.memory_space<vmem>>, vector<16x16x128xbf16>
    %17 = vector.shape_cast %16 : vector<16x16x128xbf16> to vector<256x128xbf16>
    %c0_13 = arith.constant 0 : index
    %c0_14 = arith.constant 0 : index
    %c0_15 = arith.constant 0 : index
    %18 = vector.load %arg4[%c0_13, %c0_14, %c0_15] : memref<9x128x128xbf16, #tpu.memory_space<vmem>>, vector<1x128x128xbf16>
    %19 = vector.shape_cast %18 : vector<1x128x128xbf16> to vector<128x128xbf16>
    %cst_16 = arith.constant dense<0.000000e+00> : vector<256x128xf32>
    %20 = tpu.matmul %17, %19, %cst_16 {dimension_numbers = #tpu.dot_dimension_numbers<[1], [0], [0], [1], [0, 0, 1, 1], [], []>} : vector<256x128xbf16>, vector<128x128xbf16>, vector<256x128xf32> -> vector<256x128xf32>
    %c0_17 = arith.constant 0 : index
    %c8_18 = arith.constant 8 : index
    %c0_19 = arith.constant 0 : index
    %21 = vector.load %arg8[%c0_17, %c8_18, %c0_19] : memref<18x25x128xbf16, #tpu.memory_space<vmem>>, vector<16x16x128xbf16>
    %22 = vector.shape_cast %21 : vector<16x16x128xbf16> to vector<256x128xbf16>
    %c1_20 = arith.constant 1 : index
    %c0_21 = arith.constant 0 : index
    %c0_22 = arith.constant 0 : index
    %23 = vector.load %arg4[%c1_20, %c0_21, %c0_22] : memref<9x128x128xbf16, #tpu.memory_space<vmem>>, vector<1x128x128xbf16>
    %24 = vector.shape_cast %23 : vector<1x128x128xbf16> to vector<128x128xbf16>
    %cst_23 = arith.constant dense<0.000000e+00> : vector<256x128xf32>
    %25 = tpu.matmul %22, %24, %cst_23 {dimension_numbers = #tpu.dot_dimension_numbers<[1], [0], [0], [1], [0, 0, 1, 1], [], []>} : vector<256x128xbf16>, vector<128x128xbf16>, vector<256x128xf32> -> vector<256x128xf32>
    %26 = arith.addf %20, %25 : vector<256x128xf32>
    %c0_24 = arith.constant 0 : index
    %c9 = arith.constant 9 : index
    %c0_25 = arith.constant 0 : index
    %27 = vector.load %arg8[%c0_24, %c9, %c0_25] : memref<18x25x128xbf16, #tpu.memory_space<vmem>>, vector<16x16x128xbf16>
    %28 = vector.shape_cast %27 : vector<16x16x128xbf16> to vector<256x128xbf16>
    %c2 = arith.constant 2 : index
    %c0_26 = arith.constant 0 : index
    %c0_27 = arith.constant 0 : index
    %29 = vector.load %arg4[%c2, %c0_26, %c0_27] : memref<9x128x128xbf16, #tpu.memory_space<vmem>>, vector<1x128x128xbf16>
    %30 = vector.shape_cast %29 : vector<1x128x128xbf16> to vector<128x128xbf16>
    %cst_28 = arith.constant dense<0.000000e+00> : vector<256x128xf32>
    %31 = tpu.matmul %28, %30, %cst_28 {dimension_numbers = #tpu.dot_dimension_numbers<[1], [0], [0], [1], [0, 0, 1, 1], [], []>} : vector<256x128xbf16>, vector<128x128xbf16>, vector<256x128xf32> -> vector<256x128xf32>
    %32 = arith.addf %26, %31 : vector<256x128xf32>
    %c1_29 = arith.constant 1 : index
    %c7_30 = arith.constant 7 : index
    %c0_31 = arith.constant 0 : index
    %33 = vector.load %arg8[%c1_29, %c7_30, %c0_31] : memref<18x25x128xbf16, #tpu.memory_space<vmem>>, vector<16x16x128xbf16>
    %34 = vector.shape_cast %33 : vector<16x16x128xbf16> to vector<256x128xbf16>
    %c3 = arith.constant 3 : index
    %c0_32 = arith.constant 0 : index
    %c0_33 = arith.constant 0 : index
    %35 = vector.load %arg4[%c3, %c0_32, %c0_33] : memref<9x128x128xbf16, #tpu.memory_space<vmem>>, vector<1x128x128xbf16>
    %36 = vector.shape_cast %35 : vector<1x128x128xbf16> to vector<128x128xbf16>
    %cst_34 = arith.constant dense<0.000000e+00> : vector<256x128xf32>
    %37 = tpu.matmul %34, %36, %cst_34 {dimension_numbers = #tpu.dot_dimension_numbers<[1], [0], [0], [1], [0, 0, 1, 1], [], []>} : vector<256x128xbf16>, vector<128x128xbf16>, vector<256x128xf32> -> vector<256x128xf32>
    %38 = arith.addf %32, %37 : vector<256x128xf32>
    %c1_35 = arith.constant 1 : index
    %c8_36 = arith.constant 8 : index
    %c0_37 = arith.constant 0 : index
    %39 = vector.load %arg8[%c1_35, %c8_36, %c0_37] : memref<18x25x128xbf16, #tpu.memory_space<vmem>>, vector<16x16x128xbf16>
    %40 = vector.shape_cast %39 : vector<16x16x128xbf16> to vector<256x128xbf16>
    %c4 = arith.constant 4 : index
    %c0_38 = arith.constant 0 : index
    %c0_39 = arith.constant 0 : index
    %41 = vector.load %arg4[%c4, %c0_38, %c0_39] : memref<9x128x128xbf16, #tpu.memory_space<vmem>>, vector<1x128x128xbf16>
    %42 = vector.shape_cast %41 : vector<1x128x128xbf16> to vector<128x128xbf16>
    %cst_40 = arith.constant dense<0.000000e+00> : vector<256x128xf32>
    %43 = tpu.matmul %40, %42, %cst_40 {dimension_numbers = #tpu.dot_dimension_numbers<[1], [0], [0], [1], [0, 0, 1, 1], [], []>} : vector<256x128xbf16>, vector<128x128xbf16>, vector<256x128xf32> -> vector<256x128xf32>
    %44 = arith.addf %38, %43 : vector<256x128xf32>
    %c1_41 = arith.constant 1 : index
    %c9_42 = arith.constant 9 : index
    %c0_43 = arith.constant 0 : index
    %45 = vector.load %arg8[%c1_41, %c9_42, %c0_43] : memref<18x25x128xbf16, #tpu.memory_space<vmem>>, vector<16x16x128xbf16>
    %46 = vector.shape_cast %45 : vector<16x16x128xbf16> to vector<256x128xbf16>
    %c5 = arith.constant 5 : index
    %c0_44 = arith.constant 0 : index
    %c0_45 = arith.constant 0 : index
    %47 = vector.load %arg4[%c5, %c0_44, %c0_45] : memref<9x128x128xbf16, #tpu.memory_space<vmem>>, vector<1x128x128xbf16>
    %48 = vector.shape_cast %47 : vector<1x128x128xbf16> to vector<128x128xbf16>
    %cst_46 = arith.constant dense<0.000000e+00> : vector<256x128xf32>
    %49 = tpu.matmul %46, %48, %cst_46 {dimension_numbers = #tpu.dot_dimension_numbers<[1], [0], [0], [1], [0, 0, 1, 1], [], []>} : vector<256x128xbf16>, vector<128x128xbf16>, vector<256x128xf32> -> vector<256x128xf32>
    %50 = arith.addf %44, %49 : vector<256x128xf32>
    %c2_47 = arith.constant 2 : index
    %c7_48 = arith.constant 7 : index
    %c0_49 = arith.constant 0 : index
    %51 = vector.load %arg8[%c2_47, %c7_48, %c0_49] : memref<18x25x128xbf16, #tpu.memory_space<vmem>>, vector<16x16x128xbf16>
    %52 = vector.shape_cast %51 : vector<16x16x128xbf16> to vector<256x128xbf16>
    %c6 = arith.constant 6 : index
    %c0_50 = arith.constant 0 : index
    %c0_51 = arith.constant 0 : index
    %53 = vector.load %arg4[%c6, %c0_50, %c0_51] : memref<9x128x128xbf16, #tpu.memory_space<vmem>>, vector<1x128x128xbf16>
    %54 = vector.shape_cast %53 : vector<1x128x128xbf16> to vector<128x128xbf16>
    %cst_52 = arith.constant dense<0.000000e+00> : vector<256x128xf32>
    %55 = tpu.matmul %52, %54, %cst_52 {dimension_numbers = #tpu.dot_dimension_numbers<[1], [0], [0], [1], [0, 0, 1, 1], [], []>} : vector<256x128xbf16>, vector<128x128xbf16>, vector<256x128xf32> -> vector<256x128xf32>
    %56 = arith.addf %50, %55 : vector<256x128xf32>
    %c2_53 = arith.constant 2 : index
    %c8_54 = arith.constant 8 : index
    %c0_55 = arith.constant 0 : index
    %57 = vector.load %arg8[%c2_53, %c8_54, %c0_55] : memref<18x25x128xbf16, #tpu.memory_space<vmem>>, vector<16x16x128xbf16>
    %58 = vector.shape_cast %57 : vector<16x16x128xbf16> to vector<256x128xbf16>
    %c7_56 = arith.constant 7 : index
    %c0_57 = arith.constant 0 : index
    %c0_58 = arith.constant 0 : index
    %59 = vector.load %arg4[%c7_56, %c0_57, %c0_58] : memref<9x128x128xbf16, #tpu.memory_space<vmem>>, vector<1x128x128xbf16>
    %60 = vector.shape_cast %59 : vector<1x128x128xbf16> to vector<128x128xbf16>
    %cst_59 = arith.constant dense<0.000000e+00> : vector<256x128xf32>
    %61 = tpu.matmul %58, %60, %cst_59 {dimension_numbers = #tpu.dot_dimension_numbers<[1], [0], [0], [1], [0, 0, 1, 1], [], []>} : vector<256x128xbf16>, vector<128x128xbf16>, vector<256x128xf32> -> vector<256x128xf32>
    %62 = arith.addf %56, %61 : vector<256x128xf32>
    %c2_60 = arith.constant 2 : index
    %c9_61 = arith.constant 9 : index
    %c0_62 = arith.constant 0 : index
    %63 = vector.load %arg8[%c2_60, %c9_61, %c0_62] : memref<18x25x128xbf16, #tpu.memory_space<vmem>>, vector<16x16x128xbf16>
    %64 = vector.shape_cast %63 : vector<16x16x128xbf16> to vector<256x128xbf16>
    %c8_63 = arith.constant 8 : index
    %c0_64 = arith.constant 0 : index
    %c0_65 = arith.constant 0 : index
    %65 = vector.load %arg4[%c8_63, %c0_64, %c0_65] : memref<9x128x128xbf16, #tpu.memory_space<vmem>>, vector<1x128x128xbf16>
    %66 = vector.shape_cast %65 : vector<1x128x128xbf16> to vector<128x128xbf16>
    %cst_66 = arith.constant dense<0.000000e+00> : vector<256x128xf32>
    %67 = tpu.matmul %64, %66, %cst_66 {dimension_numbers = #tpu.dot_dimension_numbers<[1], [0], [0], [1], [0, 0, 1, 1], [], []>} : vector<256x128xbf16>, vector<128x128xbf16>, vector<256x128xf32> -> vector<256x128xf32>
    %68 = arith.addf %62, %67 : vector<256x128xf32>
    %69 = arith.truncf %68 : vector<256x128xf32> to vector<256x128xbf16>
    %c0_67 = arith.constant 0 : index
    %c0_68 = arith.constant 0 : index
    %c0_69 = arith.constant 0 : index
    %70 = vector.load %arg5[%c0_67, %c0_68, %c0_69] : memref<1x256x128xbf16, #tpu.memory_space<vmem>>, vector<1x256x128xbf16>
    %71 = vector.shape_cast %70 : vector<1x256x128xbf16> to vector<256x128xbf16>
    %72 = vector.shape_cast %69 : vector<256x128xbf16> to vector<1x256x128xbf16>
    tpu.vector_store %arg5[%c0_67, %c0_68, %c0_69], %72 {strides = array<i32>} : memref<1x256x128xbf16, #tpu.memory_space<vmem>>, vector<1x256x128xbf16>,
    %cst_70 = arith.constant dense<0.000000e+00> : vector<128xf32>
    %73 = vector.multi_reduction <add>, %68, %cst_70 [0] : vector<256x128xf32> to vector<128xf32>
    %74 = vector.shape_cast %73 : vector<128xf32> to vector<1x128xf32>
    %c0_71 = arith.constant 0 : index
    %c0_72 = arith.constant 0 : index
    %c0_73 = arith.constant 0 : index
    %75 = vector.load %arg6[%c0_71, %c0_72, %c0_73] : memref<1x1x128xf32, #tpu.memory_space<vmem>>, vector<1x1x128xf32>
    %76 = vector.shape_cast %75 : vector<1x1x128xf32> to vector<1x128xf32>
    %77 = vector.shape_cast %74 : vector<1x128xf32> to vector<1x1x128xf32>
    tpu.vector_store %arg6[%c0_71, %c0_72, %c0_73], %77 {strides = array<i32>} : memref<1x1x128xf32, #tpu.memory_space<vmem>>, vector<1x1x128xf32>,
    %78 = arith.mulf %68, %68 : vector<256x128xf32>
    %cst_74 = arith.constant dense<0.000000e+00> : vector<128xf32>
    %79 = vector.multi_reduction <add>, %78, %cst_74 [0] : vector<256x128xf32> to vector<128xf32>
    %80 = vector.shape_cast %79 : vector<128xf32> to vector<1x128xf32>
    %c0_75 = arith.constant 0 : index
    %c0_76 = arith.constant 0 : index
    %c0_77 = arith.constant 0 : index
    %81 = vector.load %arg7[%c0_75, %c0_76, %c0_77] : memref<1x1x128xf32, #tpu.memory_space<vmem>>, vector<1x1x128xf32>
    %82 = vector.shape_cast %81 : vector<1x1x128xf32> to vector<1x128xf32>
    %83 = vector.shape_cast %80 : vector<1x128xf32> to vector<1x1x128xf32>
    tpu.vector_store %arg7[%c0_75, %c0_76, %c0_77], %83 {strides = array<i32>} : memref<1x1x128xf32, #tpu.memory_space<vmem>>, vector<1x1x128xf32>,
    return
  }
  func.func @transform_0(%arg0: i32) -> (i32, i32, i32) {
    %c0_i32 = arith.constant 0 : i32
    %c0_i32_0 = arith.constant 0 : i32
    %c0_i32_1 = arith.constant 0 : i32
    return %arg0, %c0_i32, %c0_i32_0 : i32, i32, i32
  }
  func.func @transform_1(%arg0: i32) -> (i32, i32) {
    %c0_i32 = arith.constant 0 : i32
    %c0_i32_0 = arith.constant 0 : i32
    %c0_i32_1 = arith.constant 0 : i32
    return %c0_i32, %c0_i32_0 : i32, i32
  }
  func.func @transform_2(%arg0: i32) -> (i32, i32) {
    %c0_i32 = arith.constant 0 : i32
    %c0_i32_0 = arith.constant 0 : i32
    %c0_i32_1 = arith.constant 0 : i32
    return %c0_i32, %c0_i32_0 : i32, i32
  }
  func.func @transform_3(%arg0: i32) -> (i32, i32, i32) {
    %c0_i32 = arith.constant 0 : i32
    %c0_i32_0 = arith.constant 0 : i32
    %c0_i32_1 = arith.constant 0 : i32
    %c0_i32_2 = arith.constant 0 : i32
    return %c0_i32, %c0_i32_0, %c0_i32_1 : i32, i32, i32
  }
  func.func @transform_4(%arg0: i32) -> (i32, i32, i32) {
    %c0_i32 = arith.constant 0 : i32
    %c0_i32_0 = arith.constant 0 : i32
    %c0_i32_1 = arith.constant 0 : i32
    return %arg0, %c0_i32, %c0_i32_0 : i32, i32, i32
  }
  func.func @transform_5(%arg0: i32) -> (i32, i32, i32) {
    %c0_i32 = arith.constant 0 : i32
    %c0_i32_0 = arith.constant 0 : i32
    %c0_i32_1 = arith.constant 0 : i32
    return %arg0, %c0_i32, %c0_i32_0 : i32, i32, i32
  }
  func.func @transform_6(%arg0: i32) -> (i32, i32, i32) {
    %c0_i32 = arith.constant 0 : i32
    %c0_i32_0 = arith.constant 0 : i32
    %c0_i32_1 = arith.constant 0 : i32
    return %arg0, %c0_i32, %c0_i32_0 : i32, i32, i32
  }
}

module attributes {stable_mosaic.version = 11 : i64} {
  func.func @_bn_residual_relu_kernel(%arg0: i32, %arg1: memref<256x128xbf16, #tpu.memory_space<vmem>>, %arg2: memref<1x128xf32, #tpu.memory_space<vmem>>, %arg3: memref<1x128xf32, #tpu.memory_space<vmem>>, %arg4: memref<256x128xbf16, #tpu.memory_space<vmem>>, %arg5: memref<256x128xf32, #tpu.memory_space<vmem>>) attributes {dimension_semantics = [#tpu.dimension_semantics<parallel>], iteration_bounds = array<i64: 2>, scalar_prefetch = 0 : i64, scratch_operands = 0 : i64, tpu.core_type = #tpu.core_type<tc>, window_params = [{transform_indices = @transform_0, window_bounds = array<i64: 256, 128>}, {pipeline_mode = #tpu.pipeline_mode<synchronous>, transform_indices = @transform_1, window_bounds = array<i64: 1, 128>}, {pipeline_mode = #tpu.pipeline_mode<synchronous>, transform_indices = @transform_2, window_bounds = array<i64: 1, 128>}, {transform_indices = @transform_3, window_bounds = array<i64: 256, 128>}, {transform_indices = @transform_4, window_bounds = array<i64: 256, 128>}]} {
    %c0 = arith.constant 0 : index
    %c0_0 = arith.constant 0 : index
    %0 = vector.load %arg1[%c0, %c0_0] : memref<256x128xbf16, #tpu.memory_space<vmem>>, vector<256x128xbf16>
    %1 = arith.extf %0 : vector<256x128xbf16> to vector<256x128xf32>
    %c0_1 = arith.constant 0 : index
    %c0_2 = arith.constant 0 : index
    %2 = vector.load %arg2[%c0_1, %c0_2] : memref<1x128xf32, #tpu.memory_space<vmem>>, vector<1x128xf32>
    %3 = vector.broadcast %2 : vector<1x128xf32> to vector<256x128xf32>
    %4 = arith.mulf %1, %3 : vector<256x128xf32>
    %c0_3 = arith.constant 0 : index
    %c0_4 = arith.constant 0 : index
    %5 = vector.load %arg3[%c0_3, %c0_4] : memref<1x128xf32, #tpu.memory_space<vmem>>, vector<1x128xf32>
    %6 = vector.broadcast %5 : vector<1x128xf32> to vector<256x128xf32>
    %7 = arith.addf %4, %6 : vector<256x128xf32>
    %c0_5 = arith.constant 0 : index
    %c0_6 = arith.constant 0 : index
    %8 = vector.load %arg4[%c0_5, %c0_6] : memref<256x128xbf16, #tpu.memory_space<vmem>>, vector<256x128xbf16>
    %9 = arith.extf %8 : vector<256x128xbf16> to vector<256x128xf32>
    %10 = arith.addf %7, %9 : vector<256x128xf32>
    %cst = arith.constant 0.000000e+00 : f32
    %11 = vector.broadcast %cst : f32 to vector<256x128xf32>
    %12 = arith.maximumf %10, %11 : vector<256x128xf32>
    %c0_7 = arith.constant 0 : index
    %c0_8 = arith.constant 0 : index
    %13 = vector.load %arg5[%c0_7, %c0_8] : memref<256x128xf32, #tpu.memory_space<vmem>>, vector<256x128xf32>
    tpu.vector_store %arg5[%c0_7, %c0_8], %12 {strides = array<i32>} : memref<256x128xf32, #tpu.memory_space<vmem>>, vector<256x128xf32>,
    return
  }
  func.func @transform_0(%arg0: i32) -> (i32, i32) {
    %c0_i32 = arith.constant 0 : i32
    %c0_i32_0 = arith.constant 0 : i32
    return %arg0, %c0_i32 : i32, i32
  }
  func.func @transform_1(%arg0: i32) -> (i32, i32) {
    %c0_i32 = arith.constant 0 : i32
    %c0_i32_0 = arith.constant 0 : i32
    %c0_i32_1 = arith.constant 0 : i32
    return %c0_i32, %c0_i32_0 : i32, i32
  }
  func.func @transform_2(%arg0: i32) -> (i32, i32) {
    %c0_i32 = arith.constant 0 : i32
    %c0_i32_0 = arith.constant 0 : i32
    %c0_i32_1 = arith.constant 0 : i32
    return %c0_i32, %c0_i32_0 : i32, i32
  }
  func.func @transform_3(%arg0: i32) -> (i32, i32) {
    %c0_i32 = arith.constant 0 : i32
    %c0_i32_0 = arith.constant 0 : i32
    return %arg0, %c0_i32 : i32, i32
  }
  func.func @transform_4(%arg0: i32) -> (i32, i32) {
    %c0_i32 = arith.constant 0 : i32
    %c0_i32_0 = arith.constant 0 : i32
    return %arg0, %c0_i32 : i32, i32
  }
}

</mosaic_0001>

<llo_original>
// kernel: basic_block_forward.5
$region0: #{basic_block_forward.5}
  #allocation0 [shape = 'u32[]', space=smem, size = 0x4, offset = 0x4, fixed_abs, tag = 'smem constant byte address 0x4 - core index']
  #allocation1 [shape = 'u32[144,128]{1,0:T(1,128)}', space=vmem, size = 0x12000, scoped, tag = 'internal scratch']
  %s0 = inlined_call_operand.vmem [shape: bf16[512,128], index: 0, kind: input, shape index: {}]
  %s1 = inlined_call_operand.vmem [shape: f32[1,128], index: 1, kind: input, shape index: {}]
  %s2 = inlined_call_operand.vmem [shape: f32[1,128], index: 2, kind: input, shape index: {}]
  %s3 = inlined_call_operand.vmem [shape: bf16[512,128], index: 3, kind: input, shape index: {}]
  %s4 = inlined_call_operand.vmem [shape: f32[512,128], index: 4, kind: output, shape index: {}]
  %s5 = sld [smem:[#allocation0]]
  $region49: #{basic_block_forward.5} parent=0
    _
  %s7 = ssub.s32 1, %s5
  %s8 = scalar_select 0, %s7, %s5
  loop: start=0, step=1, limit=4
  $region2: #{basic_block_forward.5} parent=0 // loop_pre_header
    _
  $region3: #{basic_block_forward.5} parent=0 // loop_header
    %s10 = sphi 0, %s14
    %p11 = scmp.ge.s32.totalorder %s10, 4
    %s20 = sphi 0, %s22
    %s23 = sphi 0, %s20
    %s24 = sphi 0, %s23
    %s40 = sphi 0, %s24
    %s44 = sphi 0, %s44
    %s46 = sphi 0, %s44
    %s47 = sphi 0, %s46
    %s61 = sphi 0, %s47
    %s65 = sphi 0, %s65
    %s67 = sphi 0, %s65
    %s68 = sphi 0, %s67
    %s82 = sphi 0, %s68
    %s88 = sphi 0, %s90
    %s91 = sphi 0, %s88
    %s92 = sphi 0, %s91
    %s108 = sphi 0, %s92
    %s114 = sphi 0, %s116
    %s117 = sphi 0, %s114
    %s118 = sphi 0, %s117
    %s134 = sphi 0, %s118
  $region4: #{basic_block_forward.5} parent=0 // loop_header_branch
    %13 = sbr.rel (%p11) target = $region8
  $region5: #{basic_block_forward.5} parent=0 // loop_body
    %s15 = ssub.s32 %s10, 1
    %s16 = ssub.s32 %s10, 2
    %s17 = sadd.s32 %s10, 1
    %s18 = ssub.s32 %s10, %s17
    %p19 = scmp.eq.s32.totalorder %s18, 0
    %s21 = sadd.s32 %s20, 1
    %s22 = scalar_select %p19, %s20, %s21
    %p25 = pneg %p19
    %p26 = scmp.eq.s32.totalorder %s10, 1
    %p27 = por %p25, %p26
    %p28 = scmp.ne.s32.totalorder %s20, %s23
    %p29 = scmp.eq.s32.totalorder %s10, 0
    %p30 = por %p28, %p29
    %p31 = scmp.ne.s32.totalorder %s20, %s23
    %p32 = scmp.eq.s32.totalorder %s15, 1
    %p33 = por %p31, %p32
    %p34 = scmp.ne.s32.totalorder %s23, %s24
    %p35 = scmp.eq.s32.totalorder %s15, 0
    %p36 = por %p34, %p35
    %p37 = scmp.ne.s32.totalorder %s23, %s24
    %p38 = scmp.eq.s32.totalorder %s16, 1
    %p39 = por %p37, %p38
    %p41 = scmp.ne.s32.totalorder %s24, %s40
    %p42 = scmp.eq.s32.totalorder %s16, 0
    %p43 = por %p41, %p42
    %s45 = sadd.s32 %s44, 1
    %p48 = scmp.eq.s32.totalorder %s10, 1
    %p49 = scmp.ne.s32.totalorder %s44, %s46
    %p50 = scmp.eq.s32.totalorder %s10, 0
    %p51 = por %p49, %p50
    %p52 = scmp.ne.s32.totalorder %s44, %s46
    %p53 = scmp.eq.s32.totalorder %s15, 1
    %p54 = por %p52, %p53
    %p55 = scmp.ne.s32.totalorder %s46, %s47
    %p56 = scmp.eq.s32.totalorder %s15, 0
    %p57 = por %p55, %p56
    %p58 = scmp.ne.s32.totalorder %s46, %s47
    %p59 = scmp.eq.s32.totalorder %s16, 1
    %p60 = por %p58, %p59
    %p62 = scmp.ne.s32.totalorder %s47, %s61
    %p63 = scmp.eq.s32.totalorder %s16, 0
    %p64 = por %p62, %p63
    %s66 = sadd.s32 %s65, 1
    %p69 = scmp.eq.s32.totalorder %s10, 1
    %p70 = scmp.ne.s32.totalorder %s65, %s67
    %p71 = scmp.eq.s32.totalorder %s10, 0
    %p72 = por %p70, %p71
    %p73 = scmp.ne.s32.totalorder %s65, %s67
    %p74 = scmp.eq.s32.totalorder %s15, 1
    %p75 = por %p73, %p74
    %p76 = scmp.ne.s32.totalorder %s67, %s68
    %p77 = scmp.eq.s32.totalorder %s15, 0
    %p78 = por %p76, %p77
    %p79 = scmp.ne.s32.totalorder %s67, %s68
    %p80 = scmp.eq.s32.totalorder %s16, 1
    %p81 = por %p79, %p80
    %p83 = scmp.ne.s32.totalorder %s68, %s82
    %p84 = scmp.eq.s32.totalorder %s16, 0
    %p85 = por %p83, %p84
    %s86 = ssub.s32 %s10, %s17
    %p87 = scmp.eq.s32.totalorder %s86, 0
    %s89 = sadd.s32 %s88, 1
    %s90 = scalar_select %p87, %s88, %s89
    %p93 = pneg %p87
    %p94 = scmp.eq.s32.totalorder %s10, 1
    %p95 = por %p93, %p94
    %p96 = scmp.ne.s32.totalorder %s88, %s91
    %p97 = scmp.eq.s32.totalorder %s10, 0
    %p98 = por %p96, %p97
    %p99 = scmp.ne.s32.totalorder %s88, %s91
    %p100 = scmp.eq.s32.totalorder %s15, 1
    %p101 = por %p99, %p100
    %p102 = scmp.ne.s32.totalorder %s91, %s92
    %p103 = scmp.eq.s32.totalorder %s15, 0
    %p104 = por %p102, %p103
    %p105 = scmp.ne.s32.totalorder %s91, %s92
    %p106 = scmp.eq.s32.totalorder %s16, 1
    %p107 = por %p105, %p106
    %p109 = scmp.ne.s32.totalorder %s92, %s108
    %p110 = scmp.eq.s32.totalorder %s16, 0
    %p111 = por %p109, %p110
    %s112 = ssub.s32 %s10, %s17
    %p113 = scmp.eq.s32.totalorder %s112, 0
    %s115 = sadd.s32 %s114, 1
    %s116 = scalar_select %p113, %s114, %s115
    %p119 = pneg %p113
    %p120 = scmp.eq.s32.totalorder %s10, 1
    %p121 = por %p119, %p120
    %p122 = scmp.ne.s32.totalorder %s114, %s117
    %p123 = scmp.eq.s32.totalorder %s10, 0
    %p124 = por %p122, %p123
    %p125 = scmp.ne.s32.totalorder %s114, %s117
    %p126 = scmp.eq.s32.totalorder %s15, 1
    %p127 = por %p125, %p126
    %p128 = scmp.ne.s32.totalorder %s117, %s118
    %p129 = scmp.eq.s32.totalorder %s15, 0
    %p130 = por %p128, %p129
    %p131 = scmp.ne.s32.totalorder %s117, %s118
    %p132 = scmp.eq.s32.totalorder %s16, 1
    %p133 = por %p131, %p132
    %p135 = scmp.ne.s32.totalorder %s118, %s134
    %p136 = scmp.eq.s32.totalorder %s16, 0
    %p137 = por %p135, %p136
    %p138 = scmp.le.s32.totalorder 1, %s10
    %p139 = scmp.lt.s32.totalorder %s10, 3
    %p140 = pnand %p138, %p139
    %p141 = pneg %p140
    // Predicated region
    $region9: #{basic_block_forward.5} parent=5 // pred_check
      _
    $region10: #{basic_block_forward.5} parent=5 // pred_check_branch
      %143 = sbr.rel (%p140) target = $region12
    $region11: #{basic_block_forward.5} parent=5 // pred_region
      %s144 = ssub.s32 %s10, 1
      // Predicated region
      $region13: #{basic_block_forward.5} parent=11 // pred_check
        %p145 = pneg %p57
      $region14: #{basic_block_forward.5} parent=11 // pred_check_branch
        %147 = sbr.rel (%p145) target = $region16
      $region15: #{basic_block_forward.5} parent=11 // pred_region
        _
      $region16: #{basic_block_forward.5} parent=11 // pred_fallthru
        _
      // Predicated region
      $region17: #{basic_block_forward.5} parent=11 // pred_check
        %p148 = pneg %p78
      $region18: #{basic_block_forward.5} parent=11 // pred_check_branch
        %150 = sbr.rel (%p148) target = $region20
      $region19: #{basic_block_forward.5} parent=11 // pred_region
        _
      $region20: #{basic_block_forward.5} parent=11 // pred_fallthru
        _
    $region12: #{basic_block_forward.5} parent=5 // pred_fallthru
      _
    %p151 = scmp.lt.s32.totalorder %s10, 2
    // Predicated region
    $region21: #{basic_block_forward.5} parent=5 // pred_check
      %p152 = pneg %p151
    $region22: #{basic_block_forward.5} parent=5 // pred_check_branch
      %154 = sbr.rel (%p152) target = $region24
    $region23: #{basic_block_forward.5} parent=5 // pred_region
      // Predicated region
      $region25: #{basic_block_forward.5} parent=23 // pred_check
        %p155 = pneg %p30
      $region26: #{basic_block_forward.5} parent=23 // pred_check_branch
        %157 = sbr.rel (%p155) target = $region28
      $region27: #{basic_block_forward.5} parent=23 // pred_region
        %s158 = smul.u32 32, %s10
        %p159 = scmp.lt.s32.totalorder %s158, 63
        %s160 = scalar_select %p159, %s158, 63
        %s161 = smul.addr %s160, 4
        %s162 = scalar_lea.vmem %s0, %s161
        %s163 = smul.u32 32, %s10
      $region28: #{basic_block_forward.5} parent=23 // pred_fallthru
        _
      // Predicated region
      $region29: #{basic_block_forward.5} parent=23 // pred_check
        %p164 = pneg %p98
      $region30: #{basic_block_forward.5} parent=23 // pred_check_branch
        %166 = sbr.rel (%p164) target = $region32
      $region31: #{basic_block_forward.5} parent=23 // pred_region
        %s167 = smul.u32 32, %s10
        %p168 = scmp.lt.s32.totalorder %s167, 63
        %s169 = scalar_select %p168, %s167, 63
        %s170 = smul.addr %s169, 4
        %s171 = scalar_lea.vmem %s3, %s170
        %s172 = smul.u32 32, %s10
      $region32: #{basic_block_forward.5} parent=23 // pred_fallthru
        _
    $region24: #{basic_block_forward.5} parent=5 // pred_fallthru
      _
    %p173 = scmp.le.s32.totalorder 1, %s10
    %p174 = scmp.lt.s32.totalorder %s10, 3
    %p175 = pnand %p173, %p174
    %p176 = pneg %p175
    // Predicated region
    $region33: #{basic_block_forward.5} parent=5 // pred_check
      _
    $region34: #{basic_block_forward.5} parent=5 // pred_check_branch
      %178 = sbr.rel (%p175) target = $region36
    $region35: #{basic_block_forward.5} parent=5 // pred_region
      %s179 = ssub.s32 %s10, 1
      %s180 = smul.u32 32, %s15
      %p181 = scmp.lt.s32.totalorder %s180, 63
      %s182 = scalar_select %p181, %s180, 63
      %s183 = smul.addr %s182, 4
      %s184 = scalar_lea.vmem %s0, %s183
      %p185 = pneg %p36
      %p186 = pneg %p33
      %p187 = pneg %p57
      %p188 = pneg %p54
      %p189 = pneg %p78
      %p190 = pneg %p75
      %s191 = smul.u32 32, %s15
      %p192 = scmp.lt.s32.totalorder %s191, 63
      %s193 = scalar_select %p192, %s191, 63
      %s194 = smul.addr %s193, 4
      %s195 = scalar_lea.vmem %s3, %s194
      %p196 = pneg %p104
      %p197 = pneg %p101
      %p198 = pneg %p130
      %p199 = pneg %p127
      %s200 = smul.u32 32, %s15
      %p201 = scmp.lt.s32.totalorder %s200, 63
      %s202 = scalar_select %p201, %s200, 63
      %s203 = smul.addr %s202, 8
      %s204 = scalar_lea.vmem %s4, %s203
      %s205 = smul.u32 32, %s15
      %p206 = scmp.lt.s32.totalorder %s205, 63
      %s207 = scalar_select %p206, %s205, 63
      %s208 = smul.addr %s207, 4
      %s209 = scalar_lea.vmem %s0, %s208
      %s210 = smul.u32 32, %s15
      %s211 = smul.u32 32, %s15
      %p212 = scmp.lt.s32.totalorder %s211, 63
      %s213 = scalar_select %p212, %s211, 63
      %s214 = smul.addr %s213, 4
      %s215 = scalar_lea.vmem %s3, %s214
      %s216 = smul.u32 32, %s15
      %s217 = smul.u32 32, %s15
      %p218 = scmp.lt.s32.totalorder %s217, 63
      %s219 = scalar_select %p218, %s217, 63
      %s220 = smul.addr %s219, 8
      %s221 = scalar_lea.vmem %s4, %s220
      %s222 = smul.u32 32, %s15
      %v223 = vld [vmem:[%s209] sm:$0xf]
      %v224 = vld [vmem:[%s209 + $0x4] sm:$0xf]
      %v225 = vld [vmem:[%s209 + $0x8] sm:$0xf]
      %v226 = vld [vmem:[%s209 + $0xc] sm:$0xf]
      %v227 = vld [vmem:[%s209 + $0x10] sm:$0xf]
      %v228 = vld [vmem:[%s209 + $0x14] sm:$0xf]
      %v229 = vld [vmem:[%s209 + $0x18] sm:$0xf]
      %v230 = vld [vmem:[%s209 + $0x1c] sm:$0xf]
      %v231 = vld [vmem:[%s209 + $0x20] sm:$0xf]
      %v232 = vld [vmem:[%s209 + $0x24] sm:$0xf]
      %v233 = vld [vmem:[%s209 + $0x28] sm:$0xf]
      %v234 = vld [vmem:[%s209 + $0x2c] sm:$0xf]
      %v235 = vld [vmem:[%s209 + $0x30] sm:$0xf]
      %v236 = vld [vmem:[%s209 + $0x34] sm:$0xf]
      %v237 = vld [vmem:[%s209 + $0x38] sm:$0xf]
      %v238 = vld [vmem:[%s209 + $0x3c] sm:$0xf]
      %v239 = vld [vmem:[%s209 + $0x40] sm:$0xf]
      %v240 = vld [vmem:[%s209 + $0x44] sm:$0xf]
      %v241 = vld [vmem:[%s209 + $0x48] sm:$0xf]
      %v242 = vld [vmem:[%s209 + $0x4c] sm:$0xf]
      %v243 = vld [vmem:[%s209 + $0x50] sm:$0xf]
      %v244 = vld [vmem:[%s209 + $0x54] sm:$0xf]
      %v245 = vld [vmem:[%s209 + $0x58] sm:$0xf]
      %v246 = vld [vmem:[%s209 + $0x5c] sm:$0xf]
      %v247 = vld [vmem:[%s209 + $0x60] sm:$0xf]
      %v248 = vld [vmem:[%s209 + $0x64] sm:$0xf]
      %v249 = vld [vmem:[%s209 + $0x68] sm:$0xf]
      %v250 = vld [vmem:[%s209 + $0x6c] sm:$0xf]
      %v251 = vld [vmem:[%s209 + $0x70] sm:$0xf]
      %v252 = vld [vmem:[%s209 + $0x74] sm:$0xf]
      %v253 = vld [vmem:[%s209 + $0x78] sm:$0xf]
      %v254 = vld [vmem:[%s209 + $0x7c] sm:$0xf]
      %v255 = vunpack.c.l.bf16 %v223
      %v256 = vunpack.c.l.bf16 %v224
      %v257 = vunpack.c.l.bf16 %v225
      %v258 = vunpack.c.l.bf16 %v226
      %v259 = vunpack.c.l.bf16 %v227
      %v260 = vunpack.c.l.bf16 %v228
      %v261 = vunpack.c.l.bf16 %v229
      %v262 = vunpack.c.l.bf16 %v230
      %v263 = vunpack.c.l.bf16 %v231
      %v264 = vunpack.c.l.bf16 %v232
      %v265 = vunpack.c.l.bf16 %v233
      %v266 = vunpack.c.l.bf16 %v234
      %v267 = vunpack.c.l.bf16 %v235
      %v268 = vunpack.c.l.bf16 %v236
      %v269 = vunpack.c.l.bf16 %v237
      %v270 = vunpack.c.l.bf16 %v238
      %v271 = vunpack.c.l.bf16 %v239
      %v272 = vunpack.c.l.bf16 %v240
      %v273 = vunpack.c.l.bf16 %v241
      %v274 = vunpack.c.l.bf16 %v242
      %v275 = vunpack.c.l.bf16 %v243
      %v276 = vunpack.c.l.bf16 %v244
      %v277 = vunpack.c.l.bf16 %v245
      %v278 = vunpack.c.l.bf16 %v246
      %v279 = vunpack.c.l.bf16 %v247
      %v280 = vunpack.c.l.bf16 %v248
      %v281 = vunpack.c.l.bf16 %v249
      %v282 = vunpack.c.l.bf16 %v250
      %v283 = vunpack.c.l.bf16 %v251
      %v284 = vunpack.c.l.bf16 %v252
      %v285 = vunpack.c.l.bf16 %v253
      %v286 = vunpack.c.l.bf16 %v254
      %v287 = vld [vmem:[%s1] sm:$0x1]
      %v289 = vlaneseq
      %v290 = vshrl.u32 %v289, 7
      %v291 = vsub.s32 0, %v290
      %v292 = vrot.slane %v287, %v291
      %v294 = vmul.f32 %v255, %v292
      %v295 = vmul.f32 %v256, %v292
      %v296 = vmul.f32 %v257, %v292
      %v297 = vmul.f32 %v258, %v292
      %v298 = vmul.f32 %v259, %v292
      %v299 = vmul.f32 %v260, %v292
      %v300 = vmul.f32 %v261, %v292
      %v301 = vmul.f32 %v262, %v292
      %v302 = vmul.f32 %v263, %v292
      %v303 = vmul.f32 %v264, %v292
      %v304 = vmul.f32 %v265, %v292
      %v305 = vmul.f32 %v266, %v292
      %v306 = vmul.f32 %v267, %v292
      %v307 = vmul.f32 %v268, %v292
      %v308 = vmul.f32 %v269, %v292
      %v309 = vmul.f32 %v270, %v292
      %v310 = vmul.f32 %v271, %v292
      %v311 = vmul.f32 %v272, %v292
      %v312 = vmul.f32 %v273, %v292
      %v313 = vmul.f32 %v274, %v292
      %v314 = vmul.f32 %v275, %v292
      %v315 = vmul.f32 %v276, %v292
      %v316 = vmul.f32 %v277, %v292
      %v317 = vmul.f32 %v278, %v292
      %v318 = vmul.f32 %v279, %v292
      %v319 = vmul.f32 %v280, %v292
      %v320 = vmul.f32 %v281, %v292
      %v321 = vmul.f32 %v282, %v292
      %v322 = vmul.f32 %v283, %v292
      %v323 = vmul.f32 %v284, %v292
      %v324 = vmul.f32 %v285, %v292
      %v325 = vmul.f32 %v286, %v292
      %v326 = vld [vmem:[%s2] sm:$0x1]
      %v328 = vlaneseq
      %v329 = vshrl.u32 %v328, 7
      %v330 = vsub.s32 0, %v329
      %v331 = vrot.slane %v326, %v330
      %v333 = vadd.f32 %v294, %v331
      %v334 = vadd.f32 %v295, %v331
      %v335 = vadd.f32 %v296, %v331
      %v336 = vadd.f32 %v297, %v331
      %v337 = vadd.f32 %v298, %v331
      %v338 = vadd.f32 %v299, %v331
      %v339 = vadd.f32 %v300, %v331
      %v340 = vadd.f32 %v301, %v331
      %v341 = vadd.f32 %v302, %v331
      %v342 = vadd.f32 %v303, %v331
      %v343 = vadd.f32 %v304, %v331
      %v344 = vadd.f32 %v305, %v331
      %v345 = vadd.f32 %v306, %v331
      %v346 = vadd.f32 %v307, %v331
      %v347 = vadd.f32 %v308, %v331
      %v348 = vadd.f32 %v309, %v331
      %v349 = vadd.f32 %v310, %v331
      %v350 = vadd.f32 %v311, %v331
      %v351 = vadd.f32 %v312, %v331
      %v352 = vadd.f32 %v313, %v331
      %v353 = vadd.f32 %v314, %v331
      %v354 = vadd.f32 %v315, %v331
      %v355 = vadd.f32 %v316, %v331
      %v356 = vadd.f32 %v317, %v331
      %v357 = vadd.f32 %v318, %v331
      %v358 = vadd.f32 %v319, %v331
      %v359 = vadd.f32 %v320, %v331
      %v360 = vadd.f32 %v321, %v331
      %v361 = vadd.f32 %v322, %v331
      %v362 = vadd.f32 %v323, %v331
      %v363 = vadd.f32 %v324, %v331
      %v364 = vadd.f32 %v325, %v331
      %v365 = vld [vmem:[%s215] sm:$0xf]
      %v366 = vld [vmem:[%s215 + $0x4] sm:$0xf]
      %v367 = vld [vmem:[%s215 + $0x8] sm:$0xf]
      %v368 = vld [vmem:[%s215 + $0xc] sm:$0xf]
      %v369 = vld [vmem:[%s215 + $0x10] sm:$0xf]
      %v370 = vld [vmem:[%s215 + $0x14] sm:$0xf]
      %v371 = vld [vmem:[%s215 + $0x18] sm:$0xf]
      %v372 = vld [vmem:[%s215 + $0x1c] sm:$0xf]
      %v373 = vld [vmem:[%s215 + $0x20] sm:$0xf]
      %v374 = vld [vmem:[%s215 + $0x24] sm:$0xf]
      %v375 = vld [vmem:[%s215 + $0x28] sm:$0xf]
      %v376 = vld [vmem:[%s215 + $0x2c] sm:$0xf]
      %v377 = vld [vmem:[%s215 + $0x30] sm:$0xf]
      %v378 = vld [vmem:[%s215 + $0x34] sm:$0xf]
      %v379 = vld [vmem:[%s215 + $0x38] sm:$0xf]
      %v380 = vld [vmem:[%s215 + $0x3c] sm:$0xf]
      %v381 = vld [vmem:[%s215 + $0x40] sm:$0xf]
      %v382 = vld [vmem:[%s215 + $0x44] sm:$0xf]
      %v383 = vld [vmem:[%s215 + $0x48] sm:$0xf]
      %v384 = vld [vmem:[%s215 + $0x4c] sm:$0xf]
      %v385 = vld [vmem:[%s215 + $0x50] sm:$0xf]
      %v386 = vld [vmem:[%s215 + $0x54] sm:$0xf]
      %v387 = vld [vmem:[%s215 + $0x58] sm:$0xf]
      %v388 = vld [vmem:[%s215 + $0x5c] sm:$0xf]
      %v389 = vld [vmem:[%s215 + $0x60] sm:$0xf]
      %v390 = vld [vmem:[%s215 + $0x64] sm:$0xf]
      %v391 = vld [vmem:[%s215 + $0x68] sm:$0xf]
      %v392 = vld [vmem:[%s215 + $0x6c] sm:$0xf]
      %v393 = vld [vmem:[%s215 + $0x70] sm:$0xf]
      %v394 = vld [vmem:[%s215 + $0x74] sm:$0xf]
      %v395 = vld [vmem:[%s215 + $0x78] sm:$0xf]
      %v396 = vld [vmem:[%s215 + $0x7c] sm:$0xf]
      %v397 = vunpack.c.l.bf16 %v365
      %v398 = vunpack.c.l.bf16 %v366
      %v399 = vunpack.c.l.bf16 %v367
      %v400 = vunpack.c.l.bf16 %v368
      %v401 = vunpack.c.l.bf16 %v369
      %v402 = vunpack.c.l.bf16 %v370
      %v403 = vunpack.c.l.bf16 %v371
      %v404 = vunpack.c.l.bf16 %v372
      %v405 = vunpack.c.l.bf16 %v373
      %v406 = vunpack.c.l.bf16 %v374
      %v407 = vunpack.c.l.bf16 %v375
      %v408 = vunpack.c.l.bf16 %v376
      %v409 = vunpack.c.l.bf16 %v377
      %v410 = vunpack.c.l.bf16 %v378
      %v411 = vunpack.c.l.bf16 %v379
      %v412 = vunpack.c.l.bf16 %v380
      %v413 = vunpack.c.l.bf16 %v381
      %v414 = vunpack.c.l.bf16 %v382
      %v415 = vunpack.c.l.bf16 %v383
      %v416 = vunpack.c.l.bf16 %v384
      %v417 = vunpack.c.l.bf16 %v385
      %v418 = vunpack.c.l.bf16 %v386
      %v419 = vunpack.c.l.bf16 %v387
      %v420 = vunpack.c.l.bf16 %v388
      %v421 = vunpack.c.l.bf16 %v389
      %v422 = vunpack.c.l.bf16 %v390
      %v423 = vunpack.c.l.bf16 %v391
      %v424 = vunpack.c.l.bf16 %v392
      %v425 = vunpack.c.l.bf16 %v393
      %v426 = vunpack.c.l.bf16 %v394
      %v427 = vunpack.c.l.bf16 %v395
      %v428 = vunpack.c.l.bf16 %v396
      %v429 = vadd.f32 %v333, %v397
      %v430 = vadd.f32 %v334, %v398
      %v431 = vadd.f32 %v335, %v399
      %v432 = vadd.f32 %v336, %v400
      %v433 = vadd.f32 %v337, %v401
      %v434 = vadd.f32 %v338, %v402
      %v435 = vadd.f32 %v339, %v403
      %v436 = vadd.f32 %v340, %v404
      %v437 = vadd.f32 %v341, %v405
      %v438 = vadd.f32 %v342, %v406
      %v439 = vadd.f32 %v343, %v407
      %v440 = vadd.f32 %v344, %v408
      %v441 = vadd.f32 %v345, %v409
      %v442 = vadd.f32 %v346, %v410
      %v443 = vadd.f32 %v347, %v411
      %v444 = vadd.f32 %v348, %v412
      %v445 = vadd.f32 %v349, %v413
      %v446 = vadd.f32 %v350, %v414
      %v447 = vadd.f32 %v351, %v415
      %v448 = vadd.f32 %v352, %v416
      %v449 = vadd.f32 %v353, %v417
      %v450 = vadd.f32 %v354, %v418
      %v451 = vadd.f32 %v355, %v419
      %v452 = vadd.f32 %v356, %v420
      %v453 = vadd.f32 %v357, %v421
      %v454 = vadd.f32 %v358, %v422
      %v455 = vadd.f32 %v359, %v423
      %v456 = vadd.f32 %v360, %v424
      %v457 = vadd.f32 %v361, %v425
      %v458 = vadd.f32 %v362, %v426
      %v459 = vadd.f32 %v363, %v427
      %v460 = vadd.f32 %v364, %v428
      %v461 = vmax.f32 %v429, 0.0
      %v462 = vmax.f32 %v430, 0.0
      %v463 = vmax.f32 %v431, 0.0
      %v464 = vmax.f32 %v432, 0.0
      %v465 = vmax.f32 %v433, 0.0
      %v466 = vmax.f32 %v434, 0.0
      %v467 = vmax.f32 %v435, 0.0
      %v468 = vmax.f32 %v436, 0.0
      %v469 = vmax.f32 %v437, 0.0
      %v470 = vmax.f32 %v438, 0.0
      %v471 = vmax.f32 %v439, 0.0
      %v472 = vmax.f32 %v440, 0.0
      %v473 = vmax.f32 %v441, 0.0
      %v474 = vmax.f32 %v442, 0.0
      %v475 = vmax.f32 %v443, 0.0
      %v476 = vmax.f32 %v444, 0.0
      %v477 = vmax.f32 %v445, 0.0
      %v478 = vmax.f32 %v446, 0.0
      %v479 = vmax.f32 %v447, 0.0
      %v480 = vmax.f32 %v448, 0.0
      %v481 = vmax.f32 %v449, 0.0
      %v482 = vmax.f32 %v450, 0.0
      %v483 = vmax.f32 %v451, 0.0
      %v484 = vmax.f32 %v452, 0.0
      %v485 = vmax.f32 %v453, 0.0
      %v486 = vmax.f32 %v454, 0.0
      %v487 = vmax.f32 %v455, 0.0
      %v488 = vmax.f32 %v456, 0.0
      %v489 = vmax.f32 %v457, 0.0
      %v490 = vmax.f32 %v458, 0.0
      %v491 = vmax.f32 %v459, 0.0
      %v492 = vmax.f32 %v460, 0.0
      %493 = vst [vmem:[%s221] sm:$0xff] %v461
      %494 = vst [vmem:[%s221 + $0x8] sm:$0xff] %v462
      %495 = vst [vmem:[%s221 + $0x10] sm:$0xff] %v463
      %496 = vst [vmem:[%s221 + $0x18] sm:$0xff] %v464
      %497 = vst [vmem:[%s221 + $0x20] sm:$0xff] %v465
      %498 = vst [vmem:[%s221 + $0x28] sm:$0xff] %v466
      %499 = vst [vmem:[%s221 + $0x30] sm:$0xff] %v467
      %500 = vst [vmem:[%s221 + $0x38] sm:$0xff] %v468
      %501 = vst [vmem:[%s221 + $0x40] sm:$0xff] %v469
      %502 = vst [vmem:[%s221 + $0x48] sm:$0xff] %v470
      %503 = vst [vmem:[%s221 + $0x50] sm:$0xff] %v471
      %504 = vst [vmem:[%s221 + $0x58] sm:$0xff] %v472
      %505 = vst [vmem:[%s221 + $0x60] sm:$0xff] %v473
      %506 = vst [vmem:[%s221 + $0x68] sm:$0xff] %v474
      %507 = vst [vmem:[%s221 + $0x70] sm:$0xff] %v475
      %508 = vst [vmem:[%s221 + $0x78] sm:$0xff] %v476
      %509 = vst [vmem:[%s221 + $0x80] sm:$0xff] %v477
      %510 = vst [vmem:[%s221 + $0x88] sm:$0xff] %v478
      %511 = vst [vmem:[%s221 + $0x90] sm:$0xff] %v479
      %512 = vst [vmem:[%s221 + $0x98] sm:$0xff] %v480
      %513 = vst [vmem:[%s221 + $0xa0] sm:$0xff] %v481
      %514 = vst [vmem:[%s221 + $0xa8] sm:$0xff] %v482
      %515 = vst [vmem:[%s221 + $0xb0] sm:$0xff] %v483
      %516 = vst [vmem:[%s221 + $0xb8] sm:$0xff] %v484
      %517 = vst [vmem:[%s221 + $0xc0] sm:$0xff] %v485
      %518 = vst [vmem:[%s221 + $0xc8] sm:$0xff] %v486
      %519 = vst [vmem:[%s221 + $0xd0] sm:$0xff] %v487
      %520 = vst [vmem:[%s221 + $0xd8] sm:$0xff] %v488
      %521 = vst [vmem:[%s221 + $0xe0] sm:$0xff] %v489
      %522 = vst [vmem:[%s221 + $0xe8] sm:$0xff] %v490
      %523 = vst [vmem:[%s221 + $0xf0] sm:$0xff] %v491
      %524 = vst [vmem:[%s221 + $0xf8] sm:$0xff] %v492
      %s525 = smul.u32 32, %s15
      %p526 = scmp.lt.s32.totalorder %s525, 63
      %s527 = scalar_select %p526, %s525, 63
      %s528 = smul.addr %s527, 8
      %s529 = scalar_lea.vmem %s4, %s528
      // Predicated region
      $region37: #{basic_block_forward.5} parent=35 // pred_check
        %p530 = pneg %p127
      $region38: #{basic_block_forward.5} parent=35 // pred_check_branch
        %532 = sbr.rel (%p530) target = $region40
      $region39: #{basic_block_forward.5} parent=35 // pred_region
        %s533 = smul.u32 32, %s15
      $region40: #{basic_block_forward.5} parent=35 // pred_fallthru
        _
    $region36: #{basic_block_forward.5} parent=5 // pred_fallthru
      _
    %p534 = scmp.le.s32.totalorder 2, %s10
    // Predicated region
    $region41: #{basic_block_forward.5} parent=5 // pred_check
      %p535 = pneg %p534
    $region42: #{basic_block_forward.5} parent=5 // pred_check_branch
      %537 = sbr.rel (%p535) target = $region44
    $region43: #{basic_block_forward.5} parent=5 // pred_region
      %s538 = ssub.s32 %s10, 2
      // Predicated region
      $region45: #{basic_block_forward.5} parent=43 // pred_check
        %p539 = pneg %p133
      $region46: #{basic_block_forward.5} parent=43 // pred_check_branch
        %541 = sbr.rel (%p539) target = $region48
      $region47: #{basic_block_forward.5} parent=43 // pred_region
        %s542 = smul.u32 32, %s16
        %p543 = scmp.lt.s32.totalorder %s542, 63
        %s544 = scalar_select %p543, %s542, 63
        %s545 = smul.addr %s544, 8
        %s546 = scalar_lea.vmem %s4, %s545
      $region48: #{basic_block_forward.5} parent=43 // pred_fallthru
        _
    $region44: #{basic_block_forward.5} parent=5 // pred_fallthru
      _
  $region6: #{basic_block_forward.5} parent=0 // loop_footer
    %s14 = sadd.s32 1, %s10
  $region7: #{basic_block_forward.5} parent=0 // loop_footer_branch
    %9 = sbr.rel target = $region3
  $region8: #{basic_block_forward.5} parent=0 // loop_exit
    _

// kernel: basic_block_forward.3
$region0: #{basic_block_forward.3}
  #allocation0 [shape = 'u32[]', space=smem, size = 0x4, offset = 0x4, fixed_abs, tag = 'smem constant byte address 0x4 - core index']
  #allocation1 [shape = 'u32[144,128]{1,0:T(1,128)}', space=vmem, size = 0x12000, scoped, tag = 'internal scratch']
  #allocation2 [shape = 'bf16[18,25,128]{2,1,0:T(8,128)(2,1)}', space=vmem, size = 0x24000, scoped, tag = 'scratch operand']
  %s0 = inlined_call_operand.vmem [shape: bf16[2,256,128], index: 0, kind: input, shape index: {}]
  %s1 = inlined_call_operand.vmem [shape: bf16[9,128,128], index: 1, kind: input, shape index: {}]
  %s2 = inlined_call_operand.vmem [shape: bf16[2,256,128], index: 2, kind: output, shape index: {0}]
  %s3 = inlined_call_operand.vmem [shape: f32[2,1,128], index: 3, kind: output, shape index: {1}]
  %s4 = inlined_call_operand.vmem [shape: f32[2,1,128], index: 4, kind: output, shape index: {2}]
  %5 = xla_tuple %s2, %s3, %s4
  %s6 = sld [smem:[#allocation0]]
  $region57: #{basic_block_forward.3} parent=0
    _
  %s8 = ssub.s32 1, %s6
  %s9 = scalar_select 0, %s8, %s6
  loop: start=0, step=1, limit=4
  $region2: #{basic_block_forward.3} parent=0 // loop_pre_header
    _
  $region3: #{basic_block_forward.3} parent=0 // loop_header
    %s11 = sphi 0, %s15
    %p12 = scmp.ge.s32.totalorder %s11, 4
    %s21 = sphi 0, %s23
    %s24 = sphi 0, %s21
    %s25 = sphi 0, %s24
    %s41 = sphi 0, %s25
    %s45 = sphi 0, %s45
    %s47 = sphi 0, %s45
    %s48 = sphi 0, %s47
    %s62 = sphi 0, %s48
    %s68 = sphi 0, %s70
    %s71 = sphi 0, %s68
    %s72 = sphi 0, %s71
    %s88 = sphi 0, %s72
    %s94 = sphi 0, %s96
    %s97 = sphi 0, %s94
    %s98 = sphi 0, %s97
    %s114 = sphi 0, %s98
    %s120 = sphi 0, %s122
    %s123 = sphi 0, %s120
    %s124 = sphi 0, %s123
    %s140 = sphi 0, %s124
  $region4: #{basic_block_forward.3} parent=0 // loop_header_branch
    %14 = sbr.rel (%p12) target = $region8
  $region5: #{basic_block_forward.3} parent=0 // loop_body
    %s16 = ssub.s32 %s11, 1
    %s17 = ssub.s32 %s11, 2
    %s18 = sadd.s32 %s11, 1
    %s19 = ssub.s32 %s11, %s18
    %p20 = scmp.eq.s32.totalorder %s19, 0
    %s22 = sadd.s32 %s21, 1
    %s23 = scalar_select %p20, %s21, %s22
    %p26 = pneg %p20
    %p27 = scmp.eq.s32.totalorder %s11, 1
    %p28 = por %p26, %p27
    %p29 = scmp.ne.s32.totalorder %s21, %s24
    %p30 = scmp.eq.s32.totalorder %s11, 0
    %p31 = por %p29, %p30
    %p32 = scmp.ne.s32.totalorder %s21, %s24
    %p33 = scmp.eq.s32.totalorder %s16, 1
    %p34 = por %p32, %p33
    %p35 = scmp.ne.s32.totalorder %s24, %s25
    %p36 = scmp.eq.s32.totalorder %s16, 0
    %p37 = por %p35, %p36
    %p38 = scmp.ne.s32.totalorder %s24, %s25
    %p39 = scmp.eq.s32.totalorder %s17, 1
    %p40 = por %p38, %p39
    %p42 = scmp.ne.s32.totalorder %s25, %s41
    %p43 = scmp.eq.s32.totalorder %s17, 0
    %p44 = por %p42, %p43
    %s46 = sadd.s32 %s45, 1
    %p49 = scmp.eq.s32.totalorder %s11, 1
    %p50 = scmp.ne.s32.totalorder %s45, %s47
    %p51 = scmp.eq.s32.totalorder %s11, 0
    %p52 = por %p50, %p51
    %p53 = scmp.ne.s32.totalorder %s45, %s47
    %p54 = scmp.eq.s32.totalorder %s16, 1
    %p55 = por %p53, %p54
    %p56 = scmp.ne.s32.totalorder %s47, %s48
    %p57 = scmp.eq.s32.totalorder %s16, 0
    %p58 = por %p56, %p57
    %p59 = scmp.ne.s32.totalorder %s47, %s48
    %p60 = scmp.eq.s32.totalorder %s17, 1
    %p61 = por %p59, %p60
    %p63 = scmp.ne.s32.totalorder %s48, %s62
    %p64 = scmp.eq.s32.totalorder %s17, 0
    %p65 = por %p63, %p64
    %s66 = ssub.s32 %s11, %s18
    %p67 = scmp.eq.s32.totalorder %s66, 0
    %s69 = sadd.s32 %s68, 1
    %s70 = scalar_select %p67, %s68, %s69
    %p73 = pneg %p67
    %p74 = scmp.eq.s32.totalorder %s11, 1
    %p75 = por %p73, %p74
    %p76 = scmp.ne.s32.totalorder %s68, %s71
    %p77 = scmp.eq.s32.totalorder %s11, 0
    %p78 = por %p76, %p77
    %p79 = scmp.ne.s32.totalorder %s68, %s71
    %p80 = scmp.eq.s32.totalorder %s16, 1
    %p81 = por %p79, %p80
    %p82 = scmp.ne.s32.totalorder %s71, %s72
    %p83 = scmp.eq.s32.totalorder %s16, 0
    %p84 = por %p82, %p83
    %p85 = scmp.ne.s32.totalorder %s71, %s72
    %p86 = scmp.eq.s32.totalorder %s17, 1
    %p87 = por %p85, %p86
    %p89 = scmp.ne.s32.totalorder %s72, %s88
    %p90 = scmp.eq.s32.totalorder %s17, 0
    %p91 = por %p89, %p90
    %s92 = ssub.s32 %s11, %s18
    %p93 = scmp.eq.s32.totalorder %s92, 0
    %s95 = sadd.s32 %s94, 1
    %s96 = scalar_select %p93, %s94, %s95
    %p99 = pneg %p93
    %p100 = scmp.eq.s32.totalorder %s11, 1
    %p101 = por %p99, %p100
    %p102 = scmp.ne.s32.totalorder %s94, %s97
    %p103 = scmp.eq.s32.totalorder %s11, 0
    %p104 = por %p102, %p103
    %p105 = scmp.ne.s32.totalorder %s94, %s97
    %p106 = scmp.eq.s32.totalorder %s16, 1
    %p107 = por %p105, %p106
    %p108 = scmp.ne.s32.totalorder %s97, %s98
    %p109 = scmp.eq.s32.totalorder %s16, 0
    %p110 = por %p108, %p109
    %p111 = scmp.ne.s32.totalorder %s97, %s98
    %p112 = scmp.eq.s32.totalorder %s17, 1
    %p113 = por %p111, %p112
    %p115 = scmp.ne.s32.totalorder %s98, %s114
    %p116 = scmp.eq.s32.totalorder %s17, 0
    %p117 = por %p115, %p116
    %s118 = ssub.s32 %s11, %s18
    %p119 = scmp.eq.s32.totalorder %s118, 0
    %s121 = sadd.s32 %s120, 1
    %s122 = scalar_select %p119, %s120, %s121
    %p125 = pneg %p119
    %p126 = scmp.eq.s32.totalorder %s11, 1
    %p127 = por %p125, %p126
    %p128 = scmp.ne.s32.totalorder %s120, %s123
    %p129 = scmp.eq.s32.totalorder %s11, 0
    %p130 = por %p128, %p129
    %p131 = scmp.ne.s32.totalorder %s120, %s123
    %p132 = scmp.eq.s32.totalorder %s16, 1
    %p133 = por %p131, %p132
    %p134 = scmp.ne.s32.totalorder %s123, %s124
    %p135 = scmp.eq.s32.totalorder %s16, 0
    %p136 = por %p134, %p135
    %p137 = scmp.ne.s32.totalorder %s123, %s124
    %p138 = scmp.eq.s32.totalorder %s17, 1
    %p139 = por %p137, %p138
    %p141 = scmp.ne.s32.totalorder %s124, %s140
    %p142 = scmp.eq.s32.totalorder %s17, 0
    %p143 = por %p141, %p142
    %p144 = scmp.le.s32.totalorder 1, %s11
    %p145 = scmp.lt.s32.totalorder %s11, 3
    %p146 = pnand %p144, %p145
    %p147 = pneg %p146
    // Predicated region
    $region9: #{basic_block_forward.3} parent=5 // pred_check
      _
    $region10: #{basic_block_forward.3} parent=5 // pred_check_branch
      %149 = sbr.rel (%p146) target = $region12
    $region11: #{basic_block_forward.3} parent=5 // pred_region
      %s150 = ssub.s32 %s11, 1
      // Predicated region
      $region13: #{basic_block_forward.3} parent=11 // pred_check
        %p151 = pneg %p58
      $region14: #{basic_block_forward.3} parent=11 // pred_check_branch
        %153 = sbr.rel (%p151) target = $region16
      $region15: #{basic_block_forward.3} parent=11 // pred_region
        _
      $region16: #{basic_block_forward.3} parent=11 // pred_fallthru
        _
    $region12: #{basic_block_forward.3} parent=5 // pred_fallthru
      _
    %p154 = scmp.lt.s32.totalorder %s11, 2
    // Predicated region
    $region17: #{basic_block_forward.3} parent=5 // pred_check
      %p155 = pneg %p154
    $region18: #{basic_block_forward.3} parent=5 // pred_check_branch
      %157 = sbr.rel (%p155) target = $region20
    $region19: #{basic_block_forward.3} parent=5 // pred_region
      // Predicated region
      $region21: #{basic_block_forward.3} parent=19 // pred_check
        %p158 = pneg %p31
      $region22: #{basic_block_forward.3} parent=19 // pred_check_branch
        %160 = sbr.rel (%p158) target = $region24
      $region23: #{basic_block_forward.3} parent=19 // pred_region
        %p161 = scmp.lt.s32.totalorder %s11, 1
        %s162 = scalar_select %p161, %s11, 1
        %s163 = smul.addr %s162, 32
        %s164 = smul.addr %s163, 4
        %s165 = scalar_lea.vmem %s0, %s164
      $region24: #{basic_block_forward.3} parent=19 // pred_fallthru
        _
    $region20: #{basic_block_forward.3} parent=5 // pred_fallthru
      _
    %p166 = scmp.le.s32.totalorder 1, %s11
    %p167 = scmp.lt.s32.totalorder %s11, 3
    %p168 = pnand %p166, %p167
    %p169 = pneg %p168
    // Predicated region
    $region25: #{basic_block_forward.3} parent=5 // pred_check
      _
    $region26: #{basic_block_forward.3} parent=5 // pred_check_branch
      %171 = sbr.rel (%p168) target = $region28
    $region27: #{basic_block_forward.3} parent=5 // pred_region
      %s172 = ssub.s32 %s11, 1
      %p173 = scmp.lt.s32.totalorder %s16, 1
      %s174 = scalar_select %p173, %s16, 1
      %s175 = smul.addr %s174, 32
      %s176 = smul.addr %s175, 4
      %s177 = scalar_lea.vmem %s0, %s176
      %p178 = pneg %p37
      %p179 = pneg %p34
      %p180 = pneg %p58
      %p181 = pneg %p55
      %p182 = pneg %p84
      %p183 = pneg %p81
      %p184 = scmp.lt.s32.totalorder %s16, 1
      %s185 = scalar_select %p184, %s16, 1
      %s186 = smul.addr %s185, 32
      %s187 = smul.addr %s186, 4
      %s188 = scalar_lea.vmem %s2, %s187
      %p189 = pneg %p110
      %p190 = pneg %p107
      %p191 = scmp.lt.s32.totalorder %s16, 1
      %s192 = scalar_select %p191, %s16, 1
      %s193 = scalar_lea.vmem %s3, %s192
      %p194 = pneg %p136
      %p195 = pneg %p133
      %p196 = scmp.lt.s32.totalorder %s16, 1
      %s197 = scalar_select %p196, %s16, 1
      %s198 = scalar_lea.vmem %s4, %s197
      %p199 = scmp.lt.s32.totalorder %s16, 1
      %s200 = scalar_select %p199, %s16, 1
      %s201 = smul.addr %s200, 32
      %s202 = smul.addr %s201, 4
      %s203 = scalar_lea.vmem %s0, %s202
      %p204 = scmp.lt.s32.totalorder %s16, 1
      %s205 = scalar_select %p204, %s16, 1
      %s206 = smul.addr %s205, 32
      %s207 = smul.addr %s206, 4
      %s208 = scalar_lea.vmem %s2, %s207
      %p209 = scmp.lt.s32.totalorder %s16, 1
      %s210 = scalar_select %p209, %s16, 1
      %s211 = scalar_lea.vmem %s3, %s210
      %p212 = scmp.lt.s32.totalorder %s16, 1
      %s213 = scalar_select %p212, %s16, 1
      %s214 = scalar_lea.vmem %s4, %s213
      %v216 = vld [vmem:[%s203] sm:$0xf]
      %v217 = vld [vmem:[%s203 + $0x4] sm:$0xf]
      %v218 = vld [vmem:[%s203 + $0x8] sm:$0xf]
      %v219 = vld [vmem:[%s203 + $0xc] sm:$0xf]
      %v220 = vld [vmem:[%s203 + $0x10] sm:$0xf]
      %v221 = vld [vmem:[%s203 + $0x14] sm:$0xf]
      %v222 = vld [vmem:[%s203 + $0x18] sm:$0xf]
      %v223 = vld [vmem:[%s203 + $0x1c] sm:$0xf]
      %v224 = vld [vmem:[%s203 + $0x20] sm:$0xf]
      %v225 = vld [vmem:[%s203 + $0x24] sm:$0xf]
      %v226 = vld [vmem:[%s203 + $0x28] sm:$0xf]
      %v227 = vld [vmem:[%s203 + $0x2c] sm:$0xf]
      %v228 = vld [vmem:[%s203 + $0x30] sm:$0xf]
      %v229 = vld [vmem:[%s203 + $0x34] sm:$0xf]
      %v230 = vld [vmem:[%s203 + $0x38] sm:$0xf]
      %v231 = vld [vmem:[%s203 + $0x3c] sm:$0xf]
      %v232 = vld [vmem:[%s203 + $0x40] sm:$0xf]
      %v233 = vld [vmem:[%s203 + $0x44] sm:$0xf]
      %v234 = vld [vmem:[%s203 + $0x48] sm:$0xf]
      %v235 = vld [vmem:[%s203 + $0x4c] sm:$0xf]
      %v236 = vld [vmem:[%s203 + $0x50] sm:$0xf]
      %v237 = vld [vmem:[%s203 + $0x54] sm:$0xf]
      %v238 = vld [vmem:[%s203 + $0x58] sm:$0xf]
      %v239 = vld [vmem:[%s203 + $0x5c] sm:$0xf]
      %v240 = vld [vmem:[%s203 + $0x60] sm:$0xf]
      %v241 = vld [vmem:[%s203 + $0x64] sm:$0xf]
      %v242 = vld [vmem:[%s203 + $0x68] sm:$0xf]
      %v243 = vld [vmem:[%s203 + $0x6c] sm:$0xf]
      %v244 = vld [vmem:[%s203 + $0x70] sm:$0xf]
      %v245 = vld [vmem:[%s203 + $0x74] sm:$0xf]
      %v246 = vld [vmem:[%s203 + $0x78] sm:$0xf]
      %v247 = vld [vmem:[%s203 + $0x7c] sm:$0xf]
      %248 = vst [vmem:[#allocation2] sm:$0xf] 0
      %249 = vst [vmem:[#allocation2 + $0x4] sm:$0xf] 0
      %250 = vst [vmem:[#allocation2 + $0x8] sm:$0xf] 0
      %vm251 = vcmask 1040384
      %vm252 = vsmask.f32 256
      %vm253 = vmand %vm251, %vm252
      %v254 = vld [vmem:[#allocation2 + $0xc] sm:$0x1]
      %v255 = vsel %vm253, 0, %v254
      %256 = vst [vmem:[#allocation2 + $0xc] sm:$0x1] %v255
      %257 = vst [vmem:[#allocation2 + $0x10] sm:$0xf] 0
      %258 = vst [vmem:[#allocation2 + $0x14] sm:$0xf] 0
      %259 = vst [vmem:[#allocation2 + $0x18] sm:$0xf] 0
      %v260 = vld [vmem:[#allocation2 + $0x1c] sm:$0x1]
      %v261 = vsel %vm253, 0, %v260
      %262 = vst [vmem:[#allocation2 + $0x1c] sm:$0x1] %v261
      %263 = vst [vmem:[#allocation2 + $0x20] sm:$0xf] 0
      %264 = vst [vmem:[#allocation2 + $0x24] sm:$0xf] 0
      %265 = vst [vmem:[#allocation2 + $0x28] sm:$0xf] 0
      %v266 = vld [vmem:[#allocation2 + $0x2c] sm:$0x1]
      %v267 = vsel %vm253, 0, %v266
      %268 = vst [vmem:[#allocation2 + $0x2c] sm:$0x1] %v267
      %269 = vst [vmem:[#allocation2 + $0x30] sm:$0xf] 0
      %270 = vst [vmem:[#allocation2 + $0x34] sm:$0xf] 0
      %271 = vst [vmem:[#allocation2 + $0x38] sm:$0xf] 0
      %v272 = vld [vmem:[#allocation2 + $0x3c] sm:$0x1]
      %v273 = vsel %vm253, 0, %v272
      %274 = vst [vmem:[#allocation2 + $0x3c] sm:$0x1] %v273
      %275 = vst [vmem:[#allocation2 + $0x40] sm:$0xf] 0
      %276 = vst [vmem:[#allocation2 + $0x44] sm:$0xf] 0
      %277 = vst [vmem:[#allocation2 + $0x48] sm:$0xf] 0
      %v278 = vld [vmem:[#allocation2 + $0x4c] sm:$0x1]
      %v279 = vsel %vm253, 0, %v278
      %280 = vst [vmem:[#allocation2 + $0x4c] sm:$0x1] %v279
      %281 = vst [vmem:[#allocation2 + $0x50] sm:$0xf] 0
      %282 = vst [vmem:[#allocation2 + $0x54] sm:$0xf] 0
      %283 = vst [vmem:[#allocation2 + $0x58] sm:$0xf] 0
      %v284 = vld [vmem:[#allocation2 + $0x5c] sm:$0x1]
      %v285 = vsel %vm253, 0, %v284
      %286 = vst [vmem:[#allocation2 + $0x5c] sm:$0x1] %v285
      %287 = vst [vmem:[#allocation2 + $0x60] sm:$0xf] 0
      %288 = vst [vmem:[#allocation2 + $0x64] sm:$0xf] 0
      %289 = vst [vmem:[#allocation2 + $0x68] sm:$0xf] 0
      %v290 = vld [vmem:[#allocation2 + $0x6c] sm:$0x1]
      %v291 = vsel %vm253, 0, %v290
      %292 = vst [vmem:[#allocation2 + $0x6c] sm:$0x1] %v291
      %293 = vst [vmem:[#allocation2 + $0x70] sm:$0xf] 0
      %294 = vst [vmem:[#allocation2 + $0x74] sm:$0xf] 0
      %295 = vst [vmem:[#allocation2 + $0x78] sm:$0xf] 0
      %v296 = vld [vmem:[#allocation2 + $0x7c] sm:$0x1]
      %v297 = vsel %vm253, 0, %v296
      %298 = vst [vmem:[#allocation2 + $0x7c] sm:$0x1] %v297
      %299 = vst [vmem:[#allocation2 + $0x80] sm:$0xf] 0
      %300 = vst [vmem:[#allocation2 + $0x84] sm:$0xf] 0
      %301 = vst [vmem:[#allocation2 + $0x88] sm:$0xf] 0
      %v302 = vld [vmem:[#allocation2 + $0x8c] sm:$0x1]
      %v303 = vsel %vm253, 0, %v302
      %304 = vst [vmem:[#allocation2 + $0x8c] sm:$0x1] %v303
      %305 = vst [vmem:[#allocation2 + $0x90] sm:$0xf] 0
      %306 = vst [vmem:[#allocation2 + $0x94] sm:$0xf] 0
      %307 = vst [vmem:[#allocation2 + $0x98] sm:$0xf] 0
      %v308 = vld [vmem:[#allocation2 + $0x9c] sm:$0x1]
      %v309 = vsel %vm253, 0, %v308
      %310 = vst [vmem:[#allocation2 + $0x9c] sm:$0x1] %v309
      %311 = vst [vmem:[#allocation2 + $0xa0] sm:$0xf] 0
      %312 = vst [vmem:[#allocation2 + $0xa4] sm:$0xf] 0
      %313 = vst [vmem:[#allocation2 + $0xa8] sm:$0xf] 0
      %v314 = vld [vmem:[#allocation2 + $0xac] sm:$0x1]
      %v315 = vsel %vm253, 0, %v314
      %316 = vst [vmem:[#allocation2 + $0xac] sm:$0x1] %v315
      %317 = vst [vmem:[#allocation2 + $0xb0] sm:$0xf] 0
      %318 = vst [vmem:[#allocation2 + $0xb4] sm:$0xf] 0
      %319 = vst [vmem:[#allocation2 + $0xb8] sm:$0xf] 0
      %v320 = vld [vmem:[#allocation2 + $0xbc] sm:$0x1]
      %v321 = vsel %vm253, 0, %v320
      %322 = vst [vmem:[#allocation2 + $0xbc] sm:$0x1] %v321
      %323 = vst [vmem:[#allocation2 + $0xc0] sm:$0xf] 0
      %324 = vst [vmem:[#allocation2 + $0xc4] sm:$0xf] 0
      %325 = vst [vmem:[#allocation2 + $0xc8] sm:$0xf] 0
      %v326 = vld [vmem:[#allocation2 + $0xcc] sm:$0x1]
      %v327 = vsel %vm253, 0, %v326
      %328 = vst [vmem:[#allocation2 + $0xcc] sm:$0x1] %v327
      %329 = vst [vmem:[#allocation2 + $0xd0] sm:$0xf] 0
      %330 = vst [vmem:[#allocation2 + $0xd4] sm:$0xf] 0
      %331 = vst [vmem:[#allocation2 + $0xd8] sm:$0xf] 0
      %v332 = vld [vmem:[#allocation2 + $0xdc] sm:$0x1]
      %v333 = vsel %vm253, 0, %v332
      %334 = vst [vmem:[#allocation2 + $0xdc] sm:$0x1] %v333
      %335 = vst [vmem:[#allocation2 + $0xe0] sm:$0xf] 0
      %336 = vst [vmem:[#allocation2 + $0xe4] sm:$0xf] 0
      %337 = vst [vmem:[#allocation2 + $0xe8] sm:$0xf] 0
      %v338 = vld [vmem:[#allocation2 + $0xec] sm:$0x1]
      %v339 = vsel %vm253, 0, %v338
      %340 = vst [vmem:[#allocation2 + $0xec] sm:$0x1] %v339
      %341 = vst [vmem:[#allocation2 + $0xf0] sm:$0xf] 0
      %342 = vst [vmem:[#allocation2 + $0xf4] sm:$0xf] 0
      %343 = vst [vmem:[#allocation2 + $0xf8] sm:$0xf] 0
      %v344 = vld [vmem:[#allocation2 + $0xfc] sm:$0x1]
      %v345 = vsel %vm253, 0, %v344
      %346 = vst [vmem:[#allocation2 + $0xfc] sm:$0x1] %v345
      %347 = vst [vmem:[#allocation2 + $0x100] sm:$0xf] 0
      %348 = vst [vmem:[#allocation2 + $0x104] sm:$0xf] 0
      %349 = vst [vmem:[#allocation2 + $0x108] sm:$0xf] 0
      %v350 = vld [vmem:[#allocation2 + $0x10c] sm:$0x1]
      %v351 = vsel %vm253, 0, %v350
      %352 = vst [vmem:[#allocation2 + $0x10c] sm:$0x1] %v351
      %353 = vst [vmem:[#allocation2 + $0x110] sm:$0xf] 0
      %354 = vst [vmem:[#allocation2 + $0x114] sm:$0xf] 0
      %355 = vst [vmem:[#allocation2 + $0x118] sm:$0xf] 0
      %v356 = vld [vmem:[#allocation2 + $0x11c] sm:$0x1]
      %v357 = vsel %vm253, 0, %v356
      %358 = vst [vmem:[#allocation2 + $0x11c] sm:$0x1] %v357
      %s359 = scalar_lea.vmem [#allocation2], 16
      %360 = vst [vmem:[%s359 + $0x4] sm:$0xf] %v216
      %361 = vst [vmem:[%s359 + $0x8] sm:$0xf] %v217
      %362 = vst [vmem:[%s359 + $0x14] sm:$0xf] %v218
      %363 = vst [vmem:[%s359 + $0x18] sm:$0xf] %v219
      %364 = vst [vmem:[%s359 + $0x24] sm:$0xf] %v220
      %365 = vst [vmem:[%s359 + $0x28] sm:$0xf] %v221
      %366 = vst [vmem:[%s359 + $0x34] sm:$0xf] %v222
      %367 = vst [vmem:[%s359 + $0x38] sm:$0xf] %v223
      %368 = vst [vmem:[%s359 + $0x44] sm:$0xf] %v224
      %369 = vst [vmem:[%s359 + $0x48] sm:$0xf] %v225
      %370 = vst [vmem:[%s359 + $0x54] sm:$0xf] %v226
      %371 = vst [vmem:[%s359 + $0x58] sm:$0xf] %v227
      %372 = vst [vmem:[%s359 + $0x64] sm:$0xf] %v228
      %373 = vst [vmem:[%s359 + $0x68] sm:$0xf] %v229
      %374 = vst [vmem:[%s359 + $0x74] sm:$0xf] %v230
      %375 = vst [vmem:[%s359 + $0x78] sm:$0xf] %v231
      %376 = vst [vmem:[%s359 + $0x84] sm:$0xf] %v232
      %377 = vst [vmem:[%s359 + $0x88] sm:$0xf] %v233
      %378 = vst [vmem:[%s359 + $0x94] sm:$0xf] %v234
      %379 = vst [vmem:[%s359 + $0x98] sm:$0xf] %v235
      %380 = vst [vmem:[%s359 + $0xa4] sm:$0xf] %v236
      %381 = vst [vmem:[%s359 + $0xa8] sm:$0xf] %v237
      %382 = vst [vmem:[%s359 + $0xb4] sm:$0xf] %v238
      %383 = vst [vmem:[%s359 + $0xb8] sm:$0xf] %v239
      %384 = vst [vmem:[%s359 + $0xc4] sm:$0xf] %v240
      %385 = vst [vmem:[%s359 + $0xc8] sm:$0xf] %v241
      %386 = vst [vmem:[%s359 + $0xd4] sm:$0xf] %v242
      %387 = vst [vmem:[%s359 + $0xd8] sm:$0xf] %v243
      %388 = vst [vmem:[%s359 + $0xe4] sm:$0xf] %v244
      %389 = vst [vmem:[%s359 + $0xe8] sm:$0xf] %v245
      %390 = vst [vmem:[%s359 + $0xf4] sm:$0xf] %v246
      %391 = vst [vmem:[%s359 + $0xf8] sm:$0xf] %v247
      %v392 = vld [vmem:[#allocation2] sm:$0x8]
      %v393 = vld [vmem:[#allocation2 + $0x4] sm:$0xf]
      %v394 = vld [vmem:[#allocation2 + $0x8] sm:$0xf]
      %v395 = vld [vmem:[#allocation2 + $0x10] sm:$0x8]
      %v396 = vld [vmem:[#allocation2 + $0x14] sm:$0xf]
      %v397 = vld [vmem:[#allocation2 + $0x18] sm:$0xf]
      %v398 = vld [vmem:[#allocation2 + $0x20] sm:$0x8]
      %v399 = vld [vmem:[#allocation2 + $0x24] sm:$0xf]
      %v400 = vld [vmem:[#allocation2 + $0x28] sm:$0xf]
      %v401 = vld [vmem:[#allocation2 + $0x30] sm:$0x8]
      %v402 = vld [vmem:[#allocation2 + $0x34] sm:$0xf]
      %v403 = vld [vmem:[#allocation2 + $0x38] sm:$0xf]
      %v404 = vld [vmem:[#allocation2 + $0x40] sm:$0x8]
      %v405 = vld [vmem:[#allocation2 + $0x44] sm:$0xf]
      %v406 = vld [vmem:[#allocation2 + $0x48] sm:$0xf]
      %v407 = vld [vmem:[#allocation2 + $0x50] sm:$0x8]
      %v408 = vld [vmem:[#allocation2 + $0x54] sm:$0xf]
      %v409 = vld [vmem:[#allocation2 + $0x58] sm:$0xf]
      %v410 = vld [vmem:[#allocation2 + $0x60] sm:$0x8]
      %v411 = vld [vmem:[#allocation2 + $0x64] sm:$0xf]
      %v412 = vld [vmem:[#allocation2 + $0x68] sm:$0xf]
      %v413 = vld [vmem:[#allocation2 + $0x70] sm:$0x8]
      %v414 = vld [vmem:[#allocation2 + $0x74] sm:$0xf]
      %v415 = vld [vmem:[#allocation2 + $0x78] sm:$0xf]
      %v416 = vld [vmem:[#allocation2 + $0x80] sm:$0x8]
      %v417 = vld [vmem:[#allocation2 + $0x84] sm:$0xf]
      %v418 = vld [vmem:[#allocation2 + $0x88] sm:$0xf]
      %v419 = vld [vmem:[#allocation2 + $0x90] sm:$0x8]
      %v420 = vld [vmem:[#allocation2 + $0x94] sm:$0xf]
      %v421 = vld [vmem:[#allocation2 + $0x98] sm:$0xf]
      %v422 = vld [vmem:[#allocation2 + $0xa0] sm:$0x8]
      %v423 = vld [vmem:[#allocation2 + $0xa4] sm:$0xf]
      %v424 = vld [vmem:[#allocation2 + $0xa8] sm:$0xf]
      %v425 = vld [vmem:[#allocation2 + $0xb0] sm:$0x8]
      %v426 = vld [vmem:[#allocation2 + $0xb4] sm:$0xf]
      %v427 = vld [vmem:[#allocation2 + $0xb8] sm:$0xf]
      %v428 = vld [vmem:[#allocation2 + $0xc0] sm:$0x8]
      %v429 = vld [vmem:[#allocation2 + $0xc4] sm:$0xf]
      %v430 = vld [vmem:[#allocation2 + $0xc8] sm:$0xf]
      %v431 = vld [vmem:[#allocation2 + $0xd0] sm:$0x8]
      %v432 = vld [vmem:[#allocation2 + $0xd4] sm:$0xf]
      %v433 = vld [vmem:[#allocation2 + $0xd8] sm:$0xf]
      %v434 = vld [vmem:[#allocation2 + $0xe0] sm:$0x8]
      %v435 = vld [vmem:[#allocation2 + $0xe4] sm:$0xf]
      %v436 = vld [vmem:[#allocation2 + $0xe8] sm:$0xf]
      %v437 = vld [vmem:[#allocation2 + $0xf0] sm:$0x8]
      %v438 = vld [vmem:[#allocation2 + $0xf4] sm:$0xf]
      %v439 = vld [vmem:[#allocation2 + $0xf8] sm:$0xf]
      %vm440 = vsmask.f32 4368
      %vm441 = vmor %vm252, %vm440
      %v443 = vshrl.u32 %v392, 16
      %v445 = vrot.slane %v443, 7
      %v446 = vrot.slane %v445, 4
      %v448 = vshrl.u32 %v393, 16
      %v450 = vrot.slane %v448, 7
      %v451 = vshll.u32 %v393, 16
      %v453 = vor.u32 %v450, %v451
      %v454 = vsel %vm441, %v446, %v453
      %v455 = vrot.slane %v450, 4
      %v457 = vshrl.u32 %v394, 16
      %v459 = vrot.slane %v457, 7
      %v460 = vshll.u32 %v394, 16
      %v462 = vor.u32 %v459, %v460
      %v463 = vsel %vm441, %v455, %v462
      %v465 = vshrl.u32 %v395, 16
      %v467 = vrot.slane %v465, 7
      %v468 = vrot.slane %v467, 4
      %v470 = vshrl.u32 %v396, 16
      %v472 = vrot.slane %v470, 7
      %v473 = vshll.u32 %v396, 16
      %v475 = vor.u32 %v472, %v473
      %v476 = vsel %vm441, %v468, %v475
      %v477 = vrot.slane %v472, 4
      %v479 = vshrl.u32 %v397, 16
      %v481 = vrot.slane %v479, 7
      %v482 = vshll.u32 %v397, 16
      %v484 = vor.u32 %v481, %v482
      %v485 = vsel %vm441, %v477, %v484
      %v487 = vshrl.u32 %v398, 16
      %v489 = vrot.slane %v487, 7
      %v490 = vrot.slane %v489, 4
      %v492 = vshrl.u32 %v399, 16
      %v494 = vrot.slane %v492, 7
      %v495 = vshll.u32 %v399, 16
      %v497 = vor.u32 %v494, %v495
      %v498 = vsel %vm441, %v490, %v497
      %v499 = vrot.slane %v494, 4
      %v501 = vshrl.u32 %v400, 16
      %v503 = vrot.slane %v501, 7
      %v504 = vshll.u32 %v400, 16
      %v506 = vor.u32 %v503, %v504
      %v507 = vsel %vm441, %v499, %v506
      %v509 = vshrl.u32 %v401, 16
      %v511 = vrot.slane %v509, 7
      %v512 = vrot.slane %v511, 4
      %v514 = vshrl.u32 %v402, 16
      %v516 = vrot.slane %v514, 7
      %v517 = vshll.u32 %v402, 16
      %v519 = vor.u32 %v516, %v517
      %v520 = vsel %vm441, %v512, %v519
      %v521 = vrot.slane %v516, 4
      %v523 = vshrl.u32 %v403, 16
      %v525 = vrot.slane %v523, 7
      %v526 = vshll.u32 %v403, 16
      %v528 = vor.u32 %v525, %v526
      %v529 = vsel %vm441, %v521, %v528
      %v531 = vshrl.u32 %v404, 16
      %v533 = vrot.slane %v531, 7
      %v534 = vrot.slane %v533, 4
      %v536 = vshrl.u32 %v405, 16
      %v538 = vrot.slane %v536, 7
      %v539 = vshll.u32 %v405, 16
      %v541 = vor.u32 %v538, %v539
      %v542 = vsel %vm441, %v534, %v541
      %v543 = vrot.slane %v538, 4
      %v545 = vshrl.u32 %v406, 16
      %v547 = vrot.slane %v545, 7
      %v548 = vshll.u32 %v406, 16
      %v550 = vor.u32 %v547, %v548
      %v551 = vsel %vm441, %v543, %v550
      %v553 = vshrl.u32 %v407, 16
      %v555 = vrot.slane %v553, 7
      %v556 = vrot.slane %v555, 4
      %v558 = vshrl.u32 %v408, 16
      %v560 = vrot.slane %v558, 7
      %v561 = vshll.u32 %v408, 16
      %v563 = vor.u32 %v560, %v561
      %v564 = vsel %vm441, %v556, %v563
      %v565 = vrot.slane %v560, 4
      %v567 = vshrl.u32 %v409, 16
      %v569 = vrot.slane %v567, 7
      %v570 = vshll.u32 %v409, 16
      %v572 = vor.u32 %v569, %v570
      %v573 = vsel %vm441, %v565, %v572
      %v575 = vshrl.u32 %v410, 16
      %v577 = vrot.slane %v575, 7
      %v578 = vrot.slane %v577, 4
      %v580 = vshrl.u32 %v411, 16
      %v582 = vrot.slane %v580, 7
      %v583 = vshll.u32 %v411, 16
      %v585 = vor.u32 %v582, %v583
      %v586 = vsel %vm441, %v578, %v585
      %v587 = vrot.slane %v582, 4
      %v589 = vshrl.u32 %v412, 16
      %v591 = vrot.slane %v589, 7
      %v592 = vshll.u32 %v412, 16
      %v594 = vor.u32 %v591, %v592
      %v595 = vsel %vm441, %v587, %v594
      %v597 = vshrl.u32 %v413, 16
      %v599 = vrot.slane %v597, 7
      %v600 = vrot.slane %v599, 4
      %v602 = vshrl.u32 %v414, 16
      %v604 = vrot.slane %v602, 7
      %v605 = vshll.u32 %v414, 16
      %v607 = vor.u32 %v604, %v605
      %v608 = vsel %vm441, %v600, %v607
      %v609 = vrot.slane %v604, 4
      %v611 = vshrl.u32 %v415, 16
      %v613 = vrot.slane %v611, 7
      %v614 = vshll.u32 %v415, 16
      %v616 = vor.u32 %v613, %v614
      %v617 = vsel %vm441, %v609, %v616
      %v619 = vshrl.u32 %v416, 16
      %v621 = vrot.slane %v619, 7
      %v622 = vrot.slane %v621, 4
      %v624 = vshrl.u32 %v417, 16
      %v626 = vrot.slane %v624, 7
      %v627 = vshll.u32 %v417, 16
      %v629 = vor.u32 %v626, %v627
      %v630 = vsel %vm441, %v622, %v629
      %v631 = vrot.slane %v626, 4
      %v633 = vshrl.u32 %v418, 16
      %v635 = vrot.slane %v633, 7
      %v636 = vshll.u32 %v418, 16
      %v638 = vor.u32 %v635, %v636
      %v639 = vsel %vm441, %v631, %v638
      %v641 = vshrl.u32 %v419, 16
      %v643 = vrot.slane %v641, 7
      %v644 = vrot.slane %v643, 4
      %v646 = vshrl.u32 %v420, 16
      %v648 = vrot.slane %v646, 7
      %v649 = vshll.u32 %v420, 16
      %v651 = vor.u32 %v648, %v649
      %v652 = vsel %vm441, %v644, %v651
      %v653 = vrot.slane %v648, 4
      %v655 = vshrl.u32 %v421, 16
      %v657 = vrot.slane %v655, 7
      %v658 = vshll.u32 %v421, 16
      %v660 = vor.u32 %v657, %v658
      %v661 = vsel %vm441, %v653, %v660
      %v663 = vshrl.u32 %v422, 16
      %v665 = vrot.slane %v663, 7
      %v666 = vrot.slane %v665, 4
      %v668 = vshrl.u32 %v423, 16
      %v670 = vrot.slane %v668, 7
      %v671 = vshll.u32 %v423, 16
      %v673 = vor.u32 %v670, %v671
      %v674 = vsel %vm441, %v666, %v673
      %v675 = vrot.slane %v670, 4
      %v677 = vshrl.u32 %v424, 16
      %v679 = vrot.slane %v677, 7
      %v680 = vshll.u32 %v424, 16
      %v682 = vor.u32 %v679, %v680
      %v683 = vsel %vm441, %v675, %v682
      %v685 = vshrl.u32 %v425, 16
      %v687 = vrot.slane %v685, 7
      %v688 = vrot.slane %v687, 4
      %v690 = vshrl.u32 %v426, 16
      %v692 = vrot.slane %v690, 7
      %v693 = vshll.u32 %v426, 16
      %v695 = vor.u32 %v692, %v693
      %v696 = vsel %vm441, %v688, %v695
      %v697 = vrot.slane %v692, 4
      %v699 = vshrl.u32 %v427, 16
      %v701 = vrot.slane %v699, 7
      %v702 = vshll.u32 %v427, 16
      %v704 = vor.u32 %v701, %v702
      %v705 = vsel %vm441, %v697, %v704
      %v707 = vshrl.u32 %v428, 16
      %v709 = vrot.slane %v707, 7
      %v710 = vrot.slane %v709, 4
      %v712 = vshrl.u32 %v429, 16
      %v714 = vrot.slane %v712, 7
      %v715 = vshll.u32 %v429, 16
      %v717 = vor.u32 %v714, %v715
      %v718 = vsel %vm441, %v710, %v717
      %v719 = vrot.slane %v714, 4
      %v721 = vshrl.u32 %v430, 16
      %v723 = vrot.slane %v721, 7
      %v724 = vshll.u32 %v430, 16
      %v726 = vor.u32 %v723, %v724
      %v727 = vsel %vm441, %v719, %v726
      %v729 = vshrl.u32 %v431, 16
      %v731 = vrot.slane %v729, 7
      %v732 = vrot.slane %v731, 4
      %v734 = vshrl.u32 %v432, 16
      %v736 = vrot.slane %v734, 7
      %v737 = vshll.u32 %v432, 16
      %v739 = vor.u32 %v736, %v737
      %v740 = vsel %vm441, %v732, %v739
      %v741 = vrot.slane %v736, 4
      %v743 = vshrl.u32 %v433, 16
      %v745 = vrot.slane %v743, 7
      %v746 = vshll.u32 %v433, 16
      %v748 = vor.u32 %v745, %v746
      %v749 = vsel %vm441, %v741, %v748
      %v751 = vshrl.u32 %v434, 16
      %v753 = vrot.slane %v751, 7
      %v754 = vrot.slane %v753, 4
      %v756 = vshrl.u32 %v435, 16
      %v758 = vrot.slane %v756, 7
      %v759 = vshll.u32 %v435, 16
      %v761 = vor.u32 %v758, %v759
      %v762 = vsel %vm441, %v754, %v761
      %v763 = vrot.slane %v758, 4
      %v765 = vshrl.u32 %v436, 16
      %v767 = vrot.slane %v765, 7
      %v768 = vshll.u32 %v436, 16
      %v770 = vor.u32 %v767, %v768
      %v771 = vsel %vm441, %v763, %v770
      %v773 = vshrl.u32 %v437, 16
      %v775 = vrot.slane %v773, 7
      %v776 = vrot.slane %v775, 4
      %v778 = vshrl.u32 %v438, 16
      %v780 = vrot.slane %v778, 7
      %v781 = vshll.u32 %v438, 16
      %v783 = vor.u32 %v780, %v781
      %v784 = vsel %vm441, %v776, %v783
      %v785 = vrot.slane %v780, 4
      %v787 = vshrl.u32 %v439, 16
      %v789 = vrot.slane %v787, 7
      %v790 = vshll.u32 %v439, 16
      %v792 = vor.u32 %v789, %v790
      %v793 = vsel %vm441, %v785, %v792
      %v794 = vld [vmem:[%s1] sm:$0xf]
      %v795 = vld [vmem:[%s1 + $0x4] sm:$0xf]
      %v796 = vld [vmem:[%s1 + $0x8] sm:$0xf]
      %v797 = vld [vmem:[%s1 + $0xc] sm:$0xf]
      %v798 = vld [vmem:[%s1 + $0x10] sm:$0xf]
      %v799 = vld [vmem:[%s1 + $0x14] sm:$0xf]
      %v800 = vld [vmem:[%s1 + $0x18] sm:$0xf]
      %v801 = vld [vmem:[%s1 + $0x1c] sm:$0xf]
      %v802 = vld [vmem:[%s1 + $0x20] sm:$0xf]
      %v803 = vld [vmem:[%s1 + $0x24] sm:$0xf]
      %v804 = vld [vmem:[%s1 + $0x28] sm:$0xf]
      %v805 = vld [vmem:[%s1 + $0x2c] sm:$0xf]
      %v806 = vld [vmem:[%s1 + $0x30] sm:$0xf]
      %v807 = vld [vmem:[%s1 + $0x34] sm:$0xf]
      %v808 = vld [vmem:[%s1 + $0x38] sm:$0xf]
      %v809 = vld [vmem:[%s1 + $0x3c] sm:$0xf]
      %s810 = scalar_lea.vmem %s1, 64
      %v811 = vld [vmem:[%s810] sm:$0xf]
      %v812 = vld [vmem:[%s810 + $0x4] sm:$0xf]
      %v813 = vld [vmem:[%s810 + $0x8] sm:$0xf]
      %v814 = vld [vmem:[%s810 + $0xc] sm:$0xf]
      %v815 = vld [vmem:[%s810 + $0x10] sm:$0xf]
      %v816 = vld [vmem:[%s810 + $0x14] sm:$0xf]
      %v817 = vld [vmem:[%s810 + $0x18] sm:$0xf]
      %v818 = vld [vmem:[%s810 + $0x1c] sm:$0xf]
      %v819 = vld [vmem:[%s810 + $0x20] sm:$0xf]
      %v820 = vld [vmem:[%s810 + $0x24] sm:$0xf]
      %v821 = vld [vmem:[%s810 + $0x28] sm:$0xf]
      %v822 = vld [vmem:[%s810 + $0x2c] sm:$0xf]
      %v823 = vld [vmem:[%s810 + $0x30] sm:$0xf]
      %v824 = vld [vmem:[%s810 + $0x34] sm:$0xf]
      %v825 = vld [vmem:[%s810 + $0x38] sm:$0xf]
      %v826 = vld [vmem:[%s810 + $0x3c] sm:$0xf]
      %v859 = vunpack.c.l.b16 %v393
      %v860 = vunpack.c.l.b16 %v394
      %v861 = vunpack.c.l.b16 %v396
      %v862 = vunpack.c.l.b16 %v397
      %v863 = vunpack.c.l.b16 %v399
      %v864 = vunpack.c.l.b16 %v400
      %v865 = vunpack.c.l.b16 %v402
      %v866 = vunpack.c.l.b16 %v403
      %v867 = vunpack.c.l.b16 %v405
      %v868 = vunpack.c.l.b16 %v406
      %v869 = vunpack.c.l.b16 %v408
      %v870 = vunpack.c.l.b16 %v409
      %v871 = vunpack.c.l.b16 %v411
      %v872 = vunpack.c.l.b16 %v412
      %v873 = vunpack.c.l.b16 %v414
      %v874 = vunpack.c.l.b16 %v415
      %v875 = vunpack.c.l.b16 %v417
      %v876 = vunpack.c.l.b16 %v418
      %v877 = vunpack.c.l.b16 %v420
      %v878 = vunpack.c.l.b16 %v421
      %v879 = vunpack.c.l.b16 %v423
      %v880 = vunpack.c.l.b16 %v424
      %v881 = vunpack.c.l.b16 %v426
      %v882 = vunpack.c.l.b16 %v427
      %v883 = vunpack.c.l.b16 %v429
      %v884 = vunpack.c.l.b16 %v430
      %v885 = vunpack.c.l.b16 %v432
      %v886 = vunpack.c.l.b16 %v433
      %v887 = vunpack.c.l.b16 %v435
      %v888 = vunpack.c.l.b16 %v436
      %v889 = vunpack.c.l.b16 %v438
      %v890 = vunpack.c.l.b16 %v439
      %v891 = vpack.c.b16 %v860, %v859
      %v892 = vpack.c.b16 %v862, %v861
      %v893 = vpack.c.b16 %v864, %v863
      %v894 = vpack.c.b16 %v866, %v865
      %v895 = vpack.c.b16 %v868, %v867
      %v896 = vpack.c.b16 %v870, %v869
      %v897 = vpack.c.b16 %v872, %v871
      %v898 = vpack.c.b16 %v874, %v873
      %v899 = vpack.c.b16 %v876, %v875
      %v900 = vpack.c.b16 %v878, %v877
      %v901 = vpack.c.b16 %v880, %v879
      %v902 = vpack.c.b16 %v882, %v881
      %v903 = vpack.c.b16 %v884, %v883
      %v904 = vpack.c.b16 %v886, %v885
      %v905 = vpack.c.b16 %v888, %v887
      %v906 = vpack.c.b16 %v890, %v889
      %v939 = vunpack.c.l.b16 %v811
      %v940 = vunpack.c.l.b16 %v812
      %v941 = vunpack.c.l.b16 %v813
      %v942 = vunpack.c.l.b16 %v814
      %v943 = vunpack.c.l.b16 %v815
      %v944 = vunpack.c.l.b16 %v816
      %v945 = vunpack.c.l.b16 %v817
      %v946 = vunpack.c.l.b16 %v818
      %v947 = vunpack.c.l.b16 %v819
      %v948 = vunpack.c.l.b16 %v820
      %v949 = vunpack.c.l.b16 %v821
      %v950 = vunpack.c.l.b16 %v822
      %v951 = vunpack.c.l.b16 %v823
      %v952 = vunpack.c.l.b16 %v824
      %v953 = vunpack.c.l.b16 %v825
      %v954 = vunpack.c.l.b16 %v826
      %v955 = vpack.c.b16 %v940, %v939
      %v956 = vpack.c.b16 %v942, %v941
      %v957 = vpack.c.b16 %v944, %v943
      %v958 = vpack.c.b16 %v946, %v945
      %v959 = vpack.c.b16 %v948, %v947
      %v960 = vpack.c.b16 %v950, %v949
      %v961 = vpack.c.b16 %v952, %v951
      %v962 = vpack.c.b16 %v954, %v953
      %971 = vmatprep.subr.bf16.mxu0 0
      %972 = vmatpush1.bf16.msra.mxu0 %v955
      %973 = vmatprep.subr.bf16.mxu0 0
      %974 = vmatpush1.bf16.msra.mxu0 %v956
      %975 = vmatprep.subr.bf16.mxu0 0
      %976 = vmatpush1.bf16.msra.mxu0 %v957
      %977 = vmatprep.subr.bf16.mxu0 0
      %978 = vmatpush1.bf16.msra.mxu0 %v958
      %979 = vmatprep.subr.bf16.mxu0 0
      %980 = vmatpush1.bf16.msra.mxu0 %v959
      %981 = vmatprep.subr.bf16.mxu0 0
      %982 = vmatpush1.bf16.msra.mxu0 %v960
      %983 = vmatprep.subr.bf16.mxu0 0
      %984 = vmatpush1.bf16.msra.mxu0 %v961
      %985 = vmatprep.subr.bf16.mxu0 0
      %986 = vmatpush1.bf16.msra.mxu0 %v962
      %987 = vmatprep.subr.bf16.mxu0 0
      %988 = vmatpush1.bf16.msra.mxu0 0
      %989 = vmatprep.subr.bf16.mxu0 0
      %990 = vmatpush1.bf16.msra.mxu0 0
      %991 = vmatprep.subr.bf16.mxu0 0
      %992 = vmatpush1.bf16.msra.mxu0 0
      %993 = vmatprep.subr.bf16.mxu0 0
      %994 = vmatpush1.bf16.msra.mxu0 0
      %995 = vmatprep.subr.bf16.mxu0 0
      %996 = vmatpush1.bf16.msra.mxu0 0
      %997 = vmatprep.subr.bf16.mxu0 0
      %998 = vmatpush1.bf16.msra.mxu0 0
      %999 = vmatprep.subr.bf16.mxu0 0
      %1000 = vmatpush1.bf16.msra.mxu0 0
      %1001 = vmatprep.subr.bf16.mxu0 0
      %1002 = vmatpush1.bf16.msra.mxu0 0
      %1003 = vmatprep.mubr.bf16.mxu0 0
      %1004 = vmatmul.mubr.bf16.gmra.mrb[0].mxu0 %v891
      %v1005 = vpop.f32.mrb[0].mxu0
      %v1006 = vadd.f32 0.0, %v1005
      %v1007 = vpop.f32.mrb[0].mxu0
      %v1008 = vpop.f32.mrb[0].mxu0
      %v1009 = vadd.f32 0.0, %v1008
      %v1010 = vpop.f32.mrb[0].mxu0
      %1011 = vmatprep.mubr.bf16.mxu0 0
      %1012 = vmatmul.mubr.bf16.gmra.mrb[0].mxu0 %v892
      %v1013 = vpop.f32.mrb[0].mxu0
      %v1014 = vadd.f32 0.0, %v1013
      %v1015 = vpop.f32.mrb[0].mxu0
      %v1016 = vpop.f32.mrb[0].mxu0
      %v1017 = vadd.f32 0.0, %v1016
      %v1018 = vpop.f32.mrb[0].mxu0
      %1019 = vmatprep.mubr.bf16.mxu0 0
      %1020 = vmatmul.mubr.bf16.gmra.mrb[0].mxu0 %v893
      %v1021 = vpop.f32.mrb[0].mxu0
      %v1022 = vadd.f32 0.0, %v1021
      %v1023 = vpop.f32.mrb[0].mxu0
      %v1024 = vpop.f32.mrb[0].mxu0
      %v1025 = vadd.f32 0.0, %v1024
      %v1026 = vpop.f32.mrb[0].mxu0
      %1027 = vmatprep.mubr.bf16.mxu0 0
      %1028 = vmatmul.mubr.bf16.gmra.mrb[0].mxu0 %v894
      %v1029 = vpop.f32.mrb[0].mxu0
      %v1030 = vadd.f32 0.0, %v1029
      %v1031 = vpop.f32.mrb[0].mxu0
      %v1032 = vpop.f32.mrb[0].mxu0
      %v1033 = vadd.f32 0.0, %v1032
      %v1034 = vpop.f32.mrb[0].mxu0
      %1035 = vmatprep.mubr.bf16.mxu0 0
      %1036 = vmatmul.mubr.bf16.gmra.mrb[0].mxu0 %v895
      %v1037 = vpop.f32.mrb[0].mxu0
      %v1038 = vadd.f32 0.0, %v1037
      %v1039 = vpop.f32.mrb[0].mxu0
      %v1040 = vpop.f32.mrb[0].mxu0
      %v1041 = vadd.f32 0.0, %v1040
      %v1042 = vpop.f32.mrb[0].mxu0
      %1043 = vmatprep.mubr.bf16.mxu0 0
      %1044 = vmatmul.mubr.bf16.gmra.mrb[0].mxu0 %v896
      %v1045 = vpop.f32.mrb[0].mxu0
      %v1046 = vadd.f32 0.0, %v1045
      %v1047 = vpop.f32.mrb[0].mxu0
      %v1048 = vpop.f32.mrb[0].mxu0
      %v1049 = vadd.f32 0.0, %v1048
      %v1050 = vpop.f32.mrb[0].mxu0
      %1051 = vmatprep.mubr.bf16.mxu0 0
      %1052 = vmatmul.mubr.bf16.gmra.mrb[0].mxu0 %v897
      %v1053 = vpop.f32.mrb[0].mxu0
      %v1054 = vadd.f32 0.0, %v1053
      %v1055 = vpop.f32.mrb[0].mxu0
      %v1056 = vpop.f32.mrb[0].mxu0
      %v1057 = vadd.f32 0.0, %v1056
      %v1058 = vpop.f32.mrb[0].mxu0
      %1059 = vmatprep.mubr.bf16.mxu0 0
      %1060 = vmatmul.mubr.bf16.gmra.mrb[0].mxu0 %v898
      %v1061 = vpop.f32.mrb[0].mxu0
      %v1062 = vadd.f32 0.0, %v1061
      %v1063 = vpop.f32.mrb[0].mxu0
      %v1064 = vpop.f32.mrb[0].mxu0
      %v1065 = vadd.f32 0.0, %v1064
      %v1066 = vpop.f32.mrb[0].mxu0
      %1067 = vmatprep.mubr.bf16.mxu0 0
      %1068 = vmatmul.mubr.bf16.gmra.mrb[0].mxu0 %v899
      %v1069 = vpop.f32.mrb[0].mxu0
      %v1070 = vadd.f32 0.0, %v1069
      %v1071 = vpop.f32.mrb[0].mxu0
      %v1072 = vpop.f32.mrb[0].mxu0
      %v1073 = vadd.f32 0.0, %v1072
      %v1074 = vpop.f32.mrb[0].mxu0
      %1075 = vmatprep.mubr.bf16.mxu0 0
      %1076 = vmatmul.mubr.bf16.gmra.mrb[0].mxu0 %v900
      %v1077 = vpop.f32.mrb[0].mxu0
      %v1078 = vadd.f32 0.0, %v1077
      %v1079 = vpop.f32.mrb[0].mxu0
      %v1080 = vpop.f32.mrb[0].mxu0
      %v1081 = vadd.f32 0.0, %v1080
      %v1082 = vpop.f32.mrb[0].mxu0
      %1083 = vmatprep.mubr.bf16.mxu0 0
      %1084 = vmatmul.mubr.bf16.gmra.mrb[0].mxu0 %v901
      %v1085 = vpop.f32.mrb[0].mxu0
      %v1086 = vadd.f32 0.0, %v1085
      %v1087 = vpop.f32.mrb[0].mxu0
      %v1088 = vpop.f32.mrb[0].mxu0
      %v1089 = vadd.f32 0.0, %v1088
      %v1090 = vpop.f32.mrb[0].mxu0
      %1091 = vmatprep.mubr.bf16.mxu0 0
      %1092 = vmatmul.mubr.bf16.gmra.mrb[0].mxu0 %v902
      %v1093 = vpop.f32.mrb[0].mxu0
      %v1094 = vadd.f32 0.0, %v1093
      %v1095 = vpop.f32.mrb[0].mxu0
      %v1096 = vpop.f32.mrb[0].mxu0
      %v1097 = vadd.f32 0.0, %v1096
      %v1098 = vpop.f32.mrb[0].mxu0
      %1099 = vmatprep.mubr.bf16.mxu0 0
      %1100 = vmatmul.mubr.bf16.gmra.mrb[0].mxu0 %v903
      %v1101 = vpop.f32.mrb[0].mxu0
      %v1102 = vadd.f32 0.0, %v1101
      %v1103 = vpop.f32.mrb[0].mxu0
      %v1104 = vpop.f32.mrb[0].mxu0
      %v1105 = vadd.f32 0.0, %v1104
      %v1106 = vpop.f32.mrb[0].mxu0
      %1107 = vmatprep.mubr.bf16.mxu0 0
      %1108 = vmatmul.mubr.bf16.gmra.mrb[0].mxu0 %v904
      %v1109 = vpop.f32.mrb[0].mxu0
      %v1110 = vadd.f32 0.0, %v1109
      %v1111 = vpop.f32.mrb[0].mxu0
      %v1112 = vpop.f32.mrb[0].mxu0
      %v1113 = vadd.f32 0.0, %v1112
      %v1114 = vpop.f32.mrb[0].mxu0
      %1115 = vmatprep.mubr.bf16.mxu0 0
      %1116 = vmatmul.mubr.bf16.gmra.mrb[0].mxu0 %v905
      %v1117 = vpop.f32.mrb[0].mxu0
      %v1118 = vadd.f32 0.0, %v1117
      %v1119 = vpop.f32.mrb[0].mxu0
      %v1120 = vpop.f32.mrb[0].mxu0
      %v1121 = vadd.f32 0.0, %v1120
      %v1122 = vpop.f32.mrb[0].mxu0
      %1123 = vmatprep.mubr.bf16.mxu0 0
      %1124 = vmatmul.mubr.bf16.gmra.mrb[0].mxu0 %v906
      %v1125 = vpop.f32.mrb[0].mxu0
      %v1126 = vadd.f32 0.0, %v1125
      %v1127 = vpop.f32.mrb[0].mxu0
      %v1128 = vpop.f32.mrb[0].mxu0
      %v1129 = vadd.f32 0.0, %v1128
      %v1130 = vpop.f32.mrb[0].mxu0
      %1131 = vdwg.mxu0
      %v1132 = vunpack.c.l.b16 %v454
      %v1133 = vunpack.c.l.b16 %v463
      %v1134 = vunpack.c.l.b16 %v476
      %v1135 = vunpack.c.l.b16 %v485
      %v1136 = vunpack.c.l.b16 %v498
      %v1137 = vunpack.c.l.b16 %v507
      %v1138 = vunpack.c.l.b16 %v520
      %v1139 = vunpack.c.l.b16 %v529
      %v1140 = vunpack.c.l.b16 %v542
      %v1141 = vunpack.c.l.b16 %v551
      %v1142 = vunpack.c.l.b16 %v564
      %v1143 = vunpack.c.l.b16 %v573
      %v1144 = vunpack.c.l.b16 %v586
      %v1145 = vunpack.c.l.b16 %v595
      %v1146 = vunpack.c.l.b16 %v608
      %v1147 = vunpack.c.l.b16 %v617
      %v1148 = vunpack.c.l.b16 %v630
      %v1149 = vunpack.c.l.b16 %v639
      %v1150 = vunpack.c.l.b16 %v652
      %v1151 = vunpack.c.l.b16 %v661
      %v1152 = vunpack.c.l.b16 %v674
      %v1153 = vunpack.c.l.b16 %v683
      %v1154 = vunpack.c.l.b16 %v696
      %v1155 = vunpack.c.l.b16 %v705
      %v1156 = vunpack.c.l.b16 %v718
      %v1157 = vunpack.c.l.b16 %v727
      %v1158 = vunpack.c.l.b16 %v740
      %v1159 = vunpack.c.l.b16 %v749
      %v1160 = vunpack.c.l.b16 %v762
      %v1161 = vunpack.c.l.b16 %v771
      %v1162 = vunpack.c.l.b16 %v784
      %v1163 = vunpack.c.l.b16 %v793
      %v1164 = vpack.c.b16 %v1133, %v1132
      %v1165 = vpack.c.b16 %v1135, %v1134
      %v1166 = vpack.c.b16 %v1137, %v1136
      %v1167 = vpack.c.b16 %v1139, %v1138
      %v1168 = vpack.c.b16 %v1141, %v1140
      %v1169 = vpack.c.b16 %v1143, %v1142
      %v1170 = vpack.c.b16 %v1145, %v1144
      %v1171 = vpack.c.b16 %v1147, %v1146
      %v1172 = vpack.c.b16 %v1149, %v1148
      %v1173 = vpack.c.b16 %v1151, %v1150
      %v1174 = vpack.c.b16 %v1153, %v1152
      %v1175 = vpack.c.b16 %v1155, %v1154
      %v1176 = vpack.c.b16 %v1157, %v1156
      %v1177 = vpack.c.b16 %v1159, %v1158
      %v1178 = vpack.c.b16 %v1161, %v1160
      %v1179 = vpack.c.b16 %v1163, %v1162
      %v1212 = vunpack.c.l.b16 %v794
      %v1213 = vunpack.c.l.b16 %v795
      %v1214 = vunpack.c.l.b16 %v796
      %v1215 = vunpack.c.l.b16 %v797
      %v1216 = vunpack.c.l.b16 %v798
      %v1217 = vunpack.c.l.b16 %v799
      %v1218 = vunpack.c.l.b16 %v800
      %v1219 = vunpack.c.l.b16 %v801
      %v1220 = vunpack.c.l.b16 %v802
      %v1221 = vunpack.c.l.b16 %v803
      %v1222 = vunpack.c.l.b16 %v804
      %v1223 = vunpack.c.l.b16 %v805
      %v1224 = vunpack.c.l.b16 %v806
      %v1225 = vunpack.c.l.b16 %v807
      %v1226 = vunpack.c.l.b16 %v808
      %v1227 = vunpack.c.l.b16 %v809
      %v1228 = vpack.c.b16 %v1213, %v1212
      %v1229 = vpack.c.b16 %v1215, %v1214
      %v1230 = vpack.c.b16 %v1217, %v1216
      %v1231 = vpack.c.b16 %v1219, %v1218
      %v1232 = vpack.c.b16 %v1221, %v1220
      %v1233 = vpack.c.b16 %v1223, %v1222
      %v1234 = vpack.c.b16 %v1225, %v1224
      %v1235 = vpack.c.b16 %v1227, %v1226
      %1244 = vmatprep.subr.bf16.mxu0 0
      %1245 = vmatpush1.bf16.msra.mxu0 %v1228
      %1246 = vmatprep.subr.bf16.mxu0 0
      %1247 = vmatpush1.bf16.msra.mxu0 %v1229
      %1248 = vmatprep.subr.bf16.mxu0 0
      %1249 = vmatpush1.bf16.msra.mxu0 %v1230
      %1250 = vmatprep.subr.bf16.mxu0 0
      %1251 = vmatpush1.bf16.msra.mxu0 %v1231
      %1252 = vmatprep.subr.bf16.mxu0 0
      %1253 = vmatpush1.bf16.msra.mxu0 %v1232
      %1254 = vmatprep.subr.bf16.mxu0 0
      %1255 = vmatpush1.bf16.msra.mxu0 %v1233
      %1256 = vmatprep.subr.bf16.mxu0 0
      %1257 = vmatpush1.bf16.msra.mxu0 %v1234
      %1258 = vmatprep.subr.bf16.mxu0 0
      %1259 = vmatpush1.bf16.msra.mxu0 %v1235
      %1260 = vmatprep.subr.bf16.mxu0 0
      %1261 = vmatpush1.bf16.msra.mxu0 0
      %1262 = vmatprep.subr.bf16.mxu0 0
      %1263 = vmatpush1.bf16.msra.mxu0 0
      %1264 = vmatprep.subr.bf16.mxu0 0
      %1265 = vmatpush1.bf16.msra.mxu0 0
      %1266 = vmatprep.subr.bf16.mxu0 0
      %1267 = vmatpush1.bf16.msra.mxu0 0
      %1268 = vmatprep.subr.bf16.mxu0 0
      %1269 = vmatpush1.bf16.msra.mxu0 0
      %1270 = vmatprep.subr.bf16.mxu0 0
      %1271 = vmatpush1.bf16.msra.mxu0 0
      %1272 = vmatprep.subr.bf16.mxu0 0
      %1273 = vmatpush1.bf16.msra.mxu0 0
      %1274 = vmatprep.subr.bf16.mxu0 0
      %1275 = vmatpush1.bf16.msra.mxu0 0
      %1276 = vmatprep.mubr.bf16.mxu0 0
      %1277 = vmatmul.mubr.bf16.gmra.mrb[0].mxu0 %v1164
      %v1278 = vpop.f32.mrb[0].mxu0
      %v1279 = vadd.f32 %v1006, %v1278
      %v1280 = vpop.f32.mrb[0].mxu0
      %v1281 = vpop.f32.mrb[0].mxu0
      %v1282 = vadd.f32 %v1009, %v1281
      %v1283 = vpop.f32.mrb[0].mxu0
      %1284 = vmatprep.mubr.bf16.mxu0 0
      %1285 = vmatmul.mubr.bf16.gmra.mrb[0].mxu0 %v1165
      %v1286 = vpop.f32.mrb[0].mxu0
      %v1287 = vadd.f32 %v1014, %v1286
      %v1288 = vpop.f32.mrb[0].mxu0
      %v1289 = vpop.f32.mrb[0].mxu0
      %v1290 = vadd.f32 %v1017, %v1289
      %v1291 = vpop.f32.mrb[0].mxu0
      %1292 = vmatprep.mubr.bf16.mxu0 0
      %1293 = vmatmul.mubr.bf16.gmra.mrb[0].mxu0 %v1166
      %v1294 = vpop.f32.mrb[0].mxu0
      %v1295 = vadd.f32 %v1022, %v1294
      %v1296 = vpop.f32.mrb[0].mxu0
      %v1297 = vpop.f32.mrb[0].mxu0
      %v1298 = vadd.f32 %v1025, %v1297
      %v1299 = vpop.f32.mrb[0].mxu0
      %1300 = vmatprep.mubr.bf16.mxu0 0
      %1301 = vmatmul.mubr.bf16.gmra.mrb[0].mxu0 %v1167
      %v1302 = vpop.f32.mrb[0].mxu0
      %v1303 = vadd.f32 %v1030, %v1302
      %v1304 = vpop.f32.mrb[0].mxu0
      %v1305 = vpop.f32.mrb[0].mxu0
      %v1306 = vadd.f32 %v1033, %v1305
      %v1307 = vpop.f32.mrb[0].mxu0
      %1308 = vmatprep.mubr.bf16.mxu0 0
      %1309 = vmatmul.mubr.bf16.gmra.mrb[0].mxu0 %v1168
      %v1310 = vpop.f32.mrb[0].mxu0
      %v1311 = vadd.f32 %v1038, %v1310
      %v1312 = vpop.f32.mrb[0].mxu0
      %v1313 = vpop.f32.mrb[0].mxu0
      %v1314 = vadd.f32 %v1041, %v1313
      %v1315 = vpop.f32.mrb[0].mxu0
      %1316 = vmatprep.mubr.bf16.mxu0 0
      %1317 = vmatmul.mubr.bf16.gmra.mrb[0].mxu0 %v1169
      %v1318 = vpop.f32.mrb[0].mxu0
      %v1319 = vadd.f32 %v1046, %v1318
      %v1320 = vpop.f32.mrb[0].mxu0
      %v1321 = vpop.f32.mrb[0].mxu0
      %v1322 = vadd.f32 %v1049, %v1321
      %v1323 = vpop.f32.mrb[0].mxu0
      %1324 = vmatprep.mubr.bf16.mxu0 0
      %1325 = vmatmul.mubr.bf16.gmra.mrb[0].mxu0 %v1170
      %v1326 = vpop.f32.mrb[0].mxu0
      %v1327 = vadd.f32 %v1054, %v1326
      %v1328 = vpop.f32.mrb[0].mxu0
      %v1329 = vpop.f32.mrb[0].mxu0
      %v1330 = vadd.f32 %v1057, %v1329
      %v1331 = vpop.f32.mrb[0].mxu0
      %1332 = vmatprep.mubr.bf16.mxu0 0
      %1333 = vmatmul.mubr.bf16.gmra.mrb[0].mxu0 %v1171
      %v1334 = vpop.f32.mrb[0].mxu0
      %v1335 = vadd.f32 %v1062, %v1334
      %v1336 = vpop.f32.mrb[0].mxu0
      %v1337 = vpop.f32.mrb[0].mxu0
      %v1338 = vadd.f32 %v1065, %v1337
      %v1339 = vpop.f32.mrb[0].mxu0
      %1340 = vmatprep.mubr.bf16.mxu0 0
      %1341 = vmatmul.mubr.bf16.gmra.mrb[0].mxu0 %v1172
      %v1342 = vpop.f32.mrb[0].mxu0
      %v1343 = vadd.f32 %v1070, %v1342
      %v1344 = vpop.f32.mrb[0].mxu0
      %v1345 = vpop.f32.mrb[0].mxu0
      %v1346 = vadd.f32 %v1073, %v1345
      %v1347 = vpop.f32.mrb[0].mxu0
      %1348 = vmatprep.mubr.bf16.mxu0 0
      %1349 = vmatmul.mubr.bf16.gmra.mrb[0].mxu0 %v1173
      %v1350 = vpop.f32.mrb[0].mxu0
      %v1351 = vadd.f32 %v1078, %v1350
      %v1352 = vpop.f32.mrb[0].mxu0
      %v1353 = vpop.f32.mrb[0].mxu0
      %v1354 = vadd.f32 %v1081, %v1353
      %v1355 = vpop.f32.mrb[0].mxu0
      %1356 = vmatprep.mubr.bf16.mxu0 0
      %1357 = vmatmul.mubr.bf16.gmra.mrb[0].mxu0 %v1174
      %v1358 = vpop.f32.mrb[0].mxu0
      %v1359 = vadd.f32 %v1086, %v1358
      %v1360 = vpop.f32.mrb[0].mxu0
      %v1361 = vpop.f32.mrb[0].mxu0
      %v1362 = vadd.f32 %v1089, %v1361
      %v1363 = vpop.f32.mrb[0].mxu0
      %1364 = vmatprep.mubr.bf16.mxu0 0
      %1365 = vmatmul.mubr.bf16.gmra.mrb[0].mxu0 %v1175
      %v1366 = vpop.f32.mrb[0].mxu0
      %v1367 = vadd.f32 %v1094, %v1366
      %v1368 = vpop.f32.mrb[0].mxu0
      %v1369 = vpop.f32.mrb[0].mxu0
      %v1370 = vadd.f32 %v1097, %v1369
      %v1371 = vpop.f32.mrb[0].mxu0
      %1372 = vmatprep.mubr.bf16.mxu0 0
      %1373 = vmatmul.mubr.bf16.gmra.mrb[0].mxu0 %v1176
      %v1374 = vpop.f32.mrb[0].mxu0
      %v1375 = vadd.f32 %v1102, %v1374
      %v1376 = vpop.f32.mrb[0].mxu0
      %v1377 = vpop.f32.mrb[0].mxu0
      %v1378 = vadd.f32 %v1105, %v1377
      %v1379 = vpop.f32.mrb[0].mxu0
      %1380 = vmatprep.mubr.bf16.mxu0 0
      %1381 = vmatmul.mubr.bf16.gmra.mrb[0].mxu0 %v1177
      %v1382 = vpop.f32.mrb[0].mxu0
      %v1383 = vadd.f32 %v1110, %v1382
      %v1384 = vpop.f32.mrb[0].mxu0
      %v1385 = vpop.f32.mrb[0].mxu0
      %v1386 = vadd.f32 %v1113, %v1385
      %v1387 = vpop.f32.mrb[0].mxu0
      %1388 = vmatprep.mubr.bf16.mxu0 0
      %1389 = vmatmul.mubr.bf16.gmra.mrb[0].mxu0 %v1178
      %v1390 = vpop.f32.mrb[0].mxu0
      %v1391 = vadd.f32 %v1118, %v1390
      %v1392 = vpop.f32.mrb[0].mxu0
      %v1393 = vpop.f32.mrb[0].mxu0
      %v1394 = vadd.f32 %v1121, %v1393
      %v1395 = vpop.f32.mrb[0].mxu0
      %1396 = vmatprep.mubr.bf16.mxu0 0
      %1397 = vmatmul.mubr.bf16.gmra.mrb[0].mxu0 %v1179
      %v1398 = vpop.f32.mrb[0].mxu0
      %v1399 = vadd.f32 %v1126, %v1398
      %v1400 = vpop.f32.mrb[0].mxu0
      %v1401 = vpop.f32.mrb[0].mxu0
      %v1402 = vadd.f32 %v1129, %v1401
      %v1403 = vpop.f32.mrb[0].mxu0
      %1404 = vdwg.mxu0
      %v1405 = vld [vmem:[#allocation2 + $0x4] sm:$0xf]
      %v1406 = vld [vmem:[#allocation2 + $0x8] sm:$0xf]
      %v1407 = vld [vmem:[#allocation2 + $0xc] sm:$0x1]
      %v1408 = vld [vmem:[#allocation2 + $0x14] sm:$0xf]
      %v1409 = vld [vmem:[#allocation2 + $0x18] sm:$0xf]
      %v1410 = vld [vmem:[#allocation2 + $0x1c] sm:$0x1]
      %v1411 = vld [vmem:[#allocation2 + $0x24] sm:$0xf]
      %v1412 = vld [vmem:[#allocation2 + $0x28] sm:$0xf]
      %v1413 = vld [vmem:[#allocation2 + $0x2c] sm:$0x1]
      %v1414 = vld [vmem:[#allocation2 + $0x34] sm:$0xf]
      %v1415 = vld [vmem:[#allocation2 + $0x38] sm:$0xf]
      %v1416 = vld [vmem:[#allocation2 + $0x3c] sm:$0x1]
      %v1417 = vld [vmem:[#allocation2 + $0x44] sm:$0xf]
      %v1418 = vld [vmem:[#allocation2 + $0x48] sm:$0xf]
      %v1419 = vld [vmem:[#allocation2 + $0x4c] sm:$0x1]
      %v1420 = vld [vmem:[#allocation2 + $0x54] sm:$0xf]
      %v1421 = vld [vmem:[#allocation2 + $0x58] sm:$0xf]
      %v1422 = vld [vmem:[#allocation2 + $0x5c] sm:$0x1]
      %v1423 = vld [vmem:[#allocation2 + $0x64] sm:$0xf]
      %v1424 = vld [vmem:[#allocation2 + $0x68] sm:$0xf]
      %v1425 = vld [vmem:[#allocation2 + $0x6c] sm:$0x1]
      %v1426 = vld [vmem:[#allocation2 + $0x74] sm:$0xf]
      %v1427 = vld [vmem:[#allocation2 + $0x78] sm:$0xf]
      %v1428 = vld [vmem:[#allocation2 + $0x7c] sm:$0x1]
      %v1429 = vld [vmem:[#allocation2 + $0x84] sm:$0xf]
      %v1430 = vld [vmem:[#allocation2 + $0x88] sm:$0xf]
      %v1431 = vld [vmem:[#allocation2 + $0x8c] sm:$0x1]
      %v1432 = vld [vmem:[#allocation2 + $0x94] sm:$0xf]
      %v1433 = vld [vmem:[#allocation2 + $0x98] sm:$0xf]
      %v1434 = vld [vmem:[#allocation2 + $0x9c] sm:$0x1]
      %v1435 = vld [vmem:[#allocation2 + $0xa4] sm:$0xf]
      %v1436 = vld [vmem:[#allocation2 + $0xa8] sm:$0xf]
      %v1437 = vld [vmem:[#allocation2 + $0xac] sm:$0x1]
      %v1438 = vld [vmem:[#allocation2 + $0xb4] sm:$0xf]
      %v1439 = vld [vmem:[#allocation2 + $0xb8] sm:$0xf]
      %v1440 = vld [vmem:[#allocation2 + $0xbc] sm:$0x1]
      %v1441 = vld [vmem:[#allocation2 + $0xc4] sm:$0xf]
      %v1442 = vld [vmem:[#allocation2 + $0xc8] sm:$0xf]
      %v1443 = vld [vmem:[#allocation2 + $0xcc] sm:$0x1]
      %v1444 = vld [vmem:[#allocation2 + $0xd4] sm:$0xf]
      %v1445 = vld [vmem:[#allocation2 + $0xd8] sm:$0xf]
      %v1446 = vld [vmem:[#allocation2 + $0xdc] sm:$0x1]
      %v1447 = vld [vmem:[#allocation2 + $0xe4] sm:$0xf]
      %v1448 = vld [vmem:[#allocation2 + $0xe8] sm:$0xf]
      %v1449 = vld [vmem:[#allocation2 + $0xec] sm:$0x1]
      %v1450 = vld [vmem:[#allocation2 + $0xf4] sm:$0xf]
      %v1451 = vld [vmem:[#allocation2 + $0xf8] sm:$0xf]
      %v1452 = vld [vmem:[#allocation2 + $0xfc] sm:$0x1]
      %vm1453 = vsmask.f32 3328
      %vm1454 = vsmask.f32 7440
      %vm1455 = vmor %vm1453, %vm1454
      %v1457 = vshrl.u32 %v1405, 16
      %v1459 = vrot.slane %v1457, 4
      %v1460 = vshll.u32 %v1405, 16
      %v1462 = vrot.slane %v1460, 5
      %v1463 = vor.u32 %v1459, %v1462
      %v1464 = vrot.slane %v1463, 4
      %v1466 = vshll.u32 %v1406, 16
      %v1468 = vrot.slane %v1466, 5
      %v1469 = vsel %vm1455, %v1464, %v1468
      %v1470 = vshrl.u32 %v1406, 16
      %v1472 = vrot.slane %v1470, 4
      %v1473 = vor.u32 %v1472, %v1468
      %v1474 = vrot.slane %v1473, 4
      %v1476 = vshll.u32 %v1407, 16
      %v1478 = vrot.slane %v1476, 5
      %v1479 = vsel %vm1455, %v1474, %v1478
      %v1481 = vshrl.u32 %v1408, 16
      %v1483 = vrot.slane %v1481, 4
      %v1484 = vshll.u32 %v1408, 16
      %v1486 = vrot.slane %v1484, 5
      %v1487 = vor.u32 %v1483, %v1486
      %v1488 = vrot.slane %v1487, 4
      %v1490 = vshll.u32 %v1409, 16
      %v1492 = vrot.slane %v1490, 5
      %v1493 = vsel %vm1455, %v1488, %v1492
      %v1494 = vshrl.u32 %v1409, 16
      %v1496 = vrot.slane %v1494, 4
      %v1497 = vor.u32 %v1496, %v1492
      %v1498 = vrot.slane %v1497, 4
      %v1500 = vshll.u32 %v1410, 16
      %v1502 = vrot.slane %v1500, 5
      %v1503 = vsel %vm1455, %v1498, %v1502
      %v1505 = vshrl.u32 %v1411, 16
      %v1507 = vrot.slane %v1505, 4
      %v1508 = vshll.u32 %v1411, 16
      %v1510 = vrot.slane %v1508, 5
      %v1511 = vor.u32 %v1507, %v1510
      %v1512 = vrot.slane %v1511, 4
      %v1514 = vshll.u32 %v1412, 16
      %v1516 = vrot.slane %v1514, 5
      %v1517 = vsel %vm1455, %v1512, %v1516
      %v1518 = vshrl.u32 %v1412, 16
      %v1520 = vrot.slane %v1518, 4
      %v1521 = vor.u32 %v1520, %v1516
      %v1522 = vrot.slane %v1521, 4
      %v1524 = vshll.u32 %v1413, 16
      %v1526 = vrot.slane %v1524, 5
      %v1527 = vsel %vm1455, %v1522, %v1526
      %v1529 = vshrl.u32 %v1414, 16
      %v1531 = vrot.slane %v1529, 4
      %v1532 = vshll.u32 %v1414, 16
      %v1534 = vrot.slane %v1532, 5
      %v1535 = vor.u32 %v1531, %v1534
      %v1536 = vrot.slane %v1535, 4
      %v1538 = vshll.u32 %v1415, 16
      %v1540 = vrot.slane %v1538, 5
      %v1541 = vsel %vm1455, %v1536, %v1540
      %v1542 = vshrl.u32 %v1415, 16
      %v1544 = vrot.slane %v1542, 4
      %v1545 = vor.u32 %v1544, %v1540
      %v1546 = vrot.slane %v1545, 4
      %v1548 = vshll.u32 %v1416, 16
      %v1550 = vrot.slane %v1548, 5
      %v1551 = vsel %vm1455, %v1546, %v1550
      %v1553 = vshrl.u32 %v1417, 16
      %v1555 = vrot.slane %v1553, 4
      %v1556 = vshll.u32 %v1417, 16
      %v1558 = vrot.slane %v1556, 5
      %v1559 = vor.u32 %v1555, %v1558
      %v1560 = vrot.slane %v1559, 4
      %v1562 = vshll.u32 %v1418, 16
      %v1564 = vrot.slane %v1562, 5
      %v1565 = vsel %vm1455, %v1560, %v1564
      %v1566 = vshrl.u32 %v1418, 16
      %v1568 = vrot.slane %v1566, 4
      %v1569 = vor.u32 %v1568, %v1564
      %v1570 = vrot.slane %v1569, 4
      %v1572 = vshll.u32 %v1419, 16
      %v1574 = vrot.slane %v1572, 5
      %v1575 = vsel %vm1455, %v1570, %v1574
      %v1577 = vshrl.u32 %v1420, 16
      %v1579 = vrot.slane %v1577, 4
      %v1580 = vshll.u32 %v1420, 16
      %v1582 = vrot.slane %v1580, 5
      %v1583 = vor.u32 %v1579, %v1582
      %v1584 = vrot.slane %v1583, 4
      %v1586 = vshll.u32 %v1421, 16
      %v1588 = vrot.slane %v1586, 5
      %v1589 = vsel %vm1455, %v1584, %v1588
      %v1590 = vshrl.u32 %v1421, 16
      %v1592 = vrot.slane %v1590, 4
      %v1593 = vor.u32 %v1592, %v1588
      %v1594 = vrot.slane %v1593, 4
      %v1596 = vshll.u32 %v1422, 16
      %v1598 = vrot.slane %v1596, 5
      %v1599 = vsel %vm1455, %v1594, %v1598
      %v1601 = vshrl.u32 %v1423, 16
      %v1603 = vrot.slane %v1601, 4
      %v1604 = vshll.u32 %v1423, 16
      %v1606 = vrot.slane %v1604, 5
      %v1607 = vor.u32 %v1603, %v1606
      %v1608 = vrot.slane %v1607, 4
      %v1610 = vshll.u32 %v1424, 16
      %v1612 = vrot.slane %v1610, 5
      %v1613 = vsel %vm1455, %v1608, %v1612
      %v1614 = vshrl.u32 %v1424, 16
      %v1616 = vrot.slane %v1614, 4
      %v1617 = vor.u32 %v1616, %v1612
      %v1618 = vrot.slane %v1617, 4
      %v1620 = vshll.u32 %v1425, 16
      %v1622 = vrot.slane %v1620, 5
      %v1623 = vsel %vm1455, %v1618, %v1622
      %v1625 = vshrl.u32 %v1426, 16
      %v1627 = vrot.slane %v1625, 4
      %v1628 = vshll.u32 %v1426, 16
      %v1630 = vrot.slane %v1628, 5
      %v1631 = vor.u32 %v1627, %v1630
      %v1632 = vrot.slane %v1631, 4
      %v1634 = vshll.u32 %v1427, 16
      %v1636 = vrot.slane %v1634, 5
      %v1637 = vsel %vm1455, %v1632, %v1636
      %v1638 = vshrl.u32 %v1427, 16
      %v1640 = vrot.slane %v1638, 4
      %v1641 = vor.u32 %v1640, %v1636
      %v1642 = vrot.slane %v1641, 4
      %v1644 = vshll.u32 %v1428, 16
      %v1646 = vrot.slane %v1644, 5
      %v1647 = vsel %vm1455, %v1642, %v1646
      %v1649 = vshrl.u32 %v1429, 16
      %v1651 = vrot.slane %v1649, 4
      %v1652 = vshll.u32 %v1429, 16
      %v1654 = vrot.slane %v1652, 5
      %v1655 = vor.u32 %v1651, %v1654
      %v1656 = vrot.slane %v1655, 4
      %v1658 = vshll.u32 %v1430, 16
      %v1660 = vrot.slane %v1658, 5
      %v1661 = vsel %vm1455, %v1656, %v1660
      %v1662 = vshrl.u32 %v1430, 16
      %v1664 = vrot.slane %v1662, 4
      %v1665 = vor.u32 %v1664, %v1660
      %v1666 = vrot.slane %v1665, 4
      %v1668 = vshll.u32 %v1431, 16
      %v1670 = vrot.slane %v1668, 5
      %v1671 = vsel %vm1455, %v1666, %v1670
      %v1673 = vshrl.u32 %v1432, 16
      %v1675 = vrot.slane %v1673, 4
      %v1676 = vshll.u32 %v1432, 16
      %v1678 = vrot.slane %v1676, 5
      %v1679 = vor.u32 %v1675, %v1678
      %v1680 = vrot.slane %v1679, 4
      %v1682 = vshll.u32 %v1433, 16
      %v1684 = vrot.slane %v1682, 5
      %v1685 = vsel %vm1455, %v1680, %v1684
      %v1686 = vshrl.u32 %v1433, 16
      %v1688 = vrot.slane %v1686, 4
      %v1689 = vor.u32 %v1688, %v1684
      %v1690 = vrot.slane %v1689, 4
      %v1692 = vshll.u32 %v1434, 16
      %v1694 = vrot.slane %v1692, 5
      %v1695 = vsel %vm1455, %v1690, %v1694
      %v1697 = vshrl.u32 %v1435, 16
      %v1699 = vrot.slane %v1697, 4
      %v1700 = vshll.u32 %v1435, 16
      %v1702 = vrot.slane %v1700, 5
      %v1703 = vor.u32 %v1699, %v1702
      %v1704 = vrot.slane %v1703, 4
      %v1706 = vshll.u32 %v1436, 16
      %v1708 = vrot.slane %v1706, 5
      %v1709 = vsel %vm1455, %v1704, %v1708
      %v1710 = vshrl.u32 %v1436, 16
      %v1712 = vrot.slane %v1710, 4
      %v1713 = vor.u32 %v1712, %v1708
      %v1714 = vrot.slane %v1713, 4
      %v1716 = vshll.u32 %v1437, 16
      %v1718 = vrot.slane %v1716, 5
      %v1719 = vsel %vm1455, %v1714, %v1718
      %v1721 = vshrl.u32 %v1438, 16
      %v1723 = vrot.slane %v1721, 4
      %v1724 = vshll.u32 %v1438, 16
      %v1726 = vrot.slane %v1724, 5
      %v1727 = vor.u32 %v1723, %v1726
      %v1728 = vrot.slane %v1727, 4
      %v1730 = vshll.u32 %v1439, 16
      %v1732 = vrot.slane %v1730, 5
      %v1733 = vsel %vm1455, %v1728, %v1732
      %v1734 = vshrl.u32 %v1439, 16
      %v1736 = vrot.slane %v1734, 4
      %v1737 = vor.u32 %v1736, %v1732
      %v1738 = vrot.slane %v1737, 4
      %v1740 = vshll.u32 %v1440, 16
      %v1742 = vrot.slane %v1740, 5
      %v1743 = vsel %vm1455, %v1738, %v1742
      %v1745 = vshrl.u32 %v1441, 16
      %v1747 = vrot.slane %v1745, 4
      %v1748 = vshll.u32 %v1441, 16
      %v1750 = vrot.slane %v1748, 5
      %v1751 = vor.u32 %v1747, %v1750
      %v1752 = vrot.slane %v1751, 4
      %v1754 = vshll.u32 %v1442, 16
      %v1756 = vrot.slane %v1754, 5
      %v1757 = vsel %vm1455, %v1752, %v1756
      %v1758 = vshrl.u32 %v1442, 16
      %v1760 = vrot.slane %v1758, 4
      %v1761 = vor.u32 %v1760, %v1756
      %v1762 = vrot.slane %v1761, 4
      %v1764 = vshll.u32 %v1443, 16
      %v1766 = vrot.slane %v1764, 5
      %v1767 = vsel %vm1455, %v1762, %v1766
      %v1769 = vshrl.u32 %v1444, 16
      %v1771 = vrot.slane %v1769, 4
      %v1772 = vshll.u32 %v1444, 16
      %v1774 = vrot.slane %v1772, 5
      %v1775 = vor.u32 %v1771, %v1774
      %v1776 = vrot.slane %v1775, 4
      %v1778 = vshll.u32 %v1445, 16
      %v1780 = vrot.slane %v1778, 5
      %v1781 = vsel %vm1455, %v1776, %v1780
      %v1782 = vshrl.u32 %v1445, 16
      %v1784 = vrot.slane %v1782, 4
      %v1785 = vor.u32 %v1784, %v1780
      %v1786 = vrot.slane %v1785, 4
      %v1788 = vshll.u32 %v1446, 16
      %v1790 = vrot.slane %v1788, 5
      %v1791 = vsel %vm1455, %v1786, %v1790
      %v1793 = vshrl.u32 %v1447, 16
      %v1795 = vrot.slane %v1793, 4
      %v1796 = vshll.u32 %v1447, 16
      %v1798 = vrot.slane %v1796, 5
      %v1799 = vor.u32 %v1795, %v1798
      %v1800 = vrot.slane %v1799, 4
      %v1802 = vshll.u32 %v1448, 16
      %v1804 = vrot.slane %v1802, 5
      %v1805 = vsel %vm1455, %v1800, %v1804
      %v1806 = vshrl.u32 %v1448, 16
      %v1808 = vrot.slane %v1806, 4
      %v1809 = vor.u32 %v1808, %v1804
      %v1810 = vrot.slane %v1809, 4
      %v1812 = vshll.u32 %v1449, 16
      %v1814 = vrot.slane %v1812, 5
      %v1815 = vsel %vm1455, %v1810, %v1814
      %v1817 = vshrl.u32 %v1450, 16
      %v1819 = vrot.slane %v1817, 4
      %v1820 = vshll.u32 %v1450, 16
      %v1822 = vrot.slane %v1820, 5
      %v1823 = vor.u32 %v1819, %v1822
      %v1824 = vrot.slane %v1823, 4
      %v1826 = vshll.u32 %v1451, 16
      %v1828 = vrot.slane %v1826, 5
      %v1829 = vsel %vm1455, %v1824, %v1828
      %v1830 = vshrl.u32 %v1451, 16
      %v1832 = vrot.slane %v1830, 4
      %v1833 = vor.u32 %v1832, %v1828
      %v1834 = vrot.slane %v1833, 4
      %v1836 = vshll.u32 %v1452, 16
      %v1838 = vrot.slane %v1836, 5
      %v1839 = vsel %vm1455, %v1834, %v1838
      %s1840 = scalar_lea.vmem %s1, 128
      %v1841 = vld [vmem:[%s1840] sm:$0xf]
      %v1842 = vld [vmem:[%s1840 + $0x4] sm:$0xf]
      %v1843 = vld [vmem:[%s1840 + $0x8] sm:$0xf]
      %v1844 = vld [vmem:[%s1840 + $0xc] sm:$0xf]
      %v1845 = vld [vmem:[%s1840 + $0x10] sm:$0xf]
      %v1846 = vld [vmem:[%s1840 + $0x14] sm:$0xf]
      %v1847 = vld [vmem:[%s1840 + $0x18] sm:$0xf]
      %v1848 = vld [vmem:[%s1840 + $0x1c] sm:$0xf]
      %v1849 = vld [vmem:[%s1840 + $0x20] sm:$0xf]
      %v1850 = vld [vmem:[%s1840 + $0x24] sm:$0xf]
      %v1851 = vld [vmem:[%s1840 + $0x28] sm:$0xf]
      %v1852 = vld [vmem:[%s1840 + $0x2c] sm:$0xf]
      %v1853 = vld [vmem:[%s1840 + $0x30] sm:$0xf]
      %v1854 = vld [vmem:[%s1840 + $0x34] sm:$0xf]
      %v1855 = vld [vmem:[%s1840 + $0x38] sm:$0xf]
      %v1856 = vld [vmem:[%s1840 + $0x3c] sm:$0xf]
      %v1857 = vunpack.c.l.b16 %v1469
      %v1858 = vunpack.c.l.b16 %v1479
      %v1859 = vunpack.c.l.b16 %v1493
      %v1860 = vunpack.c.l.b16 %v1503
      %v1861 = vunpack.c.l.b16 %v1517
      %v1862 = vunpack.c.l.b16 %v1527
      %v1863 = vunpack.c.l.b16 %v1541
      %v1864 = vunpack.c.l.b16 %v1551
      %v1865 = vunpack.c.l.b16 %v1565
      %v1866 = vunpack.c.l.b16 %v1575
      %v1867 = vunpack.c.l.b16 %v1589
      %v1868 = vunpack.c.l.b16 %v1599
      %v1869 = vunpack.c.l.b16 %v1613
      %v1870 = vunpack.c.l.b16 %v1623
      %v1871 = vunpack.c.l.b16 %v1637
      %v1872 = vunpack.c.l.b16 %v1647
      %v1873 = vunpack.c.l.b16 %v1661
      %v1874 = vunpack.c.l.b16 %v1671
      %v1875 = vunpack.c.l.b16 %v1685
      %v1876 = vunpack.c.l.b16 %v1695
      %v1877 = vunpack.c.l.b16 %v1709
      %v1878 = vunpack.c.l.b16 %v1719
      %v1879 = vunpack.c.l.b16 %v1733
      %v1880 = vunpack.c.l.b16 %v1743
      %v1881 = vunpack.c.l.b16 %v1757
      %v1882 = vunpack.c.l.b16 %v1767
      %v1883 = vunpack.c.l.b16 %v1781
      %v1884 = vunpack.c.l.b16 %v1791
      %v1885 = vunpack.c.l.b16 %v1805
      %v1886 = vunpack.c.l.b16 %v1815
      %v1887 = vunpack.c.l.b16 %v1829
      %v1888 = vunpack.c.l.b16 %v1839
      %v1889 = vpack.c.b16 %v1858, %v1857
      %v1890 = vpack.c.b16 %v1860, %v1859
      %v1891 = vpack.c.b16 %v1862, %v1861
      %v1892 = vpack.c.b16 %v1864, %v1863
      %v1893 = vpack.c.b16 %v1866, %v1865
      %v1894 = vpack.c.b16 %v1868, %v1867
      %v1895 = vpack.c.b16 %v1870, %v1869
      %v1896 = vpack.c.b16 %v1872, %v1871
      %v1897 = vpack.c.b16 %v1874, %v1873
      %v1898 = vpack.c.b16 %v1876, %v1875
      %v1899 = vpack.c.b16 %v1878, %v1877
      %v1900 = vpack.c.b16 %v1880, %v1879
      %v1901 = vpack.c.b16 %v1882, %v1881
      %v1902 = vpack.c.b16 %v1884, %v1883
      %v1903 = vpack.c.b16 %v1886, %v1885
      %v1904 = vpack.c.b16 %v1888, %v1887
      %v1937 = vunpack.c.l.b16 %v1841
      %v1938 = vunpack.c.l.b16 %v1842
      %v1939 = vunpack.c.l.b16 %v1843
      %v1940 = vunpack.c.l.b16 %v1844
      %v1941 = vunpack.c.l.b16 %v1845
      %v1942 = vunpack.c.l.b16 %v1846
      %v1943 = vunpack.c.l.b16 %v1847
      %v1944 = vunpack.c.l.b16 %v1848
      %v1945 = vunpack.c.l.b16 %v1849
      %v1946 = vunpack.c.l.b16 %v1850
      %v1947 = vunpack.c.l.b16 %v1851
      %v1948 = vunpack.c.l.b16 %v1852
      %v1949 = vunpack.c.l.b16 %v1853
      %v1950 = vunpack.c.l.b16 %v1854
      %v1951 = vunpack.c.l.b16 %v1855
      %v1952 = vunpack.c.l.b16 %v1856
      %v1953 = vpack.c.b16 %v1938, %v1937
      %v1954 = vpack.c.b16 %v1940, %v1939
      %v1955 = vpack.c.b16 %v1942, %v1941
      %v1956 = vpack.c.b16 %v1944, %v1943
      %v1957 = vpack.c.b16 %v1946, %v1945
      %v1958 = vpack.c.b16 %v1948, %v1947
      %v1959 = vpack.c.b16 %v1950, %v1949
      %v1960 = vpack.c.b16 %v1952, %v1951
      %1969 = vmatprep.subr.bf16.mxu0 0
      %1970 = vmatpush1.bf16.msra.mxu0 %v1953
      %1971 = vmatprep.subr.bf16.mxu0 0
      %1972 = vmatpush1.bf16.msra.mxu0 %v1954
      %1973 = vmatprep.subr.bf16.mxu0 0
      %1974 = vmatpush1.bf16.msra.mxu0 %v1955
      %1975 = vmatprep.subr.bf16.mxu0 0
      %1976 = vmatpush1.bf16.msra.mxu0 %v1956
      %1977 = vmatprep.subr.bf16.mxu0 0
      %1978 = vmatpush1.bf16.msra.mxu0 %v1957
      %1979 = vmatprep.subr.bf16.mxu0 0
      %1980 = vmatpush1.bf16.msra.mxu0 %v1958
      %1981 = vmatprep.subr.bf16.mxu0 0
      %1982 = vmatpush1.bf16.msra.mxu0 %v1959
      %1983 = vmatprep.subr.bf16.mxu0 0
      %1984 = vmatpush1.bf16.msra.mxu0 %v1960
      %1985 = vmatprep.subr.bf16.mxu0 0
      %1986 = vmatpush1.bf16.msra.mxu0 0
      %1987 = vmatprep.subr.bf16.mxu0 0
      %1988 = vmatpush1.bf16.msra.mxu0 0
      %1989 = vmatprep.subr.bf16.mxu0 0
      %1990 = vmatpush1.bf16.msra.mxu0 0
      %1991 = vmatprep.subr.bf16.mxu0 0
      %1992 = vmatpush1.bf16.msra.mxu0 0
      %1993 = vmatprep.subr.bf16.mxu0 0
      %1994 = vmatpush1.bf16.msra.mxu0 0
      %1995 = vmatprep.subr.bf16.mxu0 0
      %1996 = vmatpush1.bf16.msra.mxu0 0
      %1997 = vmatprep.subr.bf16.mxu0 0
      %1998 = vmatpush1.bf16.msra.mxu0 0
      %1999 = vmatprep.subr.bf16.mxu0 0
      %2000 = vmatpush1.bf16.msra.mxu0 0
      %2001 = vmatprep.mubr.bf16.mxu0 0
      %2002 = vmatmul.mubr.bf16.gmra.mrb[0].mxu0 %v1889
      %v2003 = vpop.f32.mrb[0].mxu0
      %v2004 = vadd.f32 0.0, %v2003
      %v2005 = vpop.f32.mrb[0].mxu0
      %v2006 = vpop.f32.mrb[0].mxu0
      %v2007 = vadd.f32 0.0, %v2006
      %v2008 = vpop.f32.mrb[0].mxu0
      %2009 = vmatprep.mubr.bf16.mxu0 0
      %2010 = vmatmul.mubr.bf16.gmra.mrb[0].mxu0 %v1890
      %v2011 = vpop.f32.mrb[0].mxu0
      %v2012 = vadd.f32 0.0, %v2011
      %v2013 = vpop.f32.mrb[0].mxu0
      %v2014 = vpop.f32.mrb[0].mxu0
      %v2015 = vadd.f32 0.0, %v2014
      %v2016 = vpop.f32.mrb[0].mxu0
      %2017 = vmatprep.mubr.bf16.mxu0 0
      %2018 = vmatmul.mubr.bf16.gmra.mrb[0].mxu0 %v1891
      %v2019 = vpop.f32.mrb[0].mxu0
      %v2020 = vadd.f32 0.0, %v2019
      %v2021 = vpop.f32.mrb[0].mxu0
      %v2022 = vpop.f32.mrb[0].mxu0
      %v2023 = vadd.f32 0.0, %v2022
      %v2024 = vpop.f32.mrb[0].mxu0
      %2025 = vmatprep.mubr.bf16.mxu0 0
      %2026 = vmatmul.mubr.bf16.gmra.mrb[0].mxu0 %v1892
      %v2027 = vpop.f32.mrb[0].mxu0
      %v2028 = vadd.f32 0.0, %v2027
      %v2029 = vpop.f32.mrb[0].mxu0
      %v2030 = vpop.f32.mrb[0].mxu0
      %v2031 = vadd.f32 0.0, %v2030
      %v2032 = vpop.f32.mrb[0].mxu0
      %2033 = vmatprep.mubr.bf16.mxu0 0
      %2034 = vmatmul.mubr.bf16.gmra.mrb[0].mxu0 %v1893
      %v2035 = vpop.f32.mrb[0].mxu0
      %v2036 = vadd.f32 0.0, %v2035
      %v2037 = vpop.f32.mrb[0].mxu0
      %v2038 = vpop.f32.mrb[0].mxu0
      %v2039 = vadd.f32 0.0, %v2038
      %v2040 = vpop.f32.mrb[0].mxu0
      %2041 = vmatprep.mubr.bf16.mxu0 0
      %2042 = vmatmul.mubr.bf16.gmra.mrb[0].mxu0 %v1894
      %v2043 = vpop.f32.mrb[0].mxu0
      %v2044 = vadd.f32 0.0, %v2043
      %v2045 = vpop.f32.mrb[0].mxu0
      %v2046 = vpop.f32.mrb[0].mxu0
      %v2047 = vadd.f32 0.0, %v2046
      %v2048 = vpop.f32.mrb[0].mxu0
      %2049 = vmatprep.mubr.bf16.mxu0 0
      %2050 = vmatmul.mubr.bf16.gmra.mrb[0].mxu0 %v1895
      %v2051 = vpop.f32.mrb[0].mxu0
      %v2052 = vadd.f32 0.0, %v2051
      %v2053 = vpop.f32.mrb[0].mxu0
      %v2054 = vpop.f32.mrb[0].mxu0
      %v2055 = vadd.f32 0.0, %v2054
      %v2056 = vpop.f32.mrb[0].mxu0
      %2057 = vmatprep.mubr.bf16.mxu0 0
      %2058 = vmatmul.mubr.bf16.gmra.mrb[0].mxu0 %v1896
      %v2059 = vpop.f32.mrb[0].mxu0
      %v2060 = vadd.f32 0.0, %v2059
      %v2061 = vpop.f32.mrb[0].mxu0
      %v2062 = vpop.f32.mrb[0].mxu0
      %v2063 = vadd.f32 0.0, %v2062
      %v2064 = vpop.f32.mrb[0].mxu0
      %2065 = vmatprep.mubr.bf16.mxu0 0
      %2066 = vmatmul.mubr.bf16.gmra.mrb[0].mxu0 %v1897
      %v2067 = vpop.f32.mrb[0].mxu0
      %v2068 = vadd.f32 0.0, %v2067
      %v2069 = vpop.f32.mrb[0].mxu0
      %v2070 = vpop.f32.mrb[0].mxu0
      %v2071 = vadd.f32 0.0, %v2070
      %v2072 = vpop.f32.mrb[0].mxu0
      %2073 = vmatprep.mubr.bf16.mxu0 0
      %2074 = vmatmul.mubr.bf16.gmra.mrb[0].mxu0 %v1898
      %v2075 = vpop.f32.mrb[0].mxu0
      %v2076 = vadd.f32 0.0, %v2075
      %v2077 = vpop.f32.mrb[0].mxu0
      %v2078 = vpop.f32.mrb[0].mxu0
      %v2079 = vadd.f32 0.0, %v2078
      %v2080 = vpop.f32.mrb[0].mxu0
      %2081 = vmatprep.mubr.bf16.mxu0 0
      %2082 = vmatmul.mubr.bf16.gmra.mrb[0].mxu0 %v1899
      %v2083 = vpop.f32.mrb[0].mxu0
      %v2084 = vadd.f32 0.0, %v2083
      %v2085 = vpop.f32.mrb[0].mxu0
      %v2086 = vpop.f32.mrb[0].mxu0
      %v2087 = vadd.f32 0.0, %v2086
      %v2088 = vpop.f32.mrb[0].mxu0
      %2089 = vmatprep.mubr.bf16.mxu0 0
      %2090 = vmatmul.mubr.bf16.gmra.mrb[0].mxu0 %v1900
      %v2091 = vpop.f32.mrb[0].mxu0
      %v2092 = vadd.f32 0.0, %v2091
      %v2093 = vpop.f32.mrb[0].mxu0
      %v2094 = vpop.f32.mrb[0].mxu0
      %v2095 = vadd.f32 0.0, %v2094
      %v2096 = vpop.f32.mrb[0].mxu0
      %2097 = vmatprep.mubr.bf16.mxu0 0
      %2098 = vmatmul.mubr.bf16.gmra.mrb[0].mxu0 %v1901
      %v2099 = vpop.f32.mrb[0].mxu0
      %v2100 = vadd.f32 0.0, %v2099
      %v2101 = vpop.f32.mrb[0].mxu0
      %v2102 = vpop.f32.mrb[0].mxu0
      %v2103 = vadd.f32 0.0, %v2102
      %v2104 = vpop.f32.mrb[0].mxu0
      %2105 = vmatprep.mubr.bf16.mxu0 0
      %2106 = vmatmul.mubr.bf16.gmra.mrb[0].mxu0 %v1902
      %v2107 = vpop.f32.mrb[0].mxu0
      %v2108 = vadd.f32 0.0, %v2107
      %v2109 = vpop.f32.mrb[0].mxu0
      %v2110 = vpop.f32.mrb[0].mxu0
      %v2111 = vadd.f32 0.0, %v2110
      %v2112 = vpop.f32.mrb[0].mxu0
      %2113 = vmatprep.mubr.bf16.mxu0 0
      %2114 = vmatmul.mubr.bf16.gmra.mrb[0].mxu0 %v1903
      %v2115 = vpop.f32.mrb[0].mxu0
      %v2116 = vadd.f32 0.0, %v2115
      %v2117 = vpop.f32.mrb[0].mxu0
      %v2118 = vpop.f32.mrb[0].mxu0
      %v2119 = vadd.f32 0.0, %v2118
      %v2120 = vpop.f32.mrb[0].mxu0
      %2121 = vmatprep.mubr.bf16.mxu0 0
      %2122 = vmatmul.mubr.bf16.gmra.mrb[0].mxu0 %v1904
      %v2123 = vpop.f32.mrb[0].mxu0
      %v2124 = vadd.f32 0.0, %v2123
      %v2125 = vpop.f32.mrb[0].mxu0
      %v2126 = vpop.f32.mrb[0].mxu0
      %v2127 = vadd.f32 0.0, %v2126
      %v2128 = vpop.f32.mrb[0].mxu0
      %2129 = vdwg.mxu0
      %v2130 = vadd.f32 %v1279, %v2004
      %v2131 = vadd.f32 %v1282, %v2007
      %v2132 = vadd.f32 %v1287, %v2012
      %v2133 = vadd.f32 %v1290, %v2015
      %v2134 = vadd.f32 %v1295, %v2020
      %v2135 = vadd.f32 %v1298, %v2023
      %v2136 = vadd.f32 %v1303, %v2028
      %v2137 = vadd.f32 %v1306, %v2031
      %v2138 = vadd.f32 %v1311, %v2036
      %v2139 = vadd.f32 %v1314, %v2039
      %v2140 = vadd.f32 %v1319, %v2044
      %v2141 = vadd.f32 %v1322, %v2047
      %v2142 = vadd.f32 %v1327, %v2052
      %v2143 = vadd.f32 %v1330, %v2055
      %v2144 = vadd.f32 %v1335, %v2060
      %v2145 = vadd.f32 %v1338, %v2063
      %v2146 = vadd.f32 %v1343, %v2068
      %v2147 = vadd.f32 %v1346, %v2071
      %v2148 = vadd.f32 %v1351, %v2076
      %v2149 = vadd.f32 %v1354, %v2079
      %v2150 = vadd.f32 %v1359, %v2084
      %v2151 = vadd.f32 %v1362, %v2087
      %v2152 = vadd.f32 %v1367, %v2092
      %v2153 = vadd.f32 %v1370, %v2095
      %v2154 = vadd.f32 %v1375, %v2100
      %v2155 = vadd.f32 %v1378, %v2103
      %v2156 = vadd.f32 %v1383, %v2108
      %v2157 = vadd.f32 %v1386, %v2111
      %v2158 = vadd.f32 %v1391, %v2116
      %v2159 = vadd.f32 %v1394, %v2119
      %v2160 = vadd.f32 %v1399, %v2124
      %v2161 = vadd.f32 %v1402, %v2127
      %v2162 = vld [vmem:[%s359] sm:$0x8]
      %v2163 = vld [vmem:[%s359 + $0x4] sm:$0xf]
      %v2164 = vld [vmem:[%s359 + $0x8] sm:$0xf]
      %v2165 = vld [vmem:[%s359 + $0x10] sm:$0x8]
      %v2166 = vld [vmem:[%s359 + $0x14] sm:$0xf]
      %v2167 = vld [vmem:[%s359 + $0x18] sm:$0xf]
      %v2168 = vld [vmem:[%s359 + $0x20] sm:$0x8]
      %v2169 = vld [vmem:[%s359 + $0x24] sm:$0xf]
      %v2170 = vld [vmem:[%s359 + $0x28] sm:$0xf]
      %v2171 = vld [vmem:[%s359 + $0x30] sm:$0x8]
      %v2172 = vld [vmem:[%s359 + $0x34] sm:$0xf]
      %v2173 = vld [vmem:[%s359 + $0x38] sm:$0xf]
      %v2174 = vld [vmem:[%s359 + $0x40] sm:$0x8]
      %v2175 = vld [vmem:[%s359 + $0x44] sm:$0xf]
      %v2176 = vld [vmem:[%s359 + $0x48] sm:$0xf]
      %v2177 = vld [vmem:[%s359 + $0x50] sm:$0x8]
      %v2178 = vld [vmem:[%s359 + $0x54] sm:$0xf]
      %v2179 = vld [vmem:[%s359 + $0x58] sm:$0xf]
      %v2180 = vld [vmem:[%s359 + $0x60] sm:$0x8]
      %v2181 = vld [vmem:[%s359 + $0x64] sm:$0xf]
      %v2182 = vld [vmem:[%s359 + $0x68] sm:$0xf]
      %v2183 = vld [vmem:[%s359 + $0x70] sm:$0x8]
      %v2184 = vld [vmem:[%s359 + $0x74] sm:$0xf]
      %v2185 = vld [vmem:[%s359 + $0x78] sm:$0xf]
      %v2186 = vld [vmem:[%s359 + $0x80] sm:$0x8]
      %v2187 = vld [vmem:[%s359 + $0x84] sm:$0xf]
      %v2188 = vld [vmem:[%s359 + $0x88] sm:$0xf]
      %v2189 = vld [vmem:[%s359 + $0x90] sm:$0x8]
      %v2190 = vld [vmem:[%s359 + $0x94] sm:$0xf]
      %v2191 = vld [vmem:[%s359 + $0x98] sm:$0xf]
      %v2192 = vld [vmem:[%s359 + $0xa0] sm:$0x8]
      %v2193 = vld [vmem:[%s359 + $0xa4] sm:$0xf]
      %v2194 = vld [vmem:[%s359 + $0xa8] sm:$0xf]
      %v2195 = vld [vmem:[%s359 + $0xb0] sm:$0x8]
      %v2196 = vld [vmem:[%s359 + $0xb4] sm:$0xf]
      %v2197 = vld [vmem:[%s359 + $0xb8] sm:$0xf]
      %v2198 = vld [vmem:[%s359 + $0xc0] sm:$0x8]
      %v2199 = vld [vmem:[%s359 + $0xc4] sm:$0xf]
      %v2200 = vld [vmem:[%s359 + $0xc8] sm:$0xf]
      %v2201 = vld [vmem:[%s359 + $0xd0] sm:$0x8]
      %v2202 = vld [vmem:[%s359 + $0xd4] sm:$0xf]
      %v2203 = vld [vmem:[%s359 + $0xd8] sm:$0xf]
      %v2204 = vld [vmem:[%s359 + $0xe0] sm:$0x8]
      %v2205 = vld [vmem:[%s359 + $0xe4] sm:$0xf]
      %v2206 = vld [vmem:[%s359 + $0xe8] sm:$0xf]
      %v2207 = vld [vmem:[%s359 + $0xf0] sm:$0x8]
      %v2208 = vld [vmem:[%s359 + $0xf4] sm:$0xf]
      %v2209 = vld [vmem:[%s359 + $0xf8] sm:$0xf]
      %v2211 = vshrl.u32 %v2162, 16
      %v2213 = vrot.slane %v2211, 7
      %v2214 = vrot.slane %v2213, 4
      %v2216 = vshrl.u32 %v2163, 16
      %v2218 = vrot.slane %v2216, 7
      %v2219 = vshll.u32 %v2163, 16
      %v2221 = vor.u32 %v2218, %v2219
      %v2222 = vsel %vm441, %v2214, %v2221
      %v2223 = vrot.slane %v2218, 4
      %v2225 = vshrl.u32 %v2164, 16
      %v2227 = vrot.slane %v2225, 7
      %v2228 = vshll.u32 %v2164, 16
      %v2230 = vor.u32 %v2227, %v2228
      %v2231 = vsel %vm441, %v2223, %v2230
      %v2233 = vshrl.u32 %v2165, 16
      %v2235 = vrot.slane %v2233, 7
      %v2236 = vrot.slane %v2235, 4
      %v2238 = vshrl.u32 %v2166, 16
      %v2240 = vrot.slane %v2238, 7
      %v2241 = vshll.u32 %v2166, 16
      %v2243 = vor.u32 %v2240, %v2241
      %v2244 = vsel %vm441, %v2236, %v2243
      %v2245 = vrot.slane %v2240, 4
      %v2247 = vshrl.u32 %v2167, 16
      %v2249 = vrot.slane %v2247, 7
      %v2250 = vshll.u32 %v2167, 16
      %v2252 = vor.u32 %v2249, %v2250
      %v2253 = vsel %vm441, %v2245, %v2252
      %v2255 = vshrl.u32 %v2168, 16
      %v2257 = vrot.slane %v2255, 7
      %v2258 = vrot.slane %v2257, 4
      %v2260 = vshrl.u32 %v2169, 16
      %v2262 = vrot.slane %v2260, 7
      %v2263 = vshll.u32 %v2169, 16
      %v2265 = vor.u32 %v2262, %v2263
      %v2266 = vsel %vm441, %v2258, %v2265
      %v2267 = vrot.slane %v2262, 4
      %v2269 = vshrl.u32 %v2170, 16
      %v2271 = vrot.slane %v2269, 7
      %v2272 = vshll.u32 %v2170, 16
      %v2274 = vor.u32 %v2271, %v2272
      %v2275 = vsel %vm441, %v2267, %v2274
      %v2277 = vshrl.u32 %v2171, 16
      %v2279 = vrot.slane %v2277, 7
      %v2280 = vrot.slane %v2279, 4
      %v2282 = vshrl.u32 %v2172, 16
      %v2284 = vrot.slane %v2282, 7
      %v2285 = vshll.u32 %v2172, 16
      %v2287 = vor.u32 %v2284, %v2285
      %v2288 = vsel %vm441, %v2280, %v2287
      %v2289 = vrot.slane %v2284, 4
      %v2291 = vshrl.u32 %v2173, 16
      %v2293 = vrot.slane %v2291, 7
      %v2294 = vshll.u32 %v2173, 16
      %v2296 = vor.u32 %v2293, %v2294
      %v2297 = vsel %vm441, %v2289, %v2296
      %v2299 = vshrl.u32 %v2174, 16
      %v2301 = vrot.slane %v2299, 7
      %v2302 = vrot.slane %v2301, 4
      %v2304 = vshrl.u32 %v2175, 16
      %v2306 = vrot.slane %v2304, 7
      %v2307 = vshll.u32 %v2175, 16
      %v2309 = vor.u32 %v2306, %v2307
      %v2310 = vsel %vm441, %v2302, %v2309
      %v2311 = vrot.slane %v2306, 4
      %v2313 = vshrl.u32 %v2176, 16
      %v2315 = vrot.slane %v2313, 7
      %v2316 = vshll.u32 %v2176, 16
      %v2318 = vor.u32 %v2315, %v2316
      %v2319 = vsel %vm441, %v2311, %v2318
      %v2321 = vshrl.u32 %v2177, 16
      %v2323 = vrot.slane %v2321, 7
      %v2324 = vrot.slane %v2323, 4
      %v2326 = vshrl.u32 %v2178, 16
      %v2328 = vrot.slane %v2326, 7
      %v2329 = vshll.u32 %v2178, 16
      %v2331 = vor.u32 %v2328, %v2329
      %v2332 = vsel %vm441, %v2324, %v2331
      %v2333 = vrot.slane %v2328, 4
      %v2335 = vshrl.u32 %v2179, 16
      %v2337 = vrot.slane %v2335, 7
      %v2338 = vshll.u32 %v2179, 16
      %v2340 = vor.u32 %v2337, %v2338
      %v2341 = vsel %vm441, %v2333, %v2340
      %v2343 = vshrl.u32 %v2180, 16
      %v2345 = vrot.slane %v2343, 7
      %v2346 = vrot.slane %v2345, 4
      %v2348 = vshrl.u32 %v2181, 16
      %v2350 = vrot.slane %v2348, 7
      %v2351 = vshll.u32 %v2181, 16
      %v2353 = vor.u32 %v2350, %v2351
      %v2354 = vsel %vm441, %v2346, %v2353
      %v2355 = vrot.slane %v2350, 4
      %v2357 = vshrl.u32 %v2182, 16
      %v2359 = vrot.slane %v2357, 7
      %v2360 = vshll.u32 %v2182, 16
      %v2362 = vor.u32 %v2359, %v2360
      %v2363 = vsel %vm441, %v2355, %v2362
      %v2365 = vshrl.u32 %v2183, 16
      %v2367 = vrot.slane %v2365, 7
      %v2368 = vrot.slane %v2367, 4
      %v2370 = vshrl.u32 %v2184, 16
      %v2372 = vrot.slane %v2370, 7
      %v2373 = vshll.u32 %v2184, 16
      %v2375 = vor.u32 %v2372, %v2373
      %v2376 = vsel %vm441, %v2368, %v2375
      %v2377 = vrot.slane %v2372, 4
      %v2379 = vshrl.u32 %v2185, 16
      %v2381 = vrot.slane %v2379, 7
      %v2382 = vshll.u32 %v2185, 16
      %v2384 = vor.u32 %v2381, %v2382
      %v2385 = vsel %vm441, %v2377, %v2384
      %v2387 = vshrl.u32 %v2186, 16
      %v2389 = vrot.slane %v2387, 7
      %v2390 = vrot.slane %v2389, 4
      %v2392 = vshrl.u32 %v2187, 16
      %v2394 = vrot.slane %v2392, 7
      %v2395 = vshll.u32 %v2187, 16
      %v2397 = vor.u32 %v2394, %v2395
      %v2398 = vsel %vm441, %v2390, %v2397
      %v2399 = vrot.slane %v2394, 4
      %v2401 = vshrl.u32 %v2188, 16
      %v2403 = vrot.slane %v2401, 7
      %v2404 = vshll.u32 %v2188, 16
      %v2406 = vor.u32 %v2403, %v2404
      %v2407 = vsel %vm441, %v2399, %v2406
      %v2409 = vshrl.u32 %v2189, 16
      %v2411 = vrot.slane %v2409, 7
      %v2412 = vrot.slane %v2411, 4
      %v2414 = vshrl.u32 %v2190, 16
      %v2416 = vrot.slane %v2414, 7
      %v2417 = vshll.u32 %v2190, 16
      %v2419 = vor.u32 %v2416, %v2417
      %v2420 = vsel %vm441, %v2412, %v2419
      %v2421 = vrot.slane %v2416, 4
      %v2423 = vshrl.u32 %v2191, 16
      %v2425 = vrot.slane %v2423, 7
      %v2426 = vshll.u32 %v2191, 16
      %v2428 = vor.u32 %v2425, %v2426
      %v2429 = vsel %vm441, %v2421, %v2428
      %v2431 = vshrl.u32 %v2192, 16
      %v2433 = vrot.slane %v2431, 7
      %v2434 = vrot.slane %v2433, 4
      %v2436 = vshrl.u32 %v2193, 16
      %v2438 = vrot.slane %v2436, 7
      %v2439 = vshll.u32 %v2193, 16
      %v2441 = vor.u32 %v2438, %v2439
      %v2442 = vsel %vm441, %v2434, %v2441
      %v2443 = vrot.slane %v2438, 4
      %v2445 = vshrl.u32 %v2194, 16
      %v2447 = vrot.slane %v2445, 7
      %v2448 = vshll.u32 %v2194, 16
      %v2450 = vor.u32 %v2447, %v2448
      %v2451 = vsel %vm441, %v2443, %v2450
      %v2453 = vshrl.u32 %v2195, 16
      %v2455 = vrot.slane %v2453, 7
      %v2456 = vrot.slane %v2455, 4
      %v2458 = vshrl.u32 %v2196, 16
      %v2460 = vrot.slane %v2458, 7
      %v2461 = vshll.u32 %v2196, 16
      %v2463 = vor.u32 %v2460, %v2461
      %v2464 = vsel %vm441, %v2456, %v2463
      %v2465 = vrot.slane %v2460, 4
      %v2467 = vshrl.u32 %v2197, 16
      %v2469 = vrot.slane %v2467, 7
      %v2470 = vshll.u32 %v2197, 16
      %v2472 = vor.u32 %v2469, %v2470
      %v2473 = vsel %vm441, %v2465, %v2472
      %v2475 = vshrl.u32 %v2198, 16
      %v2477 = vrot.slane %v2475, 7
      %v2478 = vrot.slane %v2477, 4
      %v2480 = vshrl.u32 %v2199, 16
      %v2482 = vrot.slane %v2480, 7
      %v2483 = vshll.u32 %v2199, 16
      %v2485 = vor.u32 %v2482, %v2483
      %v2486 = vsel %vm441, %v2478, %v2485
      %v2487 = vrot.slane %v2482, 4
      %v2489 = vshrl.u32 %v2200, 16
      %v2491 = vrot.slane %v2489, 7
      %v2492 = vshll.u32 %v2200, 16
      %v2494 = vor.u32 %v2491, %v2492
      %v2495 = vsel %vm441, %v2487, %v2494
      %v2497 = vshrl.u32 %v2201, 16
      %v2499 = vrot.slane %v2497, 7
      %v2500 = vrot.slane %v2499, 4
      %v2502 = vshrl.u32 %v2202, 16
      %v2504 = vrot.slane %v2502, 7
      %v2505 = vshll.u32 %v2202, 16
      %v2507 = vor.u32 %v2504, %v2505
      %v2508 = vsel %vm441, %v2500, %v2507
      %v2509 = vrot.slane %v2504, 4
      %v2511 = vshrl.u32 %v2203, 16
      %v2513 = vrot.slane %v2511, 7
      %v2514 = vshll.u32 %v2203, 16
      %v2516 = vor.u32 %v2513, %v2514
      %v2517 = vsel %vm441, %v2509, %v2516
      %v2519 = vshrl.u32 %v2204, 16
      %v2521 = vrot.slane %v2519, 7
      %v2522 = vrot.slane %v2521, 4
      %v2524 = vshrl.u32 %v2205, 16
      %v2526 = vrot.slane %v2524, 7
      %v2527 = vshll.u32 %v2205, 16
      %v2529 = vor.u32 %v2526, %v2527
      %v2530 = vsel %vm441, %v2522, %v2529
      %v2531 = vrot.slane %v2526, 4
      %v2533 = vshrl.u32 %v2206, 16
      %v2535 = vrot.slane %v2533, 7
      %v2536 = vshll.u32 %v2206, 16
      %v2538 = vor.u32 %v2535, %v2536
      %v2539 = vsel %vm441, %v2531, %v2538
      %v2541 = vshrl.u32 %v2207, 16
      %v2543 = vrot.slane %v2541, 7
      %v2544 = vrot.slane %v2543, 4
      %v2546 = vshrl.u32 %v2208, 16
      %v2548 = vrot.slane %v2546, 7
      %v2549 = vshll.u32 %v2208, 16
      %v2551 = vor.u32 %v2548, %v2549
      %v2552 = vsel %vm441, %v2544, %v2551
      %v2553 = vrot.slane %v2548, 4
      %v2555 = vshrl.u32 %v2209, 16
      %v2557 = vrot.slane %v2555, 7
      %v2558 = vshll.u32 %v2209, 16
      %v2560 = vor.u32 %v2557, %v2558
      %v2561 = vsel %vm441, %v2553, %v2560
      %s2562 = scalar_lea.vmem %s1, 192
      %v2563 = vld [vmem:[%s2562] sm:$0xf]
      %v2564 = vld [vmem:[%s2562 + $0x4] sm:$0xf]
      %v2565 = vld [vmem:[%s2562 + $0x8] sm:$0xf]
      %v2566 = vld [vmem:[%s2562 + $0xc] sm:$0xf]
      %v2567 = vld [vmem:[%s2562 + $0x10] sm:$0xf]
      %v2568 = vld [vmem:[%s2562 + $0x14] sm:$0xf]
      %v2569 = vld [vmem:[%s2562 + $0x18] sm:$0xf]
      %v2570 = vld [vmem:[%s2562 + $0x1c] sm:$0xf]
      %v2571 = vld [vmem:[%s2562 + $0x20] sm:$0xf]
      %v2572 = vld [vmem:[%s2562 + $0x24] sm:$0xf]
      %v2573 = vld [vmem:[%s2562 + $0x28] sm:$0xf]
      %v2574 = vld [vmem:[%s2562 + $0x2c] sm:$0xf]
      %v2575 = vld [vmem:[%s2562 + $0x30] sm:$0xf]
      %v2576 = vld [vmem:[%s2562 + $0x34] sm:$0xf]
      %v2577 = vld [vmem:[%s2562 + $0x38] sm:$0xf]
      %v2578 = vld [vmem:[%s2562 + $0x3c] sm:$0xf]
      %v2579 = vunpack.c.l.b16 %v2222
      %v2580 = vunpack.c.l.b16 %v2231
      %v2581 = vunpack.c.l.b16 %v2244
      %v2582 = vunpack.c.l.b16 %v2253
      %v2583 = vunpack.c.l.b16 %v2266
      %v2584 = vunpack.c.l.b16 %v2275
      %v2585 = vunpack.c.l.b16 %v2288
      %v2586 = vunpack.c.l.b16 %v2297
      %v2587 = vunpack.c.l.b16 %v2310
      %v2588 = vunpack.c.l.b16 %v2319
      %v2589 = vunpack.c.l.b16 %v2332
      %v2590 = vunpack.c.l.b16 %v2341
      %v2591 = vunpack.c.l.b16 %v2354
      %v2592 = vunpack.c.l.b16 %v2363
      %v2593 = vunpack.c.l.b16 %v2376
      %v2594 = vunpack.c.l.b16 %v2385
      %v2595 = vunpack.c.l.b16 %v2398
      %v2596 = vunpack.c.l.b16 %v2407
      %v2597 = vunpack.c.l.b16 %v2420
      %v2598 = vunpack.c.l.b16 %v2429
      %v2599 = vunpack.c.l.b16 %v2442
      %v2600 = vunpack.c.l.b16 %v2451
      %v2601 = vunpack.c.l.b16 %v2464
      %v2602 = vunpack.c.l.b16 %v2473
      %v2603 = vunpack.c.l.b16 %v2486
      %v2604 = vunpack.c.l.b16 %v2495
      %v2605 = vunpack.c.l.b16 %v2508
      %v2606 = vunpack.c.l.b16 %v2517
      %v2607 = vunpack.c.l.b16 %v2530
      %v2608 = vunpack.c.l.b16 %v2539
      %v2609 = vunpack.c.l.b16 %v2552
      %v2610 = vunpack.c.l.b16 %v2561
      %v2611 = vpack.c.b16 %v2580, %v2579
      %v2612 = vpack.c.b16 %v2582, %v2581
      %v2613 = vpack.c.b16 %v2584, %v2583
      %v2614 = vpack.c.b16 %v2586, %v2585
      %v2615 = vpack.c.b16 %v2588, %v2587
      %v2616 = vpack.c.b16 %v2590, %v2589
      %v2617 = vpack.c.b16 %v2592, %v2591
      %v2618 = vpack.c.b16 %v2594, %v2593
      %v2619 = vpack.c.b16 %v2596, %v2595
      %v2620 = vpack.c.b16 %v2598, %v2597
      %v2621 = vpack.c.b16 %v2600, %v2599
      %v2622 = vpack.c.b16 %v2602, %v2601
      %v2623 = vpack.c.b16 %v2604, %v2603
      %v2624 = vpack.c.b16 %v2606, %v2605
      %v2625 = vpack.c.b16 %v2608, %v2607
      %v2626 = vpack.c.b16 %v2610, %v2609
      %v2659 = vunpack.c.l.b16 %v2563
      %v2660 = vunpack.c.l.b16 %v2564
      %v2661 = vunpack.c.l.b16 %v2565
      %v2662 = vunpack.c.l.b16 %v2566
      %v2663 = vunpack.c.l.b16 %v2567
      %v2664 = vunpack.c.l.b16 %v2568
      %v2665 = vunpack.c.l.b16 %v2569
      %v2666 = vunpack.c.l.b16 %v2570
      %v2667 = vunpack.c.l.b16 %v2571
      %v2668 = vunpack.c.l.b16 %v2572
      %v2669 = vunpack.c.l.b16 %v2573
      %v2670 = vunpack.c.l.b16 %v2574
      %v2671 = vunpack.c.l.b16 %v2575
      %v2672 = vunpack.c.l.b16 %v2576
      %v2673 = vunpack.c.l.b16 %v2577
      %v2674 = vunpack.c.l.b16 %v2578
      %v2675 = vpack.c.b16 %v2660, %v2659
      %v2676 = vpack.c.b16 %v2662, %v2661
      %v2677 = vpack.c.b16 %v2664, %v2663
      %v2678 = vpack.c.b16 %v2666, %v2665
      %v2679 = vpack.c.b16 %v2668, %v2667
      %v2680 = vpack.c.b16 %v2670, %v2669
      %v2681 = vpack.c.b16 %v2672, %v2671
      %v2682 = vpack.c.b16 %v2674, %v2673
      %2691 = vmatprep.subr.bf16.mxu0 0
      %2692 = vmatpush1.bf16.msra.mxu0 %v2675
      %2693 = vmatprep.subr.bf16.mxu0 0
      %2694 = vmatpush1.bf16.msra.mxu0 %v2676
      %2695 = vmatprep.subr.bf16.mxu0 0
      %2696 = vmatpush1.bf16.msra.mxu0 %v2677
      %2697 = vmatprep.subr.bf16.mxu0 0
      %2698 = vmatpush1.bf16.msra.mxu0 %v2678
      %2699 = vmatprep.subr.bf16.mxu0 0
      %2700 = vmatpush1.bf16.msra.mxu0 %v2679
      %2701 = vmatprep.subr.bf16.mxu0 0
      %2702 = vmatpush1.bf16.msra.mxu0 %v2680
      %2703 = vmatprep.subr.bf16.mxu0 0
      %2704 = vmatpush1.bf16.msra.mxu0 %v2681
      %2705 = vmatprep.subr.bf16.mxu0 0
      %2706 = vmatpush1.bf16.msra.mxu0 %v2682
      %2707 = vmatprep.subr.bf16.mxu0 0
      %2708 = vmatpush1.bf16.msra.mxu0 0
      %2709 = vmatprep.subr.bf16.mxu0 0
      %2710 = vmatpush1.bf16.msra.mxu0 0
      %2711 = vmatprep.subr.bf16.mxu0 0
      %2712 = vmatpush1.bf16.msra.mxu0 0
      %2713 = vmatprep.subr.bf16.mxu0 0
      %2714 = vmatpush1.bf16.msra.mxu0 0
      %2715 = vmatprep.subr.bf16.mxu0 0
      %2716 = vmatpush1.bf16.msra.mxu0 0
      %2717 = vmatprep.subr.bf16.mxu0 0
      %2718 = vmatpush1.bf16.msra.mxu0 0
      %2719 = vmatprep.subr.bf16.mxu0 0
      %2720 = vmatpush1.bf16.msra.mxu0 0
      %2721 = vmatprep.subr.bf16.mxu0 0
      %2722 = vmatpush1.bf16.msra.mxu0 0
      %2723 = vmatprep.mubr.bf16.mxu0 0
      %2724 = vmatmul.mubr.bf16.gmra.mrb[0].mxu0 %v2611
      %v2725 = vpop.f32.mrb[0].mxu0
      %v2726 = vadd.f32 0.0, %v2725
      %v2727 = vpop.f32.mrb[0].mxu0
      %v2728 = vpop.f32.mrb[0].mxu0
      %v2729 = vadd.f32 0.0, %v2728
      %v2730 = vpop.f32.mrb[0].mxu0
      %2731 = vmatprep.mubr.bf16.mxu0 0
      %2732 = vmatmul.mubr.bf16.gmra.mrb[0].mxu0 %v2612
      %v2733 = vpop.f32.mrb[0].mxu0
      %v2734 = vadd.f32 0.0, %v2733
      %v2735 = vpop.f32.mrb[0].mxu0
      %v2736 = vpop.f32.mrb[0].mxu0
      %v2737 = vadd.f32 0.0, %v2736
      %v2738 = vpop.f32.mrb[0].mxu0
      %2739 = vmatprep.mubr.bf16.mxu0 0
      %2740 = vmatmul.mubr.bf16.gmra.mrb[0].mxu0 %v2613
      %v2741 = vpop.f32.mrb[0].mxu0
      %v2742 = vadd.f32 0.0, %v2741
      %v2743 = vpop.f32.mrb[0].mxu0
      %v2744 = vpop.f32.mrb[0].mxu0
      %v2745 = vadd.f32 0.0, %v2744
      %v2746 = vpop.f32.mrb[0].mxu0
      %2747 = vmatprep.mubr.bf16.mxu0 0
      %2748 = vmatmul.mubr.bf16.gmra.mrb[0].mxu0 %v2614
      %v2749 = vpop.f32.mrb[0].mxu0
      %v2750 = vadd.f32 0.0, %v2749
      %v2751 = vpop.f32.mrb[0].mxu0
      %v2752 = vpop.f32.mrb[0].mxu0
      %v2753 = vadd.f32 0.0, %v2752
      %v2754 = vpop.f32.mrb[0].mxu0
      %2755 = vmatprep.mubr.bf16.mxu0 0
      %2756 = vmatmul.mubr.bf16.gmra.mrb[0].mxu0 %v2615
      %v2757 = vpop.f32.mrb[0].mxu0
      %v2758 = vadd.f32 0.0, %v2757
      %v2759 = vpop.f32.mrb[0].mxu0
      %v2760 = vpop.f32.mrb[0].mxu0
      %v2761 = vadd.f32 0.0, %v2760
      %v2762 = vpop.f32.mrb[0].mxu0
      %2763 = vmatprep.mubr.bf16.mxu0 0
      %2764 = vmatmul.mubr.bf16.gmra.mrb[0].mxu0 %v2616
      %v2765 = vpop.f32.mrb[0].mxu0
      %v2766 = vadd.f32 0.0, %v2765
      %v2767 = vpop.f32.mrb[0].mxu0
      %v2768 = vpop.f32.mrb[0].mxu0
      %v2769 = vadd.f32 0.0, %v2768
      %v2770 = vpop.f32.mrb[0].mxu0
      %2771 = vmatprep.mubr.bf16.mxu0 0
      %2772 = vmatmul.mubr.bf16.gmra.mrb[0].mxu0 %v2617
      %v2773 = vpop.f32.mrb[0].mxu0
      %v2774 = vadd.f32 0.0, %v2773
      %v2775 = vpop.f32.mrb[0].mxu0
      %v2776 = vpop.f32.mrb[0].mxu0
      %v2777 = vadd.f32 0.0, %v2776
      %v2778 = vpop.f32.mrb[0].mxu0
      %2779 = vmatprep.mubr.bf16.mxu0 0
      %2780 = vmatmul.mubr.bf16.gmra.mrb[0].mxu0 %v2618
      %v2781 = vpop.f32.mrb[0].mxu0
      %v2782 = vadd.f32 0.0, %v2781
      %v2783 = vpop.f32.mrb[0].mxu0
      %v2784 = vpop.f32.mrb[0].mxu0
      %v2785 = vadd.f32 0.0, %v2784
      %v2786 = vpop.f32.mrb[0].mxu0
      %2787 = vmatprep.mubr.bf16.mxu0 0
      %2788 = vmatmul.mubr.bf16.gmra.mrb[0].mxu0 %v2619
      %v2789 = vpop.f32.mrb[0].mxu0
      %v2790 = vadd.f32 0.0, %v2789
      %v2791 = vpop.f32.mrb[0].mxu0
      %v2792 = vpop.f32.mrb[0].mxu0
      %v2793 = vadd.f32 0.0, %v2792
      %v2794 = vpop.f32.mrb[0].mxu0
      %2795 = vmatprep.mubr.bf16.mxu0 0
      %2796 = vmatmul.mubr.bf16.gmra.mrb[0].mxu0 %v2620
      %v2797 = vpop.f32.mrb[0].mxu0
      %v2798 = vadd.f32 0.0, %v2797
      %v2799 = vpop.f32.mrb[0].mxu0
      %v2800 = vpop.f32.mrb[0].mxu0
      %v2801 = vadd.f32 0.0, %v2800
      %v2802 = vpop.f32.mrb[0].mxu0
      %2803 = vmatprep.mubr.bf16.mxu0 0
      %2804 = vmatmul.mubr.bf16.gmra.mrb[0].mxu0 %v2621
      %v2805 = vpop.f32.mrb[0].mxu0
      %v2806 = vadd.f32 0.0, %v2805
      %v2807 = vpop.f32.mrb[0].mxu0
      %v2808 = vpop.f32.mrb[0].mxu0
      %v2809 = vadd.f32 0.0, %v2808
      %v2810 = vpop.f32.mrb[0].mxu0
      %2811 = vmatprep.mubr.bf16.mxu0 0
      %2812 = vmatmul.mubr.bf16.gmra.mrb[0].mxu0 %v2622
      %v2813 = vpop.f32.mrb[0].mxu0
      %v2814 = vadd.f32 0.0, %v2813
      %v2815 = vpop.f32.mrb[0].mxu0
      %v2816 = vpop.f32.mrb[0].mxu0
      %v2817 = vadd.f32 0.0, %v2816
      %v2818 = vpop.f32.mrb[0].mxu0
      %2819 = vmatprep.mubr.bf16.mxu0 0
      %2820 = vmatmul.mubr.bf16.gmra.mrb[0].mxu0 %v2623
      %v2821 = vpop.f32.mrb[0].mxu0
      %v2822 = vadd.f32 0.0, %v2821
      %v2823 = vpop.f32.mrb[0].mxu0
      %v2824 = vpop.f32.mrb[0].mxu0
      %v2825 = vadd.f32 0.0, %v2824
      %v2826 = vpop.f32.mrb[0].mxu0
      %2827 = vmatprep.mubr.bf16.mxu0 0
      %2828 = vmatmul.mubr.bf16.gmra.mrb[0].mxu0 %v2624
      %v2829 = vpop.f32.mrb[0].mxu0
      %v2830 = vadd.f32 0.0, %v2829
      %v2831 = vpop.f32.mrb[0].mxu0
      %v2832 = vpop.f32.mrb[0].mxu0
      %v2833 = vadd.f32 0.0, %v2832
      %v2834 = vpop.f32.mrb[0].mxu0
      %2835 = vmatprep.mubr.bf16.mxu0 0
      %2836 = vmatmul.mubr.bf16.gmra.mrb[0].mxu0 %v2625
      %v2837 = vpop.f32.mrb[0].mxu0
      %v2838 = vadd.f32 0.0, %v2837
      %v2839 = vpop.f32.mrb[0].mxu0
      %v2840 = vpop.f32.mrb[0].mxu0
      %v2841 = vadd.f32 0.0, %v2840
      %v2842 = vpop.f32.mrb[0].mxu0
      %2843 = vmatprep.mubr.bf16.mxu0 0
      %2844 = vmatmul.mubr.bf16.gmra.mrb[0].mxu0 %v2626
      %v2845 = vpop.f32.mrb[0].mxu0
      %v2846 = vadd.f32 0.0, %v2845
      %v2847 = vpop.f32.mrb[0].mxu0
      %v2848 = vpop.f32.mrb[0].mxu0
      %v2849 = vadd.f32 0.0, %v2848
      %v2850 = vpop.f32.mrb[0].mxu0
      %2851 = vdwg.mxu0
      %v2852 = vadd.f32 %v2130, %v2726
      %v2853 = vadd.f32 %v2131, %v2729
      %v2854 = vadd.f32 %v2132, %v2734
      %v2855 = vadd.f32 %v2133, %v2737
      %v2856 = vadd.f32 %v2134, %v2742
      %v2857 = vadd.f32 %v2135, %v2745
      %v2858 = vadd.f32 %v2136, %v2750
      %v2859 = vadd.f32 %v2137, %v2753
      %v2860 = vadd.f32 %v2138, %v2758
      %v2861 = vadd.f32 %v2139, %v2761
      %v2862 = vadd.f32 %v2140, %v2766
      %v2863 = vadd.f32 %v2141, %v2769
      %v2864 = vadd.f32 %v2142, %v2774
      %v2865 = vadd.f32 %v2143, %v2777
      %v2866 = vadd.f32 %v2144, %v2782
      %v2867 = vadd.f32 %v2145, %v2785
      %v2868 = vadd.f32 %v2146, %v2790
      %v2869 = vadd.f32 %v2147, %v2793
      %v2870 = vadd.f32 %v2148, %v2798
      %v2871 = vadd.f32 %v2149, %v2801
      %v2872 = vadd.f32 %v2150, %v2806
      %v2873 = vadd.f32 %v2151, %v2809
      %v2874 = vadd.f32 %v2152, %v2814
      %v2875 = vadd.f32 %v2153, %v2817
      %v2876 = vadd.f32 %v2154, %v2822
      %v2877 = vadd.f32 %v2155, %v2825
      %v2878 = vadd.f32 %v2156, %v2830
      %v2879 = vadd.f32 %v2157, %v2833
      %v2880 = vadd.f32 %v2158, %v2838
      %v2881 = vadd.f32 %v2159, %v2841
      %v2882 = vadd.f32 %v2160, %v2846
      %v2883 = vadd.f32 %v2161, %v2849
      %s2884 = scalar_lea.vmem %s1, 256
      %v2885 = vld [vmem:[%s2884] sm:$0xf]
      %v2886 = vld [vmem:[%s2884 + $0x4] sm:$0xf]
      %v2887 = vld [vmem:[%s2884 + $0x8] sm:$0xf]
      %v2888 = vld [vmem:[%s2884 + $0xc] sm:$0xf]
      %v2889 = vld [vmem:[%s2884 + $0x10] sm:$0xf]
      %v2890 = vld [vmem:[%s2884 + $0x14] sm:$0xf]
      %v2891 = vld [vmem:[%s2884 + $0x18] sm:$0xf]
      %v2892 = vld [vmem:[%s2884 + $0x1c] sm:$0xf]
      %v2893 = vld [vmem:[%s2884 + $0x20] sm:$0xf]
      %v2894 = vld [vmem:[%s2884 + $0x24] sm:$0xf]
      %v2895 = vld [vmem:[%s2884 + $0x28] sm:$0xf]
      %v2896 = vld [vmem:[%s2884 + $0x2c] sm:$0xf]
      %v2897 = vld [vmem:[%s2884 + $0x30] sm:$0xf]
      %v2898 = vld [vmem:[%s2884 + $0x34] sm:$0xf]
      %v2899 = vld [vmem:[%s2884 + $0x38] sm:$0xf]
      %v2900 = vld [vmem:[%s2884 + $0x3c] sm:$0xf]
      %v2933 = vunpack.c.l.b16 %v2163
      %v2934 = vunpack.c.l.b16 %v2164
      %v2935 = vunpack.c.l.b16 %v2166
      %v2936 = vunpack.c.l.b16 %v2167
      %v2937 = vunpack.c.l.b16 %v2169
      %v2938 = vunpack.c.l.b16 %v2170
      %v2939 = vunpack.c.l.b16 %v2172
      %v2940 = vunpack.c.l.b16 %v2173
      %v2941 = vunpack.c.l.b16 %v2175
      %v2942 = vunpack.c.l.b16 %v2176
      %v2943 = vunpack.c.l.b16 %v2178
      %v2944 = vunpack.c.l.b16 %v2179
      %v2945 = vunpack.c.l.b16 %v2181
      %v2946 = vunpack.c.l.b16 %v2182
      %v2947 = vunpack.c.l.b16 %v2184
      %v2948 = vunpack.c.l.b16 %v2185
      %v2949 = vunpack.c.l.b16 %v2187
      %v2950 = vunpack.c.l.b16 %v2188
      %v2951 = vunpack.c.l.b16 %v2190
      %v2952 = vunpack.c.l.b16 %v2191
      %v2953 = vunpack.c.l.b16 %v2193
      %v2954 = vunpack.c.l.b16 %v2194
      %v2955 = vunpack.c.l.b16 %v2196
      %v2956 = vunpack.c.l.b16 %v2197
      %v2957 = vunpack.c.l.b16 %v2199
      %v2958 = vunpack.c.l.b16 %v2200
      %v2959 = vunpack.c.l.b16 %v2202
      %v2960 = vunpack.c.l.b16 %v2203
      %v2961 = vunpack.c.l.b16 %v2205
      %v2962 = vunpack.c.l.b16 %v2206
      %v2963 = vunpack.c.l.b16 %v2208
      %v2964 = vunpack.c.l.b16 %v2209
      %v2965 = vpack.c.b16 %v2934, %v2933
      %v2966 = vpack.c.b16 %v2936, %v2935
      %v2967 = vpack.c.b16 %v2938, %v2937
      %v2968 = vpack.c.b16 %v2940, %v2939
      %v2969 = vpack.c.b16 %v2942, %v2941
      %v2970 = vpack.c.b16 %v2944, %v2943
      %v2971 = vpack.c.b16 %v2946, %v2945
      %v2972 = vpack.c.b16 %v2948, %v2947
      %v2973 = vpack.c.b16 %v2950, %v2949
      %v2974 = vpack.c.b16 %v2952, %v2951
      %v2975 = vpack.c.b16 %v2954, %v2953
      %v2976 = vpack.c.b16 %v2956, %v2955
      %v2977 = vpack.c.b16 %v2958, %v2957
      %v2978 = vpack.c.b16 %v2960, %v2959
      %v2979 = vpack.c.b16 %v2962, %v2961
      %v2980 = vpack.c.b16 %v2964, %v2963
      %v3013 = vunpack.c.l.b16 %v2885
      %v3014 = vunpack.c.l.b16 %v2886
      %v3015 = vunpack.c.l.b16 %v2887
      %v3016 = vunpack.c.l.b16 %v2888
      %v3017 = vunpack.c.l.b16 %v2889
      %v3018 = vunpack.c.l.b16 %v2890
      %v3019 = vunpack.c.l.b16 %v2891
      %v3020 = vunpack.c.l.b16 %v2892
      %v3021 = vunpack.c.l.b16 %v2893
      %v3022 = vunpack.c.l.b16 %v2894
      %v3023 = vunpack.c.l.b16 %v2895
      %v3024 = vunpack.c.l.b16 %v2896
      %v3025 = vunpack.c.l.b16 %v2897
      %v3026 = vunpack.c.l.b16 %v2898
      %v3027 = vunpack.c.l.b16 %v2899
      %v3028 = vunpack.c.l.b16 %v2900
      %v3029 = vpack.c.b16 %v3014, %v3013
      %v3030 = vpack.c.b16 %v3016, %v3015
      %v3031 = vpack.c.b16 %v3018, %v3017
      %v3032 = vpack.c.b16 %v3020, %v3019
      %v3033 = vpack.c.b16 %v3022, %v3021
      %v3034 = vpack.c.b16 %v3024, %v3023
      %v3035 = vpack.c.b16 %v3026, %v3025
      %v3036 = vpack.c.b16 %v3028, %v3027
      %3045 = vmatprep.subr.bf16.mxu0 0
      %3046 = vmatpush1.bf16.msra.mxu0 %v3029
      %3047 = vmatprep.subr.bf16.mxu0 0
      %3048 = vmatpush1.bf16.msra.mxu0 %v3030
      %3049 = vmatprep.subr.bf16.mxu0 0
      %3050 = vmatpush1.bf16.msra.mxu0 %v3031
      %3051 = vmatprep.subr.bf16.mxu0 0
      %3052 = vmatpush1.bf16.msra.mxu0 %v3032
      %3053 = vmatprep.subr.bf16.mxu0 0
      %3054 = vmatpush1.bf16.msra.mxu0 %v3033
      %3055 = vmatprep.subr.bf16.mxu0 0
      %3056 = vmatpush1.bf16.msra.mxu0 %v3034
      %3057 = vmatprep.subr.bf16.mxu0 0
      %3058 = vmatpush1.bf16.msra.mxu0 %v3035
      %3059 = vmatprep.subr.bf16.mxu0 0
      %3060 = vmatpush1.bf16.msra.mxu0 %v3036
      %3061 = vmatprep.subr.bf16.mxu0 0
      %3062 = vmatpush1.bf16.msra.mxu0 0
      %3063 = vmatprep.subr.bf16.mxu0 0
      %3064 = vmatpush1.bf16.msra.mxu0 0
      %3065 = vmatprep.subr.bf16.mxu0 0
      %3066 = vmatpush1.bf16.msra.mxu0 0
      %3067 = vmatprep.subr.bf16.mxu0 0
      %3068 = vmatpush1.bf16.msra.mxu0 0
      %3069 = vmatprep.subr.bf16.mxu0 0
      %3070 = vmatpush1.bf16.msra.mxu0 0
      %3071 = vmatprep.subr.bf16.mxu0 0
      %3072 = vmatpush1.bf16.msra.mxu0 0
      %3073 = vmatprep.subr.bf16.mxu0 0
      %3074 = vmatpush1.bf16.msra.mxu0 0
      %3075 = vmatprep.subr.bf16.mxu0 0
      %3076 = vmatpush1.bf16.msra.mxu0 0
      %3077 = vmatprep.mubr.bf16.mxu0 0
      %3078 = vmatmul.mubr.bf16.gmra.mrb[0].mxu0 %v2965
      %v3079 = vpop.f32.mrb[0].mxu0
      %v3080 = vadd.f32 0.0, %v3079
      %v3081 = vpop.f32.mrb[0].mxu0
      %v3082 = vpop.f32.mrb[0].mxu0
      %v3083 = vadd.f32 0.0, %v3082
      %v3084 = vpop.f32.mrb[0].mxu0
      %3085 = vmatprep.mubr.bf16.mxu0 0
      %3086 = vmatmul.mubr.bf16.gmra.mrb[0].mxu0 %v2966
      %v3087 = vpop.f32.mrb[0].mxu0
      %v3088 = vadd.f32 0.0, %v3087
      %v3089 = vpop.f32.mrb[0].mxu0
      %v3090 = vpop.f32.mrb[0].mxu0
      %v3091 = vadd.f32 0.0, %v3090
      %v3092 = vpop.f32.mrb[0].mxu0
      %3093 = vmatprep.mubr.bf16.mxu0 0
      %3094 = vmatmul.mubr.bf16.gmra.mrb[0].mxu0 %v2967
      %v3095 = vpop.f32.mrb[0].mxu0
      %v3096 = vadd.f32 0.0, %v3095
      %v3097 = vpop.f32.mrb[0].mxu0
      %v3098 = vpop.f32.mrb[0].mxu0
      %v3099 = vadd.f32 0.0, %v3098
      %v3100 = vpop.f32.mrb[0].mxu0
      %3101 = vmatprep.mubr.bf16.mxu0 0
      %3102 = vmatmul.mubr.bf16.gmra.mrb[0].mxu0 %v2968
      %v3103 = vpop.f32.mrb[0].mxu0
      %v3104 = vadd.f32 0.0, %v3103
      %v3105 = vpop.f32.mrb[0].mxu0
      %v3106 = vpop.f32.mrb[0].mxu0
      %v3107 = vadd.f32 0.0, %v3106
      %v3108 = vpop.f32.mrb[0].mxu0
      %3109 = vmatprep.mubr.bf16.mxu0 0
      %3110 = vmatmul.mubr.bf16.gmra.mrb[0].mxu0 %v2969
      %v3111 = vpop.f32.mrb[0].mxu0
      %v3112 = vadd.f32 0.0, %v3111
      %v3113 = vpop.f32.mrb[0].mxu0
      %v3114 = vpop.f32.mrb[0].mxu0
      %v3115 = vadd.f32 0.0, %v3114
      %v3116 = vpop.f32.mrb[0].mxu0
      %3117 = vmatprep.mubr.bf16.mxu0 0
      %3118 = vmatmul.mubr.bf16.gmra.mrb[0].mxu0 %v2970
      %v3119 = vpop.f32.mrb[0].mxu0
      %v3120 = vadd.f32 0.0, %v3119
      %v3121 = vpop.f32.mrb[0].mxu0
      %v3122 = vpop.f32.mrb[0].mxu0
      %v3123 = vadd.f32 0.0, %v3122
      %v3124 = vpop.f32.mrb[0].mxu0
      %3125 = vmatprep.mubr.bf16.mxu0 0
      %3126 = vmatmul.mubr.bf16.gmra.mrb[0].mxu0 %v2971
      %v3127 = vpop.f32.mrb[0].mxu0
      %v3128 = vadd.f32 0.0, %v3127
      %v3129 = vpop.f32.mrb[0].mxu0
      %v3130 = vpop.f32.mrb[0].mxu0
      %v3131 = vadd.f32 0.0, %v3130
      %v3132 = vpop.f32.mrb[0].mxu0
      %3133 = vmatprep.mubr.bf16.mxu0 0
      %3134 = vmatmul.mubr.bf16.gmra.mrb[0].mxu0 %v2972
      %v3135 = vpop.f32.mrb[0].mxu0
      %v3136 = vadd.f32 0.0, %v3135
      %v3137 = vpop.f32.mrb[0].mxu0
      %v3138 = vpop.f32.mrb[0].mxu0
      %v3139 = vadd.f32 0.0, %v3138
      %v3140 = vpop.f32.mrb[0].mxu0
      %3141 = vmatprep.mubr.bf16.mxu0 0
      %3142 = vmatmul.mubr.bf16.gmra.mrb[0].mxu0 %v2973
      %v3143 = vpop.f32.mrb[0].mxu0
      %v3144 = vadd.f32 0.0, %v3143
      %v3145 = vpop.f32.mrb[0].mxu0
      %v3146 = vpop.f32.mrb[0].mxu0
      %v3147 = vadd.f32 0.0, %v3146
      %v3148 = vpop.f32.mrb[0].mxu0
      %3149 = vmatprep.mubr.bf16.mxu0 0
      %3150 = vmatmul.mubr.bf16.gmra.mrb[0].mxu0 %v2974
      %v3151 = vpop.f32.mrb[0].mxu0
      %v3152 = vadd.f32 0.0, %v3151
      %v3153 = vpop.f32.mrb[0].mxu0
      %v3154 = vpop.f32.mrb[0].mxu0
      %v3155 = vadd.f32 0.0, %v3154
      %v3156 = vpop.f32.mrb[0].mxu0
      %3157 = vmatprep.mubr.bf16.mxu0 0
      %3158 = vmatmul.mubr.bf16.gmra.mrb[0].mxu0 %v2975
      %v3159 = vpop.f32.mrb[0].mxu0
      %v3160 = vadd.f32 0.0, %v3159
      %v3161 = vpop.f32.mrb[0].mxu0
      %v3162 = vpop.f32.mrb[0].mxu0
      %v3163 = vadd.f32 0.0, %v3162
      %v3164 = vpop.f32.mrb[0].mxu0
      %3165 = vmatprep.mubr.bf16.mxu0 0
      %3166 = vmatmul.mubr.bf16.gmra.mrb[0].mxu0 %v2976
      %v3167 = vpop.f32.mrb[0].mxu0
      %v3168 = vadd.f32 0.0, %v3167
      %v3169 = vpop.f32.mrb[0].mxu0
      %v3170 = vpop.f32.mrb[0].mxu0
      %v3171 = vadd.f32 0.0, %v3170
      %v3172 = vpop.f32.mrb[0].mxu0
      %3173 = vmatprep.mubr.bf16.mxu0 0
      %3174 = vmatmul.mubr.bf16.gmra.mrb[0].mxu0 %v2977
      %v3175 = vpop.f32.mrb[0].mxu0
      %v3176 = vadd.f32 0.0, %v3175
      %v3177 = vpop.f32.mrb[0].mxu0
      %v3178 = vpop.f32.mrb[0].mxu0
      %v3179 = vadd.f32 0.0, %v3178
      %v3180 = vpop.f32.mrb[0].mxu0
      %3181 = vmatprep.mubr.bf16.mxu0 0
      %3182 = vmatmul.mubr.bf16.gmra.mrb[0].mxu0 %v2978
      %v3183 = vpop.f32.mrb[0].mxu0
      %v3184 = vadd.f32 0.0, %v3183
      %v3185 = vpop.f32.mrb[0].mxu0
      %v3186 = vpop.f32.mrb[0].mxu0
      %v3187 = vadd.f32 0.0, %v3186
      %v3188 = vpop.f32.mrb[0].mxu0
      %3189 = vmatprep.mubr.bf16.mxu0 0
      %3190 = vmatmul.mubr.bf16.gmra.mrb[0].mxu0 %v2979
      %v3191 = vpop.f32.mrb[0].mxu0
      %v3192 = vadd.f32 0.0, %v3191
      %v3193 = vpop.f32.mrb[0].mxu0
      %v3194 = vpop.f32.mrb[0].mxu0
      %v3195 = vadd.f32 0.0, %v3194
      %v3196 = vpop.f32.mrb[0].mxu0
      %3197 = vmatprep.mubr.bf16.mxu0 0
      %3198 = vmatmul.mubr.bf16.gmra.mrb[0].mxu0 %v2980
      %v3199 = vpop.f32.mrb[0].mxu0
      %v3200 = vadd.f32 0.0, %v3199
      %v3201 = vpop.f32.mrb[0].mxu0
      %v3202 = vpop.f32.mrb[0].mxu0
      %v3203 = vadd.f32 0.0, %v3202
      %v3204 = vpop.f32.mrb[0].mxu0
      %3205 = vdwg.mxu0
      %v3206 = vadd.f32 %v2852, %v3080
      %v3207 = vadd.f32 %v2853, %v3083
      %v3208 = vadd.f32 %v2854, %v3088
      %v3209 = vadd.f32 %v2855, %v3091
      %v3210 = vadd.f32 %v2856, %v3096
      %v3211 = vadd.f32 %v2857, %v3099
      %v3212 = vadd.f32 %v2858, %v3104
      %v3213 = vadd.f32 %v2859, %v3107
      %v3214 = vadd.f32 %v2860, %v3112
      %v3215 = vadd.f32 %v2861, %v3115
      %v3216 = vadd.f32 %v2862, %v3120
      %v3217 = vadd.f32 %v2863, %v3123
      %v3218 = vadd.f32 %v2864, %v3128
      %v3219 = vadd.f32 %v2865, %v3131
      %v3220 = vadd.f32 %v2866, %v3136
      %v3221 = vadd.f32 %v2867, %v3139
      %v3222 = vadd.f32 %v2868, %v3144
      %v3223 = vadd.f32 %v2869, %v3147
      %v3224 = vadd.f32 %v2870, %v3152
      %v3225 = vadd.f32 %v2871, %v3155
      %v3226 = vadd.f32 %v2872, %v3160
      %v3227 = vadd.f32 %v2873, %v3163
      %v3228 = vadd.f32 %v2874, %v3168
      %v3229 = vadd.f32 %v2875, %v3171
      %v3230 = vadd.f32 %v2876, %v3176
      %v3231 = vadd.f32 %v2877, %v3179
      %v3232 = vadd.f32 %v2878, %v3184
      %v3233 = vadd.f32 %v2879, %v3187
      %v3234 = vadd.f32 %v2880, %v3192
      %v3235 = vadd.f32 %v2881, %v3195
      %v3236 = vadd.f32 %v2882, %v3200
      %v3237 = vadd.f32 %v2883, %v3203
      %v3238 = vld [vmem:[%s359 + $0x4] sm:$0xf]
      %v3239 = vld [vmem:[%s359 + $0x8] sm:$0xf]
      %v3240 = vld [vmem:[%s359 + $0xc] sm:$0x1]
      %v3241 = vld [vmem:[%s359 + $0x14] sm:$0xf]
      %v3242 = vld [vmem:[%s359 + $0x18] sm:$0xf]
      %v3243 = vld [vmem:[%s359 + $0x1c] sm:$0x1]
      %v3244 = vld [vmem:[%s359 + $0x24] sm:$0xf]
      %v3245 = vld [vmem:[%s359 + $0x28] sm:$0xf]
      %v3246 = vld [vmem:[%s359 + $0x2c] sm:$0x1]
      %v3247 = vld [vmem:[%s359 + $0x34] sm:$0xf]
      %v3248 = vld [vmem:[%s359 + $0x38] sm:$0xf]
      %v3249 = vld [vmem:[%s359 + $0x3c] sm:$0x1]
      %v3250 = vld [vmem:[%s359 + $0x44] sm:$0xf]
      %v3251 = vld [vmem:[%s359 + $0x48] sm:$0xf]
      %v3252 = vld [vmem:[%s359 + $0x4c] sm:$0x1]
      %v3253 = vld [vmem:[%s359 + $0x54] sm:$0xf]
      %v3254 = vld [vmem:[%s359 + $0x58] sm:$0xf]
      %v3255 = vld [vmem:[%s359 + $0x5c] sm:$0x1]
      %v3256 = vld [vmem:[%s359 + $0x64] sm:$0xf]
      %v3257 = vld [vmem:[%s359 + $0x68] sm:$0xf]
      %v3258 = vld [vmem:[%s359 + $0x6c] sm:$0x1]
      %v3259 = vld [vmem:[%s359 + $0x74] sm:$0xf]
      %v3260 = vld [vmem:[%s359 + $0x78] sm:$0xf]
      %v3261 = vld [vmem:[%s359 + $0x7c] sm:$0x1]
      %v3262 = vld [vmem:[%s359 + $0x84] sm:$0xf]
      %v3263 = vld [vmem:[%s359 + $0x88] sm:$0xf]
      %v3264 = vld [vmem:[%s359 + $0x8c] sm:$0x1]
      %v3265 = vld [vmem:[%s359 + $0x94] sm:$0xf]
      %v3266 = vld [vmem:[%s359 + $0x98] sm:$0xf]
      %v3267 = vld [vmem:[%s359 + $0x9c] sm:$0x1]
      %v3268 = vld [vmem:[%s359 + $0xa4] sm:$0xf]
      %v3269 = vld [vmem:[%s359 + $0xa8] sm:$0xf]
      %v3270 = vld [vmem:[%s359 + $0xac] sm:$0x1]
      %v3271 = vld [vmem:[%s359 + $0xb4] sm:$0xf]
      %v3272 = vld [vmem:[%s359 + $0xb8] sm:$0xf]
      %v3273 = vld [vmem:[%s359 + $0xbc] sm:$0x1]
      %v3274 = vld [vmem:[%s359 + $0xc4] sm:$0xf]
      %v3275 = vld [vmem:[%s359 + $0xc8] sm:$0xf]
      %v3276 = vld [vmem:[%s359 + $0xcc] sm:$0x1]
      %v3277 = vld [vmem:[%s359 + $0xd4] sm:$0xf]
      %v3278 = vld [vmem:[%s359 + $0xd8] sm:$0xf]
      %v3279 = vld [vmem:[%s359 + $0xdc] sm:$0x1]
      %v3280 = vld [vmem:[%s359 + $0xe4] sm:$0xf]
      %v3281 = vld [vmem:[%s359 + $0xe8] sm:$0xf]
      %v3282 = vld [vmem:[%s359 + $0xec] sm:$0x1]
      %v3283 = vld [vmem:[%s359 + $0xf4] sm:$0xf]
      %v3284 = vld [vmem:[%s359 + $0xf8] sm:$0xf]
      %v3285 = vld [vmem:[%s359 + $0xfc] sm:$0x1]
      %v3287 = vshrl.u32 %v3238, 16
      %v3289 = vrot.slane %v3287, 4
      %v3290 = vshll.u32 %v3238, 16
      %v3292 = vrot.slane %v3290, 5
      %v3293 = vor.u32 %v3289, %v3292
      %v3294 = vrot.slane %v3293, 4
      %v3296 = vshll.u32 %v3239, 16
      %v3298 = vrot.slane %v3296, 5
      %v3299 = vsel %vm1455, %v3294, %v3298
      %v3300 = vshrl.u32 %v3239, 16
      %v3302 = vrot.slane %v3300, 4
      %v3303 = vor.u32 %v3302, %v3298
      %v3304 = vrot.slane %v3303, 4
      %v3306 = vshll.u32 %v3240, 16
      %v3308 = vrot.slane %v3306, 5
      %v3309 = vsel %vm1455, %v3304, %v3308
      %v3311 = vshrl.u32 %v3241, 16
      %v3313 = vrot.slane %v3311, 4
      %v3314 = vshll.u32 %v3241, 16
      %v3316 = vrot.slane %v3314, 5
      %v3317 = vor.u32 %v3313, %v3316
      %v3318 = vrot.slane %v3317, 4
      %v3320 = vshll.u32 %v3242, 16
      %v3322 = vrot.slane %v3320, 5
      %v3323 = vsel %vm1455, %v3318, %v3322
      %v3324 = vshrl.u32 %v3242, 16
      %v3326 = vrot.slane %v3324, 4
      %v3327 = vor.u32 %v3326, %v3322
      %v3328 = vrot.slane %v3327, 4
      %v3330 = vshll.u32 %v3243, 16
      %v3332 = vrot.slane %v3330, 5
      %v3333 = vsel %vm1455, %v3328, %v3332
      %v3335 = vshrl.u32 %v3244, 16
      %v3337 = vrot.slane %v3335, 4
      %v3338 = vshll.u32 %v3244, 16
      %v3340 = vrot.slane %v3338, 5
      %v3341 = vor.u32 %v3337, %v3340
      %v3342 = vrot.slane %v3341, 4
      %v3344 = vshll.u32 %v3245, 16
      %v3346 = vrot.slane %v3344, 5
      %v3347 = vsel %vm1455, %v3342, %v3346
      %v3348 = vshrl.u32 %v3245, 16
      %v3350 = vrot.slane %v3348, 4
      %v3351 = vor.u32 %v3350, %v3346
      %v3352 = vrot.slane %v3351, 4
      %v3354 = vshll.u32 %v3246, 16
      %v3356 = vrot.slane %v3354, 5
      %v3357 = vsel %vm1455, %v3352, %v3356
      %v3359 = vshrl.u32 %v3247, 16
      %v3361 = vrot.slane %v3359, 4
      %v3362 = vshll.u32 %v3247, 16
      %v3364 = vrot.slane %v3362, 5
      %v3365 = vor.u32 %v3361, %v3364
      %v3366 = vrot.slane %v3365, 4
      %v3368 = vshll.u32 %v3248, 16
      %v3370 = vrot.slane %v3368, 5
      %v3371 = vsel %vm1455, %v3366, %v3370
      %v3372 = vshrl.u32 %v3248, 16
      %v3374 = vrot.slane %v3372, 4
      %v3375 = vor.u32 %v3374, %v3370
      %v3376 = vrot.slane %v3375, 4
      %v3378 = vshll.u32 %v3249, 16
      %v3380 = vrot.slane %v3378, 5
      %v3381 = vsel %vm1455, %v3376, %v3380
      %v3383 = vshrl.u32 %v3250, 16
      %v3385 = vrot.slane %v3383, 4
      %v3386 = vshll.u32 %v3250, 16
      %v3388 = vrot.slane %v3386, 5
      %v3389 = vor.u32 %v3385, %v3388
      %v3390 = vrot.slane %v3389, 4
      %v3392 = vshll.u32 %v3251, 16
      %v3394 = vrot.slane %v3392, 5
      %v3395 = vsel %vm1455, %v3390, %v3394
      %v3396 = vshrl.u32 %v3251, 16
      %v3398 = vrot.slane %v3396, 4
      %v3399 = vor.u32 %v3398, %v3394
      %v3400 = vrot.slane %v3399, 4
      %v3402 = vshll.u32 %v3252, 16
      %v3404 = vrot.slane %v3402, 5
      %v3405 = vsel %vm1455, %v3400, %v3404
      %v3407 = vshrl.u32 %v3253, 16
      %v3409 = vrot.slane %v3407, 4
      %v3410 = vshll.u32 %v3253, 16
      %v3412 = vrot.slane %v3410, 5
      %v3413 = vor.u32 %v3409, %v3412
      %v3414 = vrot.slane %v3413, 4
      %v3416 = vshll.u32 %v3254, 16
      %v3418 = vrot.slane %v3416, 5
      %v3419 = vsel %vm1455, %v3414, %v3418
      %v3420 = vshrl.u32 %v3254, 16
      %v3422 = vrot.slane %v3420, 4
      %v3423 = vor.u32 %v3422, %v3418
      %v3424 = vrot.slane %v3423, 4
      %v3426 = vshll.u32 %v3255, 16
      %v3428 = vrot.slane %v3426, 5
      %v3429 = vsel %vm1455, %v3424, %v3428
      %v3431 = vshrl.u32 %v3256, 16
      %v3433 = vrot.slane %v3431, 4
      %v3434 = vshll.u32 %v3256, 16
      %v3436 = vrot.slane %v3434, 5
      %v3437 = vor.u32 %v3433, %v3436
      %v3438 = vrot.slane %v3437, 4
      %v3440 = vshll.u32 %v3257, 16
      %v3442 = vrot.slane %v3440, 5
      %v3443 = vsel %vm1455, %v3438, %v3442
      %v3444 = vshrl.u32 %v3257, 16
      %v3446 = vrot.slane %v3444, 4
      %v3447 = vor.u32 %v3446, %v3442
      %v3448 = vrot.slane %v3447, 4
      %v3450 = vshll.u32 %v3258, 16
      %v3452 = vrot.slane %v3450, 5
      %v3453 = vsel %vm1455, %v3448, %v3452
      %v3455 = vshrl.u32 %v3259, 16
      %v3457 = vrot.slane %v3455, 4
      %v3458 = vshll.u32 %v3259, 16
      %v3460 = vrot.slane %v3458, 5
      %v3461 = vor.u32 %v3457, %v3460
      %v3462 = vrot.slane %v3461, 4
      %v3464 = vshll.u32 %v3260, 16
      %v3466 = vrot.slane %v3464, 5
      %v3467 = vsel %vm1455, %v3462, %v3466
      %v3468 = vshrl.u32 %v3260, 16
      %v3470 = vrot.slane %v3468, 4
      %v3471 = vor.u32 %v3470, %v3466
      %v3472 = vrot.slane %v3471, 4
      %v3474 = vshll.u32 %v3261, 16
      %v3476 = vrot.slane %v3474, 5
      %v3477 = vsel %vm1455, %v3472, %v3476
      %v3479 = vshrl.u32 %v3262, 16
      %v3481 = vrot.slane %v3479, 4
      %v3482 = vshll.u32 %v3262, 16
      %v3484 = vrot.slane %v3482, 5
      %v3485 = vor.u32 %v3481, %v3484
      %v3486 = vrot.slane %v3485, 4
      %v3488 = vshll.u32 %v3263, 16
      %v3490 = vrot.slane %v3488, 5
      %v3491 = vsel %vm1455, %v3486, %v3490
      %v3492 = vshrl.u32 %v3263, 16
      %v3494 = vrot.slane %v3492, 4
      %v3495 = vor.u32 %v3494, %v3490
      %v3496 = vrot.slane %v3495, 4
      %v3498 = vshll.u32 %v3264, 16
      %v3500 = vrot.slane %v3498, 5
      %v3501 = vsel %vm1455, %v3496, %v3500
      %v3503 = vshrl.u32 %v3265, 16
      %v3505 = vrot.slane %v3503, 4
      %v3506 = vshll.u32 %v3265, 16
      %v3508 = vrot.slane %v3506, 5
      %v3509 = vor.u32 %v3505, %v3508
      %v3510 = vrot.slane %v3509, 4
      %v3512 = vshll.u32 %v3266, 16
      %v3514 = vrot.slane %v3512, 5
      %v3515 = vsel %vm1455, %v3510, %v3514
      %v3516 = vshrl.u32 %v3266, 16
      %v3518 = vrot.slane %v3516, 4
      %v3519 = vor.u32 %v3518, %v3514
      %v3520 = vrot.slane %v3519, 4
      %v3522 = vshll.u32 %v3267, 16
      %v3524 = vrot.slane %v3522, 5
      %v3525 = vsel %vm1455, %v3520, %v3524
      %v3527 = vshrl.u32 %v3268, 16
      %v3529 = vrot.slane %v3527, 4
      %v3530 = vshll.u32 %v3268, 16
      %v3532 = vrot.slane %v3530, 5
      %v3533 = vor.u32 %v3529, %v3532
      %v3534 = vrot.slane %v3533, 4
      %v3536 = vshll.u32 %v3269, 16
      %v3538 = vrot.slane %v3536, 5
      %v3539 = vsel %vm1455, %v3534, %v3538
      %v3540 = vshrl.u32 %v3269, 16
      %v3542 = vrot.slane %v3540, 4
      %v3543 = vor.u32 %v3542, %v3538
      %v3544 = vrot.slane %v3543, 4
      %v3546 = vshll.u32 %v3270, 16
      %v3548 = vrot.slane %v3546, 5
      %v3549 = vsel %vm1455, %v3544, %v3548
      %v3551 = vshrl.u32 %v3271, 16
      %v3553 = vrot.slane %v3551, 4
      %v3554 = vshll.u32 %v3271, 16
      %v3556 = vrot.slane %v3554, 5
      %v3557 = vor.u32 %v3553, %v3556
      %v3558 = vrot.slane %v3557, 4
      %v3560 = vshll.u32 %v3272, 16
      %v3562 = vrot.slane %v3560, 5
      %v3563 = vsel %vm1455, %v3558, %v3562
      %v3564 = vshrl.u32 %v3272, 16
      %v3566 = vrot.slane %v3564, 4
      %v3567 = vor.u32 %v3566, %v3562
      %v3568 = vrot.slane %v3567, 4
      %v3570 = vshll.u32 %v3273, 16
      %v3572 = vrot.slane %v3570, 5
      %v3573 = vsel %vm1455, %v3568, %v3572
      %v3575 = vshrl.u32 %v3274, 16
      %v3577 = vrot.slane %v3575, 4
      %v3578 = vshll.u32 %v3274, 16
      %v3580 = vrot.slane %v3578, 5
      %v3581 = vor.u32 %v3577, %v3580
      %v3582 = vrot.slane %v3581, 4
      %v3584 = vshll.u32 %v3275, 16
      %v3586 = vrot.slane %v3584, 5
      %v3587 = vsel %vm1455, %v3582, %v3586
      %v3588 = vshrl.u32 %v3275, 16
      %v3590 = vrot.slane %v3588, 4
      %v3591 = vor.u32 %v3590, %v3586
      %v3592 = vrot.slane %v3591, 4
      %v3594 = vshll.u32 %v3276, 16
      %v3596 = vrot.slane %v3594, 5
      %v3597 = vsel %vm1455, %v3592, %v3596
      %v3599 = vshrl.u32 %v3277, 16
      %v3601 = vrot.slane %v3599, 4
      %v3602 = vshll.u32 %v3277, 16
      %v3604 = vrot.slane %v3602, 5
      %v3605 = vor.u32 %v3601, %v3604
      %v3606 = vrot.slane %v3605, 4
      %v3608 = vshll.u32 %v3278, 16
      %v3610 = vrot.slane %v3608, 5
      %v3611 = vsel %vm1455, %v3606, %v3610
      %v3612 = vshrl.u32 %v3278, 16
      %v3614 = vrot.slane %v3612, 4
      %v3615 = vor.u32 %v3614, %v3610
      %v3616 = vrot.slane %v3615, 4
      %v3618 = vshll.u32 %v3279, 16
      %v3620 = vrot.slane %v3618, 5
      %v3621 = vsel %vm1455, %v3616, %v3620
      %v3623 = vshrl.u32 %v3280, 16
      %v3625 = vrot.slane %v3623, 4
      %v3626 = vshll.u32 %v3280, 16
      %v3628 = vrot.slane %v3626, 5
      %v3629 = vor.u32 %v3625, %v3628
      %v3630 = vrot.slane %v3629, 4
      %v3632 = vshll.u32 %v3281, 16
      %v3634 = vrot.slane %v3632, 5
      %v3635 = vsel %vm1455, %v3630, %v3634
      %v3636 = vshrl.u32 %v3281, 16
      %v3638 = vrot.slane %v3636, 4
      %v3639 = vor.u32 %v3638, %v3634
      %v3640 = vrot.slane %v3639, 4
      %v3642 = vshll.u32 %v3282, 16
      %v3644 = vrot.slane %v3642, 5
      %v3645 = vsel %vm1455, %v3640, %v3644
      %v3647 = vshrl.u32 %v3283, 16
      %v3649 = vrot.slane %v3647, 4
      %v3650 = vshll.u32 %v3283, 16
      %v3652 = vrot.slane %v3650, 5
      %v3653 = vor.u32 %v3649, %v3652
      %v3654 = vrot.slane %v3653, 4
      %v3656 = vshll.u32 %v3284, 16
      %v3658 = vrot.slane %v3656, 5
      %v3659 = vsel %vm1455, %v3654, %v3658
      %v3660 = vshrl.u32 %v3284, 16
      %v3662 = vrot.slane %v3660, 4
      %v3663 = vor.u32 %v3662, %v3658
      %v3664 = vrot.slane %v3663, 4
      %v3666 = vshll.u32 %v3285, 16
      %v3668 = vrot.slane %v3666, 5
      %v3669 = vsel %vm1455, %v3664, %v3668
      %s3670 = scalar_lea.vmem %s1, 320
      %v3671 = vld [vmem:[%s3670] sm:$0xf]
      %v3672 = vld [vmem:[%s3670 + $0x4] sm:$0xf]
      %v3673 = vld [vmem:[%s3670 + $0x8] sm:$0xf]
      %v3674 = vld [vmem:[%s3670 + $0xc] sm:$0xf]
      %v3675 = vld [vmem:[%s3670 + $0x10] sm:$0xf]
      %v3676 = vld [vmem:[%s3670 + $0x14] sm:$0xf]
      %v3677 = vld [vmem:[%s3670 + $0x18] sm:$0xf]
      %v3678 = vld [vmem:[%s3670 + $0x1c] sm:$0xf]
      %v3679 = vld [vmem:[%s3670 + $0x20] sm:$0xf]
      %v3680 = vld [vmem:[%s3670 + $0x24] sm:$0xf]
      %v3681 = vld [vmem:[%s3670 + $0x28] sm:$0xf]
      %v3682 = vld [vmem:[%s3670 + $0x2c] sm:$0xf]
      %v3683 = vld [vmem:[%s3670 + $0x30] sm:$0xf]
      %v3684 = vld [vmem:[%s3670 + $0x34] sm:$0xf]
      %v3685 = vld [vmem:[%s3670 + $0x38] sm:$0xf]
      %v3686 = vld [vmem:[%s3670 + $0x3c] sm:$0xf]
      %v3687 = vunpack.c.l.b16 %v3299
      %v3688 = vunpack.c.l.b16 %v3309
      %v3689 = vunpack.c.l.b16 %v3323
      %v3690 = vunpack.c.l.b16 %v3333
      %v3691 = vunpack.c.l.b16 %v3347
      %v3692 = vunpack.c.l.b16 %v3357
      %v3693 = vunpack.c.l.b16 %v3371
      %v3694 = vunpack.c.l.b16 %v3381
      %v3695 = vunpack.c.l.b16 %v3395
      %v3696 = vunpack.c.l.b16 %v3405
      %v3697 = vunpack.c.l.b16 %v3419
      %v3698 = vunpack.c.l.b16 %v3429
      %v3699 = vunpack.c.l.b16 %v3443
      %v3700 = vunpack.c.l.b16 %v3453
      %v3701 = vunpack.c.l.b16 %v3467
      %v3702 = vunpack.c.l.b16 %v3477
      %v3703 = vunpack.c.l.b16 %v3491
      %v3704 = vunpack.c.l.b16 %v3501
      %v3705 = vunpack.c.l.b16 %v3515
      %v3706 = vunpack.c.l.b16 %v3525
      %v3707 = vunpack.c.l.b16 %v3539
      %v3708 = vunpack.c.l.b16 %v3549
      %v3709 = vunpack.c.l.b16 %v3563
      %v3710 = vunpack.c.l.b16 %v3573
      %v3711 = vunpack.c.l.b16 %v3587
      %v3712 = vunpack.c.l.b16 %v3597
      %v3713 = vunpack.c.l.b16 %v3611
      %v3714 = vunpack.c.l.b16 %v3621
      %v3715 = vunpack.c.l.b16 %v3635
      %v3716 = vunpack.c.l.b16 %v3645
      %v3717 = vunpack.c.l.b16 %v3659
      %v3718 = vunpack.c.l.b16 %v3669
      %v3719 = vpack.c.b16 %v3688, %v3687
      %v3720 = vpack.c.b16 %v3690, %v3689
      %v3721 = vpack.c.b16 %v3692, %v3691
      %v3722 = vpack.c.b16 %v3694, %v3693
      %v3723 = vpack.c.b16 %v3696, %v3695
      %v3724 = vpack.c.b16 %v3698, %v3697
      %v3725 = vpack.c.b16 %v3700, %v3699
      %v3726 = vpack.c.b16 %v3702, %v3701
      %v3727 = vpack.c.b16 %v3704, %v3703
      %v3728 = vpack.c.b16 %v3706, %v3705
      %v3729 = vpack.c.b16 %v3708, %v3707
      %v3730 = vpack.c.b16 %v3710, %v3709
      %v3731 = vpack.c.b16 %v3712, %v3711
      %v3732 = vpack.c.b16 %v3714, %v3713
      %v3733 = vpack.c.b16 %v3716, %v3715
      %v3734 = vpack.c.b16 %v3718, %v3717
      %v3767 = vunpack.c.l.b16 %v3671
      %v3768 = vunpack.c.l.b16 %v3672
      %v3769 = vunpack.c.l.b16 %v3673
      %v3770 = vunpack.c.l.b16 %v3674
      %v3771 = vunpack.c.l.b16 %v3675
      %v3772 = vunpack.c.l.b16 %v3676
      %v3773 = vunpack.c.l.b16 %v3677
      %v3774 = vunpack.c.l.b16 %v3678
      %v3775 = vunpack.c.l.b16 %v3679
      %v3776 = vunpack.c.l.b16 %v3680
      %v3777 = vunpack.c.l.b16 %v3681
      %v3778 = vunpack.c.l.b16 %v3682
      %v3779 = vunpack.c.l.b16 %v3683
      %v3780 = vunpack.c.l.b16 %v3684
      %v3781 = vunpack.c.l.b16 %v3685
      %v3782 = vunpack.c.l.b16 %v3686
      %v3783 = vpack.c.b16 %v3768, %v3767
      %v3784 = vpack.c.b16 %v3770, %v3769
      %v3785 = vpack.c.b16 %v3772, %v3771
      %v3786 = vpack.c.b16 %v3774, %v3773
      %v3787 = vpack.c.b16 %v3776, %v3775
      %v3788 = vpack.c.b16 %v3778, %v3777
      %v3789 = vpack.c.b16 %v3780, %v3779
      %v3790 = vpack.c.b16 %v3782, %v3781
      %3799 = vmatprep.subr.bf16.mxu0 0
      %3800 = vmatpush1.bf16.msra.mxu0 %v3783
      %3801 = vmatprep.subr.bf16.mxu0 0
      %3802 = vmatpush1.bf16.msra.mxu0 %v3784
      %3803 = vmatprep.subr.bf16.mxu0 0
      %3804 = vmatpush1.bf16.msra.mxu0 %v3785
      %3805 = vmatprep.subr.bf16.mxu0 0
      %3806 = vmatpush1.bf16.msra.mxu0 %v3786
      %3807 = vmatprep.subr.bf16.mxu0 0
      %3808 = vmatpush1.bf16.msra.mxu0 %v3787
      %3809 = vmatprep.subr.bf16.mxu0 0
      %3810 = vmatpush1.bf16.msra.mxu0 %v3788
      %3811 = vmatprep.subr.bf16.mxu0 0
      %3812 = vmatpush1.bf16.msra.mxu0 %v3789
      %3813 = vmatprep.subr.bf16.mxu0 0
      %3814 = vmatpush1.bf16.msra.mxu0 %v3790
      %3815 = vmatprep.subr.bf16.mxu0 0
      %3816 = vmatpush1.bf16.msra.mxu0 0
      %3817 = vmatprep.subr.bf16.mxu0 0
      %3818 = vmatpush1.bf16.msra.mxu0 0
      %3819 = vmatprep.subr.bf16.mxu0 0
      %3820 = vmatpush1.bf16.msra.mxu0 0
      %3821 = vmatprep.subr.bf16.mxu0 0
      %3822 = vmatpush1.bf16.msra.mxu0 0
      %3823 = vmatprep.subr.bf16.mxu0 0
      %3824 = vmatpush1.bf16.msra.mxu0 0
      %3825 = vmatprep.subr.bf16.mxu0 0
      %3826 = vmatpush1.bf16.msra.mxu0 0
      %3827 = vmatprep.subr.bf16.mxu0 0
      %3828 = vmatpush1.bf16.msra.mxu0 0
      %3829 = vmatprep.subr.bf16.mxu0 0
      %3830 = vmatpush1.bf16.msra.mxu0 0
      %3831 = vmatprep.mubr.bf16.mxu0 0
      %3832 = vmatmul.mubr.bf16.gmra.mrb[0].mxu0 %v3719
      %v3833 = vpop.f32.mrb[0].mxu0
      %v3834 = vadd.f32 0.0, %v3833
      %v3835 = vpop.f32.mrb[0].mxu0
      %v3836 = vpop.f32.mrb[0].mxu0
      %v3837 = vadd.f32 0.0, %v3836
      %v3838 = vpop.f32.mrb[0].mxu0
      %3839 = vmatprep.mubr.bf16.mxu0 0
      %3840 = vmatmul.mubr.bf16.gmra.mrb[0].mxu0 %v3720
      %v3841 = vpop.f32.mrb[0].mxu0
      %v3842 = vadd.f32 0.0, %v3841
      %v3843 = vpop.f32.mrb[0].mxu0
      %v3844 = vpop.f32.mrb[0].mxu0
      %v3845 = vadd.f32 0.0, %v3844
      %v3846 = vpop.f32.mrb[0].mxu0
      %3847 = vmatprep.mubr.bf16.mxu0 0
      %3848 = vmatmul.mubr.bf16.gmra.mrb[0].mxu0 %v3721
      %v3849 = vpop.f32.mrb[0].mxu0
      %v3850 = vadd.f32 0.0, %v3849
      %v3851 = vpop.f32.mrb[0].mxu0
      %v3852 = vpop.f32.mrb[0].mxu0
      %v3853 = vadd.f32 0.0, %v3852
      %v3854 = vpop.f32.mrb[0].mxu0
      %3855 = vmatprep.mubr.bf16.mxu0 0
      %3856 = vmatmul.mubr.bf16.gmra.mrb[0].mxu0 %v3722
      %v3857 = vpop.f32.mrb[0].mxu0
      %v3858 = vadd.f32 0.0, %v3857
      %v3859 = vpop.f32.mrb[0].mxu0
      %v3860 = vpop.f32.mrb[0].mxu0
      %v3861 = vadd.f32 0.0, %v3860
      %v3862 = vpop.f32.mrb[0].mxu0
      %3863 = vmatprep.mubr.bf16.mxu0 0
      %3864 = vmatmul.mubr.bf16.gmra.mrb[0].mxu0 %v3723
      %v3865 = vpop.f32.mrb[0].mxu0
      %v3866 = vadd.f32 0.0, %v3865
      %v3867 = vpop.f32.mrb[0].mxu0
      %v3868 = vpop.f32.mrb[0].mxu0
      %v3869 = vadd.f32 0.0, %v3868
      %v3870 = vpop.f32.mrb[0].mxu0
      %3871 = vmatprep.mubr.bf16.mxu0 0
      %3872 = vmatmul.mubr.bf16.gmra.mrb[0].mxu0 %v3724
      %v3873 = vpop.f32.mrb[0].mxu0
      %v3874 = vadd.f32 0.0, %v3873
      %v3875 = vpop.f32.mrb[0].mxu0
      %v3876 = vpop.f32.mrb[0].mxu0
      %v3877 = vadd.f32 0.0, %v3876
      %v3878 = vpop.f32.mrb[0].mxu0
      %3879 = vmatprep.mubr.bf16.mxu0 0
      %3880 = vmatmul.mubr.bf16.gmra.mrb[0].mxu0 %v3725
      %v3881 = vpop.f32.mrb[0].mxu0
      %v3882 = vadd.f32 0.0, %v3881
      %v3883 = vpop.f32.mrb[0].mxu0
      %v3884 = vpop.f32.mrb[0].mxu0
      %v3885 = vadd.f32 0.0, %v3884
      %v3886 = vpop.f32.mrb[0].mxu0
      %3887 = vmatprep.mubr.bf16.mxu0 0
      %3888 = vmatmul.mubr.bf16.gmra.mrb[0].mxu0 %v3726
      %v3889 = vpop.f32.mrb[0].mxu0
      %v3890 = vadd.f32 0.0, %v3889
      %v3891 = vpop.f32.mrb[0].mxu0
      %v3892 = vpop.f32.mrb[0].mxu0
      %v3893 = vadd.f32 0.0, %v3892
      %v3894 = vpop.f32.mrb[0].mxu0
      %3895 = vmatprep.mubr.bf16.mxu0 0
      %3896 = vmatmul.mubr.bf16.gmra.mrb[0].mxu0 %v3727
      %v3897 = vpop.f32.mrb[0].mxu0
      %v3898 = vadd.f32 0.0, %v3897
      %v3899 = vpop.f32.mrb[0].mxu0
      %v3900 = vpop.f32.mrb[0].mxu0
      %v3901 = vadd.f32 0.0, %v3900
      %v3902 = vpop.f32.mrb[0].mxu0
      %3903 = vmatprep.mubr.bf16.mxu0 0
      %3904 = vmatmul.mubr.bf16.gmra.mrb[0].mxu0 %v3728
      %v3905 = vpop.f32.mrb[0].mxu0
      %v3906 = vadd.f32 0.0, %v3905
      %v3907 = vpop.f32.mrb[0].mxu0
      %v3908 = vpop.f32.mrb[0].mxu0
      %v3909 = vadd.f32 0.0, %v3908
      %v3910 = vpop.f32.mrb[0].mxu0
      %3911 = vmatprep.mubr.bf16.mxu0 0
      %3912 = vmatmul.mubr.bf16.gmra.mrb[0].mxu0 %v3729
      %v3913 = vpop.f32.mrb[0].mxu0
      %v3914 = vadd.f32 0.0, %v3913
      %v3915 = vpop.f32.mrb[0].mxu0
      %v3916 = vpop.f32.mrb[0].mxu0
      %v3917 = vadd.f32 0.0, %v3916
      %v3918 = vpop.f32.mrb[0].mxu0
      %3919 = vmatprep.mubr.bf16.mxu0 0
      %3920 = vmatmul.mubr.bf16.gmra.mrb[0].mxu0 %v3730
      %v3921 = vpop.f32.mrb[0].mxu0
      %v3922 = vadd.f32 0.0, %v3921
      %v3923 = vpop.f32.mrb[0].mxu0
      %v3924 = vpop.f32.mrb[0].mxu0
      %v3925 = vadd.f32 0.0, %v3924
      %v3926 = vpop.f32.mrb[0].mxu0
      %3927 = vmatprep.mubr.bf16.mxu0 0
      %3928 = vmatmul.mubr.bf16.gmra.mrb[0].mxu0 %v3731
      %v3929 = vpop.f32.mrb[0].mxu0
      %v3930 = vadd.f32 0.0, %v3929
      %v3931 = vpop.f32.mrb[0].mxu0
      %v3932 = vpop.f32.mrb[0].mxu0
      %v3933 = vadd.f32 0.0, %v3932
      %v3934 = vpop.f32.mrb[0].mxu0
      %3935 = vmatprep.mubr.bf16.mxu0 0
      %3936 = vmatmul.mubr.bf16.gmra.mrb[0].mxu0 %v3732
      %v3937 = vpop.f32.mrb[0].mxu0
      %v3938 = vadd.f32 0.0, %v3937
      %v3939 = vpop.f32.mrb[0].mxu0
      %v3940 = vpop.f32.mrb[0].mxu0
      %v3941 = vadd.f32 0.0, %v3940
      %v3942 = vpop.f32.mrb[0].mxu0
      %3943 = vmatprep.mubr.bf16.mxu0 0
      %3944 = vmatmul.mubr.bf16.gmra.mrb[0].mxu0 %v3733
      %v3945 = vpop.f32.mrb[0].mxu0
      %v3946 = vadd.f32 0.0, %v3945
      %v3947 = vpop.f32.mrb[0].mxu0
      %v3948 = vpop.f32.mrb[0].mxu0
      %v3949 = vadd.f32 0.0, %v3948
      %v3950 = vpop.f32.mrb[0].mxu0
      %3951 = vmatprep.mubr.bf16.mxu0 0
      %3952 = vmatmul.mubr.bf16.gmra.mrb[0].mxu0 %v3734
      %v3953 = vpop.f32.mrb[0].mxu0
      %v3954 = vadd.f32 0.0, %v3953
      %v3955 = vpop.f32.mrb[0].mxu0
      %v3956 = vpop.f32.mrb[0].mxu0
      %v3957 = vadd.f32 0.0, %v3956
      %v3958 = vpop.f32.mrb[0].mxu0
      %3959 = vdwg.mxu0
      %v3960 = vadd.f32 %v3206, %v3834
      %v3961 = vadd.f32 %v3207, %v3837
      %v3962 = vadd.f32 %v3208, %v3842
      %v3963 = vadd.f32 %v3209, %v3845
      %v3964 = vadd.f32 %v3210, %v3850
      %v3965 = vadd.f32 %v3211, %v3853
      %v3966 = vadd.f32 %v3212, %v3858
      %v3967 = vadd.f32 %v3213, %v3861
      %v3968 = vadd.f32 %v3214, %v3866
      %v3969 = vadd.f32 %v3215, %v3869
      %v3970 = vadd.f32 %v3216, %v3874
      %v3971 = vadd.f32 %v3217, %v3877
      %v3972 = vadd.f32 %v3218, %v3882
      %v3973 = vadd.f32 %v3219, %v3885
      %v3974 = vadd.f32 %v3220, %v3890
      %v3975 = vadd.f32 %v3221, %v3893
      %v3976 = vadd.f32 %v3222, %v3898
      %v3977 = vadd.f32 %v3223, %v3901
      %v3978 = vadd.f32 %v3224, %v3906
      %v3979 = vadd.f32 %v3225, %v3909
      %v3980 = vadd.f32 %v3226, %v3914
      %v3981 = vadd.f32 %v3227, %v3917
      %v3982 = vadd.f32 %v3228, %v3922
      %v3983 = vadd.f32 %v3229, %v3925
      %v3984 = vadd.f32 %v3230, %v3930
      %v3985 = vadd.f32 %v3231, %v3933
      %v3986 = vadd.f32 %v3232, %v3938
      %v3987 = vadd.f32 %v3233, %v3941
      %v3988 = vadd.f32 %v3234, %v3946
      %v3989 = vadd.f32 %v3235, %v3949
      %v3990 = vadd.f32 %v3236, %v3954
      %v3991 = vadd.f32 %v3237, %v3957
      %s3992 = scalar_lea.vmem [#allocation2], 32
      %v3993 = vld [vmem:[%s3992] sm:$0x8]
      %v3994 = vld [vmem:[%s3992 + $0x4] sm:$0xf]
      %v3995 = vld [vmem:[%s3992 + $0x8] sm:$0xf]
      %v3996 = vld [vmem:[%s3992 + $0x10] sm:$0x8]
      %v3997 = vld [vmem:[%s3992 + $0x14] sm:$0xf]
      %v3998 = vld [vmem:[%s3992 + $0x18] sm:$0xf]
      %v3999 = vld [vmem:[%s3992 + $0x20] sm:$0x8]
      %v4000 = vld [vmem:[%s3992 + $0x24] sm:$0xf]
      %v4001 = vld [vmem:[%s3992 + $0x28] sm:$0xf]
      %v4002 = vld [vmem:[%s3992 + $0x30] sm:$0x8]
      %v4003 = vld [vmem:[%s3992 + $0x34] sm:$0xf]
      %v4004 = vld [vmem:[%s3992 + $0x38] sm:$0xf]
      %v4005 = vld [vmem:[%s3992 + $0x40] sm:$0x8]
      %v4006 = vld [vmem:[%s3992 + $0x44] sm:$0xf]
      %v4007 = vld [vmem:[%s3992 + $0x48] sm:$0xf]
      %v4008 = vld [vmem:[%s3992 + $0x50] sm:$0x8]
      %v4009 = vld [vmem:[%s3992 + $0x54] sm:$0xf]
      %v4010 = vld [vmem:[%s3992 + $0x58] sm:$0xf]
      %v4011 = vld [vmem:[%s3992 + $0x60] sm:$0x8]
      %v4012 = vld [vmem:[%s3992 + $0x64] sm:$0xf]
      %v4013 = vld [vmem:[%s3992 + $0x68] sm:$0xf]
      %v4014 = vld [vmem:[%s3992 + $0x70] sm:$0x8]
      %v4015 = vld [vmem:[%s3992 + $0x74] sm:$0xf]
      %v4016 = vld [vmem:[%s3992 + $0x78] sm:$0xf]
      %v4017 = vld [vmem:[%s3992 + $0x80] sm:$0x8]
      %v4018 = vld [vmem:[%s3992 + $0x84] sm:$0xf]
      %v4019 = vld [vmem:[%s3992 + $0x88] sm:$0xf]
      %v4020 = vld [vmem:[%s3992 + $0x90] sm:$0x8]
      %v4021 = vld [vmem:[%s3992 + $0x94] sm:$0xf]
      %v4022 = vld [vmem:[%s3992 + $0x98] sm:$0xf]
      %v4023 = vld [vmem:[%s3992 + $0xa0] sm:$0x8]
      %v4024 = vld [vmem:[%s3992 + $0xa4] sm:$0xf]
      %v4025 = vld [vmem:[%s3992 + $0xa8] sm:$0xf]
      %v4026 = vld [vmem:[%s3992 + $0xb0] sm:$0x8]
      %v4027 = vld [vmem:[%s3992 + $0xb4] sm:$0xf]
      %v4028 = vld [vmem:[%s3992 + $0xb8] sm:$0xf]
      %v4029 = vld [vmem:[%s3992 + $0xc0] sm:$0x8]
      %v4030 = vld [vmem:[%s3992 + $0xc4] sm:$0xf]
      %v4031 = vld [vmem:[%s3992 + $0xc8] sm:$0xf]
      %v4032 = vld [vmem:[%s3992 + $0xd0] sm:$0x8]
      %v4033 = vld [vmem:[%s3992 + $0xd4] sm:$0xf]
      %v4034 = vld [vmem:[%s3992 + $0xd8] sm:$0xf]
      %v4035 = vld [vmem:[%s3992 + $0xe0] sm:$0x8]
      %v4036 = vld [vmem:[%s3992 + $0xe4] sm:$0xf]
      %v4037 = vld [vmem:[%s3992 + $0xe8] sm:$0xf]
      %v4038 = vld [vmem:[%s3992 + $0xf0] sm:$0x8]
      %v4039 = vld [vmem:[%s3992 + $0xf4] sm:$0xf]
      %v4040 = vld [vmem:[%s3992 + $0xf8] sm:$0xf]
      %v4042 = vshrl.u32 %v3993, 16
      %v4044 = vrot.slane %v4042, 7
      %v4045 = vrot.slane %v4044, 4
      %v4047 = vshrl.u32 %v3994, 16
      %v4049 = vrot.slane %v4047, 7
      %v4050 = vshll.u32 %v3994, 16
      %v4052 = vor.u32 %v4049, %v4050
      %v4053 = vsel %vm441, %v4045, %v4052
      %v4054 = vrot.slane %v4049, 4
      %v4056 = vshrl.u32 %v3995, 16
      %v4058 = vrot.slane %v4056, 7
      %v4059 = vshll.u32 %v3995, 16
      %v4061 = vor.u32 %v4058, %v4059
      %v4062 = vsel %vm441, %v4054, %v4061
      %v4064 = vshrl.u32 %v3996, 16
      %v4066 = vrot.slane %v4064, 7
      %v4067 = vrot.slane %v4066, 4
      %v4069 = vshrl.u32 %v3997, 16
      %v4071 = vrot.slane %v4069, 7
      %v4072 = vshll.u32 %v3997, 16
      %v4074 = vor.u32 %v4071, %v4072
      %v4075 = vsel %vm441, %v4067, %v4074
      %v4076 = vrot.slane %v4071, 4
      %v4078 = vshrl.u32 %v3998, 16
      %v4080 = vrot.slane %v4078, 7
      %v4081 = vshll.u32 %v3998, 16
      %v4083 = vor.u32 %v4080, %v4081
      %v4084 = vsel %vm441, %v4076, %v4083
      %v4086 = vshrl.u32 %v3999, 16
      %v4088 = vrot.slane %v4086, 7
      %v4089 = vrot.slane %v4088, 4
      %v4091 = vshrl.u32 %v4000, 16
      %v4093 = vrot.slane %v4091, 7
      %v4094 = vshll.u32 %v4000, 16
      %v4096 = vor.u32 %v4093, %v4094
      %v4097 = vsel %vm441, %v4089, %v4096
      %v4098 = vrot.slane %v4093, 4
      %v4100 = vshrl.u32 %v4001, 16
      %v4102 = vrot.slane %v4100, 7
      %v4103 = vshll.u32 %v4001, 16
      %v4105 = vor.u32 %v4102, %v4103
      %v4106 = vsel %vm441, %v4098, %v4105
      %v4108 = vshrl.u32 %v4002, 16
      %v4110 = vrot.slane %v4108, 7
      %v4111 = vrot.slane %v4110, 4
      %v4113 = vshrl.u32 %v4003, 16
      %v4115 = vrot.slane %v4113, 7
      %v4116 = vshll.u32 %v4003, 16
      %v4118 = vor.u32 %v4115, %v4116
      %v4119 = vsel %vm441, %v4111, %v4118
      %v4120 = vrot.slane %v4115, 4
      %v4122 = vshrl.u32 %v4004, 16
      %v4124 = vrot.slane %v4122, 7
      %v4125 = vshll.u32 %v4004, 16
      %v4127 = vor.u32 %v4124, %v4125
      %v4128 = vsel %vm441, %v4120, %v4127
      %v4130 = vshrl.u32 %v4005, 16
      %v4132 = vrot.slane %v4130, 7
      %v4133 = vrot.slane %v4132, 4
      %v4135 = vshrl.u32 %v4006, 16
      %v4137 = vrot.slane %v4135, 7
      %v4138 = vshll.u32 %v4006, 16
      %v4140 = vor.u32 %v4137, %v4138
      %v4141 = vsel %vm441, %v4133, %v4140
      %v4142 = vrot.slane %v4137, 4
      %v4144 = vshrl.u32 %v4007, 16
      %v4146 = vrot.slane %v4144, 7
      %v4147 = vshll.u32 %v4007, 16
      %v4149 = vor.u32 %v4146, %v4147
      %v4150 = vsel %vm441, %v4142, %v4149
      %v4152 = vshrl.u32 %v4008, 16
      %v4154 = vrot.slane %v4152, 7
      %v4155 = vrot.slane %v4154, 4
      %v4157 = vshrl.u32 %v4009, 16
      %v4159 = vrot.slane %v4157, 7
      %v4160 = vshll.u32 %v4009, 16
      %v4162 = vor.u32 %v4159, %v4160
      %v4163 = vsel %vm441, %v4155, %v4162
      %v4164 = vrot.slane %v4159, 4
      %v4166 = vshrl.u32 %v4010, 16
      %v4168 = vrot.slane %v4166, 7
      %v4169 = vshll.u32 %v4010, 16
      %v4171 = vor.u32 %v4168, %v4169
      %v4172 = vsel %vm441, %v4164, %v4171
      %v4174 = vshrl.u32 %v4011, 16
      %v4176 = vrot.slane %v4174, 7
      %v4177 = vrot.slane %v4176, 4
      %v4179 = vshrl.u32 %v4012, 16
      %v4181 = vrot.slane %v4179, 7
      %v4182 = vshll.u32 %v4012, 16
      %v4184 = vor.u32 %v4181, %v4182
      %v4185 = vsel %vm441, %v4177, %v4184
      %v4186 = vrot.slane %v4181, 4
      %v4188 = vshrl.u32 %v4013, 16
      %v4190 = vrot.slane %v4188, 7
      %v4191 = vshll.u32 %v4013, 16
      %v4193 = vor.u32 %v4190, %v4191
      %v4194 = vsel %vm441, %v4186, %v4193
      %v4196 = vshrl.u32 %v4014, 16
      %v4198 = vrot.slane %v4196, 7
      %v4199 = vrot.slane %v4198, 4
      %v4201 = vshrl.u32 %v4015, 16
      %v4203 = vrot.slane %v4201, 7
      %v4204 = vshll.u32 %v4015, 16
      %v4206 = vor.u32 %v4203, %v4204
      %v4207 = vsel %vm441, %v4199, %v4206
      %v4208 = vrot.slane %v4203, 4
      %v4210 = vshrl.u32 %v4016, 16
      %v4212 = vrot.slane %v4210, 7
      %v4213 = vshll.u32 %v4016, 16
      %v4215 = vor.u32 %v4212, %v4213
      %v4216 = vsel %vm441, %v4208, %v4215
      %v4218 = vshrl.u32 %v4017, 16
      %v4220 = vrot.slane %v4218, 7
      %v4221 = vrot.slane %v4220, 4
      %v4223 = vshrl.u32 %v4018, 16
      %v4225 = vrot.slane %v4223, 7
      %v4226 = vshll.u32 %v4018, 16
      %v4228 = vor.u32 %v4225, %v4226
      %v4229 = vsel %vm441, %v4221, %v4228
      %v4230 = vrot.slane %v4225, 4
      %v4232 = vshrl.u32 %v4019, 16
      %v4234 = vrot.slane %v4232, 7
      %v4235 = vshll.u32 %v4019, 16
      %v4237 = vor.u32 %v4234, %v4235
      %v4238 = vsel %vm441, %v4230, %v4237
      %v4240 = vshrl.u32 %v4020, 16
      %v4242 = vrot.slane %v4240, 7
      %v4243 = vrot.slane %v4242, 4
      %v4245 = vshrl.u32 %v4021, 16
      %v4247 = vrot.slane %v4245, 7
      %v4248 = vshll.u32 %v4021, 16
      %v4250 = vor.u32 %v4247, %v4248
      %v4251 = vsel %vm441, %v4243, %v4250
      %v4252 = vrot.slane %v4247, 4
      %v4254 = vshrl.u32 %v4022, 16
      %v4256 = vrot.slane %v4254, 7
      %v4257 = vshll.u32 %v4022, 16
      %v4259 = vor.u32 %v4256, %v4257
      %v4260 = vsel %vm441, %v4252, %v4259
      %v4262 = vshrl.u32 %v4023, 16
      %v4264 = vrot.slane %v4262, 7
      %v4265 = vrot.slane %v4264, 4
      %v4267 = vshrl.u32 %v4024, 16
      %v4269 = vrot.slane %v4267, 7
      %v4270 = vshll.u32 %v4024, 16
      %v4272 = vor.u32 %v4269, %v4270
      %v4273 = vsel %vm441, %v4265, %v4272
      %v4274 = vrot.slane %v4269, 4
      %v4276 = vshrl.u32 %v4025, 16
      %v4278 = vrot.slane %v4276, 7
      %v4279 = vshll.u32 %v4025, 16
      %v4281 = vor.u32 %v4278, %v4279
      %v4282 = vsel %vm441, %v4274, %v4281
      %v4284 = vshrl.u32 %v4026, 16
      %v4286 = vrot.slane %v4284, 7
      %v4287 = vrot.slane %v4286, 4
      %v4289 = vshrl.u32 %v4027, 16
      %v4291 = vrot.slane %v4289, 7
      %v4292 = vshll.u32 %v4027, 16
      %v4294 = vor.u32 %v4291, %v4292
      %v4295 = vsel %vm441, %v4287, %v4294
      %v4296 = vrot.slane %v4291, 4
      %v4298 = vshrl.u32 %v4028, 16
      %v4300 = vrot.slane %v4298, 7
      %v4301 = vshll.u32 %v4028, 16
      %v4303 = vor.u32 %v4300, %v4301
      %v4304 = vsel %vm441, %v4296, %v4303
      %v4306 = vshrl.u32 %v4029, 16
      %v4308 = vrot.slane %v4306, 7
      %v4309 = vrot.slane %v4308, 4
      %v4311 = vshrl.u32 %v4030, 16
      %v4313 = vrot.slane %v4311, 7
      %v4314 = vshll.u32 %v4030, 16
      %v4316 = vor.u32 %v4313, %v4314
      %v4317 = vsel %vm441, %v4309, %v4316
      %v4318 = vrot.slane %v4313, 4
      %v4320 = vshrl.u32 %v4031, 16
      %v4322 = vrot.slane %v4320, 7
      %v4323 = vshll.u32 %v4031, 16
      %v4325 = vor.u32 %v4322, %v4323
      %v4326 = vsel %vm441, %v4318, %v4325
      %v4328 = vshrl.u32 %v4032, 16
      %v4330 = vrot.slane %v4328, 7
      %v4331 = vrot.slane %v4330, 4
      %v4333 = vshrl.u32 %v4033, 16
      %v4335 = vrot.slane %v4333, 7
      %v4336 = vshll.u32 %v4033, 16
      %v4338 = vor.u32 %v4335, %v4336
      %v4339 = vsel %vm441, %v4331, %v4338
      %v4340 = vrot.slane %v4335, 4
      %v4342 = vshrl.u32 %v4034, 16
      %v4344 = vrot.slane %v4342, 7
      %v4345 = vshll.u32 %v4034, 16
      %v4347 = vor.u32 %v4344, %v4345
      %v4348 = vsel %vm441, %v4340, %v4347
      %v4350 = vshrl.u32 %v4035, 16
      %v4352 = vrot.slane %v4350, 7
      %v4353 = vrot.slane %v4352, 4
      %v4355 = vshrl.u32 %v4036, 16
      %v4357 = vrot.slane %v4355, 7
      %v4358 = vshll.u32 %v4036, 16
      %v4360 = vor.u32 %v4357, %v4358
      %v4361 = vsel %vm441, %v4353, %v4360
      %v4362 = vrot.slane %v4357, 4
      %v4364 = vshrl.u32 %v4037, 16
      %v4366 = vrot.slane %v4364, 7
      %v4367 = vshll.u32 %v4037, 16
      %v4369 = vor.u32 %v4366, %v4367
      %v4370 = vsel %vm441, %v4362, %v4369
      %v4372 = vshrl.u32 %v4038, 16
      %v4374 = vrot.slane %v4372, 7
      %v4375 = vrot.slane %v4374, 4
      %v4377 = vshrl.u32 %v4039, 16
      %v4379 = vrot.slane %v4377, 7
      %v4380 = vshll.u32 %v4039, 16
      %v4382 = vor.u32 %v4379, %v4380
      %v4383 = vsel %vm441, %v4375, %v4382
      %v4384 = vrot.slane %v4379, 4
      %v4386 = vshrl.u32 %v4040, 16
      %v4388 = vrot.slane %v4386, 7
      %v4389 = vshll.u32 %v4040, 16
      %v4391 = vor.u32 %v4388, %v4389
      %v4392 = vsel %vm441, %v4384, %v4391
      %s4393 = scalar_lea.vmem %s1, 384
      %v4394 = vld [vmem:[%s4393] sm:$0xf]
      %v4395 = vld [vmem:[%s4393 + $0x4] sm:$0xf]
      %v4396 = vld [vmem:[%s4393 + $0x8] sm:$0xf]
      %v4397 = vld [vmem:[%s4393 + $0xc] sm:$0xf]
      %v4398 = vld [vmem:[%s4393 + $0x10] sm:$0xf]
      %v4399 = vld [vmem:[%s4393 + $0x14] sm:$0xf]
      %v4400 = vld [vmem:[%s4393 + $0x18] sm:$0xf]
      %v4401 = vld [vmem:[%s4393 + $0x1c] sm:$0xf]
      %v4402 = vld [vmem:[%s4393 + $0x20] sm:$0xf]
      %v4403 = vld [vmem:[%s4393 + $0x24] sm:$0xf]
      %v4404 = vld [vmem:[%s4393 + $0x28] sm:$0xf]
      %v4405 = vld [vmem:[%s4393 + $0x2c] sm:$0xf]
      %v4406 = vld [vmem:[%s4393 + $0x30] sm:$0xf]
      %v4407 = vld [vmem:[%s4393 + $0x34] sm:$0xf]
      %v4408 = vld [vmem:[%s4393 + $0x38] sm:$0xf]
      %v4409 = vld [vmem:[%s4393 + $0x3c] sm:$0xf]
      %v4410 = vunpack.c.l.b16 %v4053
      %v4411 = vunpack.c.l.b16 %v4062
      %v4412 = vunpack.c.l.b16 %v4075
      %v4413 = vunpack.c.l.b16 %v4084
      %v4414 = vunpack.c.l.b16 %v4097
      %v4415 = vunpack.c.l.b16 %v4106
      %v4416 = vunpack.c.l.b16 %v4119
      %v4417 = vunpack.c.l.b16 %v4128
      %v4418 = vunpack.c.l.b16 %v4141
      %v4419 = vunpack.c.l.b16 %v4150
      %v4420 = vunpack.c.l.b16 %v4163
      %v4421 = vunpack.c.l.b16 %v4172
      %v4422 = vunpack.c.l.b16 %v4185
      %v4423 = vunpack.c.l.b16 %v4194
      %v4424 = vunpack.c.l.b16 %v4207
      %v4425 = vunpack.c.l.b16 %v4216
      %v4426 = vunpack.c.l.b16 %v4229
      %v4427 = vunpack.c.l.b16 %v4238
      %v4428 = vunpack.c.l.b16 %v4251
      %v4429 = vunpack.c.l.b16 %v4260
      %v4430 = vunpack.c.l.b16 %v4273
      %v4431 = vunpack.c.l.b16 %v4282
      %v4432 = vunpack.c.l.b16 %v4295
      %v4433 = vunpack.c.l.b16 %v4304
      %v4434 = vunpack.c.l.b16 %v4317
      %v4435 = vunpack.c.l.b16 %v4326
      %v4436 = vunpack.c.l.b16 %v4339
      %v4437 = vunpack.c.l.b16 %v4348
      %v4438 = vunpack.c.l.b16 %v4361
      %v4439 = vunpack.c.l.b16 %v4370
      %v4440 = vunpack.c.l.b16 %v4383
      %v4441 = vunpack.c.l.b16 %v4392
      %v4442 = vpack.c.b16 %v4411, %v4410
      %v4443 = vpack.c.b16 %v4413, %v4412
      %v4444 = vpack.c.b16 %v4415, %v4414
      %v4445 = vpack.c.b16 %v4417, %v4416
      %v4446 = vpack.c.b16 %v4419, %v4418
      %v4447 = vpack.c.b16 %v4421, %v4420
      %v4448 = vpack.c.b16 %v4423, %v4422
      %v4449 = vpack.c.b16 %v4425, %v4424
      %v4450 = vpack.c.b16 %v4427, %v4426
      %v4451 = vpack.c.b16 %v4429, %v4428
      %v4452 = vpack.c.b16 %v4431, %v4430
      %v4453 = vpack.c.b16 %v4433, %v4432
      %v4454 = vpack.c.b16 %v4435, %v4434
      %v4455 = vpack.c.b16 %v4437, %v4436
      %v4456 = vpack.c.b16 %v4439, %v4438
      %v4457 = vpack.c.b16 %v4441, %v4440
      %v4490 = vunpack.c.l.b16 %v4394
      %v4491 = vunpack.c.l.b16 %v4395
      %v4492 = vunpack.c.l.b16 %v4396
      %v4493 = vunpack.c.l.b16 %v4397
      %v4494 = vunpack.c.l.b16 %v4398
      %v4495 = vunpack.c.l.b16 %v4399
      %v4496 = vunpack.c.l.b16 %v4400
      %v4497 = vunpack.c.l.b16 %v4401
      %v4498 = vunpack.c.l.b16 %v4402
      %v4499 = vunpack.c.l.b16 %v4403
      %v4500 = vunpack.c.l.b16 %v4404
      %v4501 = vunpack.c.l.b16 %v4405
      %v4502 = vunpack.c.l.b16 %v4406
      %v4503 = vunpack.c.l.b16 %v4407
      %v4504 = vunpack.c.l.b16 %v4408
      %v4505 = vunpack.c.l.b16 %v4409
      %v4506 = vpack.c.b16 %v4491, %v4490
      %v4507 = vpack.c.b16 %v4493, %v4492
      %v4508 = vpack.c.b16 %v4495, %v4494
      %v4509 = vpack.c.b16 %v4497, %v4496
      %v4510 = vpack.c.b16 %v4499, %v4498
      %v4511 = vpack.c.b16 %v4501, %v4500
      %v4512 = vpack.c.b16 %v4503, %v4502
      %v4513 = vpack.c.b16 %v4505, %v4504
      %4522 = vmatprep.subr.bf16.mxu0 0
      %4523 = vmatpush1.bf16.msra.mxu0 %v4506
      %4524 = vmatprep.subr.bf16.mxu0 0
      %4525 = vmatpush1.bf16.msra.mxu0 %v4507
      %4526 = vmatprep.subr.bf16.mxu0 0
      %4527 = vmatpush1.bf16.msra.mxu0 %v4508
      %4528 = vmatprep.subr.bf16.mxu0 0
      %4529 = vmatpush1.bf16.msra.mxu0 %v4509
      %4530 = vmatprep.subr.bf16.mxu0 0
      %4531 = vmatpush1.bf16.msra.mxu0 %v4510
      %4532 = vmatprep.subr.bf16.mxu0 0
      %4533 = vmatpush1.bf16.msra.mxu0 %v4511
      %4534 = vmatprep.subr.bf16.mxu0 0
      %4535 = vmatpush1.bf16.msra.mxu0 %v4512
      %4536 = vmatprep.subr.bf16.mxu0 0
      %4537 = vmatpush1.bf16.msra.mxu0 %v4513
      %4538 = vmatprep.subr.bf16.mxu0 0
      %4539 = vmatpush1.bf16.msra.mxu0 0
      %4540 = vmatprep.subr.bf16.mxu0 0
      %4541 = vmatpush1.bf16.msra.mxu0 0
      %4542 = vmatprep.subr.bf16.mxu0 0
      %4543 = vmatpush1.bf16.msra.mxu0 0
      %4544 = vmatprep.subr.bf16.mxu0 0
      %4545 = vmatpush1.bf16.msra.mxu0 0
      %4546 = vmatprep.subr.bf16.mxu0 0
      %4547 = vmatpush1.bf16.msra.mxu0 0
      %4548 = vmatprep.subr.bf16.mxu0 0
      %4549 = vmatpush1.bf16.msra.mxu0 0
      %4550 = vmatprep.subr.bf16.mxu0 0
      %4551 = vmatpush1.bf16.msra.mxu0 0
      %4552 = vmatprep.subr.bf16.mxu0 0
      %4553 = vmatpush1.bf16.msra.mxu0 0
      %4554 = vmatprep.mubr.bf16.mxu0 0
      %4555 = vmatmul.mubr.bf16.gmra.mrb[0].mxu0 %v4442
      %v4556 = vpop.f32.mrb[0].mxu0
      %v4557 = vadd.f32 0.0, %v4556
      %v4558 = vpop.f32.mrb[0].mxu0
      %v4559 = vpop.f32.mrb[0].mxu0
      %v4560 = vadd.f32 0.0, %v4559
      %v4561 = vpop.f32.mrb[0].mxu0
      %4562 = vmatprep.mubr.bf16.mxu0 0
      %4563 = vmatmul.mubr.bf16.gmra.mrb[0].mxu0 %v4443
      %v4564 = vpop.f32.mrb[0].mxu0
      %v4565 = vadd.f32 0.0, %v4564
      %v4566 = vpop.f32.mrb[0].mxu0
      %v4567 = vpop.f32.mrb[0].mxu0
      %v4568 = vadd.f32 0.0, %v4567
      %v4569 = vpop.f32.mrb[0].mxu0
      %4570 = vmatprep.mubr.bf16.mxu0 0
      %4571 = vmatmul.mubr.bf16.gmra.mrb[0].mxu0 %v4444
      %v4572 = vpop.f32.mrb[0].mxu0
      %v4573 = vadd.f32 0.0, %v4572
      %v4574 = vpop.f32.mrb[0].mxu0
      %v4575 = vpop.f32.mrb[0].mxu0
      %v4576 = vadd.f32 0.0, %v4575
      %v4577 = vpop.f32.mrb[0].mxu0
      %4578 = vmatprep.mubr.bf16.mxu0 0
      %4579 = vmatmul.mubr.bf16.gmra.mrb[0].mxu0 %v4445
      %v4580 = vpop.f32.mrb[0].mxu0
      %v4581 = vadd.f32 0.0, %v4580
      %v4582 = vpop.f32.mrb[0].mxu0
      %v4583 = vpop.f32.mrb[0].mxu0
      %v4584 = vadd.f32 0.0, %v4583
      %v4585 = vpop.f32.mrb[0].mxu0
      %4586 = vmatprep.mubr.bf16.mxu0 0
      %4587 = vmatmul.mubr.bf16.gmra.mrb[0].mxu0 %v4446
      %v4588 = vpop.f32.mrb[0].mxu0
      %v4589 = vadd.f32 0.0, %v4588
      %v4590 = vpop.f32.mrb[0].mxu0
      %v4591 = vpop.f32.mrb[0].mxu0
      %v4592 = vadd.f32 0.0, %v4591
      %v4593 = vpop.f32.mrb[0].mxu0
      %4594 = vmatprep.mubr.bf16.mxu0 0
      %4595 = vmatmul.mubr.bf16.gmra.mrb[0].mxu0 %v4447
      %v4596 = vpop.f32.mrb[0].mxu0
      %v4597 = vadd.f32 0.0, %v4596
      %v4598 = vpop.f32.mrb[0].mxu0
      %v4599 = vpop.f32.mrb[0].mxu0
      %v4600 = vadd.f32 0.0, %v4599
      %v4601 = vpop.f32.mrb[0].mxu0
      %4602 = vmatprep.mubr.bf16.mxu0 0
      %4603 = vmatmul.mubr.bf16.gmra.mrb[0].mxu0 %v4448
      %v4604 = vpop.f32.mrb[0].mxu0
      %v4605 = vadd.f32 0.0, %v4604
      %v4606 = vpop.f32.mrb[0].mxu0
      %v4607 = vpop.f32.mrb[0].mxu0
      %v4608 = vadd.f32 0.0, %v4607
      %v4609 = vpop.f32.mrb[0].mxu0
      %4610 = vmatprep.mubr.bf16.mxu0 0
      %4611 = vmatmul.mubr.bf16.gmra.mrb[0].mxu0 %v4449
      %v4612 = vpop.f32.mrb[0].mxu0
      %v4613 = vadd.f32 0.0, %v4612
      %v4614 = vpop.f32.mrb[0].mxu0
      %v4615 = vpop.f32.mrb[0].mxu0
      %v4616 = vadd.f32 0.0, %v4615
      %v4617 = vpop.f32.mrb[0].mxu0
      %4618 = vmatprep.mubr.bf16.mxu0 0
      %4619 = vmatmul.mubr.bf16.gmra.mrb[0].mxu0 %v4450
      %v4620 = vpop.f32.mrb[0].mxu0
      %v4621 = vadd.f32 0.0, %v4620
      %v4622 = vpop.f32.mrb[0].mxu0
      %v4623 = vpop.f32.mrb[0].mxu0
      %v4624 = vadd.f32 0.0, %v4623
      %v4625 = vpop.f32.mrb[0].mxu0
      %4626 = vmatprep.mubr.bf16.mxu0 0
      %4627 = vmatmul.mubr.bf16.gmra.mrb[0].mxu0 %v4451
      %v4628 = vpop.f32.mrb[0].mxu0
      %v4629 = vadd.f32 0.0, %v4628
      %v4630 = vpop.f32.mrb[0].mxu0
      %v4631 = vpop.f32.mrb[0].mxu0
      %v4632 = vadd.f32 0.0, %v4631
      %v4633 = vpop.f32.mrb[0].mxu0
      %4634 = vmatprep.mubr.bf16.mxu0 0
      %4635 = vmatmul.mubr.bf16.gmra.mrb[0].mxu0 %v4452
      %v4636 = vpop.f32.mrb[0].mxu0
      %v4637 = vadd.f32 0.0, %v4636
      %v4638 = vpop.f32.mrb[0].mxu0
      %v4639 = vpop.f32.mrb[0].mxu0
      %v4640 = vadd.f32 0.0, %v4639
      %v4641 = vpop.f32.mrb[0].mxu0
      %4642 = vmatprep.mubr.bf16.mxu0 0
      %4643 = vmatmul.mubr.bf16.gmra.mrb[0].mxu0 %v4453
      %v4644 = vpop.f32.mrb[0].mxu0
      %v4645 = vadd.f32 0.0, %v4644
      %v4646 = vpop.f32.mrb[0].mxu0
      %v4647 = vpop.f32.mrb[0].mxu0
      %v4648 = vadd.f32 0.0, %v4647
      %v4649 = vpop.f32.mrb[0].mxu0
      %4650 = vmatprep.mubr.bf16.mxu0 0
      %4651 = vmatmul.mubr.bf16.gmra.mrb[0].mxu0 %v4454
      %v4652 = vpop.f32.mrb[0].mxu0
      %v4653 = vadd.f32 0.0, %v4652
      %v4654 = vpop.f32.mrb[0].mxu0
      %v4655 = vpop.f32.mrb[0].mxu0
      %v4656 = vadd.f32 0.0, %v4655
      %v4657 = vpop.f32.mrb[0].mxu0
      %4658 = vmatprep.mubr.bf16.mxu0 0
      %4659 = vmatmul.mubr.bf16.gmra.mrb[0].mxu0 %v4455
      %v4660 = vpop.f32.mrb[0].mxu0
      %v4661 = vadd.f32 0.0, %v4660
      %v4662 = vpop.f32.mrb[0].mxu0
      %v4663 = vpop.f32.mrb[0].mxu0
      %v4664 = vadd.f32 0.0, %v4663
      %v4665 = vpop.f32.mrb[0].mxu0
      %4666 = vmatprep.mubr.bf16.mxu0 0
      %4667 = vmatmul.mubr.bf16.gmra.mrb[0].mxu0 %v4456
      %v4668 = vpop.f32.mrb[0].mxu0
      %v4669 = vadd.f32 0.0, %v4668
      %v4670 = vpop.f32.mrb[0].mxu0
      %v4671 = vpop.f32.mrb[0].mxu0
      %v4672 = vadd.f32 0.0, %v4671
      %v4673 = vpop.f32.mrb[0].mxu0
      %4674 = vmatprep.mubr.bf16.mxu0 0
      %4675 = vmatmul.mubr.bf16.gmra.mrb[0].mxu0 %v4457
      %v4676 = vpop.f32.mrb[0].mxu0
      %v4677 = vadd.f32 0.0, %v4676
      %v4678 = vpop.f32.mrb[0].mxu0
      %v4679 = vpop.f32.mrb[0].mxu0
      %v4680 = vadd.f32 0.0, %v4679
      %v4681 = vpop.f32.mrb[0].mxu0
      %4682 = vdwg.mxu0
      %v4683 = vadd.f32 %v3960, %v4557
      %v4684 = vadd.f32 %v3961, %v4560
      %v4685 = vadd.f32 %v3962, %v4565
      %v4686 = vadd.f32 %v3963, %v4568
      %v4687 = vadd.f32 %v3964, %v4573
      %v4688 = vadd.f32 %v3965, %v4576
      %v4689 = vadd.f32 %v3966, %v4581
      %v4690 = vadd.f32 %v3967, %v4584
      %v4691 = vadd.f32 %v3968, %v4589
      %v4692 = vadd.f32 %v3969, %v4592
      %v4693 = vadd.f32 %v3970, %v4597
      %v4694 = vadd.f32 %v3971, %v4600
      %v4695 = vadd.f32 %v3972, %v4605
      %v4696 = vadd.f32 %v3973, %v4608
      %v4697 = vadd.f32 %v3974, %v4613
      %v4698 = vadd.f32 %v3975, %v4616
      %v4699 = vadd.f32 %v3976, %v4621
      %v4700 = vadd.f32 %v3977, %v4624
      %v4701 = vadd.f32 %v3978, %v4629
      %v4702 = vadd.f32 %v3979, %v4632
      %v4703 = vadd.f32 %v3980, %v4637
      %v4704 = vadd.f32 %v3981, %v4640
      %v4705 = vadd.f32 %v3982, %v4645
      %v4706 = vadd.f32 %v3983, %v4648
      %v4707 = vadd.f32 %v3984, %v4653
      %v4708 = vadd.f32 %v3985, %v4656
      %v4709 = vadd.f32 %v3986, %v4661
      %v4710 = vadd.f32 %v3987, %v4664
      %v4711 = vadd.f32 %v3988, %v4669
      %v4712 = vadd.f32 %v3989, %v4672
      %v4713 = vadd.f32 %v3990, %v4677
      %v4714 = vadd.f32 %v3991, %v4680
      %s4715 = scalar_lea.vmem %s1, 448
      %v4716 = vld [vmem:[%s4715] sm:$0xf]
      %v4717 = vld [vmem:[%s4715 + $0x4] sm:$0xf]
      %v4718 = vld [vmem:[%s4715 + $0x8] sm:$0xf]
      %v4719 = vld [vmem:[%s4715 + $0xc] sm:$0xf]
      %v4720 = vld [vmem:[%s4715 + $0x10] sm:$0xf]
      %v4721 = vld [vmem:[%s4715 + $0x14] sm:$0xf]
      %v4722 = vld [vmem:[%s4715 + $0x18] sm:$0xf]
      %v4723 = vld [vmem:[%s4715 + $0x1c] sm:$0xf]
      %v4724 = vld [vmem:[%s4715 + $0x20] sm:$0xf]
      %v4725 = vld [vmem:[%s4715 + $0x24] sm:$0xf]
      %v4726 = vld [vmem:[%s4715 + $0x28] sm:$0xf]
      %v4727 = vld [vmem:[%s4715 + $0x2c] sm:$0xf]
      %v4728 = vld [vmem:[%s4715 + $0x30] sm:$0xf]
      %v4729 = vld [vmem:[%s4715 + $0x34] sm:$0xf]
      %v4730 = vld [vmem:[%s4715 + $0x38] sm:$0xf]
      %v4731 = vld [vmem:[%s4715 + $0x3c] sm:$0xf]
      %v4764 = vunpack.c.l.b16 %v3994
      %v4765 = vunpack.c.l.b16 %v3995
      %v4766 = vunpack.c.l.b16 %v3997
      %v4767 = vunpack.c.l.b16 %v3998
      %v4768 = vunpack.c.l.b16 %v4000
      %v4769 = vunpack.c.l.b16 %v4001
      %v4770 = vunpack.c.l.b16 %v4003
      %v4771 = vunpack.c.l.b16 %v4004
      %v4772 = vunpack.c.l.b16 %v4006
      %v4773 = vunpack.c.l.b16 %v4007
      %v4774 = vunpack.c.l.b16 %v4009
      %v4775 = vunpack.c.l.b16 %v4010
      %v4776 = vunpack.c.l.b16 %v4012
      %v4777 = vunpack.c.l.b16 %v4013
      %v4778 = vunpack.c.l.b16 %v4015
      %v4779 = vunpack.c.l.b16 %v4016
      %v4780 = vunpack.c.l.b16 %v4018
      %v4781 = vunpack.c.l.b16 %v4019
      %v4782 = vunpack.c.l.b16 %v4021
      %v4783 = vunpack.c.l.b16 %v4022
      %v4784 = vunpack.c.l.b16 %v4024
      %v4785 = vunpack.c.l.b16 %v4025
      %v4786 = vunpack.c.l.b16 %v4027
      %v4787 = vunpack.c.l.b16 %v4028
      %v4788 = vunpack.c.l.b16 %v4030
      %v4789 = vunpack.c.l.b16 %v4031
      %v4790 = vunpack.c.l.b16 %v4033
      %v4791 = vunpack.c.l.b16 %v4034
      %v4792 = vunpack.c.l.b16 %v4036
      %v4793 = vunpack.c.l.b16 %v4037
      %v4794 = vunpack.c.l.b16 %v4039
      %v4795 = vunpack.c.l.b16 %v4040
      %v4796 = vpack.c.b16 %v4765, %v4764
      %v4797 = vpack.c.b16 %v4767, %v4766
      %v4798 = vpack.c.b16 %v4769, %v4768
      %v4799 = vpack.c.b16 %v4771, %v4770
      %v4800 = vpack.c.b16 %v4773, %v4772
      %v4801 = vpack.c.b16 %v4775, %v4774
      %v4802 = vpack.c.b16 %v4777, %v4776
      %v4803 = vpack.c.b16 %v4779, %v4778
      %v4804 = vpack.c.b16 %v4781, %v4780
      %v4805 = vpack.c.b16 %v4783, %v4782
      %v4806 = vpack.c.b16 %v4785, %v4784
      %v4807 = vpack.c.b16 %v4787, %v4786
      %v4808 = vpack.c.b16 %v4789, %v4788
      %v4809 = vpack.c.b16 %v4791, %v4790
      %v4810 = vpack.c.b16 %v4793, %v4792
      %v4811 = vpack.c.b16 %v4795, %v4794
      %v4844 = vunpack.c.l.b16 %v4716
      %v4845 = vunpack.c.l.b16 %v4717
      %v4846 = vunpack.c.l.b16 %v4718
      %v4847 = vunpack.c.l.b16 %v4719
      %v4848 = vunpack.c.l.b16 %v4720
      %v4849 = vunpack.c.l.b16 %v4721
      %v4850 = vunpack.c.l.b16 %v4722
      %v4851 = vunpack.c.l.b16 %v4723
      %v4852 = vunpack.c.l.b16 %v4724
      %v4853 = vunpack.c.l.b16 %v4725
      %v4854 = vunpack.c.l.b16 %v4726
      %v4855 = vunpack.c.l.b16 %v4727
      %v4856 = vunpack.c.l.b16 %v4728
      %v4857 = vunpack.c.l.b16 %v4729
      %v4858 = vunpack.c.l.b16 %v4730
      %v4859 = vunpack.c.l.b16 %v4731
      %v4860 = vpack.c.b16 %v4845, %v4844
      %v4861 = vpack.c.b16 %v4847, %v4846
      %v4862 = vpack.c.b16 %v4849, %v4848
      %v4863 = vpack.c.b16 %v4851, %v4850
      %v4864 = vpack.c.b16 %v4853, %v4852
      %v4865 = vpack.c.b16 %v4855, %v4854
      %v4866 = vpack.c.b16 %v4857, %v4856
      %v4867 = vpack.c.b16 %v4859, %v4858
      %4876 = vmatprep.subr.bf16.mxu0 0
      %4877 = vmatpush1.bf16.msra.mxu0 %v4860
      %4878 = vmatprep.subr.bf16.mxu0 0
      %4879 = vmatpush1.bf16.msra.mxu0 %v4861
      %4880 = vmatprep.subr.bf16.mxu0 0
      %4881 = vmatpush1.bf16.msra.mxu0 %v4862
      %4882 = vmatprep.subr.bf16.mxu0 0
      %4883 = vmatpush1.bf16.msra.mxu0 %v4863
      %4884 = vmatprep.subr.bf16.mxu0 0
      %4885 = vmatpush1.bf16.msra.mxu0 %v4864
      %4886 = vmatprep.subr.bf16.mxu0 0
      %4887 = vmatpush1.bf16.msra.mxu0 %v4865
      %4888 = vmatprep.subr.bf16.mxu0 0
      %4889 = vmatpush1.bf16.msra.mxu0 %v4866
      %4890 = vmatprep.subr.bf16.mxu0 0
      %4891 = vmatpush1.bf16.msra.mxu0 %v4867
      %4892 = vmatprep.subr.bf16.mxu0 0
      %4893 = vmatpush1.bf16.msra.mxu0 0
      %4894 = vmatprep.subr.bf16.mxu0 0
      %4895 = vmatpush1.bf16.msra.mxu0 0
      %4896 = vmatprep.subr.bf16.mxu0 0
      %4897 = vmatpush1.bf16.msra.mxu0 0
      %4898 = vmatprep.subr.bf16.mxu0 0
      %4899 = vmatpush1.bf16.msra.mxu0 0
      %4900 = vmatprep.subr.bf16.mxu0 0
      %4901 = vmatpush1.bf16.msra.mxu0 0
      %4902 = vmatprep.subr.bf16.mxu0 0
      %4903 = vmatpush1.bf16.msra.mxu0 0
      %4904 = vmatprep.subr.bf16.mxu0 0
      %4905 = vmatpush1.bf16.msra.mxu0 0
      %4906 = vmatprep.subr.bf16.mxu0 0
      %4907 = vmatpush1.bf16.msra.mxu0 0
      %4908 = vmatprep.mubr.bf16.mxu0 0
      %4909 = vmatmul.mubr.bf16.gmra.mrb[0].mxu0 %v4796
      %v4910 = vpop.f32.mrb[0].mxu0
      %v4911 = vadd.f32 0.0, %v4910
      %v4912 = vpop.f32.mrb[0].mxu0
      %v4913 = vpop.f32.mrb[0].mxu0
      %v4914 = vadd.f32 0.0, %v4913
      %v4915 = vpop.f32.mrb[0].mxu0
      %4916 = vmatprep.mubr.bf16.mxu0 0
      %4917 = vmatmul.mubr.bf16.gmra.mrb[0].mxu0 %v4797
      %v4918 = vpop.f32.mrb[0].mxu0
      %v4919 = vadd.f32 0.0, %v4918
      %v4920 = vpop.f32.mrb[0].mxu0
      %v4921 = vpop.f32.mrb[0].mxu0
      %v4922 = vadd.f32 0.0, %v4921
      %v4923 = vpop.f32.mrb[0].mxu0
      %4924 = vmatprep.mubr.bf16.mxu0 0
      %4925 = vmatmul.mubr.bf16.gmra.mrb[0].mxu0 %v4798
      %v4926 = vpop.f32.mrb[0].mxu0
      %v4927 = vadd.f32 0.0, %v4926
      %v4928 = vpop.f32.mrb[0].mxu0
      %v4929 = vpop.f32.mrb[0].mxu0
      %v4930 = vadd.f32 0.0, %v4929
      %v4931 = vpop.f32.mrb[0].mxu0
      %4932 = vmatprep.mubr.bf16.mxu0 0
      %4933 = vmatmul.mubr.bf16.gmra.mrb[0].mxu0 %v4799
      %v4934 = vpop.f32.mrb[0].mxu0
      %v4935 = vadd.f32 0.0, %v4934
      %v4936 = vpop.f32.mrb[0].mxu0
      %v4937 = vpop.f32.mrb[0].mxu0
      %v4938 = vadd.f32 0.0, %v4937
      %v4939 = vpop.f32.mrb[0].mxu0
      %4940 = vmatprep.mubr.bf16.mxu0 0
      %4941 = vmatmul.mubr.bf16.gmra.mrb[0].mxu0 %v4800
      %v4942 = vpop.f32.mrb[0].mxu0
      %v4943 = vadd.f32 0.0, %v4942
      %v4944 = vpop.f32.mrb[0].mxu0
      %v4945 = vpop.f32.mrb[0].mxu0
      %v4946 = vadd.f32 0.0, %v4945
      %v4947 = vpop.f32.mrb[0].mxu0
      %4948 = vmatprep.mubr.bf16.mxu0 0
      %4949 = vmatmul.mubr.bf16.gmra.mrb[0].mxu0 %v4801
      %v4950 = vpop.f32.mrb[0].mxu0
      %v4951 = vadd.f32 0.0, %v4950
      %v4952 = vpop.f32.mrb[0].mxu0
      %v4953 = vpop.f32.mrb[0].mxu0
      %v4954 = vadd.f32 0.0, %v4953
      %v4955 = vpop.f32.mrb[0].mxu0
      %4956 = vmatprep.mubr.bf16.mxu0 0
      %4957 = vmatmul.mubr.bf16.gmra.mrb[0].mxu0 %v4802
      %v4958 = vpop.f32.mrb[0].mxu0
      %v4959 = vadd.f32 0.0, %v4958
      %v4960 = vpop.f32.mrb[0].mxu0
      %v4961 = vpop.f32.mrb[0].mxu0
      %v4962 = vadd.f32 0.0, %v4961
      %v4963 = vpop.f32.mrb[0].mxu0
      %4964 = vmatprep.mubr.bf16.mxu0 0
      %4965 = vmatmul.mubr.bf16.gmra.mrb[0].mxu0 %v4803
      %v4966 = vpop.f32.mrb[0].mxu0
      %v4967 = vadd.f32 0.0, %v4966
      %v4968 = vpop.f32.mrb[0].mxu0
      %v4969 = vpop.f32.mrb[0].mxu0
      %v4970 = vadd.f32 0.0, %v4969
      %v4971 = vpop.f32.mrb[0].mxu0
      %4972 = vmatprep.mubr.bf16.mxu0 0
      %4973 = vmatmul.mubr.bf16.gmra.mrb[0].mxu0 %v4804
      %v4974 = vpop.f32.mrb[0].mxu0
      %v4975 = vadd.f32 0.0, %v4974
      %v4976 = vpop.f32.mrb[0].mxu0
      %v4977 = vpop.f32.mrb[0].mxu0
      %v4978 = vadd.f32 0.0, %v4977
      %v4979 = vpop.f32.mrb[0].mxu0
      %4980 = vmatprep.mubr.bf16.mxu0 0
      %4981 = vmatmul.mubr.bf16.gmra.mrb[0].mxu0 %v4805
      %v4982 = vpop.f32.mrb[0].mxu0
      %v4983 = vadd.f32 0.0, %v4982
      %v4984 = vpop.f32.mrb[0].mxu0
      %v4985 = vpop.f32.mrb[0].mxu0
      %v4986 = vadd.f32 0.0, %v4985
      %v4987 = vpop.f32.mrb[0].mxu0
      %4988 = vmatprep.mubr.bf16.mxu0 0
      %4989 = vmatmul.mubr.bf16.gmra.mrb[0].mxu0 %v4806
      %v4990 = vpop.f32.mrb[0].mxu0
      %v4991 = vadd.f32 0.0, %v4990
      %v4992 = vpop.f32.mrb[0].mxu0
      %v4993 = vpop.f32.mrb[0].mxu0
      %v4994 = vadd.f32 0.0, %v4993
      %v4995 = vpop.f32.mrb[0].mxu0
      %4996 = vmatprep.mubr.bf16.mxu0 0
      %4997 = vmatmul.mubr.bf16.gmra.mrb[0].mxu0 %v4807
      %v4998 = vpop.f32.mrb[0].mxu0
      %v4999 = vadd.f32 0.0, %v4998
      %v5000 = vpop.f32.mrb[0].mxu0
      %v5001 = vpop.f32.mrb[0].mxu0
      %v5002 = vadd.f32 0.0, %v5001
      %v5003 = vpop.f32.mrb[0].mxu0
      %5004 = vmatprep.mubr.bf16.mxu0 0
      %5005 = vmatmul.mubr.bf16.gmra.mrb[0].mxu0 %v4808
      %v5006 = vpop.f32.mrb[0].mxu0
      %v5007 = vadd.f32 0.0, %v5006
      %v5008 = vpop.f32.mrb[0].mxu0
      %v5009 = vpop.f32.mrb[0].mxu0
      %v5010 = vadd.f32 0.0, %v5009
      %v5011 = vpop.f32.mrb[0].mxu0
      %5012 = vmatprep.mubr.bf16.mxu0 0
      %5013 = vmatmul.mubr.bf16.gmra.mrb[0].mxu0 %v4809
      %v5014 = vpop.f32.mrb[0].mxu0
      %v5015 = vadd.f32 0.0, %v5014
      %v5016 = vpop.f32.mrb[0].mxu0
      %v5017 = vpop.f32.mrb[0].mxu0
      %v5018 = vadd.f32 0.0, %v5017
      %v5019 = vpop.f32.mrb[0].mxu0
      %5020 = vmatprep.mubr.bf16.mxu0 0
      %5021 = vmatmul.mubr.bf16.gmra.mrb[0].mxu0 %v4810
      %v5022 = vpop.f32.mrb[0].mxu0
      %v5023 = vadd.f32 0.0, %v5022
      %v5024 = vpop.f32.mrb[0].mxu0
      %v5025 = vpop.f32.mrb[0].mxu0
      %v5026 = vadd.f32 0.0, %v5025
      %v5027 = vpop.f32.mrb[0].mxu0
      %5028 = vmatprep.mubr.bf16.mxu0 0
      %5029 = vmatmul.mubr.bf16.gmra.mrb[0].mxu0 %v4811
      %v5030 = vpop.f32.mrb[0].mxu0
      %v5031 = vadd.f32 0.0, %v5030
      %v5032 = vpop.f32.mrb[0].mxu0
      %v5033 = vpop.f32.mrb[0].mxu0
      %v5034 = vadd.f32 0.0, %v5033
      %v5035 = vpop.f32.mrb[0].mxu0
      %5036 = vdwg.mxu0
      %v5037 = vadd.f32 %v4683, %v4911
      %v5038 = vadd.f32 %v4684, %v4914
      %v5039 = vadd.f32 %v4685, %v4919
      %v5040 = vadd.f32 %v4686, %v4922
      %v5041 = vadd.f32 %v4687, %v4927
      %v5042 = vadd.f32 %v4688, %v4930
      %v5043 = vadd.f32 %v4689, %v4935
      %v5044 = vadd.f32 %v4690, %v4938
      %v5045 = vadd.f32 %v4691, %v4943
      %v5046 = vadd.f32 %v4692, %v4946
      %v5047 = vadd.f32 %v4693, %v4951
      %v5048 = vadd.f32 %v4694, %v4954
      %v5049 = vadd.f32 %v4695, %v4959
      %v5050 = vadd.f32 %v4696, %v4962
      %v5051 = vadd.f32 %v4697, %v4967
      %v5052 = vadd.f32 %v4698, %v4970
      %v5053 = vadd.f32 %v4699, %v4975
      %v5054 = vadd.f32 %v4700, %v4978
      %v5055 = vadd.f32 %v4701, %v4983
      %v5056 = vadd.f32 %v4702, %v4986
      %v5057 = vadd.f32 %v4703, %v4991
      %v5058 = vadd.f32 %v4704, %v4994
      %v5059 = vadd.f32 %v4705, %v4999
      %v5060 = vadd.f32 %v4706, %v5002
      %v5061 = vadd.f32 %v4707, %v5007
      %v5062 = vadd.f32 %v4708, %v5010
      %v5063 = vadd.f32 %v4709, %v5015
      %v5064 = vadd.f32 %v4710, %v5018
      %v5065 = vadd.f32 %v4711, %v5023
      %v5066 = vadd.f32 %v4712, %v5026
      %v5067 = vadd.f32 %v4713, %v5031
      %v5068 = vadd.f32 %v4714, %v5034
      %v5069 = vld [vmem:[%s3992 + $0x4] sm:$0xf]
      %v5070 = vld [vmem:[%s3992 + $0x8] sm:$0xf]
      %v5071 = vld [vmem:[%s3992 + $0xc] sm:$0x1]
      %v5072 = vld [vmem:[%s3992 + $0x14] sm:$0xf]
      %v5073 = vld [vmem:[%s3992 + $0x18] sm:$0xf]
      %v5074 = vld [vmem:[%s3992 + $0x1c] sm:$0x1]
      %v5075 = vld [vmem:[%s3992 + $0x24] sm:$0xf]
      %v5076 = vld [vmem:[%s3992 + $0x28] sm:$0xf]
      %v5077 = vld [vmem:[%s3992 + $0x2c] sm:$0x1]
      %v5078 = vld [vmem:[%s3992 + $0x34] sm:$0xf]
      %v5079 = vld [vmem:[%s3992 + $0x38] sm:$0xf]
      %v5080 = vld [vmem:[%s3992 + $0x3c] sm:$0x1]
      %v5081 = vld [vmem:[%s3992 + $0x44] sm:$0xf]
      %v5082 = vld [vmem:[%s3992 + $0x48] sm:$0xf]
      %v5083 = vld [vmem:[%s3992 + $0x4c] sm:$0x1]
      %v5084 = vld [vmem:[%s3992 + $0x54] sm:$0xf]
      %v5085 = vld [vmem:[%s3992 + $0x58] sm:$0xf]
      %v5086 = vld [vmem:[%s3992 + $0x5c] sm:$0x1]
      %v5087 = vld [vmem:[%s3992 + $0x64] sm:$0xf]
      %v5088 = vld [vmem:[%s3992 + $0x68] sm:$0xf]
      %v5089 = vld [vmem:[%s3992 + $0x6c] sm:$0x1]
      %v5090 = vld [vmem:[%s3992 + $0x74] sm:$0xf]
      %v5091 = vld [vmem:[%s3992 + $0x78] sm:$0xf]
      %v5092 = vld [vmem:[%s3992 + $0x7c] sm:$0x1]
      %v5093 = vld [vmem:[%s3992 + $0x84] sm:$0xf]
      %v5094 = vld [vmem:[%s3992 + $0x88] sm:$0xf]
      %v5095 = vld [vmem:[%s3992 + $0x8c] sm:$0x1]
      %v5096 = vld [vmem:[%s3992 + $0x94] sm:$0xf]
      %v5097 = vld [vmem:[%s3992 + $0x98] sm:$0xf]
      %v5098 = vld [vmem:[%s3992 + $0x9c] sm:$0x1]
      %v5099 = vld [vmem:[%s3992 + $0xa4] sm:$0xf]
      %v5100 = vld [vmem:[%s3992 + $0xa8] sm:$0xf]
      %v5101 = vld [vmem:[%s3992 + $0xac] sm:$0x1]
      %v5102 = vld [vmem:[%s3992 + $0xb4] sm:$0xf]
      %v5103 = vld [vmem:[%s3992 + $0xb8] sm:$0xf]
      %v5104 = vld [vmem:[%s3992 + $0xbc] sm:$0x1]
      %v5105 = vld [vmem:[%s3992 + $0xc4] sm:$0xf]
      %v5106 = vld [vmem:[%s3992 + $0xc8] sm:$0xf]
      %v5107 = vld [vmem:[%s3992 + $0xcc] sm:$0x1]
      %v5108 = vld [vmem:[%s3992 + $0xd4] sm:$0xf]
      %v5109 = vld [vmem:[%s3992 + $0xd8] sm:$0xf]
      %v5110 = vld [vmem:[%s3992 + $0xdc] sm:$0x1]
      %v5111 = vld [vmem:[%s3992 + $0xe4] sm:$0xf]
      %v5112 = vld [vmem:[%s3992 + $0xe8] sm:$0xf]
      %v5113 = vld [vmem:[%s3992 + $0xec] sm:$0x1]
      %v5114 = vld [vmem:[%s3992 + $0xf4] sm:$0xf]
      %v5115 = vld [vmem:[%s3992 + $0xf8] sm:$0xf]
      %v5116 = vld [vmem:[%s3992 + $0xfc] sm:$0x1]
      %v5118 = vshrl.u32 %v5069, 16
      %v5120 = vrot.slane %v5118, 4
      %v5121 = vshll.u32 %v5069, 16
      %v5123 = vrot.slane %v5121, 5
      %v5124 = vor.u32 %v5120, %v5123
      %v5125 = vrot.slane %v5124, 4
      %v5127 = vshll.u32 %v5070, 16
      %v5129 = vrot.slane %v5127, 5
      %v5130 = vsel %vm1455, %v5125, %v5129
      %v5131 = vshrl.u32 %v5070, 16
      %v5133 = vrot.slane %v5131, 4
      %v5134 = vor.u32 %v5133, %v5129
      %v5135 = vrot.slane %v5134, 4
      %v5137 = vshll.u32 %v5071, 16
      %v5139 = vrot.slane %v5137, 5
      %v5140 = vsel %vm1455, %v5135, %v5139
      %v5142 = vshrl.u32 %v5072, 16
      %v5144 = vrot.slane %v5142, 4
      %v5145 = vshll.u32 %v5072, 16
      %v5147 = vrot.slane %v5145, 5
      %v5148 = vor.u32 %v5144, %v5147
      %v5149 = vrot.slane %v5148, 4
      %v5151 = vshll.u32 %v5073, 16
      %v5153 = vrot.slane %v5151, 5
      %v5154 = vsel %vm1455, %v5149, %v5153
      %v5155 = vshrl.u32 %v5073, 16
      %v5157 = vrot.slane %v5155, 4
      %v5158 = vor.u32 %v5157, %v5153
      %v5159 = vrot.slane %v5158, 4
      %v5161 = vshll.u32 %v5074, 16
      %v5163 = vrot.slane %v5161, 5
      %v5164 = vsel %vm1455, %v5159, %v5163
      %v5166 = vshrl.u32 %v5075, 16
      %v5168 = vrot.slane %v5166, 4
      %v5169 = vshll.u32 %v5075, 16
      %v5171 = vrot.slane %v5169, 5
      %v5172 = vor.u32 %v5168, %v5171
      %v5173 = vrot.slane %v5172, 4
      %v5175 = vshll.u32 %v5076, 16
      %v5177 = vrot.slane %v5175, 5
      %v5178 = vsel %vm1455, %v5173, %v5177
      %v5179 = vshrl.u32 %v5076, 16
      %v5181 = vrot.slane %v5179, 4
      %v5182 = vor.u32 %v5181, %v5177
      %v5183 = vrot.slane %v5182, 4
      %v5185 = vshll.u32 %v5077, 16
      %v5187 = vrot.slane %v5185, 5
      %v5188 = vsel %vm1455, %v5183, %v5187
      %v5190 = vshrl.u32 %v5078, 16
      %v5192 = vrot.slane %v5190, 4
      %v5193 = vshll.u32 %v5078, 16
      %v5195 = vrot.slane %v5193, 5
      %v5196 = vor.u32 %v5192, %v5195
      %v5197 = vrot.slane %v5196, 4
      %v5199 = vshll.u32 %v5079, 16
      %v5201 = vrot.slane %v5199, 5
      %v5202 = vsel %vm1455, %v5197, %v5201
      %v5203 = vshrl.u32 %v5079, 16
      %v5205 = vrot.slane %v5203, 4
      %v5206 = vor.u32 %v5205, %v5201
      %v5207 = vrot.slane %v5206, 4
      %v5209 = vshll.u32 %v5080, 16
      %v5211 = vrot.slane %v5209, 5
      %v5212 = vsel %vm1455, %v5207, %v5211
      %v5214 = vshrl.u32 %v5081, 16
      %v5216 = vrot.slane %v5214, 4
      %v5217 = vshll.u32 %v5081, 16
      %v5219 = vrot.slane %v5217, 5
      %v5220 = vor.u32 %v5216, %v5219
      %v5221 = vrot.slane %v5220, 4
      %v5223 = vshll.u32 %v5082, 16
      %v5225 = vrot.slane %v5223, 5
      %v5226 = vsel %vm1455, %v5221, %v5225
      %v5227 = vshrl.u32 %v5082, 16
      %v5229 = vrot.slane %v5227, 4
      %v5230 = vor.u32 %v5229, %v5225
      %v5231 = vrot.slane %v5230, 4
      %v5233 = vshll.u32 %v5083, 16
      %v5235 = vrot.slane %v5233, 5
      %v5236 = vsel %vm1455, %v5231, %v5235
      %v5238 = vshrl.u32 %v5084, 16
      %v5240 = vrot.slane %v5238, 4
      %v5241 = vshll.u32 %v5084, 16
      %v5243 = vrot.slane %v5241, 5
      %v5244 = vor.u32 %v5240, %v5243
      %v5245 = vrot.slane %v5244, 4
      %v5247 = vshll.u32 %v5085, 16
      %v5249 = vrot.slane %v5247, 5
      %v5250 = vsel %vm1455, %v5245, %v5249
      %v5251 = vshrl.u32 %v5085, 16
      %v5253 = vrot.slane %v5251, 4
      %v5254 = vor.u32 %v5253, %v5249
      %v5255 = vrot.slane %v5254, 4
      %v5257 = vshll.u32 %v5086, 16
      %v5259 = vrot.slane %v5257, 5
      %v5260 = vsel %vm1455, %v5255, %v5259
      %v5262 = vshrl.u32 %v5087, 16
      %v5264 = vrot.slane %v5262, 4
      %v5265 = vshll.u32 %v5087, 16
      %v5267 = vrot.slane %v5265, 5
      %v5268 = vor.u32 %v5264, %v5267
      %v5269 = vrot.slane %v5268, 4
      %v5271 = vshll.u32 %v5088, 16
      %v5273 = vrot.slane %v5271, 5
      %v5274 = vsel %vm1455, %v5269, %v5273
      %v5275 = vshrl.u32 %v5088, 16
      %v5277 = vrot.slane %v5275, 4
      %v5278 = vor.u32 %v5277, %v5273
      %v5279 = vrot.slane %v5278, 4
      %v5281 = vshll.u32 %v5089, 16
      %v5283 = vrot.slane %v5281, 5
      %v5284 = vsel %vm1455, %v5279, %v5283
      %v5286 = vshrl.u32 %v5090, 16
      %v5288 = vrot.slane %v5286, 4
      %v5289 = vshll.u32 %v5090, 16
      %v5291 = vrot.slane %v5289, 5
      %v5292 = vor.u32 %v5288, %v5291
      %v5293 = vrot.slane %v5292, 4
      %v5295 = vshll.u32 %v5091, 16
      %v5297 = vrot.slane %v5295, 5
      %v5298 = vsel %vm1455, %v5293, %v5297
      %v5299 = vshrl.u32 %v5091, 16
      %v5301 = vrot.slane %v5299, 4
      %v5302 = vor.u32 %v5301, %v5297
      %v5303 = vrot.slane %v5302, 4
      %v5305 = vshll.u32 %v5092, 16
      %v5307 = vrot.slane %v5305, 5
      %v5308 = vsel %vm1455, %v5303, %v5307
      %v5310 = vshrl.u32 %v5093, 16
      %v5312 = vrot.slane %v5310, 4
      %v5313 = vshll.u32 %v5093, 16
      %v5315 = vrot.slane %v5313, 5
      %v5316 = vor.u32 %v5312, %v5315
      %v5317 = vrot.slane %v5316, 4
      %v5319 = vshll.u32 %v5094, 16
      %v5321 = vrot.slane %v5319, 5
      %v5322 = vsel %vm1455, %v5317, %v5321
      %v5323 = vshrl.u32 %v5094, 16
      %v5325 = vrot.slane %v5323, 4
      %v5326 = vor.u32 %v5325, %v5321
      %v5327 = vrot.slane %v5326, 4
      %v5329 = vshll.u32 %v5095, 16
      %v5331 = vrot.slane %v5329, 5
      %v5332 = vsel %vm1455, %v5327, %v5331
      %v5334 = vshrl.u32 %v5096, 16
      %v5336 = vrot.slane %v5334, 4
      %v5337 = vshll.u32 %v5096, 16
      %v5339 = vrot.slane %v5337, 5
      %v5340 = vor.u32 %v5336, %v5339
      %v5341 = vrot.slane %v5340, 4
      %v5343 = vshll.u32 %v5097, 16
      %v5345 = vrot.slane %v5343, 5
      %v5346 = vsel %vm1455, %v5341, %v5345
      %v5347 = vshrl.u32 %v5097, 16
      %v5349 = vrot.slane %v5347, 4
      %v5350 = vor.u32 %v5349, %v5345
      %v5351 = vrot.slane %v5350, 4
      %v5353 = vshll.u32 %v5098, 16
      %v5355 = vrot.slane %v5353, 5
      %v5356 = vsel %vm1455, %v5351, %v5355
      %v5358 = vshrl.u32 %v5099, 16
      %v5360 = vrot.slane %v5358, 4
      %v5361 = vshll.u32 %v5099, 16
      %v5363 = vrot.slane %v5361, 5
      %v5364 = vor.u32 %v5360, %v5363
      %v5365 = vrot.slane %v5364, 4
      %v5367 = vshll.u32 %v5100, 16
      %v5369 = vrot.slane %v5367, 5
      %v5370 = vsel %vm1455, %v5365, %v5369
      %v5371 = vshrl.u32 %v5100, 16
      %v5373 = vrot.slane %v5371, 4
      %v5374 = vor.u32 %v5373, %v5369
      %v5375 = vrot.slane %v5374, 4
      %v5377 = vshll.u32 %v5101, 16
      %v5379 = vrot.slane %v5377, 5
      %v5380 = vsel %vm1455, %v5375, %v5379
      %v5382 = vshrl.u32 %v5102, 16
      %v5384 = vrot.slane %v5382, 4
      %v5385 = vshll.u32 %v5102, 16
      %v5387 = vrot.slane %v5385, 5
      %v5388 = vor.u32 %v5384, %v5387
      %v5389 = vrot.slane %v5388, 4
      %v5391 = vshll.u32 %v5103, 16
      %v5393 = vrot.slane %v5391, 5
      %v5394 = vsel %vm1455, %v5389, %v5393
      %v5395 = vshrl.u32 %v5103, 16
      %v5397 = vrot.slane %v5395, 4
      %v5398 = vor.u32 %v5397, %v5393
      %v5399 = vrot.slane %v5398, 4
      %v5401 = vshll.u32 %v5104, 16
      %v5403 = vrot.slane %v5401, 5
      %v5404 = vsel %vm1455, %v5399, %v5403
      %v5406 = vshrl.u32 %v5105, 16
      %v5408 = vrot.slane %v5406, 4
      %v5409 = vshll.u32 %v5105, 16
      %v5411 = vrot.slane %v5409, 5
      %v5412 = vor.u32 %v5408, %v5411
      %v5413 = vrot.slane %v5412, 4
      %v5415 = vshll.u32 %v5106, 16
      %v5417 = vrot.slane %v5415, 5
      %v5418 = vsel %vm1455, %v5413, %v5417
      %v5419 = vshrl.u32 %v5106, 16
      %v5421 = vrot.slane %v5419, 4
      %v5422 = vor.u32 %v5421, %v5417
      %v5423 = vrot.slane %v5422, 4
      %v5425 = vshll.u32 %v5107, 16
      %v5427 = vrot.slane %v5425, 5
      %v5428 = vsel %vm1455, %v5423, %v5427
      %v5430 = vshrl.u32 %v5108, 16
      %v5432 = vrot.slane %v5430, 4
      %v5433 = vshll.u32 %v5108, 16
      %v5435 = vrot.slane %v5433, 5
      %v5436 = vor.u32 %v5432, %v5435
      %v5437 = vrot.slane %v5436, 4
      %v5439 = vshll.u32 %v5109, 16
      %v5441 = vrot.slane %v5439, 5
      %v5442 = vsel %vm1455, %v5437, %v5441
      %v5443 = vshrl.u32 %v5109, 16
      %v5445 = vrot.slane %v5443, 4
      %v5446 = vor.u32 %v5445, %v5441
      %v5447 = vrot.slane %v5446, 4
      %v5449 = vshll.u32 %v5110, 16
      %v5451 = vrot.slane %v5449, 5
      %v5452 = vsel %vm1455, %v5447, %v5451
      %v5454 = vshrl.u32 %v5111, 16
      %v5456 = vrot.slane %v5454, 4
      %v5457 = vshll.u32 %v5111, 16
      %v5459 = vrot.slane %v5457, 5
      %v5460 = vor.u32 %v5456, %v5459
      %v5461 = vrot.slane %v5460, 4
      %v5463 = vshll.u32 %v5112, 16
      %v5465 = vrot.slane %v5463, 5
      %v5466 = vsel %vm1455, %v5461, %v5465
      %v5467 = vshrl.u32 %v5112, 16
      %v5469 = vrot.slane %v5467, 4
      %v5470 = vor.u32 %v5469, %v5465
      %v5471 = vrot.slane %v5470, 4
      %v5473 = vshll.u32 %v5113, 16
      %v5475 = vrot.slane %v5473, 5
      %v5476 = vsel %vm1455, %v5471, %v5475
      %v5478 = vshrl.u32 %v5114, 16
      %v5480 = vrot.slane %v5478, 4
      %v5481 = vshll.u32 %v5114, 16
      %v5483 = vrot.slane %v5481, 5
      %v5484 = vor.u32 %v5480, %v5483
      %v5485 = vrot.slane %v5484, 4
      %v5487 = vshll.u32 %v5115, 16
      %v5489 = vrot.slane %v5487, 5
      %v5490 = vsel %vm1455, %v5485, %v5489
      %v5491 = vshrl.u32 %v5115, 16
      %v5493 = vrot.slane %v5491, 4
      %v5494 = vor.u32 %v5493, %v5489
      %v5495 = vrot.slane %v5494, 4
      %v5497 = vshll.u32 %v5116, 16
      %v5499 = vrot.slane %v5497, 5
      %v5500 = vsel %vm1455, %v5495, %v5499
      %s5501 = scalar_lea.vmem %s1, 512
      %v5502 = vld [vmem:[%s5501] sm:$0xf]
      %v5503 = vld [vmem:[%s5501 + $0x4] sm:$0xf]
      %v5504 = vld [vmem:[%s5501 + $0x8] sm:$0xf]
      %v5505 = vld [vmem:[%s5501 + $0xc] sm:$0xf]
      %v5506 = vld [vmem:[%s5501 + $0x10] sm:$0xf]
      %v5507 = vld [vmem:[%s5501 + $0x14] sm:$0xf]
      %v5508 = vld [vmem:[%s5501 + $0x18] sm:$0xf]
      %v5509 = vld [vmem:[%s5501 + $0x1c] sm:$0xf]
      %v5510 = vld [vmem:[%s5501 + $0x20] sm:$0xf]
      %v5511 = vld [vmem:[%s5501 + $0x24] sm:$0xf]
      %v5512 = vld [vmem:[%s5501 + $0x28] sm:$0xf]
      %v5513 = vld [vmem:[%s5501 + $0x2c] sm:$0xf]
      %v5514 = vld [vmem:[%s5501 + $0x30] sm:$0xf]
      %v5515 = vld [vmem:[%s5501 + $0x34] sm:$0xf]
      %v5516 = vld [vmem:[%s5501 + $0x38] sm:$0xf]
      %v5517 = vld [vmem:[%s5501 + $0x3c] sm:$0xf]
      %v5518 = vunpack.c.l.b16 %v5130
      %v5519 = vunpack.c.l.b16 %v5140
      %v5520 = vunpack.c.l.b16 %v5154
      %v5521 = vunpack.c.l.b16 %v5164
      %v5522 = vunpack.c.l.b16 %v5178
      %v5523 = vunpack.c.l.b16 %v5188
      %v5524 = vunpack.c.l.b16 %v5202
      %v5525 = vunpack.c.l.b16 %v5212
      %v5526 = vunpack.c.l.b16 %v5226
      %v5527 = vunpack.c.l.b16 %v5236
      %v5528 = vunpack.c.l.b16 %v5250
      %v5529 = vunpack.c.l.b16 %v5260
      %v5530 = vunpack.c.l.b16 %v5274
      %v5531 = vunpack.c.l.b16 %v5284
      %v5532 = vunpack.c.l.b16 %v5298
      %v5533 = vunpack.c.l.b16 %v5308
      %v5534 = vunpack.c.l.b16 %v5322
      %v5535 = vunpack.c.l.b16 %v5332
      %v5536 = vunpack.c.l.b16 %v5346
      %v5537 = vunpack.c.l.b16 %v5356
      %v5538 = vunpack.c.l.b16 %v5370
      %v5539 = vunpack.c.l.b16 %v5380
      %v5540 = vunpack.c.l.b16 %v5394
      %v5541 = vunpack.c.l.b16 %v5404
      %v5542 = vunpack.c.l.b16 %v5418
      %v5543 = vunpack.c.l.b16 %v5428
      %v5544 = vunpack.c.l.b16 %v5442
      %v5545 = vunpack.c.l.b16 %v5452
      %v5546 = vunpack.c.l.b16 %v5466
      %v5547 = vunpack.c.l.b16 %v5476
      %v5548 = vunpack.c.l.b16 %v5490
      %v5549 = vunpack.c.l.b16 %v5500
      %v5550 = vpack.c.b16 %v5519, %v5518
      %v5551 = vpack.c.b16 %v5521, %v5520
      %v5552 = vpack.c.b16 %v5523, %v5522
      %v5553 = vpack.c.b16 %v5525, %v5524
      %v5554 = vpack.c.b16 %v5527, %v5526
      %v5555 = vpack.c.b16 %v5529, %v5528
      %v5556 = vpack.c.b16 %v5531, %v5530
      %v5557 = vpack.c.b16 %v5533, %v5532
      %v5558 = vpack.c.b16 %v5535, %v5534
      %v5559 = vpack.c.b16 %v5537, %v5536
      %v5560 = vpack.c.b16 %v5539, %v5538
      %v5561 = vpack.c.b16 %v5541, %v5540
      %v5562 = vpack.c.b16 %v5543, %v5542
      %v5563 = vpack.c.b16 %v5545, %v5544
      %v5564 = vpack.c.b16 %v5547, %v5546
      %v5565 = vpack.c.b16 %v5549, %v5548
      %v5598 = vunpack.c.l.b16 %v5502
      %v5599 = vunpack.c.l.b16 %v5503
      %v5600 = vunpack.c.l.b16 %v5504
      %v5601 = vunpack.c.l.b16 %v5505
      %v5602 = vunpack.c.l.b16 %v5506
      %v5603 = vunpack.c.l.b16 %v5507
      %v5604 = vunpack.c.l.b16 %v5508
      %v5605 = vunpack.c.l.b16 %v5509
      %v5606 = vunpack.c.l.b16 %v5510
      %v5607 = vunpack.c.l.b16 %v5511
      %v5608 = vunpack.c.l.b16 %v5512
      %v5609 = vunpack.c.l.b16 %v5513
      %v5610 = vunpack.c.l.b16 %v5514
      %v5611 = vunpack.c.l.b16 %v5515
      %v5612 = vunpack.c.l.b16 %v5516
      %v5613 = vunpack.c.l.b16 %v5517
      %v5614 = vpack.c.b16 %v5599, %v5598
      %v5615 = vpack.c.b16 %v5601, %v5600
      %v5616 = vpack.c.b16 %v5603, %v5602
      %v5617 = vpack.c.b16 %v5605, %v5604
      %v5618 = vpack.c.b16 %v5607, %v5606
      %v5619 = vpack.c.b16 %v5609, %v5608
      %v5620 = vpack.c.b16 %v5611, %v5610
      %v5621 = vpack.c.b16 %v5613, %v5612
      %5630 = vmatprep.subr.bf16.mxu0 0
      %5631 = vmatpush1.bf16.msra.mxu0 %v5614
      %5632 = vmatprep.subr.bf16.mxu0 0
      %5633 = vmatpush1.bf16.msra.mxu0 %v5615
      %5634 = vmatprep.subr.bf16.mxu0 0
      %5635 = vmatpush1.bf16.msra.mxu0 %v5616
      %5636 = vmatprep.subr.bf16.mxu0 0
      %5637 = vmatpush1.bf16.msra.mxu0 %v5617
      %5638 = vmatprep.subr.bf16.mxu0 0
      %5639 = vmatpush1.bf16.msra.mxu0 %v5618
      %5640 = vmatprep.subr.bf16.mxu0 0
      %5641 = vmatpush1.bf16.msra.mxu0 %v5619
      %5642 = vmatprep.subr.bf16.mxu0 0
      %5643 = vmatpush1.bf16.msra.mxu0 %v5620
      %5644 = vmatprep.subr.bf16.mxu0 0
      %5645 = vmatpush1.bf16.msra.mxu0 %v5621
      %5646 = vmatprep.subr.bf16.mxu0 0
      %5647 = vmatpush1.bf16.msra.mxu0 0
      %5648 = vmatprep.subr.bf16.mxu0 0
      %5649 = vmatpush1.bf16.msra.mxu0 0
      %5650 = vmatprep.subr.bf16.mxu0 0
      %5651 = vmatpush1.bf16.msra.mxu0 0
      %5652 = vmatprep.subr.bf16.mxu0 0
      %5653 = vmatpush1.bf16.msra.mxu0 0
      %5654 = vmatprep.subr.bf16.mxu0 0
      %5655 = vmatpush1.bf16.msra.mxu0 0
      %5656 = vmatprep.subr.bf16.mxu0 0
      %5657 = vmatpush1.bf16.msra.mxu0 0
      %5658 = vmatprep.subr.bf16.mxu0 0
      %5659 = vmatpush1.bf16.msra.mxu0 0
      %5660 = vmatprep.subr.bf16.mxu0 0
      %5661 = vmatpush1.bf16.msra.mxu0 0
      %5662 = vmatprep.mubr.bf16.mxu0 0
      %5663 = vmatmul.mubr.bf16.gmra.mrb[0].mxu0 %v5550
      %v5664 = vpop.f32.mrb[0].mxu0
      %v5665 = vadd.f32 0.0, %v5664
      %v5666 = vpop.f32.mrb[0].mxu0
      %v5667 = vpop.f32.mrb[0].mxu0
      %v5668 = vadd.f32 0.0, %v5667
      %v5669 = vpop.f32.mrb[0].mxu0
      %5670 = vmatprep.mubr.bf16.mxu0 0
      %5671 = vmatmul.mubr.bf16.gmra.mrb[0].mxu0 %v5551
      %v5672 = vpop.f32.mrb[0].mxu0
      %v5673 = vadd.f32 0.0, %v5672
      %v5674 = vpop.f32.mrb[0].mxu0
      %v5675 = vpop.f32.mrb[0].mxu0
      %v5676 = vadd.f32 0.0, %v5675
      %v5677 = vpop.f32.mrb[0].mxu0
      %5678 = vmatprep.mubr.bf16.mxu0 0
      %5679 = vmatmul.mubr.bf16.gmra.mrb[0].mxu0 %v5552
      %v5680 = vpop.f32.mrb[0].mxu0
      %v5681 = vadd.f32 0.0, %v5680
      %v5682 = vpop.f32.mrb[0].mxu0
      %v5683 = vpop.f32.mrb[0].mxu0
      %v5684 = vadd.f32 0.0, %v5683
      %v5685 = vpop.f32.mrb[0].mxu0
      %5686 = vmatprep.mubr.bf16.mxu0 0
      %5687 = vmatmul.mubr.bf16.gmra.mrb[0].mxu0 %v5553
      %v5688 = vpop.f32.mrb[0].mxu0
      %v5689 = vadd.f32 0.0, %v5688
      %v5690 = vpop.f32.mrb[0].mxu0
      %v5691 = vpop.f32.mrb[0].mxu0
      %v5692 = vadd.f32 0.0, %v5691
      %v5693 = vpop.f32.mrb[0].mxu0
      %5694 = vmatprep.mubr.bf16.mxu0 0
      %5695 = vmatmul.mubr.bf16.gmra.mrb[0].mxu0 %v5554
      %v5696 = vpop.f32.mrb[0].mxu0
      %v5697 = vadd.f32 0.0, %v5696
      %v5698 = vpop.f32.mrb[0].mxu0
      %v5699 = vpop.f32.mrb[0].mxu0
      %v5700 = vadd.f32 0.0, %v5699
      %v5701 = vpop.f32.mrb[0].mxu0
      %5702 = vmatprep.mubr.bf16.mxu0 0
      %5703 = vmatmul.mubr.bf16.gmra.mrb[0].mxu0 %v5555
      %v5704 = vpop.f32.mrb[0].mxu0
      %v5705 = vadd.f32 0.0, %v5704
      %v5706 = vpop.f32.mrb[0].mxu0
      %v5707 = vpop.f32.mrb[0].mxu0
      %v5708 = vadd.f32 0.0, %v5707
      %v5709 = vpop.f32.mrb[0].mxu0
      %5710 = vmatprep.mubr.bf16.mxu0 0
      %5711 = vmatmul.mubr.bf16.gmra.mrb[0].mxu0 %v5556
      %v5712 = vpop.f32.mrb[0].mxu0
      %v5713 = vadd.f32 0.0, %v5712
      %v5714 = vpop.f32.mrb[0].mxu0
      %v5715 = vpop.f32.mrb[0].mxu0
      %v5716 = vadd.f32 0.0, %v5715
      %v5717 = vpop.f32.mrb[0].mxu0
      %5718 = vmatprep.mubr.bf16.mxu0 0
      %5719 = vmatmul.mubr.bf16.gmra.mrb[0].mxu0 %v5557
      %v5720 = vpop.f32.mrb[0].mxu0
      %v5721 = vadd.f32 0.0, %v5720
      %v5722 = vpop.f32.mrb[0].mxu0
      %v5723 = vpop.f32.mrb[0].mxu0
      %v5724 = vadd.f32 0.0, %v5723
      %v5725 = vpop.f32.mrb[0].mxu0
      %5726 = vmatprep.mubr.bf16.mxu0 0
      %5727 = vmatmul.mubr.bf16.gmra.mrb[0].mxu0 %v5558
      %v5728 = vpop.f32.mrb[0].mxu0
      %v5729 = vadd.f32 0.0, %v5728
      %v5730 = vpop.f32.mrb[0].mxu0
      %v5731 = vpop.f32.mrb[0].mxu0
      %v5732 = vadd.f32 0.0, %v5731
      %v5733 = vpop.f32.mrb[0].mxu0
      %5734 = vmatprep.mubr.bf16.mxu0 0
      %5735 = vmatmul.mubr.bf16.gmra.mrb[0].mxu0 %v5559
      %v5736 = vpop.f32.mrb[0].mxu0
      %v5737 = vadd.f32 0.0, %v5736
      %v5738 = vpop.f32.mrb[0].mxu0
      %v5739 = vpop.f32.mrb[0].mxu0
      %v5740 = vadd.f32 0.0, %v5739
      %v5741 = vpop.f32.mrb[0].mxu0
      %5742 = vmatprep.mubr.bf16.mxu0 0
      %5743 = vmatmul.mubr.bf16.gmra.mrb[0].mxu0 %v5560
      %v5744 = vpop.f32.mrb[0].mxu0
      %v5745 = vadd.f32 0.0, %v5744
      %v5746 = vpop.f32.mrb[0].mxu0
      %v5747 = vpop.f32.mrb[0].mxu0
      %v5748 = vadd.f32 0.0, %v5747
      %v5749 = vpop.f32.mrb[0].mxu0
      %5750 = vmatprep.mubr.bf16.mxu0 0
      %5751 = vmatmul.mubr.bf16.gmra.mrb[0].mxu0 %v5561
      %v5752 = vpop.f32.mrb[0].mxu0
      %v5753 = vadd.f32 0.0, %v5752
      %v5754 = vpop.f32.mrb[0].mxu0
      %v5755 = vpop.f32.mrb[0].mxu0
      %v5756 = vadd.f32 0.0, %v5755
      %v5757 = vpop.f32.mrb[0].mxu0
      %5758 = vmatprep.mubr.bf16.mxu0 0
      %5759 = vmatmul.mubr.bf16.gmra.mrb[0].mxu0 %v5562
      %v5760 = vpop.f32.mrb[0].mxu0
      %v5761 = vadd.f32 0.0, %v5760
      %v5762 = vpop.f32.mrb[0].mxu0
      %v5763 = vpop.f32.mrb[0].mxu0
      %v5764 = vadd.f32 0.0, %v5763
      %v5765 = vpop.f32.mrb[0].mxu0
      %5766 = vmatprep.mubr.bf16.mxu0 0
      %5767 = vmatmul.mubr.bf16.gmra.mrb[0].mxu0 %v5563
      %v5768 = vpop.f32.mrb[0].mxu0
      %v5769 = vadd.f32 0.0, %v5768
      %v5770 = vpop.f32.mrb[0].mxu0
      %v5771 = vpop.f32.mrb[0].mxu0
      %v5772 = vadd.f32 0.0, %v5771
      %v5773 = vpop.f32.mrb[0].mxu0
      %5774 = vmatprep.mubr.bf16.mxu0 0
      %5775 = vmatmul.mubr.bf16.gmra.mrb[0].mxu0 %v5564
      %v5776 = vpop.f32.mrb[0].mxu0
      %v5777 = vadd.f32 0.0, %v5776
      %v5778 = vpop.f32.mrb[0].mxu0
      %v5779 = vpop.f32.mrb[0].mxu0
      %v5780 = vadd.f32 0.0, %v5779
      %v5781 = vpop.f32.mrb[0].mxu0
      %5782 = vmatprep.mubr.bf16.mxu0 0
      %5783 = vmatmul.mubr.bf16.gmra.mrb[0].mxu0 %v5565
      %v5784 = vpop.f32.mrb[0].mxu0
      %v5785 = vadd.f32 0.0, %v5784
      %v5786 = vpop.f32.mrb[0].mxu0
      %v5787 = vpop.f32.mrb[0].mxu0
      %v5788 = vadd.f32 0.0, %v5787
      %v5789 = vpop.f32.mrb[0].mxu0
      %5790 = vdwg.mxu0
      %v5791 = vadd.f32 %v5037, %v5665
      %v5792 = vadd.f32 %v5038, %v5668
      %v5793 = vadd.f32 %v5039, %v5673
      %v5794 = vadd.f32 %v5040, %v5676
      %v5795 = vadd.f32 %v5041, %v5681
      %v5796 = vadd.f32 %v5042, %v5684
      %v5797 = vadd.f32 %v5043, %v5689
      %v5798 = vadd.f32 %v5044, %v5692
      %v5799 = vadd.f32 %v5045, %v5697
      %v5800 = vadd.f32 %v5046, %v5700
      %v5801 = vadd.f32 %v5047, %v5705
      %v5802 = vadd.f32 %v5048, %v5708
      %v5803 = vadd.f32 %v5049, %v5713
      %v5804 = vadd.f32 %v5050, %v5716
      %v5805 = vadd.f32 %v5051, %v5721
      %v5806 = vadd.f32 %v5052, %v5724
      %v5807 = vadd.f32 %v5053, %v5729
      %v5808 = vadd.f32 %v5054, %v5732
      %v5809 = vadd.f32 %v5055, %v5737
      %v5810 = vadd.f32 %v5056, %v5740
      %v5811 = vadd.f32 %v5057, %v5745
      %v5812 = vadd.f32 %v5058, %v5748
      %v5813 = vadd.f32 %v5059, %v5753
      %v5814 = vadd.f32 %v5060, %v5756
      %v5815 = vadd.f32 %v5061, %v5761
      %v5816 = vadd.f32 %v5062, %v5764
      %v5817 = vadd.f32 %v5063, %v5769
      %v5818 = vadd.f32 %v5064, %v5772
      %v5819 = vadd.f32 %v5065, %v5777
      %v5820 = vadd.f32 %v5066, %v5780
      %v5821 = vadd.f32 %v5067, %v5785
      %v5822 = vadd.f32 %v5068, %v5788
      %v5823 = vpack.c.bf16 %v5792, %v5791
      %v5824 = vpack.c.bf16 %v5794, %v5793
      %v5825 = vpack.c.bf16 %v5796, %v5795
      %v5826 = vpack.c.bf16 %v5798, %v5797
      %v5827 = vpack.c.bf16 %v5800, %v5799
      %v5828 = vpack.c.bf16 %v5802, %v5801
      %v5829 = vpack.c.bf16 %v5804, %v5803
      %v5830 = vpack.c.bf16 %v5806, %v5805
      %v5831 = vpack.c.bf16 %v5808, %v5807
      %v5832 = vpack.c.bf16 %v5810, %v5809
      %v5833 = vpack.c.bf16 %v5812, %v5811
      %v5834 = vpack.c.bf16 %v5814, %v5813
      %v5835 = vpack.c.bf16 %v5816, %v5815
      %v5836 = vpack.c.bf16 %v5818, %v5817
      %v5837 = vpack.c.bf16 %v5820, %v5819
      %v5838 = vpack.c.bf16 %v5822, %v5821
      %v5855 = vunpack.c.l.b16 %v5823
      %v5856 = vunpack.c.h.b16 %v5823
      %v5857 = vunpack.c.l.b16 %v5824
      %v5858 = vunpack.c.h.b16 %v5824
      %v5859 = vunpack.c.l.b16 %v5825
      %v5860 = vunpack.c.h.b16 %v5825
      %v5861 = vunpack.c.l.b16 %v5826
      %v5862 = vunpack.c.h.b16 %v5826
      %v5863 = vunpack.c.l.b16 %v5827
      %v5864 = vunpack.c.h.b16 %v5827
      %v5865 = vunpack.c.l.b16 %v5828
      %v5866 = vunpack.c.h.b16 %v5828
      %v5867 = vunpack.c.l.b16 %v5829
      %v5868 = vunpack.c.h.b16 %v5829
      %v5869 = vunpack.c.l.b16 %v5830
      %v5870 = vunpack.c.h.b16 %v5830
      %v5871 = vunpack.c.l.b16 %v5831
      %v5872 = vunpack.c.h.b16 %v5831
      %v5873 = vunpack.c.l.b16 %v5832
      %v5874 = vunpack.c.h.b16 %v5832
      %v5875 = vunpack.c.l.b16 %v5833
      %v5876 = vunpack.c.h.b16 %v5833
      %v5877 = vunpack.c.l.b16 %v5834
      %v5878 = vunpack.c.h.b16 %v5834
      %v5879 = vunpack.c.l.b16 %v5835
      %v5880 = vunpack.c.h.b16 %v5835
      %v5881 = vunpack.c.l.b16 %v5836
      %v5882 = vunpack.c.h.b16 %v5836
      %v5883 = vunpack.c.l.b16 %v5837
      %v5884 = vunpack.c.h.b16 %v5837
      %v5885 = vunpack.c.l.b16 %v5838
      %v5886 = vunpack.c.h.b16 %v5838
      %v5887 = vpack.c.b16 %v5855, %v5855
      %v5888 = vpack.c.b16 %v5856, %v5856
      %v5889 = vpack.c.b16 %v5857, %v5857
      %v5890 = vpack.c.b16 %v5858, %v5858
      %v5891 = vpack.c.b16 %v5859, %v5859
      %v5892 = vpack.c.b16 %v5860, %v5860
      %v5893 = vpack.c.b16 %v5861, %v5861
      %v5894 = vpack.c.b16 %v5862, %v5862
      %v5895 = vpack.c.b16 %v5863, %v5863
      %v5896 = vpack.c.b16 %v5864, %v5864
      %v5897 = vpack.c.b16 %v5865, %v5865
      %v5898 = vpack.c.b16 %v5866, %v5866
      %v5899 = vpack.c.b16 %v5867, %v5867
      %v5900 = vpack.c.b16 %v5868, %v5868
      %v5901 = vpack.c.b16 %v5869, %v5869
      %v5902 = vpack.c.b16 %v5870, %v5870
      %v5903 = vpack.c.b16 %v5871, %v5871
      %v5904 = vpack.c.b16 %v5872, %v5872
      %v5905 = vpack.c.b16 %v5873, %v5873
      %v5906 = vpack.c.b16 %v5874, %v5874
      %v5907 = vpack.c.b16 %v5875, %v5875
      %v5908 = vpack.c.b16 %v5876, %v5876
      %v5909 = vpack.c.b16 %v5877, %v5877
      %v5910 = vpack.c.b16 %v5878, %v5878
      %v5911 = vpack.c.b16 %v5879, %v5879
      %v5912 = vpack.c.b16 %v5880, %v5880
      %v5913 = vpack.c.b16 %v5881, %v5881
      %v5914 = vpack.c.b16 %v5882, %v5882
      %v5915 = vpack.c.b16 %v5883, %v5883
      %v5916 = vpack.c.b16 %v5884, %v5884
      %v5917 = vpack.c.b16 %v5885, %v5885
      %v5918 = vpack.c.b16 %v5886, %v5886
      %5951 = vst [vmem:[%s208] sm:$0xf] %v5887
      %5952 = vst [vmem:[%s208 + $0x4] sm:$0xf] %v5888
      %5953 = vst [vmem:[%s208 + $0x8] sm:$0xf] %v5889
      %5954 = vst [vmem:[%s208 + $0xc] sm:$0xf] %v5890
      %5955 = vst [vmem:[%s208 + $0x10] sm:$0xf] %v5891
      %5956 = vst [vmem:[%s208 + $0x14] sm:$0xf] %v5892
      %5957 = vst [vmem:[%s208 + $0x18] sm:$0xf] %v5893
      %5958 = vst [vmem:[%s208 + $0x1c] sm:$0xf] %v5894
      %5959 = vst [vmem:[%s208 + $0x20] sm:$0xf] %v5895
      %5960 = vst [vmem:[%s208 + $0x24] sm:$0xf] %v5896
      %5961 = vst [vmem:[%s208 + $0x28] sm:$0xf] %v5897
      %5962 = vst [vmem:[%s208 + $0x2c] sm:$0xf] %v5898
      %5963 = vst [vmem:[%s208 + $0x30] sm:$0xf] %v5899
      %5964 = vst [vmem:[%s208 + $0x34] sm:$0xf] %v5900
      %5965 = vst [vmem:[%s208 + $0x38] sm:$0xf] %v5901
      %5966 = vst [vmem:[%s208 + $0x3c] sm:$0xf] %v5902
      %5967 = vst [vmem:[%s208 + $0x40] sm:$0xf] %v5903
      %5968 = vst [vmem:[%s208 + $0x44] sm:$0xf] %v5904
      %5969 = vst [vmem:[%s208 + $0x48] sm:$0xf] %v5905
      %5970 = vst [vmem:[%s208 + $0x4c] sm:$0xf] %v5906
      %5971 = vst [vmem:[%s208 + $0x50] sm:$0xf] %v5907
      %5972 = vst [vmem:[%s208 + $0x54] sm:$0xf] %v5908
      %5973 = vst [vmem:[%s208 + $0x58] sm:$0xf] %v5909
      %5974 = vst [vmem:[%s208 + $0x5c] sm:$0xf] %v5910
      %5975 = vst [vmem:[%s208 + $0x60] sm:$0xf] %v5911
      %5976 = vst [vmem:[%s208 + $0x64] sm:$0xf] %v5912
      %5977 = vst [vmem:[%s208 + $0x68] sm:$0xf] %v5913
      %5978 = vst [vmem:[%s208 + $0x6c] sm:$0xf] %v5914
      %5979 = vst [vmem:[%s208 + $0x70] sm:$0xf] %v5915
      %5980 = vst [vmem:[%s208 + $0x74] sm:$0xf] %v5916
      %5981 = vst [vmem:[%s208 + $0x78] sm:$0xf] %v5917
      %5982 = vst [vmem:[%s208 + $0x7c] sm:$0xf] %v5918
      %v5983 = vadd.f32 %v5791, %v5792
      %v5984 = vadd.f32 %v5983, %v5793
      %v5985 = vadd.f32 %v5984, %v5794
      %v5986 = vadd.f32 %v5985, %v5795
      %v5987 = vadd.f32 %v5986, %v5796
      %v5988 = vadd.f32 %v5987, %v5797
      %v5989 = vadd.f32 %v5988, %v5798
      %v5990 = vadd.f32 %v5989, %v5799
      %v5991 = vadd.f32 %v5990, %v5800
      %v5992 = vadd.f32 %v5991, %v5801
      %v5993 = vadd.f32 %v5992, %v5802
      %v5994 = vadd.f32 %v5993, %v5803
      %v5995 = vadd.f32 %v5994, %v5804
      %v5996 = vadd.f32 %v5995, %v5805
      %v5997 = vadd.f32 %v5996, %v5806
      %v5998 = vadd.f32 %v5997, %v5807
      %v5999 = vadd.f32 %v5998, %v5808
      %v6000 = vadd.f32 %v5999, %v5809
      %v6001 = vadd.f32 %v6000, %v5810
      %v6002 = vadd.f32 %v6001, %v5811
      %v6003 = vadd.f32 %v6002, %v5812
      %v6004 = vadd.f32 %v6003, %v5813
      %v6005 = vadd.f32 %v6004, %v5814
      %v6006 = vadd.f32 %v6005, %v5815
      %v6007 = vadd.f32 %v6006, %v5816
      %v6008 = vadd.f32 %v6007, %v5817
      %v6009 = vadd.f32 %v6008, %v5818
      %v6010 = vadd.f32 %v6009, %v5819
      %v6011 = vadd.f32 %v6010, %v5820
      %v6012 = vadd.f32 %v6011, %v5821
      %v6013 = vadd.f32 %v6012, %v5822
      %v6014 = vrot.slane %v6013, 4
      %v6015 = vadd.f32 %v6013, %v6014
      %v6016 = vrot.slane %v6015, 2
      %v6017 = vadd.f32 %v6015, %v6016
      %v6018 = vrot.slane %v6017, 1
      %v6019 = vadd.f32 %v6017, %v6018
      %6020 = vst [vmem:[%s211] sm:$0x1] %v6019
      %v6021 = vmul.f32 %v5791, %v5791
      %v6022 = vmul.f32 %v5792, %v5792
      %v6023 = vmul.f32 %v5793, %v5793
      %v6024 = vmul.f32 %v5794, %v5794
      %v6025 = vmul.f32 %v5795, %v5795
      %v6026 = vmul.f32 %v5796, %v5796
      %v6027 = vmul.f32 %v5797, %v5797
      %v6028 = vmul.f32 %v5798, %v5798
      %v6029 = vmul.f32 %v5799, %v5799
      %v6030 = vmul.f32 %v5800, %v5800
      %v6031 = vmul.f32 %v5801, %v5801
      %v6032 = vmul.f32 %v5802, %v5802
      %v6033 = vmul.f32 %v5803, %v5803
      %v6034 = vmul.f32 %v5804, %v5804
      %v6035 = vmul.f32 %v5805, %v5805
      %v6036 = vmul.f32 %v5806, %v5806
      %v6037 = vmul.f32 %v5807, %v5807
      %v6038 = vmul.f32 %v5808, %v5808
      %v6039 = vmul.f32 %v5809, %v5809
      %v6040 = vmul.f32 %v5810, %v5810
      %v6041 = vmul.f32 %v5811, %v5811
      %v6042 = vmul.f32 %v5812, %v5812
      %v6043 = vmul.f32 %v5813, %v5813
      %v6044 = vmul.f32 %v5814, %v5814
      %v6045 = vmul.f32 %v5815, %v5815
      %v6046 = vmul.f32 %v5816, %v5816
      %v6047 = vmul.f32 %v5817, %v5817
      %v6048 = vmul.f32 %v5818, %v5818
      %v6049 = vmul.f32 %v5819, %v5819
      %v6050 = vmul.f32 %v5820, %v5820
      %v6051 = vmul.f32 %v5821, %v5821
      %v6052 = vmul.f32 %v5822, %v5822
      %v6053 = vadd.f32 %v6021, %v6022
      %v6054 = vadd.f32 %v6053, %v6023
      %v6055 = vadd.f32 %v6054, %v6024
      %v6056 = vadd.f32 %v6055, %v6025
      %v6057 = vadd.f32 %v6056, %v6026
      %v6058 = vadd.f32 %v6057, %v6027
      %v6059 = vadd.f32 %v6058, %v6028
      %v6060 = vadd.f32 %v6059, %v6029
      %v6061 = vadd.f32 %v6060, %v6030
      %v6062 = vadd.f32 %v6061, %v6031
      %v6063 = vadd.f32 %v6062, %v6032
      %v6064 = vadd.f32 %v6063, %v6033
      %v6065 = vadd.f32 %v6064, %v6034
      %v6066 = vadd.f32 %v6065, %v6035
      %v6067 = vadd.f32 %v6066, %v6036
      %v6068 = vadd.f32 %v6067, %v6037
      %v6069 = vadd.f32 %v6068, %v6038
      %v6070 = vadd.f32 %v6069, %v6039
      %v6071 = vadd.f32 %v6070, %v6040
      %v6072 = vadd.f32 %v6071, %v6041
      %v6073 = vadd.f32 %v6072, %v6042
      %v6074 = vadd.f32 %v6073, %v6043
      %v6075 = vadd.f32 %v6074, %v6044
      %v6076 = vadd.f32 %v6075, %v6045
      %v6077 = vadd.f32 %v6076, %v6046
      %v6078 = vadd.f32 %v6077, %v6047
      %v6079 = vadd.f32 %v6078, %v6048
      %v6080 = vadd.f32 %v6079, %v6049
      %v6081 = vadd.f32 %v6080, %v6050
      %v6082 = vadd.f32 %v6081, %v6051
      %v6083 = vadd.f32 %v6082, %v6052
      %v6084 = vrot.slane %v6083, 4
      %v6085 = vadd.f32 %v6083, %v6084
      %v6086 = vrot.slane %v6085, 2
      %v6087 = vadd.f32 %v6085, %v6086
      %v6088 = vrot.slane %v6087, 1
      %v6089 = vadd.f32 %v6087, %v6088
      %6090 = vst [vmem:[%s214] sm:$0x1] %v6089
      %p6091 = scmp.lt.s32.totalorder %s16, 1
      %s6092 = scalar_select %p6091, %s16, 1
      %s6093 = smul.addr %s6092, 32
      %s6094 = smul.addr %s6093, 4
      %s6095 = scalar_lea.vmem %s2, %s6094
      %p6096 = scmp.lt.s32.totalorder %s16, 1
      %s6097 = scalar_select %p6096, %s16, 1
      %s6098 = scalar_lea.vmem %s3, %s6097
      %p6099 = scmp.lt.s32.totalorder %s16, 1
      %s6100 = scalar_select %p6099, %s16, 1
      %s6101 = scalar_lea.vmem %s4, %s6100
      // Predicated region
      $region29: #{basic_block_forward.3} parent=27 // pred_check
        %p6102 = pneg %p81
      $region30: #{basic_block_forward.3} parent=27 // pred_check_branch
        %6104 = sbr.rel (%p6102) target = $region32
      $region31: #{basic_block_forward.3} parent=27 // pred_region
        _
      $region32: #{basic_block_forward.3} parent=27 // pred_fallthru
        _
      // Predicated region
      $region33: #{basic_block_forward.3} parent=27 // pred_check
        %p6105 = pneg %p107
      $region34: #{basic_block_forward.3} parent=27 // pred_check_branch
        %6107 = sbr.rel (%p6105) target = $region36
      $region35: #{basic_block_forward.3} parent=27 // pred_region
        _
      $region36: #{basic_block_forward.3} parent=27 // pred_fallthru
        _
      // Predicated region
      $region37: #{basic_block_forward.3} parent=27 // pred_check
        %p6108 = pneg %p133
      $region38: #{basic_block_forward.3} parent=27 // pred_check_branch
        %6110 = sbr.rel (%p6108) target = $region40
      $region39: #{basic_block_forward.3} parent=27 // pred_region
        _
      $region40: #{basic_block_forward.3} parent=27 // pred_fallthru
        _
    $region28: #{basic_block_forward.3} parent=5 // pred_fallthru
      _
    %p6111 = scmp.le.s32.totalorder 2, %s11
    // Predicated region
    $region41: #{basic_block_forward.3} parent=5 // pred_check
      %p6112 = pneg %p6111
    $region42: #{basic_block_forward.3} parent=5 // pred_check_branch
      %6114 = sbr.rel (%p6112) target = $region44
    $region43: #{basic_block_forward.3} parent=5 // pred_region
      %s6115 = ssub.s32 %s11, 2
      // Predicated region
      $region45: #{basic_block_forward.3} parent=43 // pred_check
        %p6116 = pneg %p87
      $region46: #{basic_block_forward.3} parent=43 // pred_check_branch
        %6118 = sbr.rel (%p6116) target = $region48
      $region47: #{basic_block_forward.3} parent=43 // pred_region
        %p6119 = scmp.lt.s32.totalorder %s17, 1
        %s6120 = scalar_select %p6119, %s17, 1
        %s6121 = smul.addr %s6120, 32
        %s6122 = smul.addr %s6121, 4
        %s6123 = scalar_lea.vmem %s2, %s6122
      $region48: #{basic_block_forward.3} parent=43 // pred_fallthru
        _
      // Predicated region
      $region49: #{basic_block_forward.3} parent=43 // pred_check
        %p6124 = pneg %p113
      $region50: #{basic_block_forward.3} parent=43 // pred_check_branch
        %6126 = sbr.rel (%p6124) target = $region52
      $region51: #{basic_block_forward.3} parent=43 // pred_region
        %p6127 = scmp.lt.s32.totalorder %s17, 1
        %s6128 = scalar_select %p6127, %s17, 1
        %s6129 = scalar_lea.vmem %s3, %s6128
      $region52: #{basic_block_forward.3} parent=43 // pred_fallthru
        _
      // Predicated region
      $region53: #{basic_block_forward.3} parent=43 // pred_check
        %p6130 = pneg %p139
      $region54: #{basic_block_forward.3} parent=43 // pred_check_branch
        %6132 = sbr.rel (%p6130) target = $region56
      $region55: #{basic_block_forward.3} parent=43 // pred_region
        %p6133 = scmp.lt.s32.totalorder %s17, 1
        %s6134 = scalar_select %p6133, %s17, 1
        %s6135 = scalar_lea.vmem %s4, %s6134
      $region56: #{basic_block_forward.3} parent=43 // pred_fallthru
        _
    $region44: #{basic_block_forward.3} parent=5 // pred_fallthru
      _
  $region6: #{basic_block_forward.3} parent=0 // loop_footer
    %s15 = sadd.s32 1, %s11
  $region7: #{basic_block_forward.3} parent=0 // loop_footer_branch
    %10 = sbr.rel target = $region3
  $region8: #{basic_block_forward.3} parent=0 // loop_exit
    _

// kernel: basic_block_forward.4
$region0: #{basic_block_forward.4}
  #allocation0 [shape = 'u32[]', space=smem, size = 0x4, offset = 0x4, fixed_abs, tag = 'smem constant byte address 0x4 - core index']
  #allocation1 [shape = 'u32[144,128]{1,0:T(1,128)}', space=vmem, size = 0x12000, scoped, tag = 'internal scratch']
  #allocation2 [shape = 'bf16[18,25,128]{2,1,0:T(8,128)(2,1)}', space=vmem, size = 0x24000, scoped, tag = 'scratch operand']
  %s0 = inlined_call_operand.vmem [shape: bf16[2,256,128], index: 0, kind: input, shape index: {}]
  %s1 = inlined_call_operand.vmem [shape: f32[1,128], index: 1, kind: input, shape index: {}]
  %s2 = inlined_call_operand.vmem [shape: f32[1,128], index: 2, kind: input, shape index: {}]
  %s3 = inlined_call_operand.vmem [shape: bf16[9,128,128], index: 3, kind: input, shape index: {}]
  %s4 = inlined_call_operand.vmem [shape: bf16[2,256,128], index: 4, kind: output, shape index: {0}]
  %s5 = inlined_call_operand.vmem [shape: f32[2,1,128], index: 5, kind: output, shape index: {1}]
  %s6 = inlined_call_operand.vmem [shape: f32[2,1,128], index: 6, kind: output, shape index: {2}]
  %7 = xla_tuple %s4, %s5, %s6
  %s8 = sld [smem:[#allocation0]]
  $region65: #{basic_block_forward.4} parent=0
    _
  %s10 = ssub.s32 1, %s8
  %s11 = scalar_select 0, %s10, %s8
  loop: start=0, step=1, limit=4
  $region2: #{basic_block_forward.4} parent=0 // loop_pre_header
    _
  $region3: #{basic_block_forward.4} parent=0 // loop_header
    %s13 = sphi 0, %s17
    %p14 = scmp.ge.s32.totalorder %s13, 4
    %s23 = sphi 0, %s25
    %s26 = sphi 0, %s23
    %s27 = sphi 0, %s26
    %s43 = sphi 0, %s27
    %s47 = sphi 0, %s47
    %s49 = sphi 0, %s47
    %s50 = sphi 0, %s49
    %s64 = sphi 0, %s50
    %s68 = sphi 0, %s68
    %s70 = sphi 0, %s68
    %s71 = sphi 0, %s70
    %s85 = sphi 0, %s71
    %s89 = sphi 0, %s89
    %s91 = sphi 0, %s89
    %s92 = sphi 0, %s91
    %s106 = sphi 0, %s92
    %s112 = sphi 0, %s114
    %s115 = sphi 0, %s112
    %s116 = sphi 0, %s115
    %s132 = sphi 0, %s116
    %s138 = sphi 0, %s140
    %s141 = sphi 0, %s138
    %s142 = sphi 0, %s141
    %s158 = sphi 0, %s142
    %s164 = sphi 0, %s166
    %s167 = sphi 0, %s164
    %s168 = sphi 0, %s167
    %s184 = sphi 0, %s168
  $region4: #{basic_block_forward.4} parent=0 // loop_header_branch
    %16 = sbr.rel (%p14) target = $region8
  $region5: #{basic_block_forward.4} parent=0 // loop_body
    %s18 = ssub.s32 %s13, 1
    %s19 = ssub.s32 %s13, 2
    %s20 = sadd.s32 %s13, 1
    %s21 = ssub.s32 %s13, %s20
    %p22 = scmp.eq.s32.totalorder %s21, 0
    %s24 = sadd.s32 %s23, 1
    %s25 = scalar_select %p22, %s23, %s24
    %p28 = pneg %p22
    %p29 = scmp.eq.s32.totalorder %s13, 1
    %p30 = por %p28, %p29
    %p31 = scmp.ne.s32.totalorder %s23, %s26
    %p32 = scmp.eq.s32.totalorder %s13, 0
    %p33 = por %p31, %p32
    %p34 = scmp.ne.s32.totalorder %s23, %s26
    %p35 = scmp.eq.s32.totalorder %s18, 1
    %p36 = por %p34, %p35
    %p37 = scmp.ne.s32.totalorder %s26, %s27
    %p38 = scmp.eq.s32.totalorder %s18, 0
    %p39 = por %p37, %p38
    %p40 = scmp.ne.s32.totalorder %s26, %s27
    %p41 = scmp.eq.s32.totalorder %s19, 1
    %p42 = por %p40, %p41
    %p44 = scmp.ne.s32.totalorder %s27, %s43
    %p45 = scmp.eq.s32.totalorder %s19, 0
    %p46 = por %p44, %p45
    %s48 = sadd.s32 %s47, 1
    %p51 = scmp.eq.s32.totalorder %s13, 1
    %p52 = scmp.ne.s32.totalorder %s47, %s49
    %p53 = scmp.eq.s32.totalorder %s13, 0
    %p54 = por %p52, %p53
    %p55 = scmp.ne.s32.totalorder %s47, %s49
    %p56 = scmp.eq.s32.totalorder %s18, 1
    %p57 = por %p55, %p56
    %p58 = scmp.ne.s32.totalorder %s49, %s50
    %p59 = scmp.eq.s32.totalorder %s18, 0
    %p60 = por %p58, %p59
    %p61 = scmp.ne.s32.totalorder %s49, %s50
    %p62 = scmp.eq.s32.totalorder %s19, 1
    %p63 = por %p61, %p62
    %p65 = scmp.ne.s32.totalorder %s50, %s64
    %p66 = scmp.eq.s32.totalorder %s19, 0
    %p67 = por %p65, %p66
    %s69 = sadd.s32 %s68, 1
    %p72 = scmp.eq.s32.totalorder %s13, 1
    %p73 = scmp.ne.s32.totalorder %s68, %s70
    %p74 = scmp.eq.s32.totalorder %s13, 0
    %p75 = por %p73, %p74
    %p76 = scmp.ne.s32.totalorder %s68, %s70
    %p77 = scmp.eq.s32.totalorder %s18, 1
    %p78 = por %p76, %p77
    %p79 = scmp.ne.s32.totalorder %s70, %s71
    %p80 = scmp.eq.s32.totalorder %s18, 0
    %p81 = por %p79, %p80
    %p82 = scmp.ne.s32.totalorder %s70, %s71
    %p83 = scmp.eq.s32.totalorder %s19, 1
    %p84 = por %p82, %p83
    %p86 = scmp.ne.s32.totalorder %s71, %s85
    %p87 = scmp.eq.s32.totalorder %s19, 0
    %p88 = por %p86, %p87
    %s90 = sadd.s32 %s89, 1
    %p93 = scmp.eq.s32.totalorder %s13, 1
    %p94 = scmp.ne.s32.totalorder %s89, %s91
    %p95 = scmp.eq.s32.totalorder %s13, 0
    %p96 = por %p94, %p95
    %p97 = scmp.ne.s32.totalorder %s89, %s91
    %p98 = scmp.eq.s32.totalorder %s18, 1
    %p99 = por %p97, %p98
    %p100 = scmp.ne.s32.totalorder %s91, %s92
    %p101 = scmp.eq.s32.totalorder %s18, 0
    %p102 = por %p100, %p101
    %p103 = scmp.ne.s32.totalorder %s91, %s92
    %p104 = scmp.eq.s32.totalorder %s19, 1
    %p105 = por %p103, %p104
    %p107 = scmp.ne.s32.totalorder %s92, %s106
    %p108 = scmp.eq.s32.totalorder %s19, 0
    %p109 = por %p107, %p108
    %s110 = ssub.s32 %s13, %s20
    %p111 = scmp.eq.s32.totalorder %s110, 0
    %s113 = sadd.s32 %s112, 1
    %s114 = scalar_select %p111, %s112, %s113
    %p117 = pneg %p111
    %p118 = scmp.eq.s32.totalorder %s13, 1
    %p119 = por %p117, %p118
    %p120 = scmp.ne.s32.totalorder %s112, %s115
    %p121 = scmp.eq.s32.totalorder %s13, 0
    %p122 = por %p120, %p121
    %p123 = scmp.ne.s32.totalorder %s112, %s115
    %p124 = scmp.eq.s32.totalorder %s18, 1
    %p125 = por %p123, %p124
    %p126 = scmp.ne.s32.totalorder %s115, %s116
    %p127 = scmp.eq.s32.totalorder %s18, 0
    %p128 = por %p126, %p127
    %p129 = scmp.ne.s32.totalorder %s115, %s116
    %p130 = scmp.eq.s32.totalorder %s19, 1
    %p131 = por %p129, %p130
    %p133 = scmp.ne.s32.totalorder %s116, %s132
    %p134 = scmp.eq.s32.totalorder %s19, 0
    %p135 = por %p133, %p134
    %s136 = ssub.s32 %s13, %s20
    %p137 = scmp.eq.s32.totalorder %s136, 0
    %s139 = sadd.s32 %s138, 1
    %s140 = scalar_select %p137, %s138, %s139
    %p143 = pneg %p137
    %p144 = scmp.eq.s32.totalorder %s13, 1
    %p145 = por %p143, %p144
    %p146 = scmp.ne.s32.totalorder %s138, %s141
    %p147 = scmp.eq.s32.totalorder %s13, 0
    %p148 = por %p146, %p147
    %p149 = scmp.ne.s32.totalorder %s138, %s141
    %p150 = scmp.eq.s32.totalorder %s18, 1
    %p151 = por %p149, %p150
    %p152 = scmp.ne.s32.totalorder %s141, %s142
    %p153 = scmp.eq.s32.totalorder %s18, 0
    %p154 = por %p152, %p153
    %p155 = scmp.ne.s32.totalorder %s141, %s142
    %p156 = scmp.eq.s32.totalorder %s19, 1
    %p157 = por %p155, %p156
    %p159 = scmp.ne.s32.totalorder %s142, %s158
    %p160 = scmp.eq.s32.totalorder %s19, 0
    %p161 = por %p159, %p160
    %s162 = ssub.s32 %s13, %s20
    %p163 = scmp.eq.s32.totalorder %s162, 0
    %s165 = sadd.s32 %s164, 1
    %s166 = scalar_select %p163, %s164, %s165
    %p169 = pneg %p163
    %p170 = scmp.eq.s32.totalorder %s13, 1
    %p171 = por %p169, %p170
    %p172 = scmp.ne.s32.totalorder %s164, %s167
    %p173 = scmp.eq.s32.totalorder %s13, 0
    %p174 = por %p172, %p173
    %p175 = scmp.ne.s32.totalorder %s164, %s167
    %p176 = scmp.eq.s32.totalorder %s18, 1
    %p177 = por %p175, %p176
    %p178 = scmp.ne.s32.totalorder %s167, %s168
    %p179 = scmp.eq.s32.totalorder %s18, 0
    %p180 = por %p178, %p179
    %p181 = scmp.ne.s32.totalorder %s167, %s168
    %p182 = scmp.eq.s32.totalorder %s19, 1
    %p183 = por %p181, %p182
    %p185 = scmp.ne.s32.totalorder %s168, %s184
    %p186 = scmp.eq.s32.totalorder %s19, 0
    %p187 = por %p185, %p186
    %p188 = scmp.le.s32.totalorder 1, %s13
    %p189 = scmp.lt.s32.totalorder %s13, 3
    %p190 = pnand %p188, %p189
    %p191 = pneg %p190
    // Predicated region
    $region9: #{basic_block_forward.4} parent=5 // pred_check
      _
    $region10: #{basic_block_forward.4} parent=5 // pred_check_branch
      %193 = sbr.rel (%p190) target = $region12
    $region11: #{basic_block_forward.4} parent=5 // pred_region
      %s194 = ssub.s32 %s13, 1
      // Predicated region
      $region13: #{basic_block_forward.4} parent=11 // pred_check
        %p195 = pneg %p60
      $region14: #{basic_block_forward.4} parent=11 // pred_check_branch
        %197 = sbr.rel (%p195) target = $region16
      $region15: #{basic_block_forward.4} parent=11 // pred_region
        _
      $region16: #{basic_block_forward.4} parent=11 // pred_fallthru
        _
      // Predicated region
      $region17: #{basic_block_forward.4} parent=11 // pred_check
        %p198 = pneg %p81
      $region18: #{basic_block_forward.4} parent=11 // pred_check_branch
        %200 = sbr.rel (%p198) target = $region20
      $region19: #{basic_block_forward.4} parent=11 // pred_region
        _
      $region20: #{basic_block_forward.4} parent=11 // pred_fallthru
        _
      // Predicated region
      $region21: #{basic_block_forward.4} parent=11 // pred_check
        %p201 = pneg %p102
      $region22: #{basic_block_forward.4} parent=11 // pred_check_branch
        %203 = sbr.rel (%p201) target = $region24
      $region23: #{basic_block_forward.4} parent=11 // pred_region
        _
      $region24: #{basic_block_forward.4} parent=11 // pred_fallthru
        _
    $region12: #{basic_block_forward.4} parent=5 // pred_fallthru
      _
    %p204 = scmp.lt.s32.totalorder %s13, 2
    // Predicated region
    $region25: #{basic_block_forward.4} parent=5 // pred_check
      %p205 = pneg %p204
    $region26: #{basic_block_forward.4} parent=5 // pred_check_branch
      %207 = sbr.rel (%p205) target = $region28
    $region27: #{basic_block_forward.4} parent=5 // pred_region
      // Predicated region
      $region29: #{basic_block_forward.4} parent=27 // pred_check
        %p208 = pneg %p33
      $region30: #{basic_block_forward.4} parent=27 // pred_check_branch
        %210 = sbr.rel (%p208) target = $region32
      $region31: #{basic_block_forward.4} parent=27 // pred_region
        %p211 = scmp.lt.s32.totalorder %s13, 1
        %s212 = scalar_select %p211, %s13, 1
        %s213 = smul.addr %s212, 32
        %s214 = smul.addr %s213, 4
        %s215 = scalar_lea.vmem %s0, %s214
      $region32: #{basic_block_forward.4} parent=27 // pred_fallthru
        _
    $region28: #{basic_block_forward.4} parent=5 // pred_fallthru
      _
    %p216 = scmp.le.s32.totalorder 1, %s13
    %p217 = scmp.lt.s32.totalorder %s13, 3
    %p218 = pnand %p216, %p217
    %p219 = pneg %p218
    // Predicated region
    $region33: #{basic_block_forward.4} parent=5 // pred_check
      _
    $region34: #{basic_block_forward.4} parent=5 // pred_check_branch
      %221 = sbr.rel (%p218) target = $region36
    $region35: #{basic_block_forward.4} parent=5 // pred_region
      %s222 = ssub.s32 %s13, 1
      %p223 = scmp.lt.s32.totalorder %s18, 1
      %s224 = scalar_select %p223, %s18, 1
      %s225 = smul.addr %s224, 32
      %s226 = smul.addr %s225, 4
      %s227 = scalar_lea.vmem %s0, %s226
      %p228 = pneg %p39
      %p229 = pneg %p36
      %p230 = pneg %p60
      %p231 = pneg %p57
      %p232 = pneg %p81
      %p233 = pneg %p78
      %p234 = pneg %p102
      %p235 = pneg %p99
      %p236 = pneg %p128
      %p237 = pneg %p125
      %p238 = scmp.lt.s32.totalorder %s18, 1
      %s239 = scalar_select %p238, %s18, 1
      %s240 = smul.addr %s239, 32
      %s241 = smul.addr %s240, 4
      %s242 = scalar_lea.vmem %s4, %s241
      %p243 = pneg %p154
      %p244 = pneg %p151
      %p245 = scmp.lt.s32.totalorder %s18, 1
      %s246 = scalar_select %p245, %s18, 1
      %s247 = scalar_lea.vmem %s5, %s246
      %p248 = pneg %p180
      %p249 = pneg %p177
      %p250 = scmp.lt.s32.totalorder %s18, 1
      %s251 = scalar_select %p250, %s18, 1
      %s252 = scalar_lea.vmem %s6, %s251
      %p253 = scmp.lt.s32.totalorder %s18, 1
      %s254 = scalar_select %p253, %s18, 1
      %s255 = smul.addr %s254, 32
      %s256 = smul.addr %s255, 4
      %s257 = scalar_lea.vmem %s0, %s256
      %p258 = scmp.lt.s32.totalorder %s18, 1
      %s259 = scalar_select %p258, %s18, 1
      %s260 = smul.addr %s259, 32
      %s261 = smul.addr %s260, 4
      %s262 = scalar_lea.vmem %s4, %s261
      %p263 = scmp.lt.s32.totalorder %s18, 1
      %s264 = scalar_select %p263, %s18, 1
      %s265 = scalar_lea.vmem %s5, %s264
      %p266 = scmp.lt.s32.totalorder %s18, 1
      %s267 = scalar_select %p266, %s18, 1
      %s268 = scalar_lea.vmem %s6, %s267
      %v270 = vld [vmem:[%s257] sm:$0xf]
      %v271 = vld [vmem:[%s257 + $0x4] sm:$0xf]
      %v272 = vld [vmem:[%s257 + $0x8] sm:$0xf]
      %v273 = vld [vmem:[%s257 + $0xc] sm:$0xf]
      %v274 = vld [vmem:[%s257 + $0x10] sm:$0xf]
      %v275 = vld [vmem:[%s257 + $0x14] sm:$0xf]
      %v276 = vld [vmem:[%s257 + $0x18] sm:$0xf]
      %v277 = vld [vmem:[%s257 + $0x1c] sm:$0xf]
      %v278 = vld [vmem:[%s257 + $0x20] sm:$0xf]
      %v279 = vld [vmem:[%s257 + $0x24] sm:$0xf]
      %v280 = vld [vmem:[%s257 + $0x28] sm:$0xf]
      %v281 = vld [vmem:[%s257 + $0x2c] sm:$0xf]
      %v282 = vld [vmem:[%s257 + $0x30] sm:$0xf]
      %v283 = vld [vmem:[%s257 + $0x34] sm:$0xf]
      %v284 = vld [vmem:[%s257 + $0x38] sm:$0xf]
      %v285 = vld [vmem:[%s257 + $0x3c] sm:$0xf]
      %v286 = vld [vmem:[%s257 + $0x40] sm:$0xf]
      %v287 = vld [vmem:[%s257 + $0x44] sm:$0xf]
      %v288 = vld [vmem:[%s257 + $0x48] sm:$0xf]
      %v289 = vld [vmem:[%s257 + $0x4c] sm:$0xf]
      %v290 = vld [vmem:[%s257 + $0x50] sm:$0xf]
      %v291 = vld [vmem:[%s257 + $0x54] sm:$0xf]
      %v292 = vld [vmem:[%s257 + $0x58] sm:$0xf]
      %v293 = vld [vmem:[%s257 + $0x5c] sm:$0xf]
      %v294 = vld [vmem:[%s257 + $0x60] sm:$0xf]
      %v295 = vld [vmem:[%s257 + $0x64] sm:$0xf]
      %v296 = vld [vmem:[%s257 + $0x68] sm:$0xf]
      %v297 = vld [vmem:[%s257 + $0x6c] sm:$0xf]
      %v298 = vld [vmem:[%s257 + $0x70] sm:$0xf]
      %v299 = vld [vmem:[%s257 + $0x74] sm:$0xf]
      %v300 = vld [vmem:[%s257 + $0x78] sm:$0xf]
      %v301 = vld [vmem:[%s257 + $0x7c] sm:$0xf]
      %v302 = vunpack.c.l.bf16 %v270
      %v303 = vunpack.c.l.bf16 %v271
      %v304 = vunpack.c.l.bf16 %v272
      %v305 = vunpack.c.l.bf16 %v273
      %v306 = vunpack.c.l.bf16 %v274
      %v307 = vunpack.c.l.bf16 %v275
      %v308 = vunpack.c.l.bf16 %v276
      %v309 = vunpack.c.l.bf16 %v277
      %v310 = vunpack.c.l.bf16 %v278
      %v311 = vunpack.c.l.bf16 %v279
      %v312 = vunpack.c.l.bf16 %v280
      %v313 = vunpack.c.l.bf16 %v281
      %v314 = vunpack.c.l.bf16 %v282
      %v315 = vunpack.c.l.bf16 %v283
      %v316 = vunpack.c.l.bf16 %v284
      %v317 = vunpack.c.l.bf16 %v285
      %v318 = vunpack.c.l.bf16 %v286
      %v319 = vunpack.c.l.bf16 %v287
      %v320 = vunpack.c.l.bf16 %v288
      %v321 = vunpack.c.l.bf16 %v289
      %v322 = vunpack.c.l.bf16 %v290
      %v323 = vunpack.c.l.bf16 %v291
      %v324 = vunpack.c.l.bf16 %v292
      %v325 = vunpack.c.l.bf16 %v293
      %v326 = vunpack.c.l.bf16 %v294
      %v327 = vunpack.c.l.bf16 %v295
      %v328 = vunpack.c.l.bf16 %v296
      %v329 = vunpack.c.l.bf16 %v297
      %v330 = vunpack.c.l.bf16 %v298
      %v331 = vunpack.c.l.bf16 %v299
      %v332 = vunpack.c.l.bf16 %v300
      %v333 = vunpack.c.l.bf16 %v301
      %v334 = vld [vmem:[%s1] sm:$0x1]
      %v336 = vlaneseq
      %v337 = vshrl.u32 %v336, 7
      %v338 = vsub.s32 0, %v337
      %v339 = vrot.slane %v334, %v338
      %v341 = vmul.f32 %v302, %v339
      %v342 = vmul.f32 %v303, %v339
      %v343 = vmul.f32 %v304, %v339
      %v344 = vmul.f32 %v305, %v339
      %v345 = vmul.f32 %v306, %v339
      %v346 = vmul.f32 %v307, %v339
      %v347 = vmul.f32 %v308, %v339
      %v348 = vmul.f32 %v309, %v339
      %v349 = vmul.f32 %v310, %v339
      %v350 = vmul.f32 %v311, %v339
      %v351 = vmul.f32 %v312, %v339
      %v352 = vmul.f32 %v313, %v339
      %v353 = vmul.f32 %v314, %v339
      %v354 = vmul.f32 %v315, %v339
      %v355 = vmul.f32 %v316, %v339
      %v356 = vmul.f32 %v317, %v339
      %v357 = vmul.f32 %v318, %v339
      %v358 = vmul.f32 %v319, %v339
      %v359 = vmul.f32 %v320, %v339
      %v360 = vmul.f32 %v321, %v339
      %v361 = vmul.f32 %v322, %v339
      %v362 = vmul.f32 %v323, %v339
      %v363 = vmul.f32 %v324, %v339
      %v364 = vmul.f32 %v325, %v339
      %v365 = vmul.f32 %v326, %v339
      %v366 = vmul.f32 %v327, %v339
      %v367 = vmul.f32 %v328, %v339
      %v368 = vmul.f32 %v329, %v339
      %v369 = vmul.f32 %v330, %v339
      %v370 = vmul.f32 %v331, %v339
      %v371 = vmul.f32 %v332, %v339
      %v372 = vmul.f32 %v333, %v339
      %v373 = vld [vmem:[%s2] sm:$0x1]
      %v375 = vlaneseq
      %v376 = vshrl.u32 %v375, 7
      %v377 = vsub.s32 0, %v376
      %v378 = vrot.slane %v373, %v377
      %v380 = vadd.f32 %v341, %v378
      %v381 = vadd.f32 %v342, %v378
      %v382 = vadd.f32 %v343, %v378
      %v383 = vadd.f32 %v344, %v378
      %v384 = vadd.f32 %v345, %v378
      %v385 = vadd.f32 %v346, %v378
      %v386 = vadd.f32 %v347, %v378
      %v387 = vadd.f32 %v348, %v378
      %v388 = vadd.f32 %v349, %v378
      %v389 = vadd.f32 %v350, %v378
      %v390 = vadd.f32 %v351, %v378
      %v391 = vadd.f32 %v352, %v378
      %v392 = vadd.f32 %v353, %v378
      %v393 = vadd.f32 %v354, %v378
      %v394 = vadd.f32 %v355, %v378
      %v395 = vadd.f32 %v356, %v378
      %v396 = vadd.f32 %v357, %v378
      %v397 = vadd.f32 %v358, %v378
      %v398 = vadd.f32 %v359, %v378
      %v399 = vadd.f32 %v360, %v378
      %v400 = vadd.f32 %v361, %v378
      %v401 = vadd.f32 %v362, %v378
      %v402 = vadd.f32 %v363, %v378
      %v403 = vadd.f32 %v364, %v378
      %v404 = vadd.f32 %v365, %v378
      %v405 = vadd.f32 %v366, %v378
      %v406 = vadd.f32 %v367, %v378
      %v407 = vadd.f32 %v368, %v378
      %v408 = vadd.f32 %v369, %v378
      %v409 = vadd.f32 %v370, %v378
      %v410 = vadd.f32 %v371, %v378
      %v411 = vadd.f32 %v372, %v378
      %v412 = vmax.f32 %v380, 0.0
      %v413 = vmax.f32 %v381, 0.0
      %v414 = vmax.f32 %v382, 0.0
      %v415 = vmax.f32 %v383, 0.0
      %v416 = vmax.f32 %v384, 0.0
      %v417 = vmax.f32 %v385, 0.0
      %v418 = vmax.f32 %v386, 0.0
      %v419 = vmax.f32 %v387, 0.0
      %v420 = vmax.f32 %v388, 0.0
      %v421 = vmax.f32 %v389, 0.0
      %v422 = vmax.f32 %v390, 0.0
      %v423 = vmax.f32 %v391, 0.0
      %v424 = vmax.f32 %v392, 0.0
      %v425 = vmax.f32 %v393, 0.0
      %v426 = vmax.f32 %v394, 0.0
      %v427 = vmax.f32 %v395, 0.0
      %v428 = vmax.f32 %v396, 0.0
      %v429 = vmax.f32 %v397, 0.0
      %v430 = vmax.f32 %v398, 0.0
      %v431 = vmax.f32 %v399, 0.0
      %v432 = vmax.f32 %v400, 0.0
      %v433 = vmax.f32 %v401, 0.0
      %v434 = vmax.f32 %v402, 0.0
      %v435 = vmax.f32 %v403, 0.0
      %v436 = vmax.f32 %v404, 0.0
      %v437 = vmax.f32 %v405, 0.0
      %v438 = vmax.f32 %v406, 0.0
      %v439 = vmax.f32 %v407, 0.0
      %v440 = vmax.f32 %v408, 0.0
      %v441 = vmax.f32 %v409, 0.0
      %v442 = vmax.f32 %v410, 0.0
      %v443 = vmax.f32 %v411, 0.0
      %v444 = vpack.c.bf16 %v413, %v412
      %v445 = vpack.c.bf16 %v415, %v414
      %v446 = vpack.c.bf16 %v417, %v416
      %v447 = vpack.c.bf16 %v419, %v418
      %v448 = vpack.c.bf16 %v421, %v420
      %v449 = vpack.c.bf16 %v423, %v422
      %v450 = vpack.c.bf16 %v425, %v424
      %v451 = vpack.c.bf16 %v427, %v426
      %v452 = vpack.c.bf16 %v429, %v428
      %v453 = vpack.c.bf16 %v431, %v430
      %v454 = vpack.c.bf16 %v433, %v432
      %v455 = vpack.c.bf16 %v435, %v434
      %v456 = vpack.c.bf16 %v437, %v436
      %v457 = vpack.c.bf16 %v439, %v438
      %v458 = vpack.c.bf16 %v441, %v440
      %v459 = vpack.c.bf16 %v443, %v442
      %460 = vst [vmem:[#allocation2] sm:$0xf] 0
      %461 = vst [vmem:[#allocation2 + $0x4] sm:$0xf] 0
      %462 = vst [vmem:[#allocation2 + $0x8] sm:$0xf] 0
      %vm463 = vcmask 1040384
      %vm464 = vsmask.f32 256
      %vm465 = vmand %vm463, %vm464
      %v466 = vld [vmem:[#allocation2 + $0xc] sm:$0x1]
      %v467 = vsel %vm465, 0, %v466
      %468 = vst [vmem:[#allocation2 + $0xc] sm:$0x1] %v467
      %469 = vst [vmem:[#allocation2 + $0x10] sm:$0xf] 0
      %470 = vst [vmem:[#allocation2 + $0x14] sm:$0xf] 0
      %471 = vst [vmem:[#allocation2 + $0x18] sm:$0xf] 0
      %v472 = vld [vmem:[#allocation2 + $0x1c] sm:$0x1]
      %v473 = vsel %vm465, 0, %v472
      %474 = vst [vmem:[#allocation2 + $0x1c] sm:$0x1] %v473
      %475 = vst [vmem:[#allocation2 + $0x20] sm:$0xf] 0
      %476 = vst [vmem:[#allocation2 + $0x24] sm:$0xf] 0
      %477 = vst [vmem:[#allocation2 + $0x28] sm:$0xf] 0
      %v478 = vld [vmem:[#allocation2 + $0x2c] sm:$0x1]
      %v479 = vsel %vm465, 0, %v478
      %480 = vst [vmem:[#allocation2 + $0x2c] sm:$0x1] %v479
      %481 = vst [vmem:[#allocation2 + $0x30] sm:$0xf] 0
      %482 = vst [vmem:[#allocation2 + $0x34] sm:$0xf] 0
      %483 = vst [vmem:[#allocation2 + $0x38] sm:$0xf] 0
      %v484 = vld [vmem:[#allocation2 + $0x3c] sm:$0x1]
      %v485 = vsel %vm465, 0, %v484
      %486 = vst [vmem:[#allocation2 + $0x3c] sm:$0x1] %v485
      %487 = vst [vmem:[#allocation2 + $0x40] sm:$0xf] 0
      %488 = vst [vmem:[#allocation2 + $0x44] sm:$0xf] 0
      %489 = vst [vmem:[#allocation2 + $0x48] sm:$0xf] 0
      %v490 = vld [vmem:[#allocation2 + $0x4c] sm:$0x1]
      %v491 = vsel %vm465, 0, %v490
      %492 = vst [vmem:[#allocation2 + $0x4c] sm:$0x1] %v491
      %493 = vst [vmem:[#allocation2 + $0x50] sm:$0xf] 0
      %494 = vst [vmem:[#allocation2 + $0x54] sm:$0xf] 0
      %495 = vst [vmem:[#allocation2 + $0x58] sm:$0xf] 0
      %v496 = vld [vmem:[#allocation2 + $0x5c] sm:$0x1]
      %v497 = vsel %vm465, 0, %v496
      %498 = vst [vmem:[#allocation2 + $0x5c] sm:$0x1] %v497
      %499 = vst [vmem:[#allocation2 + $0x60] sm:$0xf] 0
      %500 = vst [vmem:[#allocation2 + $0x64] sm:$0xf] 0
      %501 = vst [vmem:[#allocation2 + $0x68] sm:$0xf] 0
      %v502 = vld [vmem:[#allocation2 + $0x6c] sm:$0x1]
      %v503 = vsel %vm465, 0, %v502
      %504 = vst [vmem:[#allocation2 + $0x6c] sm:$0x1] %v503
      %505 = vst [vmem:[#allocation2 + $0x70] sm:$0xf] 0
      %506 = vst [vmem:[#allocation2 + $0x74] sm:$0xf] 0
      %507 = vst [vmem:[#allocation2 + $0x78] sm:$0xf] 0
      %v508 = vld [vmem:[#allocation2 + $0x7c] sm:$0x1]
      %v509 = vsel %vm465, 0, %v508
      %510 = vst [vmem:[#allocation2 + $0x7c] sm:$0x1] %v509
      %511 = vst [vmem:[#allocation2 + $0x80] sm:$0xf] 0
      %512 = vst [vmem:[#allocation2 + $0x84] sm:$0xf] 0
      %513 = vst [vmem:[#allocation2 + $0x88] sm:$0xf] 0
      %v514 = vld [vmem:[#allocation2 + $0x8c] sm:$0x1]
      %v515 = vsel %vm465, 0, %v514
      %516 = vst [vmem:[#allocation2 + $0x8c] sm:$0x1] %v515
      %517 = vst [vmem:[#allocation2 + $0x90] sm:$0xf] 0
      %518 = vst [vmem:[#allocation2 + $0x94] sm:$0xf] 0
      %519 = vst [vmem:[#allocation2 + $0x98] sm:$0xf] 0
      %v520 = vld [vmem:[#allocation2 + $0x9c] sm:$0x1]
      %v521 = vsel %vm465, 0, %v520
      %522 = vst [vmem:[#allocation2 + $0x9c] sm:$0x1] %v521
      %523 = vst [vmem:[#allocation2 + $0xa0] sm:$0xf] 0
      %524 = vst [vmem:[#allocation2 + $0xa4] sm:$0xf] 0
      %525 = vst [vmem:[#allocation2 + $0xa8] sm:$0xf] 0
      %v526 = vld [vmem:[#allocation2 + $0xac] sm:$0x1]
      %v527 = vsel %vm465, 0, %v526
      %528 = vst [vmem:[#allocation2 + $0xac] sm:$0x1] %v527
      %529 = vst [vmem:[#allocation2 + $0xb0] sm:$0xf] 0
      %530 = vst [vmem:[#allocation2 + $0xb4] sm:$0xf] 0
      %531 = vst [vmem:[#allocation2 + $0xb8] sm:$0xf] 0
      %v532 = vld [vmem:[#allocation2 + $0xbc] sm:$0x1]
      %v533 = vsel %vm465, 0, %v532
      %534 = vst [vmem:[#allocation2 + $0xbc] sm:$0x1] %v533
      %535 = vst [vmem:[#allocation2 + $0xc0] sm:$0xf] 0
      %536 = vst [vmem:[#allocation2 + $0xc4] sm:$0xf] 0
      %537 = vst [vmem:[#allocation2 + $0xc8] sm:$0xf] 0
      %v538 = vld [vmem:[#allocation2 + $0xcc] sm:$0x1]
      %v539 = vsel %vm465, 0, %v538
      %540 = vst [vmem:[#allocation2 + $0xcc] sm:$0x1] %v539
      %541 = vst [vmem:[#allocation2 + $0xd0] sm:$0xf] 0
      %542 = vst [vmem:[#allocation2 + $0xd4] sm:$0xf] 0
      %543 = vst [vmem:[#allocation2 + $0xd8] sm:$0xf] 0
      %v544 = vld [vmem:[#allocation2 + $0xdc] sm:$0x1]
      %v545 = vsel %vm465, 0, %v544
      %546 = vst [vmem:[#allocation2 + $0xdc] sm:$0x1] %v545
      %547 = vst [vmem:[#allocation2 + $0xe0] sm:$0xf] 0
      %548 = vst [vmem:[#allocation2 + $0xe4] sm:$0xf] 0
      %549 = vst [vmem:[#allocation2 + $0xe8] sm:$0xf] 0
      %v550 = vld [vmem:[#allocation2 + $0xec] sm:$0x1]
      %v551 = vsel %vm465, 0, %v550
      %552 = vst [vmem:[#allocation2 + $0xec] sm:$0x1] %v551
      %553 = vst [vmem:[#allocation2 + $0xf0] sm:$0xf] 0
      %554 = vst [vmem:[#allocation2 + $0xf4] sm:$0xf] 0
      %555 = vst [vmem:[#allocation2 + $0xf8] sm:$0xf] 0
      %v556 = vld [vmem:[#allocation2 + $0xfc] sm:$0x1]
      %v557 = vsel %vm465, 0, %v556
      %558 = vst [vmem:[#allocation2 + $0xfc] sm:$0x1] %v557
      %559 = vst [vmem:[#allocation2 + $0x100] sm:$0xf] 0
      %560 = vst [vmem:[#allocation2 + $0x104] sm:$0xf] 0
      %561 = vst [vmem:[#allocation2 + $0x108] sm:$0xf] 0
      %v562 = vld [vmem:[#allocation2 + $0x10c] sm:$0x1]
      %v563 = vsel %vm465, 0, %v562
      %564 = vst [vmem:[#allocation2 + $0x10c] sm:$0x1] %v563
      %565 = vst [vmem:[#allocation2 + $0x110] sm:$0xf] 0
      %566 = vst [vmem:[#allocation2 + $0x114] sm:$0xf] 0
      %567 = vst [vmem:[#allocation2 + $0x118] sm:$0xf] 0
      %v568 = vld [vmem:[#allocation2 + $0x11c] sm:$0x1]
      %v569 = vsel %vm465, 0, %v568
      %570 = vst [vmem:[#allocation2 + $0x11c] sm:$0x1] %v569
      %v587 = vunpack.c.l.b16 %v444
      %v588 = vunpack.c.h.b16 %v444
      %v589 = vunpack.c.l.b16 %v445
      %v590 = vunpack.c.h.b16 %v445
      %v591 = vunpack.c.l.b16 %v446
      %v592 = vunpack.c.h.b16 %v446
      %v593 = vunpack.c.l.b16 %v447
      %v594 = vunpack.c.h.b16 %v447
      %v595 = vunpack.c.l.b16 %v448
      %v596 = vunpack.c.h.b16 %v448
      %v597 = vunpack.c.l.b16 %v449
      %v598 = vunpack.c.h.b16 %v449
      %v599 = vunpack.c.l.b16 %v450
      %v600 = vunpack.c.h.b16 %v450
      %v601 = vunpack.c.l.b16 %v451
      %v602 = vunpack.c.h.b16 %v451
      %v603 = vunpack.c.l.b16 %v452
      %v604 = vunpack.c.h.b16 %v452
      %v605 = vunpack.c.l.b16 %v453
      %v606 = vunpack.c.h.b16 %v453
      %v607 = vunpack.c.l.b16 %v454
      %v608 = vunpack.c.h.b16 %v454
      %v609 = vunpack.c.l.b16 %v455
      %v610 = vunpack.c.h.b16 %v455
      %v611 = vunpack.c.l.b16 %v456
      %v612 = vunpack.c.h.b16 %v456
      %v613 = vunpack.c.l.b16 %v457
      %v614 = vunpack.c.h.b16 %v457
      %v615 = vunpack.c.l.b16 %v458
      %v616 = vunpack.c.h.b16 %v458
      %v617 = vunpack.c.l.b16 %v459
      %v618 = vunpack.c.h.b16 %v459
      %v619 = vpack.c.b16 %v587, %v587
      %v620 = vpack.c.b16 %v588, %v588
      %v621 = vpack.c.b16 %v589, %v589
      %v622 = vpack.c.b16 %v590, %v590
      %v623 = vpack.c.b16 %v591, %v591
      %v624 = vpack.c.b16 %v592, %v592
      %v625 = vpack.c.b16 %v593, %v593
      %v626 = vpack.c.b16 %v594, %v594
      %v627 = vpack.c.b16 %v595, %v595
      %v628 = vpack.c.b16 %v596, %v596
      %v629 = vpack.c.b16 %v597, %v597
      %v630 = vpack.c.b16 %v598, %v598
      %v631 = vpack.c.b16 %v599, %v599
      %v632 = vpack.c.b16 %v600, %v600
      %v633 = vpack.c.b16 %v601, %v601
      %v634 = vpack.c.b16 %v602, %v602
      %v635 = vpack.c.b16 %v603, %v603
      %v636 = vpack.c.b16 %v604, %v604
      %v637 = vpack.c.b16 %v605, %v605
      %v638 = vpack.c.b16 %v606, %v606
      %v639 = vpack.c.b16 %v607, %v607
      %v640 = vpack.c.b16 %v608, %v608
      %v641 = vpack.c.b16 %v609, %v609
      %v642 = vpack.c.b16 %v610, %v610
      %v643 = vpack.c.b16 %v611, %v611
      %v644 = vpack.c.b16 %v612, %v612
      %v645 = vpack.c.b16 %v613, %v613
      %v646 = vpack.c.b16 %v614, %v614
      %v647 = vpack.c.b16 %v615, %v615
      %v648 = vpack.c.b16 %v616, %v616
      %v649 = vpack.c.b16 %v617, %v617
      %v650 = vpack.c.b16 %v618, %v618
      %s683 = scalar_lea.vmem [#allocation2], 16
      %684 = vst [vmem:[%s683 + $0x4] sm:$0xf] %v619
      %685 = vst [vmem:[%s683 + $0x8] sm:$0xf] %v620
      %686 = vst [vmem:[%s683 + $0x14] sm:$0xf] %v621
      %687 = vst [vmem:[%s683 + $0x18] sm:$0xf] %v622
      %688 = vst [vmem:[%s683 + $0x24] sm:$0xf] %v623
      %689 = vst [vmem:[%s683 + $0x28] sm:$0xf] %v624
      %690 = vst [vmem:[%s683 + $0x34] sm:$0xf] %v625
      %691 = vst [vmem:[%s683 + $0x38] sm:$0xf] %v626
      %692 = vst [vmem:[%s683 + $0x44] sm:$0xf] %v627
      %693 = vst [vmem:[%s683 + $0x48] sm:$0xf] %v628
      %694 = vst [vmem:[%s683 + $0x54] sm:$0xf] %v629
      %695 = vst [vmem:[%s683 + $0x58] sm:$0xf] %v630
      %696 = vst [vmem:[%s683 + $0x64] sm:$0xf] %v631
      %697 = vst [vmem:[%s683 + $0x68] sm:$0xf] %v632
      %698 = vst [vmem:[%s683 + $0x74] sm:$0xf] %v633
      %699 = vst [vmem:[%s683 + $0x78] sm:$0xf] %v634
      %700 = vst [vmem:[%s683 + $0x84] sm:$0xf] %v635
      %701 = vst [vmem:[%s683 + $0x88] sm:$0xf] %v636
      %702 = vst [vmem:[%s683 + $0x94] sm:$0xf] %v637
      %703 = vst [vmem:[%s683 + $0x98] sm:$0xf] %v638
      %704 = vst [vmem:[%s683 + $0xa4] sm:$0xf] %v639
      %705 = vst [vmem:[%s683 + $0xa8] sm:$0xf] %v640
      %706 = vst [vmem:[%s683 + $0xb4] sm:$0xf] %v641
      %707 = vst [vmem:[%s683 + $0xb8] sm:$0xf] %v642
      %708 = vst [vmem:[%s683 + $0xc4] sm:$0xf] %v643
      %709 = vst [vmem:[%s683 + $0xc8] sm:$0xf] %v644
      %710 = vst [vmem:[%s683 + $0xd4] sm:$0xf] %v645
      %711 = vst [vmem:[%s683 + $0xd8] sm:$0xf] %v646
      %712 = vst [vmem:[%s683 + $0xe4] sm:$0xf] %v647
      %713 = vst [vmem:[%s683 + $0xe8] sm:$0xf] %v648
      %714 = vst [vmem:[%s683 + $0xf4] sm:$0xf] %v649
      %715 = vst [vmem:[%s683 + $0xf8] sm:$0xf] %v650
      %v716 = vld [vmem:[#allocation2] sm:$0x8]
      %v717 = vld [vmem:[#allocation2 + $0x4] sm:$0xf]
      %v718 = vld [vmem:[#allocation2 + $0x8] sm:$0xf]
      %v719 = vld [vmem:[#allocation2 + $0x10] sm:$0x8]
      %v720 = vld [vmem:[#allocation2 + $0x14] sm:$0xf]
      %v721 = vld [vmem:[#allocation2 + $0x18] sm:$0xf]
      %v722 = vld [vmem:[#allocation2 + $0x20] sm:$0x8]
      %v723 = vld [vmem:[#allocation2 + $0x24] sm:$0xf]
      %v724 = vld [vmem:[#allocation2 + $0x28] sm:$0xf]
      %v725 = vld [vmem:[#allocation2 + $0x30] sm:$0x8]
      %v726 = vld [vmem:[#allocation2 + $0x34] sm:$0xf]
      %v727 = vld [vmem:[#allocation2 + $0x38] sm:$0xf]
      %v728 = vld [vmem:[#allocation2 + $0x40] sm:$0x8]
      %v729 = vld [vmem:[#allocation2 + $0x44] sm:$0xf]
      %v730 = vld [vmem:[#allocation2 + $0x48] sm:$0xf]
      %v731 = vld [vmem:[#allocation2 + $0x50] sm:$0x8]
      %v732 = vld [vmem:[#allocation2 + $0x54] sm:$0xf]
      %v733 = vld [vmem:[#allocation2 + $0x58] sm:$0xf]
      %v734 = vld [vmem:[#allocation2 + $0x60] sm:$0x8]
      %v735 = vld [vmem:[#allocation2 + $0x64] sm:$0xf]
      %v736 = vld [vmem:[#allocation2 + $0x68] sm:$0xf]
      %v737 = vld [vmem:[#allocation2 + $0x70] sm:$0x8]
      %v738 = vld [vmem:[#allocation2 + $0x74] sm:$0xf]
      %v739 = vld [vmem:[#allocation2 + $0x78] sm:$0xf]
      %v740 = vld [vmem:[#allocation2 + $0x80] sm:$0x8]
      %v741 = vld [vmem:[#allocation2 + $0x84] sm:$0xf]
      %v742 = vld [vmem:[#allocation2 + $0x88] sm:$0xf]
      %v743 = vld [vmem:[#allocation2 + $0x90] sm:$0x8]
      %v744 = vld [vmem:[#allocation2 + $0x94] sm:$0xf]
      %v745 = vld [vmem:[#allocation2 + $0x98] sm:$0xf]
      %v746 = vld [vmem:[#allocation2 + $0xa0] sm:$0x8]
      %v747 = vld [vmem:[#allocation2 + $0xa4] sm:$0xf]
      %v748 = vld [vmem:[#allocation2 + $0xa8] sm:$0xf]
      %v749 = vld [vmem:[#allocation2 + $0xb0] sm:$0x8]
      %v750 = vld [vmem:[#allocation2 + $0xb4] sm:$0xf]
      %v751 = vld [vmem:[#allocation2 + $0xb8] sm:$0xf]
      %v752 = vld [vmem:[#allocation2 + $0xc0] sm:$0x8]
      %v753 = vld [vmem:[#allocation2 + $0xc4] sm:$0xf]
      %v754 = vld [vmem:[#allocation2 + $0xc8] sm:$0xf]
      %v755 = vld [vmem:[#allocation2 + $0xd0] sm:$0x8]
      %v756 = vld [vmem:[#allocation2 + $0xd4] sm:$0xf]
      %v757 = vld [vmem:[#allocation2 + $0xd8] sm:$0xf]
      %v758 = vld [vmem:[#allocation2 + $0xe0] sm:$0x8]
      %v759 = vld [vmem:[#allocation2 + $0xe4] sm:$0xf]
      %v760 = vld [vmem:[#allocation2 + $0xe8] sm:$0xf]
      %v761 = vld [vmem:[#allocation2 + $0xf0] sm:$0x8]
      %v762 = vld [vmem:[#allocation2 + $0xf4] sm:$0xf]
      %v763 = vld [vmem:[#allocation2 + $0xf8] sm:$0xf]
      %vm764 = vsmask.f32 4368
      %vm765 = vmor %vm464, %vm764
      %v767 = vshrl.u32 %v716, 16
      %v769 = vrot.slane %v767, 7
      %v770 = vrot.slane %v769, 4
      %v772 = vshrl.u32 %v717, 16
      %v774 = vrot.slane %v772, 7
      %v775 = vshll.u32 %v717, 16
      %v777 = vor.u32 %v774, %v775
      %v778 = vsel %vm765, %v770, %v777
      %v779 = vrot.slane %v774, 4
      %v781 = vshrl.u32 %v718, 16
      %v783 = vrot.slane %v781, 7
      %v784 = vshll.u32 %v718, 16
      %v786 = vor.u32 %v783, %v784
      %v787 = vsel %vm765, %v779, %v786
      %v789 = vshrl.u32 %v719, 16
      %v791 = vrot.slane %v789, 7
      %v792 = vrot.slane %v791, 4
      %v794 = vshrl.u32 %v720, 16
      %v796 = vrot.slane %v794, 7
      %v797 = vshll.u32 %v720, 16
      %v799 = vor.u32 %v796, %v797
      %v800 = vsel %vm765, %v792, %v799
      %v801 = vrot.slane %v796, 4
      %v803 = vshrl.u32 %v721, 16
      %v805 = vrot.slane %v803, 7
      %v806 = vshll.u32 %v721, 16
      %v808 = vor.u32 %v805, %v806
      %v809 = vsel %vm765, %v801, %v808
      %v811 = vshrl.u32 %v722, 16
      %v813 = vrot.slane %v811, 7
      %v814 = vrot.slane %v813, 4
      %v816 = vshrl.u32 %v723, 16
      %v818 = vrot.slane %v816, 7
      %v819 = vshll.u32 %v723, 16
      %v821 = vor.u32 %v818, %v819
      %v822 = vsel %vm765, %v814, %v821
      %v823 = vrot.slane %v818, 4
      %v825 = vshrl.u32 %v724, 16
      %v827 = vrot.slane %v825, 7
      %v828 = vshll.u32 %v724, 16
      %v830 = vor.u32 %v827, %v828
      %v831 = vsel %vm765, %v823, %v830
      %v833 = vshrl.u32 %v725, 16
      %v835 = vrot.slane %v833, 7
      %v836 = vrot.slane %v835, 4
      %v838 = vshrl.u32 %v726, 16
      %v840 = vrot.slane %v838, 7
      %v841 = vshll.u32 %v726, 16
      %v843 = vor.u32 %v840, %v841
      %v844 = vsel %vm765, %v836, %v843
      %v845 = vrot.slane %v840, 4
      %v847 = vshrl.u32 %v727, 16
      %v849 = vrot.slane %v847, 7
      %v850 = vshll.u32 %v727, 16
      %v852 = vor.u32 %v849, %v850
      %v853 = vsel %vm765, %v845, %v852
      %v855 = vshrl.u32 %v728, 16
      %v857 = vrot.slane %v855, 7
      %v858 = vrot.slane %v857, 4
      %v860 = vshrl.u32 %v729, 16
      %v862 = vrot.slane %v860, 7
      %v863 = vshll.u32 %v729, 16
      %v865 = vor.u32 %v862, %v863
      %v866 = vsel %vm765, %v858, %v865
      %v867 = vrot.slane %v862, 4
      %v869 = vshrl.u32 %v730, 16
      %v871 = vrot.slane %v869, 7
      %v872 = vshll.u32 %v730, 16
      %v874 = vor.u32 %v871, %v872
      %v875 = vsel %vm765, %v867, %v874
      %v877 = vshrl.u32 %v731, 16
      %v879 = vrot.slane %v877, 7
      %v880 = vrot.slane %v879, 4
      %v882 = vshrl.u32 %v732, 16
      %v884 = vrot.slane %v882, 7
      %v885 = vshll.u32 %v732, 16
      %v887 = vor.u32 %v884, %v885
      %v888 = vsel %vm765, %v880, %v887
      %v889 = vrot.slane %v884, 4
      %v891 = vshrl.u32 %v733, 16
      %v893 = vrot.slane %v891, 7
      %v894 = vshll.u32 %v733, 16
      %v896 = vor.u32 %v893, %v894
      %v897 = vsel %vm765, %v889, %v896
      %v899 = vshrl.u32 %v734, 16
      %v901 = vrot.slane %v899, 7
      %v902 = vrot.slane %v901, 4
      %v904 = vshrl.u32 %v735, 16
      %v906 = vrot.slane %v904, 7
      %v907 = vshll.u32 %v735, 16
      %v909 = vor.u32 %v906, %v907
      %v910 = vsel %vm765, %v902, %v909
      %v911 = vrot.slane %v906, 4
      %v913 = vshrl.u32 %v736, 16
      %v915 = vrot.slane %v913, 7
      %v916 = vshll.u32 %v736, 16
      %v918 = vor.u32 %v915, %v916
      %v919 = vsel %vm765, %v911, %v918
      %v921 = vshrl.u32 %v737, 16
      %v923 = vrot.slane %v921, 7
      %v924 = vrot.slane %v923, 4
      %v926 = vshrl.u32 %v738, 16
      %v928 = vrot.slane %v926, 7
      %v929 = vshll.u32 %v738, 16
      %v931 = vor.u32 %v928, %v929
      %v932 = vsel %vm765, %v924, %v931
      %v933 = vrot.slane %v928, 4
      %v935 = vshrl.u32 %v739, 16
      %v937 = vrot.slane %v935, 7
      %v938 = vshll.u32 %v739, 16
      %v940 = vor.u32 %v937, %v938
      %v941 = vsel %vm765, %v933, %v940
      %v943 = vshrl.u32 %v740, 16
      %v945 = vrot.slane %v943, 7
      %v946 = vrot.slane %v945, 4
      %v948 = vshrl.u32 %v741, 16
      %v950 = vrot.slane %v948, 7
      %v951 = vshll.u32 %v741, 16
      %v953 = vor.u32 %v950, %v951
      %v954 = vsel %vm765, %v946, %v953
      %v955 = vrot.slane %v950, 4
      %v957 = vshrl.u32 %v742, 16
      %v959 = vrot.slane %v957, 7
      %v960 = vshll.u32 %v742, 16
      %v962 = vor.u32 %v959, %v960
      %v963 = vsel %vm765, %v955, %v962
      %v965 = vshrl.u32 %v743, 16
      %v967 = vrot.slane %v965, 7
      %v968 = vrot.slane %v967, 4
      %v970 = vshrl.u32 %v744, 16
      %v972 = vrot.slane %v970, 7
      %v973 = vshll.u32 %v744, 16
      %v975 = vor.u32 %v972, %v973
      %v976 = vsel %vm765, %v968, %v975
      %v977 = vrot.slane %v972, 4
      %v979 = vshrl.u32 %v745, 16
      %v981 = vrot.slane %v979, 7
      %v982 = vshll.u32 %v745, 16
      %v984 = vor.u32 %v981, %v982
      %v985 = vsel %vm765, %v977, %v984
      %v987 = vshrl.u32 %v746, 16
      %v989 = vrot.slane %v987, 7
      %v990 = vrot.slane %v989, 4
      %v992 = vshrl.u32 %v747, 16
      %v994 = vrot.slane %v992, 7
      %v995 = vshll.u32 %v747, 16
      %v997 = vor.u32 %v994, %v995
      %v998 = vsel %vm765, %v990, %v997
      %v999 = vrot.slane %v994, 4
      %v1001 = vshrl.u32 %v748, 16
      %v1003 = vrot.slane %v1001, 7
      %v1004 = vshll.u32 %v748, 16
      %v1006 = vor.u32 %v1003, %v1004
      %v1007 = vsel %vm765, %v999, %v1006
      %v1009 = vshrl.u32 %v749, 16
      %v1011 = vrot.slane %v1009, 7
      %v1012 = vrot.slane %v1011, 4
      %v1014 = vshrl.u32 %v750, 16
      %v1016 = vrot.slane %v1014, 7
      %v1017 = vshll.u32 %v750, 16
      %v1019 = vor.u32 %v1016, %v1017
      %v1020 = vsel %vm765, %v1012, %v1019
      %v1021 = vrot.slane %v1016, 4
      %v1023 = vshrl.u32 %v751, 16
      %v1025 = vrot.slane %v1023, 7
      %v1026 = vshll.u32 %v751, 16
      %v1028 = vor.u32 %v1025, %v1026
      %v1029 = vsel %vm765, %v1021, %v1028
      %v1031 = vshrl.u32 %v752, 16
      %v1033 = vrot.slane %v1031, 7
      %v1034 = vrot.slane %v1033, 4
      %v1036 = vshrl.u32 %v753, 16
      %v1038 = vrot.slane %v1036, 7
      %v1039 = vshll.u32 %v753, 16
      %v1041 = vor.u32 %v1038, %v1039
      %v1042 = vsel %vm765, %v1034, %v1041
      %v1043 = vrot.slane %v1038, 4
      %v1045 = vshrl.u32 %v754, 16
      %v1047 = vrot.slane %v1045, 7
      %v1048 = vshll.u32 %v754, 16
      %v1050 = vor.u32 %v1047, %v1048
      %v1051 = vsel %vm765, %v1043, %v1050
      %v1053 = vshrl.u32 %v755, 16
      %v1055 = vrot.slane %v1053, 7
      %v1056 = vrot.slane %v1055, 4
      %v1058 = vshrl.u32 %v756, 16
      %v1060 = vrot.slane %v1058, 7
      %v1061 = vshll.u32 %v756, 16
      %v1063 = vor.u32 %v1060, %v1061
      %v1064 = vsel %vm765, %v1056, %v1063
      %v1065 = vrot.slane %v1060, 4
      %v1067 = vshrl.u32 %v757, 16
      %v1069 = vrot.slane %v1067, 7
      %v1070 = vshll.u32 %v757, 16
      %v1072 = vor.u32 %v1069, %v1070
      %v1073 = vsel %vm765, %v1065, %v1072
      %v1075 = vshrl.u32 %v758, 16
      %v1077 = vrot.slane %v1075, 7
      %v1078 = vrot.slane %v1077, 4
      %v1080 = vshrl.u32 %v759, 16
      %v1082 = vrot.slane %v1080, 7
      %v1083 = vshll.u32 %v759, 16
      %v1085 = vor.u32 %v1082, %v1083
      %v1086 = vsel %vm765, %v1078, %v1085
      %v1087 = vrot.slane %v1082, 4
      %v1089 = vshrl.u32 %v760, 16
      %v1091 = vrot.slane %v1089, 7
      %v1092 = vshll.u32 %v760, 16
      %v1094 = vor.u32 %v1091, %v1092
      %v1095 = vsel %vm765, %v1087, %v1094
      %v1097 = vshrl.u32 %v761, 16
      %v1099 = vrot.slane %v1097, 7
      %v1100 = vrot.slane %v1099, 4
      %v1102 = vshrl.u32 %v762, 16
      %v1104 = vrot.slane %v1102, 7
      %v1105 = vshll.u32 %v762, 16
      %v1107 = vor.u32 %v1104, %v1105
      %v1108 = vsel %vm765, %v1100, %v1107
      %v1109 = vrot.slane %v1104, 4
      %v1111 = vshrl.u32 %v763, 16
      %v1113 = vrot.slane %v1111, 7
      %v1114 = vshll.u32 %v763, 16
      %v1116 = vor.u32 %v1113, %v1114
      %v1117 = vsel %vm765, %v1109, %v1116
      %v1118 = vld [vmem:[%s3] sm:$0xf]
      %v1119 = vld [vmem:[%s3 + $0x4] sm:$0xf]
      %v1120 = vld [vmem:[%s3 + $0x8] sm:$0xf]
      %v1121 = vld [vmem:[%s3 + $0xc] sm:$0xf]
      %v1122 = vld [vmem:[%s3 + $0x10] sm:$0xf]
      %v1123 = vld [vmem:[%s3 + $0x14] sm:$0xf]
      %v1124 = vld [vmem:[%s3 + $0x18] sm:$0xf]
      %v1125 = vld [vmem:[%s3 + $0x1c] sm:$0xf]
      %v1126 = vld [vmem:[%s3 + $0x20] sm:$0xf]
      %v1127 = vld [vmem:[%s3 + $0x24] sm:$0xf]
      %v1128 = vld [vmem:[%s3 + $0x28] sm:$0xf]
      %v1129 = vld [vmem:[%s3 + $0x2c] sm:$0xf]
      %v1130 = vld [vmem:[%s3 + $0x30] sm:$0xf]
      %v1131 = vld [vmem:[%s3 + $0x34] sm:$0xf]
      %v1132 = vld [vmem:[%s3 + $0x38] sm:$0xf]
      %v1133 = vld [vmem:[%s3 + $0x3c] sm:$0xf]
      %s1134 = scalar_lea.vmem %s3, 64
      %v1135 = vld [vmem:[%s1134] sm:$0xf]
      %v1136 = vld [vmem:[%s1134 + $0x4] sm:$0xf]
      %v1137 = vld [vmem:[%s1134 + $0x8] sm:$0xf]
      %v1138 = vld [vmem:[%s1134 + $0xc] sm:$0xf]
      %v1139 = vld [vmem:[%s1134 + $0x10] sm:$0xf]
      %v1140 = vld [vmem:[%s1134 + $0x14] sm:$0xf]
      %v1141 = vld [vmem:[%s1134 + $0x18] sm:$0xf]
      %v1142 = vld [vmem:[%s1134 + $0x1c] sm:$0xf]
      %v1143 = vld [vmem:[%s1134 + $0x20] sm:$0xf]
      %v1144 = vld [vmem:[%s1134 + $0x24] sm:$0xf]
      %v1145 = vld [vmem:[%s1134 + $0x28] sm:$0xf]
      %v1146 = vld [vmem:[%s1134 + $0x2c] sm:$0xf]
      %v1147 = vld [vmem:[%s1134 + $0x30] sm:$0xf]
      %v1148 = vld [vmem:[%s1134 + $0x34] sm:$0xf]
      %v1149 = vld [vmem:[%s1134 + $0x38] sm:$0xf]
      %v1150 = vld [vmem:[%s1134 + $0x3c] sm:$0xf]
      %v1183 = vunpack.c.l.b16 %v717
      %v1184 = vunpack.c.l.b16 %v718
      %v1185 = vunpack.c.l.b16 %v720
      %v1186 = vunpack.c.l.b16 %v721
      %v1187 = vunpack.c.l.b16 %v723
      %v1188 = vunpack.c.l.b16 %v724
      %v1189 = vunpack.c.l.b16 %v726
      %v1190 = vunpack.c.l.b16 %v727
      %v1191 = vunpack.c.l.b16 %v729
      %v1192 = vunpack.c.l.b16 %v730
      %v1193 = vunpack.c.l.b16 %v732
      %v1194 = vunpack.c.l.b16 %v733
      %v1195 = vunpack.c.l.b16 %v735
      %v1196 = vunpack.c.l.b16 %v736
      %v1197 = vunpack.c.l.b16 %v738
      %v1198 = vunpack.c.l.b16 %v739
      %v1199 = vunpack.c.l.b16 %v741
      %v1200 = vunpack.c.l.b16 %v742
      %v1201 = vunpack.c.l.b16 %v744
      %v1202 = vunpack.c.l.b16 %v745
      %v1203 = vunpack.c.l.b16 %v747
      %v1204 = vunpack.c.l.b16 %v748
      %v1205 = vunpack.c.l.b16 %v750
      %v1206 = vunpack.c.l.b16 %v751
      %v1207 = vunpack.c.l.b16 %v753
      %v1208 = vunpack.c.l.b16 %v754
      %v1209 = vunpack.c.l.b16 %v756
      %v1210 = vunpack.c.l.b16 %v757
      %v1211 = vunpack.c.l.b16 %v759
      %v1212 = vunpack.c.l.b16 %v760
      %v1213 = vunpack.c.l.b16 %v762
      %v1214 = vunpack.c.l.b16 %v763
      %v1215 = vpack.c.b16 %v1184, %v1183
      %v1216 = vpack.c.b16 %v1186, %v1185
      %v1217 = vpack.c.b16 %v1188, %v1187
      %v1218 = vpack.c.b16 %v1190, %v1189
      %v1219 = vpack.c.b16 %v1192, %v1191
      %v1220 = vpack.c.b16 %v1194, %v1193
      %v1221 = vpack.c.b16 %v1196, %v1195
      %v1222 = vpack.c.b16 %v1198, %v1197
      %v1223 = vpack.c.b16 %v1200, %v1199
      %v1224 = vpack.c.b16 %v1202, %v1201
      %v1225 = vpack.c.b16 %v1204, %v1203
      %v1226 = vpack.c.b16 %v1206, %v1205
      %v1227 = vpack.c.b16 %v1208, %v1207
      %v1228 = vpack.c.b16 %v1210, %v1209
      %v1229 = vpack.c.b16 %v1212, %v1211
      %v1230 = vpack.c.b16 %v1214, %v1213
      %v1263 = vunpack.c.l.b16 %v1135
      %v1264 = vunpack.c.l.b16 %v1136
      %v1265 = vunpack.c.l.b16 %v1137
      %v1266 = vunpack.c.l.b16 %v1138
      %v1267 = vunpack.c.l.b16 %v1139
      %v1268 = vunpack.c.l.b16 %v1140
      %v1269 = vunpack.c.l.b16 %v1141
      %v1270 = vunpack.c.l.b16 %v1142
      %v1271 = vunpack.c.l.b16 %v1143
      %v1272 = vunpack.c.l.b16 %v1144
      %v1273 = vunpack.c.l.b16 %v1145
      %v1274 = vunpack.c.l.b16 %v1146
      %v1275 = vunpack.c.l.b16 %v1147
      %v1276 = vunpack.c.l.b16 %v1148
      %v1277 = vunpack.c.l.b16 %v1149
      %v1278 = vunpack.c.l.b16 %v1150
      %v1279 = vpack.c.b16 %v1264, %v1263
      %v1280 = vpack.c.b16 %v1266, %v1265
      %v1281 = vpack.c.b16 %v1268, %v1267
      %v1282 = vpack.c.b16 %v1270, %v1269
      %v1283 = vpack.c.b16 %v1272, %v1271
      %v1284 = vpack.c.b16 %v1274, %v1273
      %v1285 = vpack.c.b16 %v1276, %v1275
      %v1286 = vpack.c.b16 %v1278, %v1277
      %1295 = vmatprep.subr.bf16.mxu0 0
      %1296 = vmatpush1.bf16.msra.mxu0 %v1279
      %1297 = vmatprep.subr.bf16.mxu0 0
      %1298 = vmatpush1.bf16.msra.mxu0 %v1280
      %1299 = vmatprep.subr.bf16.mxu0 0
      %1300 = vmatpush1.bf16.msra.mxu0 %v1281
      %1301 = vmatprep.subr.bf16.mxu0 0
      %1302 = vmatpush1.bf16.msra.mxu0 %v1282
      %1303 = vmatprep.subr.bf16.mxu0 0
      %1304 = vmatpush1.bf16.msra.mxu0 %v1283
      %1305 = vmatprep.subr.bf16.mxu0 0
      %1306 = vmatpush1.bf16.msra.mxu0 %v1284
      %1307 = vmatprep.subr.bf16.mxu0 0
      %1308 = vmatpush1.bf16.msra.mxu0 %v1285
      %1309 = vmatprep.subr.bf16.mxu0 0
      %1310 = vmatpush1.bf16.msra.mxu0 %v1286
      %1311 = vmatprep.subr.bf16.mxu0 0
      %1312 = vmatpush1.bf16.msra.mxu0 0
      %1313 = vmatprep.subr.bf16.mxu0 0
      %1314 = vmatpush1.bf16.msra.mxu0 0
      %1315 = vmatprep.subr.bf16.mxu0 0
      %1316 = vmatpush1.bf16.msra.mxu0 0
      %1317 = vmatprep.subr.bf16.mxu0 0
      %1318 = vmatpush1.bf16.msra.mxu0 0
      %1319 = vmatprep.subr.bf16.mxu0 0
      %1320 = vmatpush1.bf16.msra.mxu0 0
      %1321 = vmatprep.subr.bf16.mxu0 0
      %1322 = vmatpush1.bf16.msra.mxu0 0
      %1323 = vmatprep.subr.bf16.mxu0 0
      %1324 = vmatpush1.bf16.msra.mxu0 0
      %1325 = vmatprep.subr.bf16.mxu0 0
      %1326 = vmatpush1.bf16.msra.mxu0 0
      %1327 = vmatprep.mubr.bf16.mxu0 0
      %1328 = vmatmul.mubr.bf16.gmra.mrb[0].mxu0 %v1215
      %v1329 = vpop.f32.mrb[0].mxu0
      %v1330 = vadd.f32 0.0, %v1329
      %v1331 = vpop.f32.mrb[0].mxu0
      %v1332 = vpop.f32.mrb[0].mxu0
      %v1333 = vadd.f32 0.0, %v1332
      %v1334 = vpop.f32.mrb[0].mxu0
      %1335 = vmatprep.mubr.bf16.mxu0 0
      %1336 = vmatmul.mubr.bf16.gmra.mrb[0].mxu0 %v1216
      %v1337 = vpop.f32.mrb[0].mxu0
      %v1338 = vadd.f32 0.0, %v1337
      %v1339 = vpop.f32.mrb[0].mxu0
      %v1340 = vpop.f32.mrb[0].mxu0
      %v1341 = vadd.f32 0.0, %v1340
      %v1342 = vpop.f32.mrb[0].mxu0
      %1343 = vmatprep.mubr.bf16.mxu0 0
      %1344 = vmatmul.mubr.bf16.gmra.mrb[0].mxu0 %v1217
      %v1345 = vpop.f32.mrb[0].mxu0
      %v1346 = vadd.f32 0.0, %v1345
      %v1347 = vpop.f32.mrb[0].mxu0
      %v1348 = vpop.f32.mrb[0].mxu0
      %v1349 = vadd.f32 0.0, %v1348
      %v1350 = vpop.f32.mrb[0].mxu0
      %1351 = vmatprep.mubr.bf16.mxu0 0
      %1352 = vmatmul.mubr.bf16.gmra.mrb[0].mxu0 %v1218
      %v1353 = vpop.f32.mrb[0].mxu0
      %v1354 = vadd.f32 0.0, %v1353
      %v1355 = vpop.f32.mrb[0].mxu0
      %v1356 = vpop.f32.mrb[0].mxu0
      %v1357 = vadd.f32 0.0, %v1356
      %v1358 = vpop.f32.mrb[0].mxu0
      %1359 = vmatprep.mubr.bf16.mxu0 0
      %1360 = vmatmul.mubr.bf16.gmra.mrb[0].mxu0 %v1219
      %v1361 = vpop.f32.mrb[0].mxu0
      %v1362 = vadd.f32 0.0, %v1361
      %v1363 = vpop.f32.mrb[0].mxu0
      %v1364 = vpop.f32.mrb[0].mxu0
      %v1365 = vadd.f32 0.0, %v1364
      %v1366 = vpop.f32.mrb[0].mxu0
      %1367 = vmatprep.mubr.bf16.mxu0 0
      %1368 = vmatmul.mubr.bf16.gmra.mrb[0].mxu0 %v1220
      %v1369 = vpop.f32.mrb[0].mxu0
      %v1370 = vadd.f32 0.0, %v1369
      %v1371 = vpop.f32.mrb[0].mxu0
      %v1372 = vpop.f32.mrb[0].mxu0
      %v1373 = vadd.f32 0.0, %v1372
      %v1374 = vpop.f32.mrb[0].mxu0
      %1375 = vmatprep.mubr.bf16.mxu0 0
      %1376 = vmatmul.mubr.bf16.gmra.mrb[0].mxu0 %v1221
      %v1377 = vpop.f32.mrb[0].mxu0
      %v1378 = vadd.f32 0.0, %v1377
      %v1379 = vpop.f32.mrb[0].mxu0
      %v1380 = vpop.f32.mrb[0].mxu0
      %v1381 = vadd.f32 0.0, %v1380
      %v1382 = vpop.f32.mrb[0].mxu0
      %1383 = vmatprep.mubr.bf16.mxu0 0
      %1384 = vmatmul.mubr.bf16.gmra.mrb[0].mxu0 %v1222
      %v1385 = vpop.f32.mrb[0].mxu0
      %v1386 = vadd.f32 0.0, %v1385
      %v1387 = vpop.f32.mrb[0].mxu0
      %v1388 = vpop.f32.mrb[0].mxu0
      %v1389 = vadd.f32 0.0, %v1388
      %v1390 = vpop.f32.mrb[0].mxu0
      %1391 = vmatprep.mubr.bf16.mxu0 0
      %1392 = vmatmul.mubr.bf16.gmra.mrb[0].mxu0 %v1223
      %v1393 = vpop.f32.mrb[0].mxu0
      %v1394 = vadd.f32 0.0, %v1393
      %v1395 = vpop.f32.mrb[0].mxu0
      %v1396 = vpop.f32.mrb[0].mxu0
      %v1397 = vadd.f32 0.0, %v1396
      %v1398 = vpop.f32.mrb[0].mxu0
      %1399 = vmatprep.mubr.bf16.mxu0 0
      %1400 = vmatmul.mubr.bf16.gmra.mrb[0].mxu0 %v1224
      %v1401 = vpop.f32.mrb[0].mxu0
      %v1402 = vadd.f32 0.0, %v1401
      %v1403 = vpop.f32.mrb[0].mxu0
      %v1404 = vpop.f32.mrb[0].mxu0
      %v1405 = vadd.f32 0.0, %v1404
      %v1406 = vpop.f32.mrb[0].mxu0
      %1407 = vmatprep.mubr.bf16.mxu0 0
      %1408 = vmatmul.mubr.bf16.gmra.mrb[0].mxu0 %v1225
      %v1409 = vpop.f32.mrb[0].mxu0
      %v1410 = vadd.f32 0.0, %v1409
      %v1411 = vpop.f32.mrb[0].mxu0
      %v1412 = vpop.f32.mrb[0].mxu0
      %v1413 = vadd.f32 0.0, %v1412
      %v1414 = vpop.f32.mrb[0].mxu0
      %1415 = vmatprep.mubr.bf16.mxu0 0
      %1416 = vmatmul.mubr.bf16.gmra.mrb[0].mxu0 %v1226
      %v1417 = vpop.f32.mrb[0].mxu0
      %v1418 = vadd.f32 0.0, %v1417
      %v1419 = vpop.f32.mrb[0].mxu0
      %v1420 = vpop.f32.mrb[0].mxu0
      %v1421 = vadd.f32 0.0, %v1420
      %v1422 = vpop.f32.mrb[0].mxu0
      %1423 = vmatprep.mubr.bf16.mxu0 0
      %1424 = vmatmul.mubr.bf16.gmra.mrb[0].mxu0 %v1227
      %v1425 = vpop.f32.mrb[0].mxu0
      %v1426 = vadd.f32 0.0, %v1425
      %v1427 = vpop.f32.mrb[0].mxu0
      %v1428 = vpop.f32.mrb[0].mxu0
      %v1429 = vadd.f32 0.0, %v1428
      %v1430 = vpop.f32.mrb[0].mxu0
      %1431 = vmatprep.mubr.bf16.mxu0 0
      %1432 = vmatmul.mubr.bf16.gmra.mrb[0].mxu0 %v1228
      %v1433 = vpop.f32.mrb[0].mxu0
      %v1434 = vadd.f32 0.0, %v1433
      %v1435 = vpop.f32.mrb[0].mxu0
      %v1436 = vpop.f32.mrb[0].mxu0
      %v1437 = vadd.f32 0.0, %v1436
      %v1438 = vpop.f32.mrb[0].mxu0
      %1439 = vmatprep.mubr.bf16.mxu0 0
      %1440 = vmatmul.mubr.bf16.gmra.mrb[0].mxu0 %v1229
      %v1441 = vpop.f32.mrb[0].mxu0
      %v1442 = vadd.f32 0.0, %v1441
      %v1443 = vpop.f32.mrb[0].mxu0
      %v1444 = vpop.f32.mrb[0].mxu0
      %v1445 = vadd.f32 0.0, %v1444
      %v1446 = vpop.f32.mrb[0].mxu0
      %1447 = vmatprep.mubr.bf16.mxu0 0
      %1448 = vmatmul.mubr.bf16.gmra.mrb[0].mxu0 %v1230
      %v1449 = vpop.f32.mrb[0].mxu0
      %v1450 = vadd.f32 0.0, %v1449
      %v1451 = vpop.f32.mrb[0].mxu0
      %v1452 = vpop.f32.mrb[0].mxu0
      %v1453 = vadd.f32 0.0, %v1452
      %v1454 = vpop.f32.mrb[0].mxu0
      %1455 = vdwg.mxu0
      %v1456 = vunpack.c.l.b16 %v778
      %v1457 = vunpack.c.l.b16 %v787
      %v1458 = vunpack.c.l.b16 %v800
      %v1459 = vunpack.c.l.b16 %v809
      %v1460 = vunpack.c.l.b16 %v822
      %v1461 = vunpack.c.l.b16 %v831
      %v1462 = vunpack.c.l.b16 %v844
      %v1463 = vunpack.c.l.b16 %v853
      %v1464 = vunpack.c.l.b16 %v866
      %v1465 = vunpack.c.l.b16 %v875
      %v1466 = vunpack.c.l.b16 %v888
      %v1467 = vunpack.c.l.b16 %v897
      %v1468 = vunpack.c.l.b16 %v910
      %v1469 = vunpack.c.l.b16 %v919
      %v1470 = vunpack.c.l.b16 %v932
      %v1471 = vunpack.c.l.b16 %v941
      %v1472 = vunpack.c.l.b16 %v954
      %v1473 = vunpack.c.l.b16 %v963
      %v1474 = vunpack.c.l.b16 %v976
      %v1475 = vunpack.c.l.b16 %v985
      %v1476 = vunpack.c.l.b16 %v998
      %v1477 = vunpack.c.l.b16 %v1007
      %v1478 = vunpack.c.l.b16 %v1020
      %v1479 = vunpack.c.l.b16 %v1029
      %v1480 = vunpack.c.l.b16 %v1042
      %v1481 = vunpack.c.l.b16 %v1051
      %v1482 = vunpack.c.l.b16 %v1064
      %v1483 = vunpack.c.l.b16 %v1073
      %v1484 = vunpack.c.l.b16 %v1086
      %v1485 = vunpack.c.l.b16 %v1095
      %v1486 = vunpack.c.l.b16 %v1108
      %v1487 = vunpack.c.l.b16 %v1117
      %v1488 = vpack.c.b16 %v1457, %v1456
      %v1489 = vpack.c.b16 %v1459, %v1458
      %v1490 = vpack.c.b16 %v1461, %v1460
      %v1491 = vpack.c.b16 %v1463, %v1462
      %v1492 = vpack.c.b16 %v1465, %v1464
      %v1493 = vpack.c.b16 %v1467, %v1466
      %v1494 = vpack.c.b16 %v1469, %v1468
      %v1495 = vpack.c.b16 %v1471, %v1470
      %v1496 = vpack.c.b16 %v1473, %v1472
      %v1497 = vpack.c.b16 %v1475, %v1474
      %v1498 = vpack.c.b16 %v1477, %v1476
      %v1499 = vpack.c.b16 %v1479, %v1478
      %v1500 = vpack.c.b16 %v1481, %v1480
      %v1501 = vpack.c.b16 %v1483, %v1482
      %v1502 = vpack.c.b16 %v1485, %v1484
      %v1503 = vpack.c.b16 %v1487, %v1486
      %v1536 = vunpack.c.l.b16 %v1118
      %v1537 = vunpack.c.l.b16 %v1119
      %v1538 = vunpack.c.l.b16 %v1120
      %v1539 = vunpack.c.l.b16 %v1121
      %v1540 = vunpack.c.l.b16 %v1122
      %v1541 = vunpack.c.l.b16 %v1123
      %v1542 = vunpack.c.l.b16 %v1124
      %v1543 = vunpack.c.l.b16 %v1125
      %v1544 = vunpack.c.l.b16 %v1126
      %v1545 = vunpack.c.l.b16 %v1127
      %v1546 = vunpack.c.l.b16 %v1128
      %v1547 = vunpack.c.l.b16 %v1129
      %v1548 = vunpack.c.l.b16 %v1130
      %v1549 = vunpack.c.l.b16 %v1131
      %v1550 = vunpack.c.l.b16 %v1132
      %v1551 = vunpack.c.l.b16 %v1133
      %v1552 = vpack.c.b16 %v1537, %v1536
      %v1553 = vpack.c.b16 %v1539, %v1538
      %v1554 = vpack.c.b16 %v1541, %v1540
      %v1555 = vpack.c.b16 %v1543, %v1542
      %v1556 = vpack.c.b16 %v1545, %v1544
      %v1557 = vpack.c.b16 %v1547, %v1546
      %v1558 = vpack.c.b16 %v1549, %v1548
      %v1559 = vpack.c.b16 %v1551, %v1550
      %1568 = vmatprep.subr.bf16.mxu0 0
      %1569 = vmatpush1.bf16.msra.mxu0 %v1552
      %1570 = vmatprep.subr.bf16.mxu0 0
      %1571 = vmatpush1.bf16.msra.mxu0 %v1553
      %1572 = vmatprep.subr.bf16.mxu0 0
      %1573 = vmatpush1.bf16.msra.mxu0 %v1554
      %1574 = vmatprep.subr.bf16.mxu0 0
      %1575 = vmatpush1.bf16.msra.mxu0 %v1555
      %1576 = vmatprep.subr.bf16.mxu0 0
      %1577 = vmatpush1.bf16.msra.mxu0 %v1556
      %1578 = vmatprep.subr.bf16.mxu0 0
      %1579 = vmatpush1.bf16.msra.mxu0 %v1557
      %1580 = vmatprep.subr.bf16.mxu0 0
      %1581 = vmatpush1.bf16.msra.mxu0 %v1558
      %1582 = vmatprep.subr.bf16.mxu0 0
      %1583 = vmatpush1.bf16.msra.mxu0 %v1559
      %1584 = vmatprep.subr.bf16.mxu0 0
      %1585 = vmatpush1.bf16.msra.mxu0 0
      %1586 = vmatprep.subr.bf16.mxu0 0
      %1587 = vmatpush1.bf16.msra.mxu0 0
      %1588 = vmatprep.subr.bf16.mxu0 0
      %1589 = vmatpush1.bf16.msra.mxu0 0
      %1590 = vmatprep.subr.bf16.mxu0 0
      %1591 = vmatpush1.bf16.msra.mxu0 0
      %1592 = vmatprep.subr.bf16.mxu0 0
      %1593 = vmatpush1.bf16.msra.mxu0 0
      %1594 = vmatprep.subr.bf16.mxu0 0
      %1595 = vmatpush1.bf16.msra.mxu0 0
      %1596 = vmatprep.subr.bf16.mxu0 0
      %1597 = vmatpush1.bf16.msra.mxu0 0
      %1598 = vmatprep.subr.bf16.mxu0 0
      %1599 = vmatpush1.bf16.msra.mxu0 0
      %1600 = vmatprep.mubr.bf16.mxu0 0
      %1601 = vmatmul.mubr.bf16.gmra.mrb[0].mxu0 %v1488
      %v1602 = vpop.f32.mrb[0].mxu0
      %v1603 = vadd.f32 %v1330, %v1602
      %v1604 = vpop.f32.mrb[0].mxu0
      %v1605 = vpop.f32.mrb[0].mxu0
      %v1606 = vadd.f32 %v1333, %v1605
      %v1607 = vpop.f32.mrb[0].mxu0
      %1608 = vmatprep.mubr.bf16.mxu0 0
      %1609 = vmatmul.mubr.bf16.gmra.mrb[0].mxu0 %v1489
      %v1610 = vpop.f32.mrb[0].mxu0
      %v1611 = vadd.f32 %v1338, %v1610
      %v1612 = vpop.f32.mrb[0].mxu0
      %v1613 = vpop.f32.mrb[0].mxu0
      %v1614 = vadd.f32 %v1341, %v1613
      %v1615 = vpop.f32.mrb[0].mxu0
      %1616 = vmatprep.mubr.bf16.mxu0 0
      %1617 = vmatmul.mubr.bf16.gmra.mrb[0].mxu0 %v1490
      %v1618 = vpop.f32.mrb[0].mxu0
      %v1619 = vadd.f32 %v1346, %v1618
      %v1620 = vpop.f32.mrb[0].mxu0
      %v1621 = vpop.f32.mrb[0].mxu0
      %v1622 = vadd.f32 %v1349, %v1621
      %v1623 = vpop.f32.mrb[0].mxu0
      %1624 = vmatprep.mubr.bf16.mxu0 0
      %1625 = vmatmul.mubr.bf16.gmra.mrb[0].mxu0 %v1491
      %v1626 = vpop.f32.mrb[0].mxu0
      %v1627 = vadd.f32 %v1354, %v1626
      %v1628 = vpop.f32.mrb[0].mxu0
      %v1629 = vpop.f32.mrb[0].mxu0
      %v1630 = vadd.f32 %v1357, %v1629
      %v1631 = vpop.f32.mrb[0].mxu0
      %1632 = vmatprep.mubr.bf16.mxu0 0
      %1633 = vmatmul.mubr.bf16.gmra.mrb[0].mxu0 %v1492
      %v1634 = vpop.f32.mrb[0].mxu0
      %v1635 = vadd.f32 %v1362, %v1634
      %v1636 = vpop.f32.mrb[0].mxu0
      %v1637 = vpop.f32.mrb[0].mxu0
      %v1638 = vadd.f32 %v1365, %v1637
      %v1639 = vpop.f32.mrb[0].mxu0
      %1640 = vmatprep.mubr.bf16.mxu0 0
      %1641 = vmatmul.mubr.bf16.gmra.mrb[0].mxu0 %v1493
      %v1642 = vpop.f32.mrb[0].mxu0
      %v1643 = vadd.f32 %v1370, %v1642
      %v1644 = vpop.f32.mrb[0].mxu0
      %v1645 = vpop.f32.mrb[0].mxu0
      %v1646 = vadd.f32 %v1373, %v1645
      %v1647 = vpop.f32.mrb[0].mxu0
      %1648 = vmatprep.mubr.bf16.mxu0 0
      %1649 = vmatmul.mubr.bf16.gmra.mrb[0].mxu0 %v1494
      %v1650 = vpop.f32.mrb[0].mxu0
      %v1651 = vadd.f32 %v1378, %v1650
      %v1652 = vpop.f32.mrb[0].mxu0
      %v1653 = vpop.f32.mrb[0].mxu0
      %v1654 = vadd.f32 %v1381, %v1653
      %v1655 = vpop.f32.mrb[0].mxu0
      %1656 = vmatprep.mubr.bf16.mxu0 0
      %1657 = vmatmul.mubr.bf16.gmra.mrb[0].mxu0 %v1495
      %v1658 = vpop.f32.mrb[0].mxu0
      %v1659 = vadd.f32 %v1386, %v1658
      %v1660 = vpop.f32.mrb[0].mxu0
      %v1661 = vpop.f32.mrb[0].mxu0
      %v1662 = vadd.f32 %v1389, %v1661
      %v1663 = vpop.f32.mrb[0].mxu0
      %1664 = vmatprep.mubr.bf16.mxu0 0
      %1665 = vmatmul.mubr.bf16.gmra.mrb[0].mxu0 %v1496
      %v1666 = vpop.f32.mrb[0].mxu0
      %v1667 = vadd.f32 %v1394, %v1666
      %v1668 = vpop.f32.mrb[0].mxu0
      %v1669 = vpop.f32.mrb[0].mxu0
      %v1670 = vadd.f32 %v1397, %v1669
      %v1671 = vpop.f32.mrb[0].mxu0
      %1672 = vmatprep.mubr.bf16.mxu0 0
      %1673 = vmatmul.mubr.bf16.gmra.mrb[0].mxu0 %v1497
      %v1674 = vpop.f32.mrb[0].mxu0
      %v1675 = vadd.f32 %v1402, %v1674
      %v1676 = vpop.f32.mrb[0].mxu0
      %v1677 = vpop.f32.mrb[0].mxu0
      %v1678 = vadd.f32 %v1405, %v1677
      %v1679 = vpop.f32.mrb[0].mxu0
      %1680 = vmatprep.mubr.bf16.mxu0 0
      %1681 = vmatmul.mubr.bf16.gmra.mrb[0].mxu0 %v1498
      %v1682 = vpop.f32.mrb[0].mxu0
      %v1683 = vadd.f32 %v1410, %v1682
      %v1684 = vpop.f32.mrb[0].mxu0
      %v1685 = vpop.f32.mrb[0].mxu0
      %v1686 = vadd.f32 %v1413, %v1685
      %v1687 = vpop.f32.mrb[0].mxu0
      %1688 = vmatprep.mubr.bf16.mxu0 0
      %1689 = vmatmul.mubr.bf16.gmra.mrb[0].mxu0 %v1499
      %v1690 = vpop.f32.mrb[0].mxu0
      %v1691 = vadd.f32 %v1418, %v1690
      %v1692 = vpop.f32.mrb[0].mxu0
      %v1693 = vpop.f32.mrb[0].mxu0
      %v1694 = vadd.f32 %v1421, %v1693
      %v1695 = vpop.f32.mrb[0].mxu0
      %1696 = vmatprep.mubr.bf16.mxu0 0
      %1697 = vmatmul.mubr.bf16.gmra.mrb[0].mxu0 %v1500
      %v1698 = vpop.f32.mrb[0].mxu0
      %v1699 = vadd.f32 %v1426, %v1698
      %v1700 = vpop.f32.mrb[0].mxu0
      %v1701 = vpop.f32.mrb[0].mxu0
      %v1702 = vadd.f32 %v1429, %v1701
      %v1703 = vpop.f32.mrb[0].mxu0
      %1704 = vmatprep.mubr.bf16.mxu0 0
      %1705 = vmatmul.mubr.bf16.gmra.mrb[0].mxu0 %v1501
      %v1706 = vpop.f32.mrb[0].mxu0
      %v1707 = vadd.f32 %v1434, %v1706
      %v1708 = vpop.f32.mrb[0].mxu0
      %v1709 = vpop.f32.mrb[0].mxu0
      %v1710 = vadd.f32 %v1437, %v1709
      %v1711 = vpop.f32.mrb[0].mxu0
      %1712 = vmatprep.mubr.bf16.mxu0 0
      %1713 = vmatmul.mubr.bf16.gmra.mrb[0].mxu0 %v1502
      %v1714 = vpop.f32.mrb[0].mxu0
      %v1715 = vadd.f32 %v1442, %v1714
      %v1716 = vpop.f32.mrb[0].mxu0
      %v1717 = vpop.f32.mrb[0].mxu0
      %v1718 = vadd.f32 %v1445, %v1717
      %v1719 = vpop.f32.mrb[0].mxu0
      %1720 = vmatprep.mubr.bf16.mxu0 0
      %1721 = vmatmul.mubr.bf16.gmra.mrb[0].mxu0 %v1503
      %v1722 = vpop.f32.mrb[0].mxu0
      %v1723 = vadd.f32 %v1450, %v1722
      %v1724 = vpop.f32.mrb[0].mxu0
      %v1725 = vpop.f32.mrb[0].mxu0
      %v1726 = vadd.f32 %v1453, %v1725
      %v1727 = vpop.f32.mrb[0].mxu0
      %1728 = vdwg.mxu0
      %v1729 = vld [vmem:[#allocation2 + $0x4] sm:$0xf]
      %v1730 = vld [vmem:[#allocation2 + $0x8] sm:$0xf]
      %v1731 = vld [vmem:[#allocation2 + $0xc] sm:$0x1]
      %v1732 = vld [vmem:[#allocation2 + $0x14] sm:$0xf]
      %v1733 = vld [vmem:[#allocation2 + $0x18] sm:$0xf]
      %v1734 = vld [vmem:[#allocation2 + $0x1c] sm:$0x1]
      %v1735 = vld [vmem:[#allocation2 + $0x24] sm:$0xf]
      %v1736 = vld [vmem:[#allocation2 + $0x28] sm:$0xf]
      %v1737 = vld [vmem:[#allocation2 + $0x2c] sm:$0x1]
      %v1738 = vld [vmem:[#allocation2 + $0x34] sm:$0xf]
      %v1739 = vld [vmem:[#allocation2 + $0x38] sm:$0xf]
      %v1740 = vld [vmem:[#allocation2 + $0x3c] sm:$0x1]
      %v1741 = vld [vmem:[#allocation2 + $0x44] sm:$0xf]
      %v1742 = vld [vmem:[#allocation2 + $0x48] sm:$0xf]
      %v1743 = vld [vmem:[#allocation2 + $0x4c] sm:$0x1]
      %v1744 = vld [vmem:[#allocation2 + $0x54] sm:$0xf]
      %v1745 = vld [vmem:[#allocation2 + $0x58] sm:$0xf]
      %v1746 = vld [vmem:[#allocation2 + $0x5c] sm:$0x1]
      %v1747 = vld [vmem:[#allocation2 + $0x64] sm:$0xf]
      %v1748 = vld [vmem:[#allocation2 + $0x68] sm:$0xf]
      %v1749 = vld [vmem:[#allocation2 + $0x6c] sm:$0x1]
      %v1750 = vld [vmem:[#allocation2 + $0x74] sm:$0xf]
      %v1751 = vld [vmem:[#allocation2 + $0x78] sm:$0xf]
      %v1752 = vld [vmem:[#allocation2 + $0x7c] sm:$0x1]
      %v1753 = vld [vmem:[#allocation2 + $0x84] sm:$0xf]
      %v1754 = vld [vmem:[#allocation2 + $0x88] sm:$0xf]
      %v1755 = vld [vmem:[#allocation2 + $0x8c] sm:$0x1]
      %v1756 = vld [vmem:[#allocation2 + $0x94] sm:$0xf]
      %v1757 = vld [vmem:[#allocation2 + $0x98] sm:$0xf]
      %v1758 = vld [vmem:[#allocation2 + $0x9c] sm:$0x1]
      %v1759 = vld [vmem:[#allocation2 + $0xa4] sm:$0xf]
      %v1760 = vld [vmem:[#allocation2 + $0xa8] sm:$0xf]
      %v1761 = vld [vmem:[#allocation2 + $0xac] sm:$0x1]
      %v1762 = vld [vmem:[#allocation2 + $0xb4] sm:$0xf]
      %v1763 = vld [vmem:[#allocation2 + $0xb8] sm:$0xf]
      %v1764 = vld [vmem:[#allocation2 + $0xbc] sm:$0x1]
      %v1765 = vld [vmem:[#allocation2 + $0xc4] sm:$0xf]
      %v1766 = vld [vmem:[#allocation2 + $0xc8] sm:$0xf]
      %v1767 = vld [vmem:[#allocation2 + $0xcc] sm:$0x1]
      %v1768 = vld [vmem:[#allocation2 + $0xd4] sm:$0xf]
      %v1769 = vld [vmem:[#allocation2 + $0xd8] sm:$0xf]
      %v1770 = vld [vmem:[#allocation2 + $0xdc] sm:$0x1]
      %v1771 = vld [vmem:[#allocation2 + $0xe4] sm:$0xf]
      %v1772 = vld [vmem:[#allocation2 + $0xe8] sm:$0xf]
      %v1773 = vld [vmem:[#allocation2 + $0xec] sm:$0x1]
      %v1774 = vld [vmem:[#allocation2 + $0xf4] sm:$0xf]
      %v1775 = vld [vmem:[#allocation2 + $0xf8] sm:$0xf]
      %v1776 = vld [vmem:[#allocation2 + $0xfc] sm:$0x1]
      %vm1777 = vsmask.f32 3328
      %vm1778 = vsmask.f32 7440
      %vm1779 = vmor %vm1777, %vm1778
      %v1781 = vshrl.u32 %v1729, 16
      %v1783 = vrot.slane %v1781, 4
      %v1784 = vshll.u32 %v1729, 16
      %v1786 = vrot.slane %v1784, 5
      %v1787 = vor.u32 %v1783, %v1786
      %v1788 = vrot.slane %v1787, 4
      %v1790 = vshll.u32 %v1730, 16
      %v1792 = vrot.slane %v1790, 5
      %v1793 = vsel %vm1779, %v1788, %v1792
      %v1794 = vshrl.u32 %v1730, 16
      %v1796 = vrot.slane %v1794, 4
      %v1797 = vor.u32 %v1796, %v1792
      %v1798 = vrot.slane %v1797, 4
      %v1800 = vshll.u32 %v1731, 16
      %v1802 = vrot.slane %v1800, 5
      %v1803 = vsel %vm1779, %v1798, %v1802
      %v1805 = vshrl.u32 %v1732, 16
      %v1807 = vrot.slane %v1805, 4
      %v1808 = vshll.u32 %v1732, 16
      %v1810 = vrot.slane %v1808, 5
      %v1811 = vor.u32 %v1807, %v1810
      %v1812 = vrot.slane %v1811, 4
      %v1814 = vshll.u32 %v1733, 16
      %v1816 = vrot.slane %v1814, 5
      %v1817 = vsel %vm1779, %v1812, %v1816
      %v1818 = vshrl.u32 %v1733, 16
      %v1820 = vrot.slane %v1818, 4
      %v1821 = vor.u32 %v1820, %v1816
      %v1822 = vrot.slane %v1821, 4
      %v1824 = vshll.u32 %v1734, 16
      %v1826 = vrot.slane %v1824, 5
      %v1827 = vsel %vm1779, %v1822, %v1826
      %v1829 = vshrl.u32 %v1735, 16
      %v1831 = vrot.slane %v1829, 4
      %v1832 = vshll.u32 %v1735, 16
      %v1834 = vrot.slane %v1832, 5
      %v1835 = vor.u32 %v1831, %v1834
      %v1836 = vrot.slane %v1835, 4
      %v1838 = vshll.u32 %v1736, 16
      %v1840 = vrot.slane %v1838, 5
      %v1841 = vsel %vm1779, %v1836, %v1840
      %v1842 = vshrl.u32 %v1736, 16
      %v1844 = vrot.slane %v1842, 4
      %v1845 = vor.u32 %v1844, %v1840
      %v1846 = vrot.slane %v1845, 4
      %v1848 = vshll.u32 %v1737, 16
      %v1850 = vrot.slane %v1848, 5
      %v1851 = vsel %vm1779, %v1846, %v1850
      %v1853 = vshrl.u32 %v1738, 16
      %v1855 = vrot.slane %v1853, 4
      %v1856 = vshll.u32 %v1738, 16
      %v1858 = vrot.slane %v1856, 5
      %v1859 = vor.u32 %v1855, %v1858
      %v1860 = vrot.slane %v1859, 4
      %v1862 = vshll.u32 %v1739, 16
      %v1864 = vrot.slane %v1862, 5
      %v1865 = vsel %vm1779, %v1860, %v1864
      %v1866 = vshrl.u32 %v1739, 16
      %v1868 = vrot.slane %v1866, 4
      %v1869 = vor.u32 %v1868, %v1864
      %v1870 = vrot.slane %v1869, 4
      %v1872 = vshll.u32 %v1740, 16
      %v1874 = vrot.slane %v1872, 5
      %v1875 = vsel %vm1779, %v1870, %v1874
      %v1877 = vshrl.u32 %v1741, 16
      %v1879 = vrot.slane %v1877, 4
      %v1880 = vshll.u32 %v1741, 16
      %v1882 = vrot.slane %v1880, 5
      %v1883 = vor.u32 %v1879, %v1882
      %v1884 = vrot.slane %v1883, 4
      %v1886 = vshll.u32 %v1742, 16
      %v1888 = vrot.slane %v1886, 5
      %v1889 = vsel %vm1779, %v1884, %v1888
      %v1890 = vshrl.u32 %v1742, 16
      %v1892 = vrot.slane %v1890, 4
      %v1893 = vor.u32 %v1892, %v1888
      %v1894 = vrot.slane %v1893, 4
      %v1896 = vshll.u32 %v1743, 16
      %v1898 = vrot.slane %v1896, 5
      %v1899 = vsel %vm1779, %v1894, %v1898
      %v1901 = vshrl.u32 %v1744, 16
      %v1903 = vrot.slane %v1901, 4
      %v1904 = vshll.u32 %v1744, 16
      %v1906 = vrot.slane %v1904, 5
      %v1907 = vor.u32 %v1903, %v1906
      %v1908 = vrot.slane %v1907, 4
      %v1910 = vshll.u32 %v1745, 16
      %v1912 = vrot.slane %v1910, 5
      %v1913 = vsel %vm1779, %v1908, %v1912
      %v1914 = vshrl.u32 %v1745, 16
      %v1916 = vrot.slane %v1914, 4
      %v1917 = vor.u32 %v1916, %v1912
      %v1918 = vrot.slane %v1917, 4
      %v1920 = vshll.u32 %v1746, 16
      %v1922 = vrot.slane %v1920, 5
      %v1923 = vsel %vm1779, %v1918, %v1922
      %v1925 = vshrl.u32 %v1747, 16
      %v1927 = vrot.slane %v1925, 4
      %v1928 = vshll.u32 %v1747, 16
      %v1930 = vrot.slane %v1928, 5
      %v1931 = vor.u32 %v1927, %v1930
      %v1932 = vrot.slane %v1931, 4
      %v1934 = vshll.u32 %v1748, 16
      %v1936 = vrot.slane %v1934, 5
      %v1937 = vsel %vm1779, %v1932, %v1936
      %v1938 = vshrl.u32 %v1748, 16
      %v1940 = vrot.slane %v1938, 4
      %v1941 = vor.u32 %v1940, %v1936
      %v1942 = vrot.slane %v1941, 4
      %v1944 = vshll.u32 %v1749, 16
      %v1946 = vrot.slane %v1944, 5
      %v1947 = vsel %vm1779, %v1942, %v1946
      %v1949 = vshrl.u32 %v1750, 16
      %v1951 = vrot.slane %v1949, 4
      %v1952 = vshll.u32 %v1750, 16
      %v1954 = vrot.slane %v1952, 5
      %v1955 = vor.u32 %v1951, %v1954
      %v1956 = vrot.slane %v1955, 4
      %v1958 = vshll.u32 %v1751, 16
      %v1960 = vrot.slane %v1958, 5
      %v1961 = vsel %vm1779, %v1956, %v1960
      %v1962 = vshrl.u32 %v1751, 16
      %v1964 = vrot.slane %v1962, 4
      %v1965 = vor.u32 %v1964, %v1960
      %v1966 = vrot.slane %v1965, 4
      %v1968 = vshll.u32 %v1752, 16
      %v1970 = vrot.slane %v1968, 5
      %v1971 = vsel %vm1779, %v1966, %v1970
      %v1973 = vshrl.u32 %v1753, 16
      %v1975 = vrot.slane %v1973, 4
      %v1976 = vshll.u32 %v1753, 16
      %v1978 = vrot.slane %v1976, 5
      %v1979 = vor.u32 %v1975, %v1978
      %v1980 = vrot.slane %v1979, 4
      %v1982 = vshll.u32 %v1754, 16
      %v1984 = vrot.slane %v1982, 5
      %v1985 = vsel %vm1779, %v1980, %v1984
      %v1986 = vshrl.u32 %v1754, 16
      %v1988 = vrot.slane %v1986, 4
      %v1989 = vor.u32 %v1988, %v1984
      %v1990 = vrot.slane %v1989, 4
      %v1992 = vshll.u32 %v1755, 16
      %v1994 = vrot.slane %v1992, 5
      %v1995 = vsel %vm1779, %v1990, %v1994
      %v1997 = vshrl.u32 %v1756, 16
      %v1999 = vrot.slane %v1997, 4
      %v2000 = vshll.u32 %v1756, 16
      %v2002 = vrot.slane %v2000, 5
      %v2003 = vor.u32 %v1999, %v2002
      %v2004 = vrot.slane %v2003, 4
      %v2006 = vshll.u32 %v1757, 16
      %v2008 = vrot.slane %v2006, 5
      %v2009 = vsel %vm1779, %v2004, %v2008
      %v2010 = vshrl.u32 %v1757, 16
      %v2012 = vrot.slane %v2010, 4
      %v2013 = vor.u32 %v2012, %v2008
      %v2014 = vrot.slane %v2013, 4
      %v2016 = vshll.u32 %v1758, 16
      %v2018 = vrot.slane %v2016, 5
      %v2019 = vsel %vm1779, %v2014, %v2018
      %v2021 = vshrl.u32 %v1759, 16
      %v2023 = vrot.slane %v2021, 4
      %v2024 = vshll.u32 %v1759, 16
      %v2026 = vrot.slane %v2024, 5
      %v2027 = vor.u32 %v2023, %v2026
      %v2028 = vrot.slane %v2027, 4
      %v2030 = vshll.u32 %v1760, 16
      %v2032 = vrot.slane %v2030, 5
      %v2033 = vsel %vm1779, %v2028, %v2032
      %v2034 = vshrl.u32 %v1760, 16
      %v2036 = vrot.slane %v2034, 4
      %v2037 = vor.u32 %v2036, %v2032
      %v2038 = vrot.slane %v2037, 4
      %v2040 = vshll.u32 %v1761, 16
      %v2042 = vrot.slane %v2040, 5
      %v2043 = vsel %vm1779, %v2038, %v2042
      %v2045 = vshrl.u32 %v1762, 16
      %v2047 = vrot.slane %v2045, 4
      %v2048 = vshll.u32 %v1762, 16
      %v2050 = vrot.slane %v2048, 5
      %v2051 = vor.u32 %v2047, %v2050
      %v2052 = vrot.slane %v2051, 4
      %v2054 = vshll.u32 %v1763, 16
      %v2056 = vrot.slane %v2054, 5
      %v2057 = vsel %vm1779, %v2052, %v2056
      %v2058 = vshrl.u32 %v1763, 16
      %v2060 = vrot.slane %v2058, 4
      %v2061 = vor.u32 %v2060, %v2056
      %v2062 = vrot.slane %v2061, 4
      %v2064 = vshll.u32 %v1764, 16
      %v2066 = vrot.slane %v2064, 5
      %v2067 = vsel %vm1779, %v2062, %v2066
      %v2069 = vshrl.u32 %v1765, 16
      %v2071 = vrot.slane %v2069, 4
      %v2072 = vshll.u32 %v1765, 16
      %v2074 = vrot.slane %v2072, 5
      %v2075 = vor.u32 %v2071, %v2074
      %v2076 = vrot.slane %v2075, 4
      %v2078 = vshll.u32 %v1766, 16
      %v2080 = vrot.slane %v2078, 5
      %v2081 = vsel %vm1779, %v2076, %v2080
      %v2082 = vshrl.u32 %v1766, 16
      %v2084 = vrot.slane %v2082, 4
      %v2085 = vor.u32 %v2084, %v2080
      %v2086 = vrot.slane %v2085, 4
      %v2088 = vshll.u32 %v1767, 16
      %v2090 = vrot.slane %v2088, 5
      %v2091 = vsel %vm1779, %v2086, %v2090
      %v2093 = vshrl.u32 %v1768, 16
      %v2095 = vrot.slane %v2093, 4
      %v2096 = vshll.u32 %v1768, 16
      %v2098 = vrot.slane %v2096, 5
      %v2099 = vor.u32 %v2095, %v2098
      %v2100 = vrot.slane %v2099, 4
      %v2102 = vshll.u32 %v1769, 16
      %v2104 = vrot.slane %v2102, 5
      %v2105 = vsel %vm1779, %v2100, %v2104
      %v2106 = vshrl.u32 %v1769, 16
      %v2108 = vrot.slane %v2106, 4
      %v2109 = vor.u32 %v2108, %v2104
      %v2110 = vrot.slane %v2109, 4
      %v2112 = vshll.u32 %v1770, 16
      %v2114 = vrot.slane %v2112, 5
      %v2115 = vsel %vm1779, %v2110, %v2114
      %v2117 = vshrl.u32 %v1771, 16
      %v2119 = vrot.slane %v2117, 4
      %v2120 = vshll.u32 %v1771, 16
      %v2122 = vrot.slane %v2120, 5
      %v2123 = vor.u32 %v2119, %v2122
      %v2124 = vrot.slane %v2123, 4
      %v2126 = vshll.u32 %v1772, 16
      %v2128 = vrot.slane %v2126, 5
      %v2129 = vsel %vm1779, %v2124, %v2128
      %v2130 = vshrl.u32 %v1772, 16
      %v2132 = vrot.slane %v2130, 4
      %v2133 = vor.u32 %v2132, %v2128
      %v2134 = vrot.slane %v2133, 4
      %v2136 = vshll.u32 %v1773, 16
      %v2138 = vrot.slane %v2136, 5
      %v2139 = vsel %vm1779, %v2134, %v2138
      %v2141 = vshrl.u32 %v1774, 16
      %v2143 = vrot.slane %v2141, 4
      %v2144 = vshll.u32 %v1774, 16
      %v2146 = vrot.slane %v2144, 5
      %v2147 = vor.u32 %v2143, %v2146
      %v2148 = vrot.slane %v2147, 4
      %v2150 = vshll.u32 %v1775, 16
      %v2152 = vrot.slane %v2150, 5
      %v2153 = vsel %vm1779, %v2148, %v2152
      %v2154 = vshrl.u32 %v1775, 16
      %v2156 = vrot.slane %v2154, 4
      %v2157 = vor.u32 %v2156, %v2152
      %v2158 = vrot.slane %v2157, 4
      %v2160 = vshll.u32 %v1776, 16
      %v2162 = vrot.slane %v2160, 5
      %v2163 = vsel %vm1779, %v2158, %v2162
      %s2164 = scalar_lea.vmem %s3, 128
      %v2165 = vld [vmem:[%s2164] sm:$0xf]
      %v2166 = vld [vmem:[%s2164 + $0x4] sm:$0xf]
      %v2167 = vld [vmem:[%s2164 + $0x8] sm:$0xf]
      %v2168 = vld [vmem:[%s2164 + $0xc] sm:$0xf]
      %v2169 = vld [vmem:[%s2164 + $0x10] sm:$0xf]
      %v2170 = vld [vmem:[%s2164 + $0x14] sm:$0xf]
      %v2171 = vld [vmem:[%s2164 + $0x18] sm:$0xf]
      %v2172 = vld [vmem:[%s2164 + $0x1c] sm:$0xf]
      %v2173 = vld [vmem:[%s2164 + $0x20] sm:$0xf]
      %v2174 = vld [vmem:[%s2164 + $0x24] sm:$0xf]
      %v2175 = vld [vmem:[%s2164 + $0x28] sm:$0xf]
      %v2176 = vld [vmem:[%s2164 + $0x2c] sm:$0xf]
      %v2177 = vld [vmem:[%s2164 + $0x30] sm:$0xf]
      %v2178 = vld [vmem:[%s2164 + $0x34] sm:$0xf]
      %v2179 = vld [vmem:[%s2164 + $0x38] sm:$0xf]
      %v2180 = vld [vmem:[%s2164 + $0x3c] sm:$0xf]
      %v2181 = vunpack.c.l.b16 %v1793
      %v2182 = vunpack.c.l.b16 %v1803
      %v2183 = vunpack.c.l.b16 %v1817
      %v2184 = vunpack.c.l.b16 %v1827
      %v2185 = vunpack.c.l.b16 %v1841
      %v2186 = vunpack.c.l.b16 %v1851
      %v2187 = vunpack.c.l.b16 %v1865
      %v2188 = vunpack.c.l.b16 %v1875
      %v2189 = vunpack.c.l.b16 %v1889
      %v2190 = vunpack.c.l.b16 %v1899
      %v2191 = vunpack.c.l.b16 %v1913
      %v2192 = vunpack.c.l.b16 %v1923
      %v2193 = vunpack.c.l.b16 %v1937
      %v2194 = vunpack.c.l.b16 %v1947
      %v2195 = vunpack.c.l.b16 %v1961
      %v2196 = vunpack.c.l.b16 %v1971
      %v2197 = vunpack.c.l.b16 %v1985
      %v2198 = vunpack.c.l.b16 %v1995
      %v2199 = vunpack.c.l.b16 %v2009
      %v2200 = vunpack.c.l.b16 %v2019
      %v2201 = vunpack.c.l.b16 %v2033
      %v2202 = vunpack.c.l.b16 %v2043
      %v2203 = vunpack.c.l.b16 %v2057
      %v2204 = vunpack.c.l.b16 %v2067
      %v2205 = vunpack.c.l.b16 %v2081
      %v2206 = vunpack.c.l.b16 %v2091
      %v2207 = vunpack.c.l.b16 %v2105
      %v2208 = vunpack.c.l.b16 %v2115
      %v2209 = vunpack.c.l.b16 %v2129
      %v2210 = vunpack.c.l.b16 %v2139
      %v2211 = vunpack.c.l.b16 %v2153
      %v2212 = vunpack.c.l.b16 %v2163
      %v2213 = vpack.c.b16 %v2182, %v2181
      %v2214 = vpack.c.b16 %v2184, %v2183
      %v2215 = vpack.c.b16 %v2186, %v2185
      %v2216 = vpack.c.b16 %v2188, %v2187
      %v2217 = vpack.c.b16 %v2190, %v2189
      %v2218 = vpack.c.b16 %v2192, %v2191
      %v2219 = vpack.c.b16 %v2194, %v2193
      %v2220 = vpack.c.b16 %v2196, %v2195
      %v2221 = vpack.c.b16 %v2198, %v2197
      %v2222 = vpack.c.b16 %v2200, %v2199
      %v2223 = vpack.c.b16 %v2202, %v2201
      %v2224 = vpack.c.b16 %v2204, %v2203
      %v2225 = vpack.c.b16 %v2206, %v2205
      %v2226 = vpack.c.b16 %v2208, %v2207
      %v2227 = vpack.c.b16 %v2210, %v2209
      %v2228 = vpack.c.b16 %v2212, %v2211
      %v2261 = vunpack.c.l.b16 %v2165
      %v2262 = vunpack.c.l.b16 %v2166
      %v2263 = vunpack.c.l.b16 %v2167
      %v2264 = vunpack.c.l.b16 %v2168
      %v2265 = vunpack.c.l.b16 %v2169
      %v2266 = vunpack.c.l.b16 %v2170
      %v2267 = vunpack.c.l.b16 %v2171
      %v2268 = vunpack.c.l.b16 %v2172
      %v2269 = vunpack.c.l.b16 %v2173
      %v2270 = vunpack.c.l.b16 %v2174
      %v2271 = vunpack.c.l.b16 %v2175
      %v2272 = vunpack.c.l.b16 %v2176
      %v2273 = vunpack.c.l.b16 %v2177
      %v2274 = vunpack.c.l.b16 %v2178
      %v2275 = vunpack.c.l.b16 %v2179
      %v2276 = vunpack.c.l.b16 %v2180
      %v2277 = vpack.c.b16 %v2262, %v2261
      %v2278 = vpack.c.b16 %v2264, %v2263
      %v2279 = vpack.c.b16 %v2266, %v2265
      %v2280 = vpack.c.b16 %v2268, %v2267
      %v2281 = vpack.c.b16 %v2270, %v2269
      %v2282 = vpack.c.b16 %v2272, %v2271
      %v2283 = vpack.c.b16 %v2274, %v2273
      %v2284 = vpack.c.b16 %v2276, %v2275
      %2293 = vmatprep.subr.bf16.mxu0 0
      %2294 = vmatpush1.bf16.msra.mxu0 %v2277
      %2295 = vmatprep.subr.bf16.mxu0 0
      %2296 = vmatpush1.bf16.msra.mxu0 %v2278
      %2297 = vmatprep.subr.bf16.mxu0 0
      %2298 = vmatpush1.bf16.msra.mxu0 %v2279
      %2299 = vmatprep.subr.bf16.mxu0 0
      %2300 = vmatpush1.bf16.msra.mxu0 %v2280
      %2301 = vmatprep.subr.bf16.mxu0 0
      %2302 = vmatpush1.bf16.msra.mxu0 %v2281
      %2303 = vmatprep.subr.bf16.mxu0 0
      %2304 = vmatpush1.bf16.msra.mxu0 %v2282
      %2305 = vmatprep.subr.bf16.mxu0 0
      %2306 = vmatpush1.bf16.msra.mxu0 %v2283
      %2307 = vmatprep.subr.bf16.mxu0 0
      %2308 = vmatpush1.bf16.msra.mxu0 %v2284
      %2309 = vmatprep.subr.bf16.mxu0 0
      %2310 = vmatpush1.bf16.msra.mxu0 0
      %2311 = vmatprep.subr.bf16.mxu0 0
      %2312 = vmatpush1.bf16.msra.mxu0 0
      %2313 = vmatprep.subr.bf16.mxu0 0
      %2314 = vmatpush1.bf16.msra.mxu0 0
      %2315 = vmatprep.subr.bf16.mxu0 0
      %2316 = vmatpush1.bf16.msra.mxu0 0
      %2317 = vmatprep.subr.bf16.mxu0 0
      %2318 = vmatpush1.bf16.msra.mxu0 0
      %2319 = vmatprep.subr.bf16.mxu0 0
      %2320 = vmatpush1.bf16.msra.mxu0 0
      %2321 = vmatprep.subr.bf16.mxu0 0
      %2322 = vmatpush1.bf16.msra.mxu0 0
      %2323 = vmatprep.subr.bf16.mxu0 0
      %2324 = vmatpush1.bf16.msra.mxu0 0
      %2325 = vmatprep.mubr.bf16.mxu0 0
      %2326 = vmatmul.mubr.bf16.gmra.mrb[0].mxu0 %v2213
      %v2327 = vpop.f32.mrb[0].mxu0
      %v2328 = vadd.f32 0.0, %v2327
      %v2329 = vpop.f32.mrb[0].mxu0
      %v2330 = vpop.f32.mrb[0].mxu0
      %v2331 = vadd.f32 0.0, %v2330
      %v2332 = vpop.f32.mrb[0].mxu0
      %2333 = vmatprep.mubr.bf16.mxu0 0
      %2334 = vmatmul.mubr.bf16.gmra.mrb[0].mxu0 %v2214
      %v2335 = vpop.f32.mrb[0].mxu0
      %v2336 = vadd.f32 0.0, %v2335
      %v2337 = vpop.f32.mrb[0].mxu0
      %v2338 = vpop.f32.mrb[0].mxu0
      %v2339 = vadd.f32 0.0, %v2338
      %v2340 = vpop.f32.mrb[0].mxu0
      %2341 = vmatprep.mubr.bf16.mxu0 0
      %2342 = vmatmul.mubr.bf16.gmra.mrb[0].mxu0 %v2215
      %v2343 = vpop.f32.mrb[0].mxu0
      %v2344 = vadd.f32 0.0, %v2343
      %v2345 = vpop.f32.mrb[0].mxu0
      %v2346 = vpop.f32.mrb[0].mxu0
      %v2347 = vadd.f32 0.0, %v2346
      %v2348 = vpop.f32.mrb[0].mxu0
      %2349 = vmatprep.mubr.bf16.mxu0 0
      %2350 = vmatmul.mubr.bf16.gmra.mrb[0].mxu0 %v2216
      %v2351 = vpop.f32.mrb[0].mxu0
      %v2352 = vadd.f32 0.0, %v2351
      %v2353 = vpop.f32.mrb[0].mxu0
      %v2354 = vpop.f32.mrb[0].mxu0
      %v2355 = vadd.f32 0.0, %v2354
      %v2356 = vpop.f32.mrb[0].mxu0
      %2357 = vmatprep.mubr.bf16.mxu0 0
      %2358 = vmatmul.mubr.bf16.gmra.mrb[0].mxu0 %v2217
      %v2359 = vpop.f32.mrb[0].mxu0
      %v2360 = vadd.f32 0.0, %v2359
      %v2361 = vpop.f32.mrb[0].mxu0
      %v2362 = vpop.f32.mrb[0].mxu0
      %v2363 = vadd.f32 0.0, %v2362
      %v2364 = vpop.f32.mrb[0].mxu0
      %2365 = vmatprep.mubr.bf16.mxu0 0
      %2366 = vmatmul.mubr.bf16.gmra.mrb[0].mxu0 %v2218
      %v2367 = vpop.f32.mrb[0].mxu0
      %v2368 = vadd.f32 0.0, %v2367
      %v2369 = vpop.f32.mrb[0].mxu0
      %v2370 = vpop.f32.mrb[0].mxu0
      %v2371 = vadd.f32 0.0, %v2370
      %v2372 = vpop.f32.mrb[0].mxu0
      %2373 = vmatprep.mubr.bf16.mxu0 0
      %2374 = vmatmul.mubr.bf16.gmra.mrb[0].mxu0 %v2219
      %v2375 = vpop.f32.mrb[0].mxu0
      %v2376 = vadd.f32 0.0, %v2375
      %v2377 = vpop.f32.mrb[0].mxu0
      %v2378 = vpop.f32.mrb[0].mxu0
      %v2379 = vadd.f32 0.0, %v2378
      %v2380 = vpop.f32.mrb[0].mxu0
      %2381 = vmatprep.mubr.bf16.mxu0 0
      %2382 = vmatmul.mubr.bf16.gmra.mrb[0].mxu0 %v2220
      %v2383 = vpop.f32.mrb[0].mxu0
      %v2384 = vadd.f32 0.0, %v2383
      %v2385 = vpop.f32.mrb[0].mxu0
      %v2386 = vpop.f32.mrb[0].mxu0
      %v2387 = vadd.f32 0.0, %v2386
      %v2388 = vpop.f32.mrb[0].mxu0
      %2389 = vmatprep.mubr.bf16.mxu0 0
      %2390 = vmatmul.mubr.bf16.gmra.mrb[0].mxu0 %v2221
      %v2391 = vpop.f32.mrb[0].mxu0
      %v2392 = vadd.f32 0.0, %v2391
      %v2393 = vpop.f32.mrb[0].mxu0
      %v2394 = vpop.f32.mrb[0].mxu0
      %v2395 = vadd.f32 0.0, %v2394
      %v2396 = vpop.f32.mrb[0].mxu0
      %2397 = vmatprep.mubr.bf16.mxu0 0
      %2398 = vmatmul.mubr.bf16.gmra.mrb[0].mxu0 %v2222
      %v2399 = vpop.f32.mrb[0].mxu0
      %v2400 = vadd.f32 0.0, %v2399
      %v2401 = vpop.f32.mrb[0].mxu0
      %v2402 = vpop.f32.mrb[0].mxu0
      %v2403 = vadd.f32 0.0, %v2402
      %v2404 = vpop.f32.mrb[0].mxu0
      %2405 = vmatprep.mubr.bf16.mxu0 0
      %2406 = vmatmul.mubr.bf16.gmra.mrb[0].mxu0 %v2223
      %v2407 = vpop.f32.mrb[0].mxu0
      %v2408 = vadd.f32 0.0, %v2407
      %v2409 = vpop.f32.mrb[0].mxu0
      %v2410 = vpop.f32.mrb[0].mxu0
      %v2411 = vadd.f32 0.0, %v2410
      %v2412 = vpop.f32.mrb[0].mxu0
      %2413 = vmatprep.mubr.bf16.mxu0 0
      %2414 = vmatmul.mubr.bf16.gmra.mrb[0].mxu0 %v2224
      %v2415 = vpop.f32.mrb[0].mxu0
      %v2416 = vadd.f32 0.0, %v2415
      %v2417 = vpop.f32.mrb[0].mxu0
      %v2418 = vpop.f32.mrb[0].mxu0
      %v2419 = vadd.f32 0.0, %v2418
      %v2420 = vpop.f32.mrb[0].mxu0
      %2421 = vmatprep.mubr.bf16.mxu0 0
      %2422 = vmatmul.mubr.bf16.gmra.mrb[0].mxu0 %v2225
      %v2423 = vpop.f32.mrb[0].mxu0
      %v2424 = vadd.f32 0.0, %v2423
      %v2425 = vpop.f32.mrb[0].mxu0
      %v2426 = vpop.f32.mrb[0].mxu0
      %v2427 = vadd.f32 0.0, %v2426
      %v2428 = vpop.f32.mrb[0].mxu0
      %2429 = vmatprep.mubr.bf16.mxu0 0
      %2430 = vmatmul.mubr.bf16.gmra.mrb[0].mxu0 %v2226
      %v2431 = vpop.f32.mrb[0].mxu0
      %v2432 = vadd.f32 0.0, %v2431
      %v2433 = vpop.f32.mrb[0].mxu0
      %v2434 = vpop.f32.mrb[0].mxu0
      %v2435 = vadd.f32 0.0, %v2434
      %v2436 = vpop.f32.mrb[0].mxu0
      %2437 = vmatprep.mubr.bf16.mxu0 0
      %2438 = vmatmul.mubr.bf16.gmra.mrb[0].mxu0 %v2227
      %v2439 = vpop.f32.mrb[0].mxu0
      %v2440 = vadd.f32 0.0, %v2439
      %v2441 = vpop.f32.mrb[0].mxu0
      %v2442 = vpop.f32.mrb[0].mxu0
      %v2443 = vadd.f32 0.0, %v2442
      %v2444 = vpop.f32.mrb[0].mxu0
      %2445 = vmatprep.mubr.bf16.mxu0 0
      %2446 = vmatmul.mubr.bf16.gmra.mrb[0].mxu0 %v2228
      %v2447 = vpop.f32.mrb[0].mxu0
      %v2448 = vadd.f32 0.0, %v2447
      %v2449 = vpop.f32.mrb[0].mxu0
      %v2450 = vpop.f32.mrb[0].mxu0
      %v2451 = vadd.f32 0.0, %v2450
      %v2452 = vpop.f32.mrb[0].mxu0
      %2453 = vdwg.mxu0
      %v2454 = vadd.f32 %v1603, %v2328
      %v2455 = vadd.f32 %v1606, %v2331
      %v2456 = vadd.f32 %v1611, %v2336
      %v2457 = vadd.f32 %v1614, %v2339
      %v2458 = vadd.f32 %v1619, %v2344
      %v2459 = vadd.f32 %v1622, %v2347
      %v2460 = vadd.f32 %v1627, %v2352
      %v2461 = vadd.f32 %v1630, %v2355
      %v2462 = vadd.f32 %v1635, %v2360
      %v2463 = vadd.f32 %v1638, %v2363
      %v2464 = vadd.f32 %v1643, %v2368
      %v2465 = vadd.f32 %v1646, %v2371
      %v2466 = vadd.f32 %v1651, %v2376
      %v2467 = vadd.f32 %v1654, %v2379
      %v2468 = vadd.f32 %v1659, %v2384
      %v2469 = vadd.f32 %v1662, %v2387
      %v2470 = vadd.f32 %v1667, %v2392
      %v2471 = vadd.f32 %v1670, %v2395
      %v2472 = vadd.f32 %v1675, %v2400
      %v2473 = vadd.f32 %v1678, %v2403
      %v2474 = vadd.f32 %v1683, %v2408
      %v2475 = vadd.f32 %v1686, %v2411
      %v2476 = vadd.f32 %v1691, %v2416
      %v2477 = vadd.f32 %v1694, %v2419
      %v2478 = vadd.f32 %v1699, %v2424
      %v2479 = vadd.f32 %v1702, %v2427
      %v2480 = vadd.f32 %v1707, %v2432
      %v2481 = vadd.f32 %v1710, %v2435
      %v2482 = vadd.f32 %v1715, %v2440
      %v2483 = vadd.f32 %v1718, %v2443
      %v2484 = vadd.f32 %v1723, %v2448
      %v2485 = vadd.f32 %v1726, %v2451
      %v2486 = vld [vmem:[%s683] sm:$0x8]
      %v2487 = vld [vmem:[%s683 + $0x4] sm:$0xf]
      %v2488 = vld [vmem:[%s683 + $0x8] sm:$0xf]
      %v2489 = vld [vmem:[%s683 + $0x10] sm:$0x8]
      %v2490 = vld [vmem:[%s683 + $0x14] sm:$0xf]
      %v2491 = vld [vmem:[%s683 + $0x18] sm:$0xf]
      %v2492 = vld [vmem:[%s683 + $0x20] sm:$0x8]
      %v2493 = vld [vmem:[%s683 + $0x24] sm:$0xf]
      %v2494 = vld [vmem:[%s683 + $0x28] sm:$0xf]
      %v2495 = vld [vmem:[%s683 + $0x30] sm:$0x8]
      %v2496 = vld [vmem:[%s683 + $0x34] sm:$0xf]
      %v2497 = vld [vmem:[%s683 + $0x38] sm:$0xf]
      %v2498 = vld [vmem:[%s683 + $0x40] sm:$0x8]
      %v2499 = vld [vmem:[%s683 + $0x44] sm:$0xf]
      %v2500 = vld [vmem:[%s683 + $0x48] sm:$0xf]
      %v2501 = vld [vmem:[%s683 + $0x50] sm:$0x8]
      %v2502 = vld [vmem:[%s683 + $0x54] sm:$0xf]
      %v2503 = vld [vmem:[%s683 + $0x58] sm:$0xf]
      %v2504 = vld [vmem:[%s683 + $0x60] sm:$0x8]
      %v2505 = vld [vmem:[%s683 + $0x64] sm:$0xf]
      %v2506 = vld [vmem:[%s683 + $0x68] sm:$0xf]
      %v2507 = vld [vmem:[%s683 + $0x70] sm:$0x8]
      %v2508 = vld [vmem:[%s683 + $0x74] sm:$0xf]
      %v2509 = vld [vmem:[%s683 + $0x78] sm:$0xf]
      %v2510 = vld [vmem:[%s683 + $0x80] sm:$0x8]
      %v2511 = vld [vmem:[%s683 + $0x84] sm:$0xf]
      %v2512 = vld [vmem:[%s683 + $0x88] sm:$0xf]
      %v2513 = vld [vmem:[%s683 + $0x90] sm:$0x8]
      %v2514 = vld [vmem:[%s683 + $0x94] sm:$0xf]
      %v2515 = vld [vmem:[%s683 + $0x98] sm:$0xf]
      %v2516 = vld [vmem:[%s683 + $0xa0] sm:$0x8]
      %v2517 = vld [vmem:[%s683 + $0xa4] sm:$0xf]
      %v2518 = vld [vmem:[%s683 + $0xa8] sm:$0xf]
      %v2519 = vld [vmem:[%s683 + $0xb0] sm:$0x8]
      %v2520 = vld [vmem:[%s683 + $0xb4] sm:$0xf]
      %v2521 = vld [vmem:[%s683 + $0xb8] sm:$0xf]
      %v2522 = vld [vmem:[%s683 + $0xc0] sm:$0x8]
      %v2523 = vld [vmem:[%s683 + $0xc4] sm:$0xf]
      %v2524 = vld [vmem:[%s683 + $0xc8] sm:$0xf]
      %v2525 = vld [vmem:[%s683 + $0xd0] sm:$0x8]
      %v2526 = vld [vmem:[%s683 + $0xd4] sm:$0xf]
      %v2527 = vld [vmem:[%s683 + $0xd8] sm:$0xf]
      %v2528 = vld [vmem:[%s683 + $0xe0] sm:$0x8]
      %v2529 = vld [vmem:[%s683 + $0xe4] sm:$0xf]
      %v2530 = vld [vmem:[%s683 + $0xe8] sm:$0xf]
      %v2531 = vld [vmem:[%s683 + $0xf0] sm:$0x8]
      %v2532 = vld [vmem:[%s683 + $0xf4] sm:$0xf]
      %v2533 = vld [vmem:[%s683 + $0xf8] sm:$0xf]
      %v2535 = vshrl.u32 %v2486, 16
      %v2537 = vrot.slane %v2535, 7
      %v2538 = vrot.slane %v2537, 4
      %v2540 = vshrl.u32 %v2487, 16
      %v2542 = vrot.slane %v2540, 7
      %v2543 = vshll.u32 %v2487, 16
      %v2545 = vor.u32 %v2542, %v2543
      %v2546 = vsel %vm765, %v2538, %v2545
      %v2547 = vrot.slane %v2542, 4
      %v2549 = vshrl.u32 %v2488, 16
      %v2551 = vrot.slane %v2549, 7
      %v2552 = vshll.u32 %v2488, 16
      %v2554 = vor.u32 %v2551, %v2552
      %v2555 = vsel %vm765, %v2547, %v2554
      %v2557 = vshrl.u32 %v2489, 16
      %v2559 = vrot.slane %v2557, 7
      %v2560 = vrot.slane %v2559, 4
      %v2562 = vshrl.u32 %v2490, 16
      %v2564 = vrot.slane %v2562, 7
      %v2565 = vshll.u32 %v2490, 16
      %v2567 = vor.u32 %v2564, %v2565
      %v2568 = vsel %vm765, %v2560, %v2567
      %v2569 = vrot.slane %v2564, 4
      %v2571 = vshrl.u32 %v2491, 16
      %v2573 = vrot.slane %v2571, 7
      %v2574 = vshll.u32 %v2491, 16
      %v2576 = vor.u32 %v2573, %v2574
      %v2577 = vsel %vm765, %v2569, %v2576
      %v2579 = vshrl.u32 %v2492, 16
      %v2581 = vrot.slane %v2579, 7
      %v2582 = vrot.slane %v2581, 4
      %v2584 = vshrl.u32 %v2493, 16
      %v2586 = vrot.slane %v2584, 7
      %v2587 = vshll.u32 %v2493, 16
      %v2589 = vor.u32 %v2586, %v2587
      %v2590 = vsel %vm765, %v2582, %v2589
      %v2591 = vrot.slane %v2586, 4
      %v2593 = vshrl.u32 %v2494, 16
      %v2595 = vrot.slane %v2593, 7
      %v2596 = vshll.u32 %v2494, 16
      %v2598 = vor.u32 %v2595, %v2596
      %v2599 = vsel %vm765, %v2591, %v2598
      %v2601 = vshrl.u32 %v2495, 16
      %v2603 = vrot.slane %v2601, 7
      %v2604 = vrot.slane %v2603, 4
      %v2606 = vshrl.u32 %v2496, 16
      %v2608 = vrot.slane %v2606, 7
      %v2609 = vshll.u32 %v2496, 16
      %v2611 = vor.u32 %v2608, %v2609
      %v2612 = vsel %vm765, %v2604, %v2611
      %v2613 = vrot.slane %v2608, 4
      %v2615 = vshrl.u32 %v2497, 16
      %v2617 = vrot.slane %v2615, 7
      %v2618 = vshll.u32 %v2497, 16
      %v2620 = vor.u32 %v2617, %v2618
      %v2621 = vsel %vm765, %v2613, %v2620
      %v2623 = vshrl.u32 %v2498, 16
      %v2625 = vrot.slane %v2623, 7
      %v2626 = vrot.slane %v2625, 4
      %v2628 = vshrl.u32 %v2499, 16
      %v2630 = vrot.slane %v2628, 7
      %v2631 = vshll.u32 %v2499, 16
      %v2633 = vor.u32 %v2630, %v2631
      %v2634 = vsel %vm765, %v2626, %v2633
      %v2635 = vrot.slane %v2630, 4
      %v2637 = vshrl.u32 %v2500, 16
      %v2639 = vrot.slane %v2637, 7
      %v2640 = vshll.u32 %v2500, 16
      %v2642 = vor.u32 %v2639, %v2640
      %v2643 = vsel %vm765, %v2635, %v2642
      %v2645 = vshrl.u32 %v2501, 16
      %v2647 = vrot.slane %v2645, 7
      %v2648 = vrot.slane %v2647, 4
      %v2650 = vshrl.u32 %v2502, 16
      %v2652 = vrot.slane %v2650, 7
      %v2653 = vshll.u32 %v2502, 16
      %v2655 = vor.u32 %v2652, %v2653
      %v2656 = vsel %vm765, %v2648, %v2655
      %v2657 = vrot.slane %v2652, 4
      %v2659 = vshrl.u32 %v2503, 16
      %v2661 = vrot.slane %v2659, 7
      %v2662 = vshll.u32 %v2503, 16
      %v2664 = vor.u32 %v2661, %v2662
      %v2665 = vsel %vm765, %v2657, %v2664
      %v2667 = vshrl.u32 %v2504, 16
      %v2669 = vrot.slane %v2667, 7
      %v2670 = vrot.slane %v2669, 4
      %v2672 = vshrl.u32 %v2505, 16
      %v2674 = vrot.slane %v2672, 7
      %v2675 = vshll.u32 %v2505, 16
      %v2677 = vor.u32 %v2674, %v2675
      %v2678 = vsel %vm765, %v2670, %v2677
      %v2679 = vrot.slane %v2674, 4
      %v2681 = vshrl.u32 %v2506, 16
      %v2683 = vrot.slane %v2681, 7
      %v2684 = vshll.u32 %v2506, 16
      %v2686 = vor.u32 %v2683, %v2684
      %v2687 = vsel %vm765, %v2679, %v2686
      %v2689 = vshrl.u32 %v2507, 16
      %v2691 = vrot.slane %v2689, 7
      %v2692 = vrot.slane %v2691, 4
      %v2694 = vshrl.u32 %v2508, 16
      %v2696 = vrot.slane %v2694, 7
      %v2697 = vshll.u32 %v2508, 16
      %v2699 = vor.u32 %v2696, %v2697
      %v2700 = vsel %vm765, %v2692, %v2699
      %v2701 = vrot.slane %v2696, 4
      %v2703 = vshrl.u32 %v2509, 16
      %v2705 = vrot.slane %v2703, 7
      %v2706 = vshll.u32 %v2509, 16
      %v2708 = vor.u32 %v2705, %v2706
      %v2709 = vsel %vm765, %v2701, %v2708
      %v2711 = vshrl.u32 %v2510, 16
      %v2713 = vrot.slane %v2711, 7
      %v2714 = vrot.slane %v2713, 4
      %v2716 = vshrl.u32 %v2511, 16
      %v2718 = vrot.slane %v2716, 7
      %v2719 = vshll.u32 %v2511, 16
      %v2721 = vor.u32 %v2718, %v2719
      %v2722 = vsel %vm765, %v2714, %v2721
      %v2723 = vrot.slane %v2718, 4
      %v2725 = vshrl.u32 %v2512, 16
      %v2727 = vrot.slane %v2725, 7
      %v2728 = vshll.u32 %v2512, 16
      %v2730 = vor.u32 %v2727, %v2728
      %v2731 = vsel %vm765, %v2723, %v2730
      %v2733 = vshrl.u32 %v2513, 16
      %v2735 = vrot.slane %v2733, 7
      %v2736 = vrot.slane %v2735, 4
      %v2738 = vshrl.u32 %v2514, 16
      %v2740 = vrot.slane %v2738, 7
      %v2741 = vshll.u32 %v2514, 16
      %v2743 = vor.u32 %v2740, %v2741
      %v2744 = vsel %vm765, %v2736, %v2743
      %v2745 = vrot.slane %v2740, 4
      %v2747 = vshrl.u32 %v2515, 16
      %v2749 = vrot.slane %v2747, 7
      %v2750 = vshll.u32 %v2515, 16
      %v2752 = vor.u32 %v2749, %v2750
      %v2753 = vsel %vm765, %v2745, %v2752
      %v2755 = vshrl.u32 %v2516, 16
      %v2757 = vrot.slane %v2755, 7
      %v2758 = vrot.slane %v2757, 4
      %v2760 = vshrl.u32 %v2517, 16
      %v2762 = vrot.slane %v2760, 7
      %v2763 = vshll.u32 %v2517, 16
      %v2765 = vor.u32 %v2762, %v2763
      %v2766 = vsel %vm765, %v2758, %v2765
      %v2767 = vrot.slane %v2762, 4
      %v2769 = vshrl.u32 %v2518, 16
      %v2771 = vrot.slane %v2769, 7
      %v2772 = vshll.u32 %v2518, 16
      %v2774 = vor.u32 %v2771, %v2772
      %v2775 = vsel %vm765, %v2767, %v2774
      %v2777 = vshrl.u32 %v2519, 16
      %v2779 = vrot.slane %v2777, 7
      %v2780 = vrot.slane %v2779, 4
      %v2782 = vshrl.u32 %v2520, 16
      %v2784 = vrot.slane %v2782, 7
      %v2785 = vshll.u32 %v2520, 16
      %v2787 = vor.u32 %v2784, %v2785
      %v2788 = vsel %vm765, %v2780, %v2787
      %v2789 = vrot.slane %v2784, 4
      %v2791 = vshrl.u32 %v2521, 16
      %v2793 = vrot.slane %v2791, 7
      %v2794 = vshll.u32 %v2521, 16
      %v2796 = vor.u32 %v2793, %v2794
      %v2797 = vsel %vm765, %v2789, %v2796
      %v2799 = vshrl.u32 %v2522, 16
      %v2801 = vrot.slane %v2799, 7
      %v2802 = vrot.slane %v2801, 4
      %v2804 = vshrl.u32 %v2523, 16
      %v2806 = vrot.slane %v2804, 7
      %v2807 = vshll.u32 %v2523, 16
      %v2809 = vor.u32 %v2806, %v2807
      %v2810 = vsel %vm765, %v2802, %v2809
      %v2811 = vrot.slane %v2806, 4
      %v2813 = vshrl.u32 %v2524, 16
      %v2815 = vrot.slane %v2813, 7
      %v2816 = vshll.u32 %v2524, 16
      %v2818 = vor.u32 %v2815, %v2816
      %v2819 = vsel %vm765, %v2811, %v2818
      %v2821 = vshrl.u32 %v2525, 16
      %v2823 = vrot.slane %v2821, 7
      %v2824 = vrot.slane %v2823, 4
      %v2826 = vshrl.u32 %v2526, 16
      %v2828 = vrot.slane %v2826, 7
      %v2829 = vshll.u32 %v2526, 16
      %v2831 = vor.u32 %v2828, %v2829
      %v2832 = vsel %vm765, %v2824, %v2831
      %v2833 = vrot.slane %v2828, 4
      %v2835 = vshrl.u32 %v2527, 16
      %v2837 = vrot.slane %v2835, 7
      %v2838 = vshll.u32 %v2527, 16
      %v2840 = vor.u32 %v2837, %v2838
      %v2841 = vsel %vm765, %v2833, %v2840
      %v2843 = vshrl.u32 %v2528, 16
      %v2845 = vrot.slane %v2843, 7
      %v2846 = vrot.slane %v2845, 4
      %v2848 = vshrl.u32 %v2529, 16
      %v2850 = vrot.slane %v2848, 7
      %v2851 = vshll.u32 %v2529, 16
      %v2853 = vor.u32 %v2850, %v2851
      %v2854 = vsel %vm765, %v2846, %v2853
      %v2855 = vrot.slane %v2850, 4
      %v2857 = vshrl.u32 %v2530, 16
      %v2859 = vrot.slane %v2857, 7
      %v2860 = vshll.u32 %v2530, 16
      %v2862 = vor.u32 %v2859, %v2860
      %v2863 = vsel %vm765, %v2855, %v2862
      %v2865 = vshrl.u32 %v2531, 16
      %v2867 = vrot.slane %v2865, 7
      %v2868 = vrot.slane %v2867, 4
      %v2870 = vshrl.u32 %v2532, 16
      %v2872 = vrot.slane %v2870, 7
      %v2873 = vshll.u32 %v2532, 16
      %v2875 = vor.u32 %v2872, %v2873
      %v2876 = vsel %vm765, %v2868, %v2875
      %v2877 = vrot.slane %v2872, 4
      %v2879 = vshrl.u32 %v2533, 16
      %v2881 = vrot.slane %v2879, 7
      %v2882 = vshll.u32 %v2533, 16
      %v2884 = vor.u32 %v2881, %v2882
      %v2885 = vsel %vm765, %v2877, %v2884
      %s2886 = scalar_lea.vmem %s3, 192
      %v2887 = vld [vmem:[%s2886] sm:$0xf]
      %v2888 = vld [vmem:[%s2886 + $0x4] sm:$0xf]
      %v2889 = vld [vmem:[%s2886 + $0x8] sm:$0xf]
      %v2890 = vld [vmem:[%s2886 + $0xc] sm:$0xf]
      %v2891 = vld [vmem:[%s2886 + $0x10] sm:$0xf]
      %v2892 = vld [vmem:[%s2886 + $0x14] sm:$0xf]
      %v2893 = vld [vmem:[%s2886 + $0x18] sm:$0xf]
      %v2894 = vld [vmem:[%s2886 + $0x1c] sm:$0xf]
      %v2895 = vld [vmem:[%s2886 + $0x20] sm:$0xf]
      %v2896 = vld [vmem:[%s2886 + $0x24] sm:$0xf]
      %v2897 = vld [vmem:[%s2886 + $0x28] sm:$0xf]
      %v2898 = vld [vmem:[%s2886 + $0x2c] sm:$0xf]
      %v2899 = vld [vmem:[%s2886 + $0x30] sm:$0xf]
      %v2900 = vld [vmem:[%s2886 + $0x34] sm:$0xf]
      %v2901 = vld [vmem:[%s2886 + $0x38] sm:$0xf]
      %v2902 = vld [vmem:[%s2886 + $0x3c] sm:$0xf]
      %v2903 = vunpack.c.l.b16 %v2546
      %v2904 = vunpack.c.l.b16 %v2555
      %v2905 = vunpack.c.l.b16 %v2568
      %v2906 = vunpack.c.l.b16 %v2577
      %v2907 = vunpack.c.l.b16 %v2590
      %v2908 = vunpack.c.l.b16 %v2599
      %v2909 = vunpack.c.l.b16 %v2612
      %v2910 = vunpack.c.l.b16 %v2621
      %v2911 = vunpack.c.l.b16 %v2634
      %v2912 = vunpack.c.l.b16 %v2643
      %v2913 = vunpack.c.l.b16 %v2656
      %v2914 = vunpack.c.l.b16 %v2665
      %v2915 = vunpack.c.l.b16 %v2678
      %v2916 = vunpack.c.l.b16 %v2687
      %v2917 = vunpack.c.l.b16 %v2700
      %v2918 = vunpack.c.l.b16 %v2709
      %v2919 = vunpack.c.l.b16 %v2722
      %v2920 = vunpack.c.l.b16 %v2731
      %v2921 = vunpack.c.l.b16 %v2744
      %v2922 = vunpack.c.l.b16 %v2753
      %v2923 = vunpack.c.l.b16 %v2766
      %v2924 = vunpack.c.l.b16 %v2775
      %v2925 = vunpack.c.l.b16 %v2788
      %v2926 = vunpack.c.l.b16 %v2797
      %v2927 = vunpack.c.l.b16 %v2810
      %v2928 = vunpack.c.l.b16 %v2819
      %v2929 = vunpack.c.l.b16 %v2832
      %v2930 = vunpack.c.l.b16 %v2841
      %v2931 = vunpack.c.l.b16 %v2854
      %v2932 = vunpack.c.l.b16 %v2863
      %v2933 = vunpack.c.l.b16 %v2876
      %v2934 = vunpack.c.l.b16 %v2885
      %v2935 = vpack.c.b16 %v2904, %v2903
      %v2936 = vpack.c.b16 %v2906, %v2905
      %v2937 = vpack.c.b16 %v2908, %v2907
      %v2938 = vpack.c.b16 %v2910, %v2909
      %v2939 = vpack.c.b16 %v2912, %v2911
      %v2940 = vpack.c.b16 %v2914, %v2913
      %v2941 = vpack.c.b16 %v2916, %v2915
      %v2942 = vpack.c.b16 %v2918, %v2917
      %v2943 = vpack.c.b16 %v2920, %v2919
      %v2944 = vpack.c.b16 %v2922, %v2921
      %v2945 = vpack.c.b16 %v2924, %v2923
      %v2946 = vpack.c.b16 %v2926, %v2925
      %v2947 = vpack.c.b16 %v2928, %v2927
      %v2948 = vpack.c.b16 %v2930, %v2929
      %v2949 = vpack.c.b16 %v2932, %v2931
      %v2950 = vpack.c.b16 %v2934, %v2933
      %v2983 = vunpack.c.l.b16 %v2887
      %v2984 = vunpack.c.l.b16 %v2888
      %v2985 = vunpack.c.l.b16 %v2889
      %v2986 = vunpack.c.l.b16 %v2890
      %v2987 = vunpack.c.l.b16 %v2891
      %v2988 = vunpack.c.l.b16 %v2892
      %v2989 = vunpack.c.l.b16 %v2893
      %v2990 = vunpack.c.l.b16 %v2894
      %v2991 = vunpack.c.l.b16 %v2895
      %v2992 = vunpack.c.l.b16 %v2896
      %v2993 = vunpack.c.l.b16 %v2897
      %v2994 = vunpack.c.l.b16 %v2898
      %v2995 = vunpack.c.l.b16 %v2899
      %v2996 = vunpack.c.l.b16 %v2900
      %v2997 = vunpack.c.l.b16 %v2901
      %v2998 = vunpack.c.l.b16 %v2902
      %v2999 = vpack.c.b16 %v2984, %v2983
      %v3000 = vpack.c.b16 %v2986, %v2985
      %v3001 = vpack.c.b16 %v2988, %v2987
      %v3002 = vpack.c.b16 %v2990, %v2989
      %v3003 = vpack.c.b16 %v2992, %v2991
      %v3004 = vpack.c.b16 %v2994, %v2993
      %v3005 = vpack.c.b16 %v2996, %v2995
      %v3006 = vpack.c.b16 %v2998, %v2997
      %3015 = vmatprep.subr.bf16.mxu0 0
      %3016 = vmatpush1.bf16.msra.mxu0 %v2999
      %3017 = vmatprep.subr.bf16.mxu0 0
      %3018 = vmatpush1.bf16.msra.mxu0 %v3000
      %3019 = vmatprep.subr.bf16.mxu0 0
      %3020 = vmatpush1.bf16.msra.mxu0 %v3001
      %3021 = vmatprep.subr.bf16.mxu0 0
      %3022 = vmatpush1.bf16.msra.mxu0 %v3002
      %3023 = vmatprep.subr.bf16.mxu0 0
      %3024 = vmatpush1.bf16.msra.mxu0 %v3003
      %3025 = vmatprep.subr.bf16.mxu0 0
      %3026 = vmatpush1.bf16.msra.mxu0 %v3004
      %3027 = vmatprep.subr.bf16.mxu0 0
      %3028 = vmatpush1.bf16.msra.mxu0 %v3005
      %3029 = vmatprep.subr.bf16.mxu0 0
      %3030 = vmatpush1.bf16.msra.mxu0 %v3006
      %3031 = vmatprep.subr.bf16.mxu0 0
      %3032 = vmatpush1.bf16.msra.mxu0 0
      %3033 = vmatprep.subr.bf16.mxu0 0
      %3034 = vmatpush1.bf16.msra.mxu0 0
      %3035 = vmatprep.subr.bf16.mxu0 0
      %3036 = vmatpush1.bf16.msra.mxu0 0
      %3037 = vmatprep.subr.bf16.mxu0 0
      %3038 = vmatpush1.bf16.msra.mxu0 0
      %3039 = vmatprep.subr.bf16.mxu0 0
      %3040 = vmatpush1.bf16.msra.mxu0 0
      %3041 = vmatprep.subr.bf16.mxu0 0
      %3042 = vmatpush1.bf16.msra.mxu0 0
      %3043 = vmatprep.subr.bf16.mxu0 0
      %3044 = vmatpush1.bf16.msra.mxu0 0
      %3045 = vmatprep.subr.bf16.mxu0 0
      %3046 = vmatpush1.bf16.msra.mxu0 0
      %3047 = vmatprep.mubr.bf16.mxu0 0
      %3048 = vmatmul.mubr.bf16.gmra.mrb[0].mxu0 %v2935
      %v3049 = vpop.f32.mrb[0].mxu0
      %v3050 = vadd.f32 0.0, %v3049
      %v3051 = vpop.f32.mrb[0].mxu0
      %v3052 = vpop.f32.mrb[0].mxu0
      %v3053 = vadd.f32 0.0, %v3052
      %v3054 = vpop.f32.mrb[0].mxu0
      %3055 = vmatprep.mubr.bf16.mxu0 0
      %3056 = vmatmul.mubr.bf16.gmra.mrb[0].mxu0 %v2936
      %v3057 = vpop.f32.mrb[0].mxu0
      %v3058 = vadd.f32 0.0, %v3057
      %v3059 = vpop.f32.mrb[0].mxu0
      %v3060 = vpop.f32.mrb[0].mxu0
      %v3061 = vadd.f32 0.0, %v3060
      %v3062 = vpop.f32.mrb[0].mxu0
      %3063 = vmatprep.mubr.bf16.mxu0 0
      %3064 = vmatmul.mubr.bf16.gmra.mrb[0].mxu0 %v2937
      %v3065 = vpop.f32.mrb[0].mxu0
      %v3066 = vadd.f32 0.0, %v3065
      %v3067 = vpop.f32.mrb[0].mxu0
      %v3068 = vpop.f32.mrb[0].mxu0
      %v3069 = vadd.f32 0.0, %v3068
      %v3070 = vpop.f32.mrb[0].mxu0
      %3071 = vmatprep.mubr.bf16.mxu0 0
      %3072 = vmatmul.mubr.bf16.gmra.mrb[0].mxu0 %v2938
      %v3073 = vpop.f32.mrb[0].mxu0
      %v3074 = vadd.f32 0.0, %v3073
      %v3075 = vpop.f32.mrb[0].mxu0
      %v3076 = vpop.f32.mrb[0].mxu0
      %v3077 = vadd.f32 0.0, %v3076
      %v3078 = vpop.f32.mrb[0].mxu0
      %3079 = vmatprep.mubr.bf16.mxu0 0
      %3080 = vmatmul.mubr.bf16.gmra.mrb[0].mxu0 %v2939
      %v3081 = vpop.f32.mrb[0].mxu0
      %v3082 = vadd.f32 0.0, %v3081
      %v3083 = vpop.f32.mrb[0].mxu0
      %v3084 = vpop.f32.mrb[0].mxu0
      %v3085 = vadd.f32 0.0, %v3084
      %v3086 = vpop.f32.mrb[0].mxu0
      %3087 = vmatprep.mubr.bf16.mxu0 0
      %3088 = vmatmul.mubr.bf16.gmra.mrb[0].mxu0 %v2940
      %v3089 = vpop.f32.mrb[0].mxu0
      %v3090 = vadd.f32 0.0, %v3089
      %v3091 = vpop.f32.mrb[0].mxu0
      %v3092 = vpop.f32.mrb[0].mxu0
      %v3093 = vadd.f32 0.0, %v3092
      %v3094 = vpop.f32.mrb[0].mxu0
      %3095 = vmatprep.mubr.bf16.mxu0 0
      %3096 = vmatmul.mubr.bf16.gmra.mrb[0].mxu0 %v2941
      %v3097 = vpop.f32.mrb[0].mxu0
      %v3098 = vadd.f32 0.0, %v3097
      %v3099 = vpop.f32.mrb[0].mxu0
      %v3100 = vpop.f32.mrb[0].mxu0
      %v3101 = vadd.f32 0.0, %v3100
      %v3102 = vpop.f32.mrb[0].mxu0
      %3103 = vmatprep.mubr.bf16.mxu0 0
      %3104 = vmatmul.mubr.bf16.gmra.mrb[0].mxu0 %v2942
      %v3105 = vpop.f32.mrb[0].mxu0
      %v3106 = vadd.f32 0.0, %v3105
      %v3107 = vpop.f32.mrb[0].mxu0
      %v3108 = vpop.f32.mrb[0].mxu0
      %v3109 = vadd.f32 0.0, %v3108
      %v3110 = vpop.f32.mrb[0].mxu0
      %3111 = vmatprep.mubr.bf16.mxu0 0
      %3112 = vmatmul.mubr.bf16.gmra.mrb[0].mxu0 %v2943
      %v3113 = vpop.f32.mrb[0].mxu0
      %v3114 = vadd.f32 0.0, %v3113
      %v3115 = vpop.f32.mrb[0].mxu0
      %v3116 = vpop.f32.mrb[0].mxu0
      %v3117 = vadd.f32 0.0, %v3116
      %v3118 = vpop.f32.mrb[0].mxu0
      %3119 = vmatprep.mubr.bf16.mxu0 0
      %3120 = vmatmul.mubr.bf16.gmra.mrb[0].mxu0 %v2944
      %v3121 = vpop.f32.mrb[0].mxu0
      %v3122 = vadd.f32 0.0, %v3121
      %v3123 = vpop.f32.mrb[0].mxu0
      %v3124 = vpop.f32.mrb[0].mxu0
      %v3125 = vadd.f32 0.0, %v3124
      %v3126 = vpop.f32.mrb[0].mxu0
      %3127 = vmatprep.mubr.bf16.mxu0 0
      %3128 = vmatmul.mubr.bf16.gmra.mrb[0].mxu0 %v2945
      %v3129 = vpop.f32.mrb[0].mxu0
      %v3130 = vadd.f32 0.0, %v3129
      %v3131 = vpop.f32.mrb[0].mxu0
      %v3132 = vpop.f32.mrb[0].mxu0
      %v3133 = vadd.f32 0.0, %v3132
      %v3134 = vpop.f32.mrb[0].mxu0
      %3135 = vmatprep.mubr.bf16.mxu0 0
      %3136 = vmatmul.mubr.bf16.gmra.mrb[0].mxu0 %v2946
      %v3137 = vpop.f32.mrb[0].mxu0
      %v3138 = vadd.f32 0.0, %v3137
      %v3139 = vpop.f32.mrb[0].mxu0
      %v3140 = vpop.f32.mrb[0].mxu0
      %v3141 = vadd.f32 0.0, %v3140
      %v3142 = vpop.f32.mrb[0].mxu0
      %3143 = vmatprep.mubr.bf16.mxu0 0
      %3144 = vmatmul.mubr.bf16.gmra.mrb[0].mxu0 %v2947
      %v3145 = vpop.f32.mrb[0].mxu0
      %v3146 = vadd.f32 0.0, %v3145
      %v3147 = vpop.f32.mrb[0].mxu0
      %v3148 = vpop.f32.mrb[0].mxu0
      %v3149 = vadd.f32 0.0, %v3148
      %v3150 = vpop.f32.mrb[0].mxu0
      %3151 = vmatprep.mubr.bf16.mxu0 0
      %3152 = vmatmul.mubr.bf16.gmra.mrb[0].mxu0 %v2948
      %v3153 = vpop.f32.mrb[0].mxu0
      %v3154 = vadd.f32 0.0, %v3153
      %v3155 = vpop.f32.mrb[0].mxu0
      %v3156 = vpop.f32.mrb[0].mxu0
      %v3157 = vadd.f32 0.0, %v3156
      %v3158 = vpop.f32.mrb[0].mxu0
      %3159 = vmatprep.mubr.bf16.mxu0 0
      %3160 = vmatmul.mubr.bf16.gmra.mrb[0].mxu0 %v2949
      %v3161 = vpop.f32.mrb[0].mxu0
      %v3162 = vadd.f32 0.0, %v3161
      %v3163 = vpop.f32.mrb[0].mxu0
      %v3164 = vpop.f32.mrb[0].mxu0
      %v3165 = vadd.f32 0.0, %v3164
      %v3166 = vpop.f32.mrb[0].mxu0
      %3167 = vmatprep.mubr.bf16.mxu0 0
      %3168 = vmatmul.mubr.bf16.gmra.mrb[0].mxu0 %v2950
      %v3169 = vpop.f32.mrb[0].mxu0
      %v3170 = vadd.f32 0.0, %v3169
      %v3171 = vpop.f32.mrb[0].mxu0
      %v3172 = vpop.f32.mrb[0].mxu0
      %v3173 = vadd.f32 0.0, %v3172
      %v3174 = vpop.f32.mrb[0].mxu0
      %3175 = vdwg.mxu0
      %v3176 = vadd.f32 %v2454, %v3050
      %v3177 = vadd.f32 %v2455, %v3053
      %v3178 = vadd.f32 %v2456, %v3058
      %v3179 = vadd.f32 %v2457, %v3061
      %v3180 = vadd.f32 %v2458, %v3066
      %v3181 = vadd.f32 %v2459, %v3069
      %v3182 = vadd.f32 %v2460, %v3074
      %v3183 = vadd.f32 %v2461, %v3077
      %v3184 = vadd.f32 %v2462, %v3082
      %v3185 = vadd.f32 %v2463, %v3085
      %v3186 = vadd.f32 %v2464, %v3090
      %v3187 = vadd.f32 %v2465, %v3093
      %v3188 = vadd.f32 %v2466, %v3098
      %v3189 = vadd.f32 %v2467, %v3101
      %v3190 = vadd.f32 %v2468, %v3106
      %v3191 = vadd.f32 %v2469, %v3109
      %v3192 = vadd.f32 %v2470, %v3114
      %v3193 = vadd.f32 %v2471, %v3117
      %v3194 = vadd.f32 %v2472, %v3122
      %v3195 = vadd.f32 %v2473, %v3125
      %v3196 = vadd.f32 %v2474, %v3130
      %v3197 = vadd.f32 %v2475, %v3133
      %v3198 = vadd.f32 %v2476, %v3138
      %v3199 = vadd.f32 %v2477, %v3141
      %v3200 = vadd.f32 %v2478, %v3146
      %v3201 = vadd.f32 %v2479, %v3149
      %v3202 = vadd.f32 %v2480, %v3154
      %v3203 = vadd.f32 %v2481, %v3157
      %v3204 = vadd.f32 %v2482, %v3162
      %v3205 = vadd.f32 %v2483, %v3165
      %v3206 = vadd.f32 %v2484, %v3170
      %v3207 = vadd.f32 %v2485, %v3173
      %s3208 = scalar_lea.vmem %s3, 256
      %v3209 = vld [vmem:[%s3208] sm:$0xf]
      %v3210 = vld [vmem:[%s3208 + $0x4] sm:$0xf]
      %v3211 = vld [vmem:[%s3208 + $0x8] sm:$0xf]
      %v3212 = vld [vmem:[%s3208 + $0xc] sm:$0xf]
      %v3213 = vld [vmem:[%s3208 + $0x10] sm:$0xf]
      %v3214 = vld [vmem:[%s3208 + $0x14] sm:$0xf]
      %v3215 = vld [vmem:[%s3208 + $0x18] sm:$0xf]
      %v3216 = vld [vmem:[%s3208 + $0x1c] sm:$0xf]
      %v3217 = vld [vmem:[%s3208 + $0x20] sm:$0xf]
      %v3218 = vld [vmem:[%s3208 + $0x24] sm:$0xf]
      %v3219 = vld [vmem:[%s3208 + $0x28] sm:$0xf]
      %v3220 = vld [vmem:[%s3208 + $0x2c] sm:$0xf]
      %v3221 = vld [vmem:[%s3208 + $0x30] sm:$0xf]
      %v3222 = vld [vmem:[%s3208 + $0x34] sm:$0xf]
      %v3223 = vld [vmem:[%s3208 + $0x38] sm:$0xf]
      %v3224 = vld [vmem:[%s3208 + $0x3c] sm:$0xf]
      %v3257 = vunpack.c.l.b16 %v2487
      %v3258 = vunpack.c.l.b16 %v2488
      %v3259 = vunpack.c.l.b16 %v2490
      %v3260 = vunpack.c.l.b16 %v2491
      %v3261 = vunpack.c.l.b16 %v2493
      %v3262 = vunpack.c.l.b16 %v2494
      %v3263 = vunpack.c.l.b16 %v2496
      %v3264 = vunpack.c.l.b16 %v2497
      %v3265 = vunpack.c.l.b16 %v2499
      %v3266 = vunpack.c.l.b16 %v2500
      %v3267 = vunpack.c.l.b16 %v2502
      %v3268 = vunpack.c.l.b16 %v2503
      %v3269 = vunpack.c.l.b16 %v2505
      %v3270 = vunpack.c.l.b16 %v2506
      %v3271 = vunpack.c.l.b16 %v2508
      %v3272 = vunpack.c.l.b16 %v2509
      %v3273 = vunpack.c.l.b16 %v2511
      %v3274 = vunpack.c.l.b16 %v2512
      %v3275 = vunpack.c.l.b16 %v2514
      %v3276 = vunpack.c.l.b16 %v2515
      %v3277 = vunpack.c.l.b16 %v2517
      %v3278 = vunpack.c.l.b16 %v2518
      %v3279 = vunpack.c.l.b16 %v2520
      %v3280 = vunpack.c.l.b16 %v2521
      %v3281 = vunpack.c.l.b16 %v2523
      %v3282 = vunpack.c.l.b16 %v2524
      %v3283 = vunpack.c.l.b16 %v2526
      %v3284 = vunpack.c.l.b16 %v2527
      %v3285 = vunpack.c.l.b16 %v2529
      %v3286 = vunpack.c.l.b16 %v2530
      %v3287 = vunpack.c.l.b16 %v2532
      %v3288 = vunpack.c.l.b16 %v2533
      %v3289 = vpack.c.b16 %v3258, %v3257
      %v3290 = vpack.c.b16 %v3260, %v3259
      %v3291 = vpack.c.b16 %v3262, %v3261
      %v3292 = vpack.c.b16 %v3264, %v3263
      %v3293 = vpack.c.b16 %v3266, %v3265
      %v3294 = vpack.c.b16 %v3268, %v3267
      %v3295 = vpack.c.b16 %v3270, %v3269
      %v3296 = vpack.c.b16 %v3272, %v3271
      %v3297 = vpack.c.b16 %v3274, %v3273
      %v3298 = vpack.c.b16 %v3276, %v3275
      %v3299 = vpack.c.b16 %v3278, %v3277
      %v3300 = vpack.c.b16 %v3280, %v3279
      %v3301 = vpack.c.b16 %v3282, %v3281
      %v3302 = vpack.c.b16 %v3284, %v3283
      %v3303 = vpack.c.b16 %v3286, %v3285
      %v3304 = vpack.c.b16 %v3288, %v3287
      %v3337 = vunpack.c.l.b16 %v3209
      %v3338 = vunpack.c.l.b16 %v3210
      %v3339 = vunpack.c.l.b16 %v3211
      %v3340 = vunpack.c.l.b16 %v3212
      %v3341 = vunpack.c.l.b16 %v3213
      %v3342 = vunpack.c.l.b16 %v3214
      %v3343 = vunpack.c.l.b16 %v3215
      %v3344 = vunpack.c.l.b16 %v3216
      %v3345 = vunpack.c.l.b16 %v3217
      %v3346 = vunpack.c.l.b16 %v3218
      %v3347 = vunpack.c.l.b16 %v3219
      %v3348 = vunpack.c.l.b16 %v3220
      %v3349 = vunpack.c.l.b16 %v3221
      %v3350 = vunpack.c.l.b16 %v3222
      %v3351 = vunpack.c.l.b16 %v3223
      %v3352 = vunpack.c.l.b16 %v3224
      %v3353 = vpack.c.b16 %v3338, %v3337
      %v3354 = vpack.c.b16 %v3340, %v3339
      %v3355 = vpack.c.b16 %v3342, %v3341
      %v3356 = vpack.c.b16 %v3344, %v3343
      %v3357 = vpack.c.b16 %v3346, %v3345
      %v3358 = vpack.c.b16 %v3348, %v3347
      %v3359 = vpack.c.b16 %v3350, %v3349
      %v3360 = vpack.c.b16 %v3352, %v3351
      %3369 = vmatprep.subr.bf16.mxu0 0
      %3370 = vmatpush1.bf16.msra.mxu0 %v3353
      %3371 = vmatprep.subr.bf16.mxu0 0
      %3372 = vmatpush1.bf16.msra.mxu0 %v3354
      %3373 = vmatprep.subr.bf16.mxu0 0
      %3374 = vmatpush1.bf16.msra.mxu0 %v3355
      %3375 = vmatprep.subr.bf16.mxu0 0
      %3376 = vmatpush1.bf16.msra.mxu0 %v3356
      %3377 = vmatprep.subr.bf16.mxu0 0
      %3378 = vmatpush1.bf16.msra.mxu0 %v3357
      %3379 = vmatprep.subr.bf16.mxu0 0
      %3380 = vmatpush1.bf16.msra.mxu0 %v3358
      %3381 = vmatprep.subr.bf16.mxu0 0
      %3382 = vmatpush1.bf16.msra.mxu0 %v3359
      %3383 = vmatprep.subr.bf16.mxu0 0
      %3384 = vmatpush1.bf16.msra.mxu0 %v3360
      %3385 = vmatprep.subr.bf16.mxu0 0
      %3386 = vmatpush1.bf16.msra.mxu0 0
      %3387 = vmatprep.subr.bf16.mxu0 0
      %3388 = vmatpush1.bf16.msra.mxu0 0
      %3389 = vmatprep.subr.bf16.mxu0 0
      %3390 = vmatpush1.bf16.msra.mxu0 0
      %3391 = vmatprep.subr.bf16.mxu0 0
      %3392 = vmatpush1.bf16.msra.mxu0 0
      %3393 = vmatprep.subr.bf16.mxu0 0
      %3394 = vmatpush1.bf16.msra.mxu0 0
      %3395 = vmatprep.subr.bf16.mxu0 0
      %3396 = vmatpush1.bf16.msra.mxu0 0
      %3397 = vmatprep.subr.bf16.mxu0 0
      %3398 = vmatpush1.bf16.msra.mxu0 0
      %3399 = vmatprep.subr.bf16.mxu0 0
      %3400 = vmatpush1.bf16.msra.mxu0 0
      %3401 = vmatprep.mubr.bf16.mxu0 0
      %3402 = vmatmul.mubr.bf16.gmra.mrb[0].mxu0 %v3289
      %v3403 = vpop.f32.mrb[0].mxu0
      %v3404 = vadd.f32 0.0, %v3403
      %v3405 = vpop.f32.mrb[0].mxu0
      %v3406 = vpop.f32.mrb[0].mxu0
      %v3407 = vadd.f32 0.0, %v3406
      %v3408 = vpop.f32.mrb[0].mxu0
      %3409 = vmatprep.mubr.bf16.mxu0 0
      %3410 = vmatmul.mubr.bf16.gmra.mrb[0].mxu0 %v3290
      %v3411 = vpop.f32.mrb[0].mxu0
      %v3412 = vadd.f32 0.0, %v3411
      %v3413 = vpop.f32.mrb[0].mxu0
      %v3414 = vpop.f32.mrb[0].mxu0
      %v3415 = vadd.f32 0.0, %v3414
      %v3416 = vpop.f32.mrb[0].mxu0
      %3417 = vmatprep.mubr.bf16.mxu0 0
      %3418 = vmatmul.mubr.bf16.gmra.mrb[0].mxu0 %v3291
      %v3419 = vpop.f32.mrb[0].mxu0
      %v3420 = vadd.f32 0.0, %v3419
      %v3421 = vpop.f32.mrb[0].mxu0
      %v3422 = vpop.f32.mrb[0].mxu0
      %v3423 = vadd.f32 0.0, %v3422
      %v3424 = vpop.f32.mrb[0].mxu0
      %3425 = vmatprep.mubr.bf16.mxu0 0
      %3426 = vmatmul.mubr.bf16.gmra.mrb[0].mxu0 %v3292
      %v3427 = vpop.f32.mrb[0].mxu0
      %v3428 = vadd.f32 0.0, %v3427
      %v3429 = vpop.f32.mrb[0].mxu0
      %v3430 = vpop.f32.mrb[0].mxu0
      %v3431 = vadd.f32 0.0, %v3430
      %v3432 = vpop.f32.mrb[0].mxu0
      %3433 = vmatprep.mubr.bf16.mxu0 0
      %3434 = vmatmul.mubr.bf16.gmra.mrb[0].mxu0 %v3293
      %v3435 = vpop.f32.mrb[0].mxu0
      %v3436 = vadd.f32 0.0, %v3435
      %v3437 = vpop.f32.mrb[0].mxu0
      %v3438 = vpop.f32.mrb[0].mxu0
      %v3439 = vadd.f32 0.0, %v3438
      %v3440 = vpop.f32.mrb[0].mxu0
      %3441 = vmatprep.mubr.bf16.mxu0 0
      %3442 = vmatmul.mubr.bf16.gmra.mrb[0].mxu0 %v3294
      %v3443 = vpop.f32.mrb[0].mxu0
      %v3444 = vadd.f32 0.0, %v3443
      %v3445 = vpop.f32.mrb[0].mxu0
      %v3446 = vpop.f32.mrb[0].mxu0
      %v3447 = vadd.f32 0.0, %v3446
      %v3448 = vpop.f32.mrb[0].mxu0
      %3449 = vmatprep.mubr.bf16.mxu0 0
      %3450 = vmatmul.mubr.bf16.gmra.mrb[0].mxu0 %v3295
      %v3451 = vpop.f32.mrb[0].mxu0
      %v3452 = vadd.f32 0.0, %v3451
      %v3453 = vpop.f32.mrb[0].mxu0
      %v3454 = vpop.f32.mrb[0].mxu0
      %v3455 = vadd.f32 0.0, %v3454
      %v3456 = vpop.f32.mrb[0].mxu0
      %3457 = vmatprep.mubr.bf16.mxu0 0
      %3458 = vmatmul.mubr.bf16.gmra.mrb[0].mxu0 %v3296
      %v3459 = vpop.f32.mrb[0].mxu0
      %v3460 = vadd.f32 0.0, %v3459
      %v3461 = vpop.f32.mrb[0].mxu0
      %v3462 = vpop.f32.mrb[0].mxu0
      %v3463 = vadd.f32 0.0, %v3462
      %v3464 = vpop.f32.mrb[0].mxu0
      %3465 = vmatprep.mubr.bf16.mxu0 0
      %3466 = vmatmul.mubr.bf16.gmra.mrb[0].mxu0 %v3297
      %v3467 = vpop.f32.mrb[0].mxu0
      %v3468 = vadd.f32 0.0, %v3467
      %v3469 = vpop.f32.mrb[0].mxu0
      %v3470 = vpop.f32.mrb[0].mxu0
      %v3471 = vadd.f32 0.0, %v3470
      %v3472 = vpop.f32.mrb[0].mxu0
      %3473 = vmatprep.mubr.bf16.mxu0 0
      %3474 = vmatmul.mubr.bf16.gmra.mrb[0].mxu0 %v3298
      %v3475 = vpop.f32.mrb[0].mxu0
      %v3476 = vadd.f32 0.0, %v3475
      %v3477 = vpop.f32.mrb[0].mxu0
      %v3478 = vpop.f32.mrb[0].mxu0
      %v3479 = vadd.f32 0.0, %v3478
      %v3480 = vpop.f32.mrb[0].mxu0
      %3481 = vmatprep.mubr.bf16.mxu0 0
      %3482 = vmatmul.mubr.bf16.gmra.mrb[0].mxu0 %v3299
      %v3483 = vpop.f32.mrb[0].mxu0
      %v3484 = vadd.f32 0.0, %v3483
      %v3485 = vpop.f32.mrb[0].mxu0
      %v3486 = vpop.f32.mrb[0].mxu0
      %v3487 = vadd.f32 0.0, %v3486
      %v3488 = vpop.f32.mrb[0].mxu0
      %3489 = vmatprep.mubr.bf16.mxu0 0
      %3490 = vmatmul.mubr.bf16.gmra.mrb[0].mxu0 %v3300
      %v3491 = vpop.f32.mrb[0].mxu0
      %v3492 = vadd.f32 0.0, %v3491
      %v3493 = vpop.f32.mrb[0].mxu0
      %v3494 = vpop.f32.mrb[0].mxu0
      %v3495 = vadd.f32 0.0, %v3494
      %v3496 = vpop.f32.mrb[0].mxu0
      %3497 = vmatprep.mubr.bf16.mxu0 0
      %3498 = vmatmul.mubr.bf16.gmra.mrb[0].mxu0 %v3301
      %v3499 = vpop.f32.mrb[0].mxu0
      %v3500 = vadd.f32 0.0, %v3499
      %v3501 = vpop.f32.mrb[0].mxu0
      %v3502 = vpop.f32.mrb[0].mxu0
      %v3503 = vadd.f32 0.0, %v3502
      %v3504 = vpop.f32.mrb[0].mxu0
      %3505 = vmatprep.mubr.bf16.mxu0 0
      %3506 = vmatmul.mubr.bf16.gmra.mrb[0].mxu0 %v3302
      %v3507 = vpop.f32.mrb[0].mxu0
      %v3508 = vadd.f32 0.0, %v3507
      %v3509 = vpop.f32.mrb[0].mxu0
      %v3510 = vpop.f32.mrb[0].mxu0
      %v3511 = vadd.f32 0.0, %v3510
      %v3512 = vpop.f32.mrb[0].mxu0
      %3513 = vmatprep.mubr.bf16.mxu0 0
      %3514 = vmatmul.mubr.bf16.gmra.mrb[0].mxu0 %v3303
      %v3515 = vpop.f32.mrb[0].mxu0
      %v3516 = vadd.f32 0.0, %v3515
      %v3517 = vpop.f32.mrb[0].mxu0
      %v3518 = vpop.f32.mrb[0].mxu0
      %v3519 = vadd.f32 0.0, %v3518
      %v3520 = vpop.f32.mrb[0].mxu0
      %3521 = vmatprep.mubr.bf16.mxu0 0
      %3522 = vmatmul.mubr.bf16.gmra.mrb[0].mxu0 %v3304
      %v3523 = vpop.f32.mrb[0].mxu0
      %v3524 = vadd.f32 0.0, %v3523
      %v3525 = vpop.f32.mrb[0].mxu0
      %v3526 = vpop.f32.mrb[0].mxu0
      %v3527 = vadd.f32 0.0, %v3526
      %v3528 = vpop.f32.mrb[0].mxu0
      %3529 = vdwg.mxu0
      %v3530 = vadd.f32 %v3176, %v3404
      %v3531 = vadd.f32 %v3177, %v3407
      %v3532 = vadd.f32 %v3178, %v3412
      %v3533 = vadd.f32 %v3179, %v3415
      %v3534 = vadd.f32 %v3180, %v3420
      %v3535 = vadd.f32 %v3181, %v3423
      %v3536 = vadd.f32 %v3182, %v3428
      %v3537 = vadd.f32 %v3183, %v3431
      %v3538 = vadd.f32 %v3184, %v3436
      %v3539 = vadd.f32 %v3185, %v3439
      %v3540 = vadd.f32 %v3186, %v3444
      %v3541 = vadd.f32 %v3187, %v3447
      %v3542 = vadd.f32 %v3188, %v3452
      %v3543 = vadd.f32 %v3189, %v3455
      %v3544 = vadd.f32 %v3190, %v3460
      %v3545 = vadd.f32 %v3191, %v3463
      %v3546 = vadd.f32 %v3192, %v3468
      %v3547 = vadd.f32 %v3193, %v3471
      %v3548 = vadd.f32 %v3194, %v3476
      %v3549 = vadd.f32 %v3195, %v3479
      %v3550 = vadd.f32 %v3196, %v3484
      %v3551 = vadd.f32 %v3197, %v3487
      %v3552 = vadd.f32 %v3198, %v3492
      %v3553 = vadd.f32 %v3199, %v3495
      %v3554 = vadd.f32 %v3200, %v3500
      %v3555 = vadd.f32 %v3201, %v3503
      %v3556 = vadd.f32 %v3202, %v3508
      %v3557 = vadd.f32 %v3203, %v3511
      %v3558 = vadd.f32 %v3204, %v3516
      %v3559 = vadd.f32 %v3205, %v3519
      %v3560 = vadd.f32 %v3206, %v3524
      %v3561 = vadd.f32 %v3207, %v3527
      %v3562 = vld [vmem:[%s683 + $0x4] sm:$0xf]
      %v3563 = vld [vmem:[%s683 + $0x8] sm:$0xf]
      %v3564 = vld [vmem:[%s683 + $0xc] sm:$0x1]
      %v3565 = vld [vmem:[%s683 + $0x14] sm:$0xf]
      %v3566 = vld [vmem:[%s683 + $0x18] sm:$0xf]
      %v3567 = vld [vmem:[%s683 + $0x1c] sm:$0x1]
      %v3568 = vld [vmem:[%s683 + $0x24] sm:$0xf]
      %v3569 = vld [vmem:[%s683 + $0x28] sm:$0xf]
      %v3570 = vld [vmem:[%s683 + $0x2c] sm:$0x1]
      %v3571 = vld [vmem:[%s683 + $0x34] sm:$0xf]
      %v3572 = vld [vmem:[%s683 + $0x38] sm:$0xf]
      %v3573 = vld [vmem:[%s683 + $0x3c] sm:$0x1]
      %v3574 = vld [vmem:[%s683 + $0x44] sm:$0xf]
      %v3575 = vld [vmem:[%s683 + $0x48] sm:$0xf]
      %v3576 = vld [vmem:[%s683 + $0x4c] sm:$0x1]
      %v3577 = vld [vmem:[%s683 + $0x54] sm:$0xf]
      %v3578 = vld [vmem:[%s683 + $0x58] sm:$0xf]
      %v3579 = vld [vmem:[%s683 + $0x5c] sm:$0x1]
      %v3580 = vld [vmem:[%s683 + $0x64] sm:$0xf]
      %v3581 = vld [vmem:[%s683 + $0x68] sm:$0xf]
      %v3582 = vld [vmem:[%s683 + $0x6c] sm:$0x1]
      %v3583 = vld [vmem:[%s683 + $0x74] sm:$0xf]
      %v3584 = vld [vmem:[%s683 + $0x78] sm:$0xf]
      %v3585 = vld [vmem:[%s683 + $0x7c] sm:$0x1]
      %v3586 = vld [vmem:[%s683 + $0x84] sm:$0xf]
      %v3587 = vld [vmem:[%s683 + $0x88] sm:$0xf]
      %v3588 = vld [vmem:[%s683 + $0x8c] sm:$0x1]
      %v3589 = vld [vmem:[%s683 + $0x94] sm:$0xf]
      %v3590 = vld [vmem:[%s683 + $0x98] sm:$0xf]
      %v3591 = vld [vmem:[%s683 + $0x9c] sm:$0x1]
      %v3592 = vld [vmem:[%s683 + $0xa4] sm:$0xf]
      %v3593 = vld [vmem:[%s683 + $0xa8] sm:$0xf]
      %v3594 = vld [vmem:[%s683 + $0xac] sm:$0x1]
      %v3595 = vld [vmem:[%s683 + $0xb4] sm:$0xf]
      %v3596 = vld [vmem:[%s683 + $0xb8] sm:$0xf]
      %v3597 = vld [vmem:[%s683 + $0xbc] sm:$0x1]
      %v3598 = vld [vmem:[%s683 + $0xc4] sm:$0xf]
      %v3599 = vld [vmem:[%s683 + $0xc8] sm:$0xf]
      %v3600 = vld [vmem:[%s683 + $0xcc] sm:$0x1]
      %v3601 = vld [vmem:[%s683 + $0xd4] sm:$0xf]
      %v3602 = vld [vmem:[%s683 + $0xd8] sm:$0xf]
      %v3603 = vld [vmem:[%s683 + $0xdc] sm:$0x1]
      %v3604 = vld [vmem:[%s683 + $0xe4] sm:$0xf]
      %v3605 = vld [vmem:[%s683 + $0xe8] sm:$0xf]
      %v3606 = vld [vmem:[%s683 + $0xec] sm:$0x1]
      %v3607 = vld [vmem:[%s683 + $0xf4] sm:$0xf]
      %v3608 = vld [vmem:[%s683 + $0xf8] sm:$0xf]
      %v3609 = vld [vmem:[%s683 + $0xfc] sm:$0x1]
      %v3611 = vshrl.u32 %v3562, 16
      %v3613 = vrot.slane %v3611, 4
      %v3614 = vshll.u32 %v3562, 16
      %v3616 = vrot.slane %v3614, 5
      %v3617 = vor.u32 %v3613, %v3616
      %v3618 = vrot.slane %v3617, 4
      %v3620 = vshll.u32 %v3563, 16
      %v3622 = vrot.slane %v3620, 5
      %v3623 = vsel %vm1779, %v3618, %v3622
      %v3624 = vshrl.u32 %v3563, 16
      %v3626 = vrot.slane %v3624, 4
      %v3627 = vor.u32 %v3626, %v3622
      %v3628 = vrot.slane %v3627, 4
      %v3630 = vshll.u32 %v3564, 16
      %v3632 = vrot.slane %v3630, 5
      %v3633 = vsel %vm1779, %v3628, %v3632
      %v3635 = vshrl.u32 %v3565, 16
      %v3637 = vrot.slane %v3635, 4
      %v3638 = vshll.u32 %v3565, 16
      %v3640 = vrot.slane %v3638, 5
      %v3641 = vor.u32 %v3637, %v3640
      %v3642 = vrot.slane %v3641, 4
      %v3644 = vshll.u32 %v3566, 16
      %v3646 = vrot.slane %v3644, 5
      %v3647 = vsel %vm1779, %v3642, %v3646
      %v3648 = vshrl.u32 %v3566, 16
      %v3650 = vrot.slane %v3648, 4
      %v3651 = vor.u32 %v3650, %v3646
      %v3652 = vrot.slane %v3651, 4
      %v3654 = vshll.u32 %v3567, 16
      %v3656 = vrot.slane %v3654, 5
      %v3657 = vsel %vm1779, %v3652, %v3656
      %v3659 = vshrl.u32 %v3568, 16
      %v3661 = vrot.slane %v3659, 4
      %v3662 = vshll.u32 %v3568, 16
      %v3664 = vrot.slane %v3662, 5
      %v3665 = vor.u32 %v3661, %v3664
      %v3666 = vrot.slane %v3665, 4
      %v3668 = vshll.u32 %v3569, 16
      %v3670 = vrot.slane %v3668, 5
      %v3671 = vsel %vm1779, %v3666, %v3670
      %v3672 = vshrl.u32 %v3569, 16
      %v3674 = vrot.slane %v3672, 4
      %v3675 = vor.u32 %v3674, %v3670
      %v3676 = vrot.slane %v3675, 4
      %v3678 = vshll.u32 %v3570, 16
      %v3680 = vrot.slane %v3678, 5
      %v3681 = vsel %vm1779, %v3676, %v3680
      %v3683 = vshrl.u32 %v3571, 16
      %v3685 = vrot.slane %v3683, 4
      %v3686 = vshll.u32 %v3571, 16
      %v3688 = vrot.slane %v3686, 5
      %v3689 = vor.u32 %v3685, %v3688
      %v3690 = vrot.slane %v3689, 4
      %v3692 = vshll.u32 %v3572, 16
      %v3694 = vrot.slane %v3692, 5
      %v3695 = vsel %vm1779, %v3690, %v3694
      %v3696 = vshrl.u32 %v3572, 16
      %v3698 = vrot.slane %v3696, 4
      %v3699 = vor.u32 %v3698, %v3694
      %v3700 = vrot.slane %v3699, 4
      %v3702 = vshll.u32 %v3573, 16
      %v3704 = vrot.slane %v3702, 5
      %v3705 = vsel %vm1779, %v3700, %v3704
      %v3707 = vshrl.u32 %v3574, 16
      %v3709 = vrot.slane %v3707, 4
      %v3710 = vshll.u32 %v3574, 16
      %v3712 = vrot.slane %v3710, 5
      %v3713 = vor.u32 %v3709, %v3712
      %v3714 = vrot.slane %v3713, 4
      %v3716 = vshll.u32 %v3575, 16
      %v3718 = vrot.slane %v3716, 5
      %v3719 = vsel %vm1779, %v3714, %v3718
      %v3720 = vshrl.u32 %v3575, 16
      %v3722 = vrot.slane %v3720, 4
      %v3723 = vor.u32 %v3722, %v3718
      %v3724 = vrot.slane %v3723, 4
      %v3726 = vshll.u32 %v3576, 16
      %v3728 = vrot.slane %v3726, 5
      %v3729 = vsel %vm1779, %v3724, %v3728
      %v3731 = vshrl.u32 %v3577, 16
      %v3733 = vrot.slane %v3731, 4
      %v3734 = vshll.u32 %v3577, 16
      %v3736 = vrot.slane %v3734, 5
      %v3737 = vor.u32 %v3733, %v3736
      %v3738 = vrot.slane %v3737, 4
      %v3740 = vshll.u32 %v3578, 16
      %v3742 = vrot.slane %v3740, 5
      %v3743 = vsel %vm1779, %v3738, %v3742
      %v3744 = vshrl.u32 %v3578, 16
      %v3746 = vrot.slane %v3744, 4
      %v3747 = vor.u32 %v3746, %v3742
      %v3748 = vrot.slane %v3747, 4
      %v3750 = vshll.u32 %v3579, 16
      %v3752 = vrot.slane %v3750, 5
      %v3753 = vsel %vm1779, %v3748, %v3752
      %v3755 = vshrl.u32 %v3580, 16
      %v3757 = vrot.slane %v3755, 4
      %v3758 = vshll.u32 %v3580, 16
      %v3760 = vrot.slane %v3758, 5
      %v3761 = vor.u32 %v3757, %v3760
      %v3762 = vrot.slane %v3761, 4
      %v3764 = vshll.u32 %v3581, 16
      %v3766 = vrot.slane %v3764, 5
      %v3767 = vsel %vm1779, %v3762, %v3766
      %v3768 = vshrl.u32 %v3581, 16
      %v3770 = vrot.slane %v3768, 4
      %v3771 = vor.u32 %v3770, %v3766
      %v3772 = vrot.slane %v3771, 4
      %v3774 = vshll.u32 %v3582, 16
      %v3776 = vrot.slane %v3774, 5
      %v3777 = vsel %vm1779, %v3772, %v3776
      %v3779 = vshrl.u32 %v3583, 16
      %v3781 = vrot.slane %v3779, 4
      %v3782 = vshll.u32 %v3583, 16
      %v3784 = vrot.slane %v3782, 5
      %v3785 = vor.u32 %v3781, %v3784
      %v3786 = vrot.slane %v3785, 4
      %v3788 = vshll.u32 %v3584, 16
      %v3790 = vrot.slane %v3788, 5
      %v3791 = vsel %vm1779, %v3786, %v3790
      %v3792 = vshrl.u32 %v3584, 16
      %v3794 = vrot.slane %v3792, 4
      %v3795 = vor.u32 %v3794, %v3790
      %v3796 = vrot.slane %v3795, 4
      %v3798 = vshll.u32 %v3585, 16
      %v3800 = vrot.slane %v3798, 5
      %v3801 = vsel %vm1779, %v3796, %v3800
      %v3803 = vshrl.u32 %v3586, 16
      %v3805 = vrot.slane %v3803, 4
      %v3806 = vshll.u32 %v3586, 16
      %v3808 = vrot.slane %v3806, 5
      %v3809 = vor.u32 %v3805, %v3808
      %v3810 = vrot.slane %v3809, 4
      %v3812 = vshll.u32 %v3587, 16
      %v3814 = vrot.slane %v3812, 5
      %v3815 = vsel %vm1779, %v3810, %v3814
      %v3816 = vshrl.u32 %v3587, 16
      %v3818 = vrot.slane %v3816, 4
      %v3819 = vor.u32 %v3818, %v3814
      %v3820 = vrot.slane %v3819, 4
      %v3822 = vshll.u32 %v3588, 16
      %v3824 = vrot.slane %v3822, 5
      %v3825 = vsel %vm1779, %v3820, %v3824
      %v3827 = vshrl.u32 %v3589, 16
      %v3829 = vrot.slane %v3827, 4
      %v3830 = vshll.u32 %v3589, 16
      %v3832 = vrot.slane %v3830, 5
      %v3833 = vor.u32 %v3829, %v3832
      %v3834 = vrot.slane %v3833, 4
      %v3836 = vshll.u32 %v3590, 16
      %v3838 = vrot.slane %v3836, 5
      %v3839 = vsel %vm1779, %v3834, %v3838
      %v3840 = vshrl.u32 %v3590, 16
      %v3842 = vrot.slane %v3840, 4
      %v3843 = vor.u32 %v3842, %v3838
      %v3844 = vrot.slane %v3843, 4
      %v3846 = vshll.u32 %v3591, 16
      %v3848 = vrot.slane %v3846, 5
      %v3849 = vsel %vm1779, %v3844, %v3848
      %v3851 = vshrl.u32 %v3592, 16
      %v3853 = vrot.slane %v3851, 4
      %v3854 = vshll.u32 %v3592, 16
      %v3856 = vrot.slane %v3854, 5
      %v3857 = vor.u32 %v3853, %v3856
      %v3858 = vrot.slane %v3857, 4
      %v3860 = vshll.u32 %v3593, 16
      %v3862 = vrot.slane %v3860, 5
      %v3863 = vsel %vm1779, %v3858, %v3862
      %v3864 = vshrl.u32 %v3593, 16
      %v3866 = vrot.slane %v3864, 4
      %v3867 = vor.u32 %v3866, %v3862
      %v3868 = vrot.slane %v3867, 4
      %v3870 = vshll.u32 %v3594, 16
      %v3872 = vrot.slane %v3870, 5
      %v3873 = vsel %vm1779, %v3868, %v3872
      %v3875 = vshrl.u32 %v3595, 16
      %v3877 = vrot.slane %v3875, 4
      %v3878 = vshll.u32 %v3595, 16
      %v3880 = vrot.slane %v3878, 5
      %v3881 = vor.u32 %v3877, %v3880
      %v3882 = vrot.slane %v3881, 4
      %v3884 = vshll.u32 %v3596, 16
      %v3886 = vrot.slane %v3884, 5
      %v3887 = vsel %vm1779, %v3882, %v3886
      %v3888 = vshrl.u32 %v3596, 16
      %v3890 = vrot.slane %v3888, 4
      %v3891 = vor.u32 %v3890, %v3886
      %v3892 = vrot.slane %v3891, 4
      %v3894 = vshll.u32 %v3597, 16
      %v3896 = vrot.slane %v3894, 5
      %v3897 = vsel %vm1779, %v3892, %v3896
      %v3899 = vshrl.u32 %v3598, 16
      %v3901 = vrot.slane %v3899, 4
      %v3902 = vshll.u32 %v3598, 16
      %v3904 = vrot.slane %v3902, 5
      %v3905 = vor.u32 %v3901, %v3904
      %v3906 = vrot.slane %v3905, 4
      %v3908 = vshll.u32 %v3599, 16
      %v3910 = vrot.slane %v3908, 5
      %v3911 = vsel %vm1779, %v3906, %v3910
      %v3912 = vshrl.u32 %v3599, 16
      %v3914 = vrot.slane %v3912, 4
      %v3915 = vor.u32 %v3914, %v3910
      %v3916 = vrot.slane %v3915, 4
      %v3918 = vshll.u32 %v3600, 16
      %v3920 = vrot.slane %v3918, 5
      %v3921 = vsel %vm1779, %v3916, %v3920
      %v3923 = vshrl.u32 %v3601, 16
      %v3925 = vrot.slane %v3923, 4
      %v3926 = vshll.u32 %v3601, 16
      %v3928 = vrot.slane %v3926, 5
      %v3929 = vor.u32 %v3925, %v3928
      %v3930 = vrot.slane %v3929, 4
      %v3932 = vshll.u32 %v3602, 16
      %v3934 = vrot.slane %v3932, 5
      %v3935 = vsel %vm1779, %v3930, %v3934
      %v3936 = vshrl.u32 %v3602, 16
      %v3938 = vrot.slane %v3936, 4
      %v3939 = vor.u32 %v3938, %v3934
      %v3940 = vrot.slane %v3939, 4
      %v3942 = vshll.u32 %v3603, 16
      %v3944 = vrot.slane %v3942, 5
      %v3945 = vsel %vm1779, %v3940, %v3944
      %v3947 = vshrl.u32 %v3604, 16
      %v3949 = vrot.slane %v3947, 4
      %v3950 = vshll.u32 %v3604, 16
      %v3952 = vrot.slane %v3950, 5
      %v3953 = vor.u32 %v3949, %v3952
      %v3954 = vrot.slane %v3953, 4
      %v3956 = vshll.u32 %v3605, 16
      %v3958 = vrot.slane %v3956, 5
      %v3959 = vsel %vm1779, %v3954, %v3958
      %v3960 = vshrl.u32 %v3605, 16
      %v3962 = vrot.slane %v3960, 4
      %v3963 = vor.u32 %v3962, %v3958
      %v3964 = vrot.slane %v3963, 4
      %v3966 = vshll.u32 %v3606, 16
      %v3968 = vrot.slane %v3966, 5
      %v3969 = vsel %vm1779, %v3964, %v3968
      %v3971 = vshrl.u32 %v3607, 16
      %v3973 = vrot.slane %v3971, 4
      %v3974 = vshll.u32 %v3607, 16
      %v3976 = vrot.slane %v3974, 5
      %v3977 = vor.u32 %v3973, %v3976
      %v3978 = vrot.slane %v3977, 4
      %v3980 = vshll.u32 %v3608, 16
      %v3982 = vrot.slane %v3980, 5
      %v3983 = vsel %vm1779, %v3978, %v3982
      %v3984 = vshrl.u32 %v3608, 16
      %v3986 = vrot.slane %v3984, 4
      %v3987 = vor.u32 %v3986, %v3982
      %v3988 = vrot.slane %v3987, 4
      %v3990 = vshll.u32 %v3609, 16
      %v3992 = vrot.slane %v3990, 5
      %v3993 = vsel %vm1779, %v3988, %v3992
      %s3994 = scalar_lea.vmem %s3, 320
      %v3995 = vld [vmem:[%s3994] sm:$0xf]
      %v3996 = vld [vmem:[%s3994 + $0x4] sm:$0xf]
      %v3997 = vld [vmem:[%s3994 + $0x8] sm:$0xf]
      %v3998 = vld [vmem:[%s3994 + $0xc] sm:$0xf]
      %v3999 = vld [vmem:[%s3994 + $0x10] sm:$0xf]
      %v4000 = vld [vmem:[%s3994 + $0x14] sm:$0xf]
      %v4001 = vld [vmem:[%s3994 + $0x18] sm:$0xf]
      %v4002 = vld [vmem:[%s3994 + $0x1c] sm:$0xf]
      %v4003 = vld [vmem:[%s3994 + $0x20] sm:$0xf]
      %v4004 = vld [vmem:[%s3994 + $0x24] sm:$0xf]
      %v4005 = vld [vmem:[%s3994 + $0x28] sm:$0xf]
      %v4006 = vld [vmem:[%s3994 + $0x2c] sm:$0xf]
      %v4007 = vld [vmem:[%s3994 + $0x30] sm:$0xf]
      %v4008 = vld [vmem:[%s3994 + $0x34] sm:$0xf]
      %v4009 = vld [vmem:[%s3994 + $0x38] sm:$0xf]
      %v4010 = vld [vmem:[%s3994 + $0x3c] sm:$0xf]
      %v4011 = vunpack.c.l.b16 %v3623
      %v4012 = vunpack.c.l.b16 %v3633
      %v4013 = vunpack.c.l.b16 %v3647
      %v4014 = vunpack.c.l.b16 %v3657
      %v4015 = vunpack.c.l.b16 %v3671
      %v4016 = vunpack.c.l.b16 %v3681
      %v4017 = vunpack.c.l.b16 %v3695
      %v4018 = vunpack.c.l.b16 %v3705
      %v4019 = vunpack.c.l.b16 %v3719
      %v4020 = vunpack.c.l.b16 %v3729
      %v4021 = vunpack.c.l.b16 %v3743
      %v4022 = vunpack.c.l.b16 %v3753
      %v4023 = vunpack.c.l.b16 %v3767
      %v4024 = vunpack.c.l.b16 %v3777
      %v4025 = vunpack.c.l.b16 %v3791
      %v4026 = vunpack.c.l.b16 %v3801
      %v4027 = vunpack.c.l.b16 %v3815
      %v4028 = vunpack.c.l.b16 %v3825
      %v4029 = vunpack.c.l.b16 %v3839
      %v4030 = vunpack.c.l.b16 %v3849
      %v4031 = vunpack.c.l.b16 %v3863
      %v4032 = vunpack.c.l.b16 %v3873
      %v4033 = vunpack.c.l.b16 %v3887
      %v4034 = vunpack.c.l.b16 %v3897
      %v4035 = vunpack.c.l.b16 %v3911
      %v4036 = vunpack.c.l.b16 %v3921
      %v4037 = vunpack.c.l.b16 %v3935
      %v4038 = vunpack.c.l.b16 %v3945
      %v4039 = vunpack.c.l.b16 %v3959
      %v4040 = vunpack.c.l.b16 %v3969
      %v4041 = vunpack.c.l.b16 %v3983
      %v4042 = vunpack.c.l.b16 %v3993
      %v4043 = vpack.c.b16 %v4012, %v4011
      %v4044 = vpack.c.b16 %v4014, %v4013
      %v4045 = vpack.c.b16 %v4016, %v4015
      %v4046 = vpack.c.b16 %v4018, %v4017
      %v4047 = vpack.c.b16 %v4020, %v4019
      %v4048 = vpack.c.b16 %v4022, %v4021
      %v4049 = vpack.c.b16 %v4024, %v4023
      %v4050 = vpack.c.b16 %v4026, %v4025
      %v4051 = vpack.c.b16 %v4028, %v4027
      %v4052 = vpack.c.b16 %v4030, %v4029
      %v4053 = vpack.c.b16 %v4032, %v4031
      %v4054 = vpack.c.b16 %v4034, %v4033
      %v4055 = vpack.c.b16 %v4036, %v4035
      %v4056 = vpack.c.b16 %v4038, %v4037
      %v4057 = vpack.c.b16 %v4040, %v4039
      %v4058 = vpack.c.b16 %v4042, %v4041
      %v4091 = vunpack.c.l.b16 %v3995
      %v4092 = vunpack.c.l.b16 %v3996
      %v4093 = vunpack.c.l.b16 %v3997
      %v4094 = vunpack.c.l.b16 %v3998
      %v4095 = vunpack.c.l.b16 %v3999
      %v4096 = vunpack.c.l.b16 %v4000
      %v4097 = vunpack.c.l.b16 %v4001
      %v4098 = vunpack.c.l.b16 %v4002
      %v4099 = vunpack.c.l.b16 %v4003
      %v4100 = vunpack.c.l.b16 %v4004
      %v4101 = vunpack.c.l.b16 %v4005
      %v4102 = vunpack.c.l.b16 %v4006
      %v4103 = vunpack.c.l.b16 %v4007
      %v4104 = vunpack.c.l.b16 %v4008
      %v4105 = vunpack.c.l.b16 %v4009
      %v4106 = vunpack.c.l.b16 %v4010
      %v4107 = vpack.c.b16 %v4092, %v4091
      %v4108 = vpack.c.b16 %v4094, %v4093
      %v4109 = vpack.c.b16 %v4096, %v4095
      %v4110 = vpack.c.b16 %v4098, %v4097
      %v4111 = vpack.c.b16 %v4100, %v4099
      %v4112 = vpack.c.b16 %v4102, %v4101
      %v4113 = vpack.c.b16 %v4104, %v4103
      %v4114 = vpack.c.b16 %v4106, %v4105
      %4123 = vmatprep.subr.bf16.mxu0 0
      %4124 = vmatpush1.bf16.msra.mxu0 %v4107
      %4125 = vmatprep.subr.bf16.mxu0 0
      %4126 = vmatpush1.bf16.msra.mxu0 %v4108
      %4127 = vmatprep.subr.bf16.mxu0 0
      %4128 = vmatpush1.bf16.msra.mxu0 %v4109
      %4129 = vmatprep.subr.bf16.mxu0 0
      %4130 = vmatpush1.bf16.msra.mxu0 %v4110
      %4131 = vmatprep.subr.bf16.mxu0 0
      %4132 = vmatpush1.bf16.msra.mxu0 %v4111
      %4133 = vmatprep.subr.bf16.mxu0 0
      %4134 = vmatpush1.bf16.msra.mxu0 %v4112
      %4135 = vmatprep.subr.bf16.mxu0 0
      %4136 = vmatpush1.bf16.msra.mxu0 %v4113
      %4137 = vmatprep.subr.bf16.mxu0 0
      %4138 = vmatpush1.bf16.msra.mxu0 %v4114
      %4139 = vmatprep.subr.bf16.mxu0 0
      %4140 = vmatpush1.bf16.msra.mxu0 0
      %4141 = vmatprep.subr.bf16.mxu0 0
      %4142 = vmatpush1.bf16.msra.mxu0 0
      %4143 = vmatprep.subr.bf16.mxu0 0
      %4144 = vmatpush1.bf16.msra.mxu0 0
      %4145 = vmatprep.subr.bf16.mxu0 0
      %4146 = vmatpush1.bf16.msra.mxu0 0
      %4147 = vmatprep.subr.bf16.mxu0 0
      %4148 = vmatpush1.bf16.msra.mxu0 0
      %4149 = vmatprep.subr.bf16.mxu0 0
      %4150 = vmatpush1.bf16.msra.mxu0 0
      %4151 = vmatprep.subr.bf16.mxu0 0
      %4152 = vmatpush1.bf16.msra.mxu0 0
      %4153 = vmatprep.subr.bf16.mxu0 0
      %4154 = vmatpush1.bf16.msra.mxu0 0
      %4155 = vmatprep.mubr.bf16.mxu0 0
      %4156 = vmatmul.mubr.bf16.gmra.mrb[0].mxu0 %v4043
      %v4157 = vpop.f32.mrb[0].mxu0
      %v4158 = vadd.f32 0.0, %v4157
      %v4159 = vpop.f32.mrb[0].mxu0
      %v4160 = vpop.f32.mrb[0].mxu0
      %v4161 = vadd.f32 0.0, %v4160
      %v4162 = vpop.f32.mrb[0].mxu0
      %4163 = vmatprep.mubr.bf16.mxu0 0
      %4164 = vmatmul.mubr.bf16.gmra.mrb[0].mxu0 %v4044
      %v4165 = vpop.f32.mrb[0].mxu0
      %v4166 = vadd.f32 0.0, %v4165
      %v4167 = vpop.f32.mrb[0].mxu0
      %v4168 = vpop.f32.mrb[0].mxu0
      %v4169 = vadd.f32 0.0, %v4168
      %v4170 = vpop.f32.mrb[0].mxu0
      %4171 = vmatprep.mubr.bf16.mxu0 0
      %4172 = vmatmul.mubr.bf16.gmra.mrb[0].mxu0 %v4045
      %v4173 = vpop.f32.mrb[0].mxu0
      %v4174 = vadd.f32 0.0, %v4173
      %v4175 = vpop.f32.mrb[0].mxu0
      %v4176 = vpop.f32.mrb[0].mxu0
      %v4177 = vadd.f32 0.0, %v4176
      %v4178 = vpop.f32.mrb[0].mxu0
      %4179 = vmatprep.mubr.bf16.mxu0 0
      %4180 = vmatmul.mubr.bf16.gmra.mrb[0].mxu0 %v4046
      %v4181 = vpop.f32.mrb[0].mxu0
      %v4182 = vadd.f32 0.0, %v4181
      %v4183 = vpop.f32.mrb[0].mxu0
      %v4184 = vpop.f32.mrb[0].mxu0
      %v4185 = vadd.f32 0.0, %v4184
      %v4186 = vpop.f32.mrb[0].mxu0
      %4187 = vmatprep.mubr.bf16.mxu0 0
      %4188 = vmatmul.mubr.bf16.gmra.mrb[0].mxu0 %v4047
      %v4189 = vpop.f32.mrb[0].mxu0
      %v4190 = vadd.f32 0.0, %v4189
      %v4191 = vpop.f32.mrb[0].mxu0
      %v4192 = vpop.f32.mrb[0].mxu0
      %v4193 = vadd.f32 0.0, %v4192
      %v4194 = vpop.f32.mrb[0].mxu0
      %4195 = vmatprep.mubr.bf16.mxu0 0
      %4196 = vmatmul.mubr.bf16.gmra.mrb[0].mxu0 %v4048
      %v4197 = vpop.f32.mrb[0].mxu0
      %v4198 = vadd.f32 0.0, %v4197
      %v4199 = vpop.f32.mrb[0].mxu0
      %v4200 = vpop.f32.mrb[0].mxu0
      %v4201 = vadd.f32 0.0, %v4200
      %v4202 = vpop.f32.mrb[0].mxu0
      %4203 = vmatprep.mubr.bf16.mxu0 0
      %4204 = vmatmul.mubr.bf16.gmra.mrb[0].mxu0 %v4049
      %v4205 = vpop.f32.mrb[0].mxu0
      %v4206 = vadd.f32 0.0, %v4205
      %v4207 = vpop.f32.mrb[0].mxu0
      %v4208 = vpop.f32.mrb[0].mxu0
      %v4209 = vadd.f32 0.0, %v4208
      %v4210 = vpop.f32.mrb[0].mxu0
      %4211 = vmatprep.mubr.bf16.mxu0 0
      %4212 = vmatmul.mubr.bf16.gmra.mrb[0].mxu0 %v4050
      %v4213 = vpop.f32.mrb[0].mxu0
      %v4214 = vadd.f32 0.0, %v4213
      %v4215 = vpop.f32.mrb[0].mxu0
      %v4216 = vpop.f32.mrb[0].mxu0
      %v4217 = vadd.f32 0.0, %v4216
      %v4218 = vpop.f32.mrb[0].mxu0
      %4219 = vmatprep.mubr.bf16.mxu0 0
      %4220 = vmatmul.mubr.bf16.gmra.mrb[0].mxu0 %v4051
      %v4221 = vpop.f32.mrb[0].mxu0
      %v4222 = vadd.f32 0.0, %v4221
      %v4223 = vpop.f32.mrb[0].mxu0
      %v4224 = vpop.f32.mrb[0].mxu0
      %v4225 = vadd.f32 0.0, %v4224
      %v4226 = vpop.f32.mrb[0].mxu0
      %4227 = vmatprep.mubr.bf16.mxu0 0
      %4228 = vmatmul.mubr.bf16.gmra.mrb[0].mxu0 %v4052
      %v4229 = vpop.f32.mrb[0].mxu0
      %v4230 = vadd.f32 0.0, %v4229
      %v4231 = vpop.f32.mrb[0].mxu0
      %v4232 = vpop.f32.mrb[0].mxu0
      %v4233 = vadd.f32 0.0, %v4232
      %v4234 = vpop.f32.mrb[0].mxu0
      %4235 = vmatprep.mubr.bf16.mxu0 0
      %4236 = vmatmul.mubr.bf16.gmra.mrb[0].mxu0 %v4053
      %v4237 = vpop.f32.mrb[0].mxu0
      %v4238 = vadd.f32 0.0, %v4237
      %v4239 = vpop.f32.mrb[0].mxu0
      %v4240 = vpop.f32.mrb[0].mxu0
      %v4241 = vadd.f32 0.0, %v4240
      %v4242 = vpop.f32.mrb[0].mxu0
      %4243 = vmatprep.mubr.bf16.mxu0 0
      %4244 = vmatmul.mubr.bf16.gmra.mrb[0].mxu0 %v4054
      %v4245 = vpop.f32.mrb[0].mxu0
      %v4246 = vadd.f32 0.0, %v4245
      %v4247 = vpop.f32.mrb[0].mxu0
      %v4248 = vpop.f32.mrb[0].mxu0
      %v4249 = vadd.f32 0.0, %v4248
      %v4250 = vpop.f32.mrb[0].mxu0
      %4251 = vmatprep.mubr.bf16.mxu0 0
      %4252 = vmatmul.mubr.bf16.gmra.mrb[0].mxu0 %v4055
      %v4253 = vpop.f32.mrb[0].mxu0
      %v4254 = vadd.f32 0.0, %v4253
      %v4255 = vpop.f32.mrb[0].mxu0
      %v4256 = vpop.f32.mrb[0].mxu0
      %v4257 = vadd.f32 0.0, %v4256
      %v4258 = vpop.f32.mrb[0].mxu0
      %4259 = vmatprep.mubr.bf16.mxu0 0
      %4260 = vmatmul.mubr.bf16.gmra.mrb[0].mxu0 %v4056
      %v4261 = vpop.f32.mrb[0].mxu0
      %v4262 = vadd.f32 0.0, %v4261
      %v4263 = vpop.f32.mrb[0].mxu0
      %v4264 = vpop.f32.mrb[0].mxu0
      %v4265 = vadd.f32 0.0, %v4264
      %v4266 = vpop.f32.mrb[0].mxu0
      %4267 = vmatprep.mubr.bf16.mxu0 0
      %4268 = vmatmul.mubr.bf16.gmra.mrb[0].mxu0 %v4057
      %v4269 = vpop.f32.mrb[0].mxu0
      %v4270 = vadd.f32 0.0, %v4269
      %v4271 = vpop.f32.mrb[0].mxu0
      %v4272 = vpop.f32.mrb[0].mxu0
      %v4273 = vadd.f32 0.0, %v4272
      %v4274 = vpop.f32.mrb[0].mxu0
      %4275 = vmatprep.mubr.bf16.mxu0 0
      %4276 = vmatmul.mubr.bf16.gmra.mrb[0].mxu0 %v4058
      %v4277 = vpop.f32.mrb[0].mxu0
      %v4278 = vadd.f32 0.0, %v4277
      %v4279 = vpop.f32.mrb[0].mxu0
      %v4280 = vpop.f32.mrb[0].mxu0
      %v4281 = vadd.f32 0.0, %v4280
      %v4282 = vpop.f32.mrb[0].mxu0
      %4283 = vdwg.mxu0
      %v4284 = vadd.f32 %v3530, %v4158
      %v4285 = vadd.f32 %v3531, %v4161
      %v4286 = vadd.f32 %v3532, %v4166
      %v4287 = vadd.f32 %v3533, %v4169
      %v4288 = vadd.f32 %v3534, %v4174
      %v4289 = vadd.f32 %v3535, %v4177
      %v4290 = vadd.f32 %v3536, %v4182
      %v4291 = vadd.f32 %v3537, %v4185
      %v4292 = vadd.f32 %v3538, %v4190
      %v4293 = vadd.f32 %v3539, %v4193
      %v4294 = vadd.f32 %v3540, %v4198
      %v4295 = vadd.f32 %v3541, %v4201
      %v4296 = vadd.f32 %v3542, %v4206
      %v4297 = vadd.f32 %v3543, %v4209
      %v4298 = vadd.f32 %v3544, %v4214
      %v4299 = vadd.f32 %v3545, %v4217
      %v4300 = vadd.f32 %v3546, %v4222
      %v4301 = vadd.f32 %v3547, %v4225
      %v4302 = vadd.f32 %v3548, %v4230
      %v4303 = vadd.f32 %v3549, %v4233
      %v4304 = vadd.f32 %v3550, %v4238
      %v4305 = vadd.f32 %v3551, %v4241
      %v4306 = vadd.f32 %v3552, %v4246
      %v4307 = vadd.f32 %v3553, %v4249
      %v4308 = vadd.f32 %v3554, %v4254
      %v4309 = vadd.f32 %v3555, %v4257
      %v4310 = vadd.f32 %v3556, %v4262
      %v4311 = vadd.f32 %v3557, %v4265
      %v4312 = vadd.f32 %v3558, %v4270
      %v4313 = vadd.f32 %v3559, %v4273
      %v4314 = vadd.f32 %v3560, %v4278
      %v4315 = vadd.f32 %v3561, %v4281
      %s4316 = scalar_lea.vmem [#allocation2], 32
      %v4317 = vld [vmem:[%s4316] sm:$0x8]
      %v4318 = vld [vmem:[%s4316 + $0x4] sm:$0xf]
      %v4319 = vld [vmem:[%s4316 + $0x8] sm:$0xf]
      %v4320 = vld [vmem:[%s4316 + $0x10] sm:$0x8]
      %v4321 = vld [vmem:[%s4316 + $0x14] sm:$0xf]
      %v4322 = vld [vmem:[%s4316 + $0x18] sm:$0xf]
      %v4323 = vld [vmem:[%s4316 + $0x20] sm:$0x8]
      %v4324 = vld [vmem:[%s4316 + $0x24] sm:$0xf]
      %v4325 = vld [vmem:[%s4316 + $0x28] sm:$0xf]
      %v4326 = vld [vmem:[%s4316 + $0x30] sm:$0x8]
      %v4327 = vld [vmem:[%s4316 + $0x34] sm:$0xf]
      %v4328 = vld [vmem:[%s4316 + $0x38] sm:$0xf]
      %v4329 = vld [vmem:[%s4316 + $0x40] sm:$0x8]
      %v4330 = vld [vmem:[%s4316 + $0x44] sm:$0xf]
      %v4331 = vld [vmem:[%s4316 + $0x48] sm:$0xf]
      %v4332 = vld [vmem:[%s4316 + $0x50] sm:$0x8]
      %v4333 = vld [vmem:[%s4316 + $0x54] sm:$0xf]
      %v4334 = vld [vmem:[%s4316 + $0x58] sm:$0xf]
      %v4335 = vld [vmem:[%s4316 + $0x60] sm:$0x8]
      %v4336 = vld [vmem:[%s4316 + $0x64] sm:$0xf]
      %v4337 = vld [vmem:[%s4316 + $0x68] sm:$0xf]
      %v4338 = vld [vmem:[%s4316 + $0x70] sm:$0x8]
      %v4339 = vld [vmem:[%s4316 + $0x74] sm:$0xf]
      %v4340 = vld [vmem:[%s4316 + $0x78] sm:$0xf]
      %v4341 = vld [vmem:[%s4316 + $0x80] sm:$0x8]
      %v4342 = vld [vmem:[%s4316 + $0x84] sm:$0xf]
      %v4343 = vld [vmem:[%s4316 + $0x88] sm:$0xf]
      %v4344 = vld [vmem:[%s4316 + $0x90] sm:$0x8]
      %v4345 = vld [vmem:[%s4316 + $0x94] sm:$0xf]
      %v4346 = vld [vmem:[%s4316 + $0x98] sm:$0xf]
      %v4347 = vld [vmem:[%s4316 + $0xa0] sm:$0x8]
      %v4348 = vld [vmem:[%s4316 + $0xa4] sm:$0xf]
      %v4349 = vld [vmem:[%s4316 + $0xa8] sm:$0xf]
      %v4350 = vld [vmem:[%s4316 + $0xb0] sm:$0x8]
      %v4351 = vld [vmem:[%s4316 + $0xb4] sm:$0xf]
      %v4352 = vld [vmem:[%s4316 + $0xb8] sm:$0xf]
      %v4353 = vld [vmem:[%s4316 + $0xc0] sm:$0x8]
      %v4354 = vld [vmem:[%s4316 + $0xc4] sm:$0xf]
      %v4355 = vld [vmem:[%s4316 + $0xc8] sm:$0xf]
      %v4356 = vld [vmem:[%s4316 + $0xd0] sm:$0x8]
      %v4357 = vld [vmem:[%s4316 + $0xd4] sm:$0xf]
      %v4358 = vld [vmem:[%s4316 + $0xd8] sm:$0xf]
      %v4359 = vld [vmem:[%s4316 + $0xe0] sm:$0x8]
      %v4360 = vld [vmem:[%s4316 + $0xe4] sm:$0xf]
      %v4361 = vld [vmem:[%s4316 + $0xe8] sm:$0xf]
      %v4362 = vld [vmem:[%s4316 + $0xf0] sm:$0x8]
      %v4363 = vld [vmem:[%s4316 + $0xf4] sm:$0xf]
      %v4364 = vld [vmem:[%s4316 + $0xf8] sm:$0xf]
      %v4366 = vshrl.u32 %v4317, 16
      %v4368 = vrot.slane %v4366, 7
      %v4369 = vrot.slane %v4368, 4
      %v4371 = vshrl.u32 %v4318, 16
      %v4373 = vrot.slane %v4371, 7
      %v4374 = vshll.u32 %v4318, 16
      %v4376 = vor.u32 %v4373, %v4374
      %v4377 = vsel %vm765, %v4369, %v4376
      %v4378 = vrot.slane %v4373, 4
      %v4380 = vshrl.u32 %v4319, 16
      %v4382 = vrot.slane %v4380, 7
      %v4383 = vshll.u32 %v4319, 16
      %v4385 = vor.u32 %v4382, %v4383
      %v4386 = vsel %vm765, %v4378, %v4385
      %v4388 = vshrl.u32 %v4320, 16
      %v4390 = vrot.slane %v4388, 7
      %v4391 = vrot.slane %v4390, 4
      %v4393 = vshrl.u32 %v4321, 16
      %v4395 = vrot.slane %v4393, 7
      %v4396 = vshll.u32 %v4321, 16
      %v4398 = vor.u32 %v4395, %v4396
      %v4399 = vsel %vm765, %v4391, %v4398
      %v4400 = vrot.slane %v4395, 4
      %v4402 = vshrl.u32 %v4322, 16
      %v4404 = vrot.slane %v4402, 7
      %v4405 = vshll.u32 %v4322, 16
      %v4407 = vor.u32 %v4404, %v4405
      %v4408 = vsel %vm765, %v4400, %v4407
      %v4410 = vshrl.u32 %v4323, 16
      %v4412 = vrot.slane %v4410, 7
      %v4413 = vrot.slane %v4412, 4
      %v4415 = vshrl.u32 %v4324, 16
      %v4417 = vrot.slane %v4415, 7
      %v4418 = vshll.u32 %v4324, 16
      %v4420 = vor.u32 %v4417, %v4418
      %v4421 = vsel %vm765, %v4413, %v4420
      %v4422 = vrot.slane %v4417, 4
      %v4424 = vshrl.u32 %v4325, 16
      %v4426 = vrot.slane %v4424, 7
      %v4427 = vshll.u32 %v4325, 16
      %v4429 = vor.u32 %v4426, %v4427
      %v4430 = vsel %vm765, %v4422, %v4429
      %v4432 = vshrl.u32 %v4326, 16
      %v4434 = vrot.slane %v4432, 7
      %v4435 = vrot.slane %v4434, 4
      %v4437 = vshrl.u32 %v4327, 16
      %v4439 = vrot.slane %v4437, 7
      %v4440 = vshll.u32 %v4327, 16
      %v4442 = vor.u32 %v4439, %v4440
      %v4443 = vsel %vm765, %v4435, %v4442
      %v4444 = vrot.slane %v4439, 4
      %v4446 = vshrl.u32 %v4328, 16
      %v4448 = vrot.slane %v4446, 7
      %v4449 = vshll.u32 %v4328, 16
      %v4451 = vor.u32 %v4448, %v4449
      %v4452 = vsel %vm765, %v4444, %v4451
      %v4454 = vshrl.u32 %v4329, 16
      %v4456 = vrot.slane %v4454, 7
      %v4457 = vrot.slane %v4456, 4
      %v4459 = vshrl.u32 %v4330, 16
      %v4461 = vrot.slane %v4459, 7
      %v4462 = vshll.u32 %v4330, 16
      %v4464 = vor.u32 %v4461, %v4462
      %v4465 = vsel %vm765, %v4457, %v4464
      %v4466 = vrot.slane %v4461, 4
      %v4468 = vshrl.u32 %v4331, 16
      %v4470 = vrot.slane %v4468, 7
      %v4471 = vshll.u32 %v4331, 16
      %v4473 = vor.u32 %v4470, %v4471
      %v4474 = vsel %vm765, %v4466, %v4473
      %v4476 = vshrl.u32 %v4332, 16
      %v4478 = vrot.slane %v4476, 7
      %v4479 = vrot.slane %v4478, 4
      %v4481 = vshrl.u32 %v4333, 16
      %v4483 = vrot.slane %v4481, 7
      %v4484 = vshll.u32 %v4333, 16
      %v4486 = vor.u32 %v4483, %v4484
      %v4487 = vsel %vm765, %v4479, %v4486
      %v4488 = vrot.slane %v4483, 4
      %v4490 = vshrl.u32 %v4334, 16
      %v4492 = vrot.slane %v4490, 7
      %v4493 = vshll.u32 %v4334, 16
      %v4495 = vor.u32 %v4492, %v4493
      %v4496 = vsel %vm765, %v4488, %v4495
      %v4498 = vshrl.u32 %v4335, 16
      %v4500 = vrot.slane %v4498, 7
      %v4501 = vrot.slane %v4500, 4
      %v4503 = vshrl.u32 %v4336, 16
      %v4505 = vrot.slane %v4503, 7
      %v4506 = vshll.u32 %v4336, 16
      %v4508 = vor.u32 %v4505, %v4506
      %v4509 = vsel %vm765, %v4501, %v4508
      %v4510 = vrot.slane %v4505, 4
      %v4512 = vshrl.u32 %v4337, 16
      %v4514 = vrot.slane %v4512, 7
      %v4515 = vshll.u32 %v4337, 16
      %v4517 = vor.u32 %v4514, %v4515
      %v4518 = vsel %vm765, %v4510, %v4517
      %v4520 = vshrl.u32 %v4338, 16
      %v4522 = vrot.slane %v4520, 7
      %v4523 = vrot.slane %v4522, 4
      %v4525 = vshrl.u32 %v4339, 16
      %v4527 = vrot.slane %v4525, 7
      %v4528 = vshll.u32 %v4339, 16
      %v4530 = vor.u32 %v4527, %v4528
      %v4531 = vsel %vm765, %v4523, %v4530
      %v4532 = vrot.slane %v4527, 4
      %v4534 = vshrl.u32 %v4340, 16
      %v4536 = vrot.slane %v4534, 7
      %v4537 = vshll.u32 %v4340, 16
      %v4539 = vor.u32 %v4536, %v4537
      %v4540 = vsel %vm765, %v4532, %v4539
      %v4542 = vshrl.u32 %v4341, 16
      %v4544 = vrot.slane %v4542, 7
      %v4545 = vrot.slane %v4544, 4
      %v4547 = vshrl.u32 %v4342, 16
      %v4549 = vrot.slane %v4547, 7
      %v4550 = vshll.u32 %v4342, 16
      %v4552 = vor.u32 %v4549, %v4550
      %v4553 = vsel %vm765, %v4545, %v4552
      %v4554 = vrot.slane %v4549, 4
      %v4556 = vshrl.u32 %v4343, 16
      %v4558 = vrot.slane %v4556, 7
      %v4559 = vshll.u32 %v4343, 16
      %v4561 = vor.u32 %v4558, %v4559
      %v4562 = vsel %vm765, %v4554, %v4561
      %v4564 = vshrl.u32 %v4344, 16
      %v4566 = vrot.slane %v4564, 7
      %v4567 = vrot.slane %v4566, 4
      %v4569 = vshrl.u32 %v4345, 16
      %v4571 = vrot.slane %v4569, 7
      %v4572 = vshll.u32 %v4345, 16
      %v4574 = vor.u32 %v4571, %v4572
      %v4575 = vsel %vm765, %v4567, %v4574
      %v4576 = vrot.slane %v4571, 4
      %v4578 = vshrl.u32 %v4346, 16
      %v4580 = vrot.slane %v4578, 7
      %v4581 = vshll.u32 %v4346, 16
      %v4583 = vor.u32 %v4580, %v4581
      %v4584 = vsel %vm765, %v4576, %v4583
      %v4586 = vshrl.u32 %v4347, 16
      %v4588 = vrot.slane %v4586, 7
      %v4589 = vrot.slane %v4588, 4
      %v4591 = vshrl.u32 %v4348, 16
      %v4593 = vrot.slane %v4591, 7
      %v4594 = vshll.u32 %v4348, 16
      %v4596 = vor.u32 %v4593, %v4594
      %v4597 = vsel %vm765, %v4589, %v4596
      %v4598 = vrot.slane %v4593, 4
      %v4600 = vshrl.u32 %v4349, 16
      %v4602 = vrot.slane %v4600, 7
      %v4603 = vshll.u32 %v4349, 16
      %v4605 = vor.u32 %v4602, %v4603
      %v4606 = vsel %vm765, %v4598, %v4605
      %v4608 = vshrl.u32 %v4350, 16
      %v4610 = vrot.slane %v4608, 7
      %v4611 = vrot.slane %v4610, 4
      %v4613 = vshrl.u32 %v4351, 16
      %v4615 = vrot.slane %v4613, 7
      %v4616 = vshll.u32 %v4351, 16
      %v4618 = vor.u32 %v4615, %v4616
      %v4619 = vsel %vm765, %v4611, %v4618
      %v4620 = vrot.slane %v4615, 4
      %v4622 = vshrl.u32 %v4352, 16
      %v4624 = vrot.slane %v4622, 7
      %v4625 = vshll.u32 %v4352, 16
      %v4627 = vor.u32 %v4624, %v4625
      %v4628 = vsel %vm765, %v4620, %v4627
      %v4630 = vshrl.u32 %v4353, 16
      %v4632 = vrot.slane %v4630, 7
      %v4633 = vrot.slane %v4632, 4
      %v4635 = vshrl.u32 %v4354, 16
      %v4637 = vrot.slane %v4635, 7
      %v4638 = vshll.u32 %v4354, 16
      %v4640 = vor.u32 %v4637, %v4638
      %v4641 = vsel %vm765, %v4633, %v4640
      %v4642 = vrot.slane %v4637, 4
      %v4644 = vshrl.u32 %v4355, 16
      %v4646 = vrot.slane %v4644, 7
      %v4647 = vshll.u32 %v4355, 16
      %v4649 = vor.u32 %v4646, %v4647
      %v4650 = vsel %vm765, %v4642, %v4649
      %v4652 = vshrl.u32 %v4356, 16
      %v4654 = vrot.slane %v4652, 7
      %v4655 = vrot.slane %v4654, 4
      %v4657 = vshrl.u32 %v4357, 16
      %v4659 = vrot.slane %v4657, 7
      %v4660 = vshll.u32 %v4357, 16
      %v4662 = vor.u32 %v4659, %v4660
      %v4663 = vsel %vm765, %v4655, %v4662
      %v4664 = vrot.slane %v4659, 4
      %v4666 = vshrl.u32 %v4358, 16
      %v4668 = vrot.slane %v4666, 7
      %v4669 = vshll.u32 %v4358, 16
      %v4671 = vor.u32 %v4668, %v4669
      %v4672 = vsel %vm765, %v4664, %v4671
      %v4674 = vshrl.u32 %v4359, 16
      %v4676 = vrot.slane %v4674, 7
      %v4677 = vrot.slane %v4676, 4
      %v4679 = vshrl.u32 %v4360, 16
      %v4681 = vrot.slane %v4679, 7
      %v4682 = vshll.u32 %v4360, 16
      %v4684 = vor.u32 %v4681, %v4682
      %v4685 = vsel %vm765, %v4677, %v4684
      %v4686 = vrot.slane %v4681, 4
      %v4688 = vshrl.u32 %v4361, 16
      %v4690 = vrot.slane %v4688, 7
      %v4691 = vshll.u32 %v4361, 16
      %v4693 = vor.u32 %v4690, %v4691
      %v4694 = vsel %vm765, %v4686, %v4693
      %v4696 = vshrl.u32 %v4362, 16
      %v4698 = vrot.slane %v4696, 7
      %v4699 = vrot.slane %v4698, 4
      %v4701 = vshrl.u32 %v4363, 16
      %v4703 = vrot.slane %v4701, 7
      %v4704 = vshll.u32 %v4363, 16
      %v4706 = vor.u32 %v4703, %v4704
      %v4707 = vsel %vm765, %v4699, %v4706
      %v4708 = vrot.slane %v4703, 4
      %v4710 = vshrl.u32 %v4364, 16
      %v4712 = vrot.slane %v4710, 7
      %v4713 = vshll.u32 %v4364, 16
      %v4715 = vor.u32 %v4712, %v4713
      %v4716 = vsel %vm765, %v4708, %v4715
      %s4717 = scalar_lea.vmem %s3, 384
      %v4718 = vld [vmem:[%s4717] sm:$0xf]
      %v4719 = vld [vmem:[%s4717 + $0x4] sm:$0xf]
      %v4720 = vld [vmem:[%s4717 + $0x8] sm:$0xf]
      %v4721 = vld [vmem:[%s4717 + $0xc] sm:$0xf]
      %v4722 = vld [vmem:[%s4717 + $0x10] sm:$0xf]
      %v4723 = vld [vmem:[%s4717 + $0x14] sm:$0xf]
      %v4724 = vld [vmem:[%s4717 + $0x18] sm:$0xf]
      %v4725 = vld [vmem:[%s4717 + $0x1c] sm:$0xf]
      %v4726 = vld [vmem:[%s4717 + $0x20] sm:$0xf]
      %v4727 = vld [vmem:[%s4717 + $0x24] sm:$0xf]
      %v4728 = vld [vmem:[%s4717 + $0x28] sm:$0xf]
      %v4729 = vld [vmem:[%s4717 + $0x2c] sm:$0xf]
      %v4730 = vld [vmem:[%s4717 + $0x30] sm:$0xf]
      %v4731 = vld [vmem:[%s4717 + $0x34] sm:$0xf]
      %v4732 = vld [vmem:[%s4717 + $0x38] sm:$0xf]
      %v4733 = vld [vmem:[%s4717 + $0x3c] sm:$0xf]
      %v4734 = vunpack.c.l.b16 %v4377
      %v4735 = vunpack.c.l.b16 %v4386
      %v4736 = vunpack.c.l.b16 %v4399
      %v4737 = vunpack.c.l.b16 %v4408
      %v4738 = vunpack.c.l.b16 %v4421
      %v4739 = vunpack.c.l.b16 %v4430
      %v4740 = vunpack.c.l.b16 %v4443
      %v4741 = vunpack.c.l.b16 %v4452
      %v4742 = vunpack.c.l.b16 %v4465
      %v4743 = vunpack.c.l.b16 %v4474
      %v4744 = vunpack.c.l.b16 %v4487
      %v4745 = vunpack.c.l.b16 %v4496
      %v4746 = vunpack.c.l.b16 %v4509
      %v4747 = vunpack.c.l.b16 %v4518
      %v4748 = vunpack.c.l.b16 %v4531
      %v4749 = vunpack.c.l.b16 %v4540
      %v4750 = vunpack.c.l.b16 %v4553
      %v4751 = vunpack.c.l.b16 %v4562
      %v4752 = vunpack.c.l.b16 %v4575
      %v4753 = vunpack.c.l.b16 %v4584
      %v4754 = vunpack.c.l.b16 %v4597
      %v4755 = vunpack.c.l.b16 %v4606
      %v4756 = vunpack.c.l.b16 %v4619
      %v4757 = vunpack.c.l.b16 %v4628
      %v4758 = vunpack.c.l.b16 %v4641
      %v4759 = vunpack.c.l.b16 %v4650
      %v4760 = vunpack.c.l.b16 %v4663
      %v4761 = vunpack.c.l.b16 %v4672
      %v4762 = vunpack.c.l.b16 %v4685
      %v4763 = vunpack.c.l.b16 %v4694
      %v4764 = vunpack.c.l.b16 %v4707
      %v4765 = vunpack.c.l.b16 %v4716
      %v4766 = vpack.c.b16 %v4735, %v4734
      %v4767 = vpack.c.b16 %v4737, %v4736
      %v4768 = vpack.c.b16 %v4739, %v4738
      %v4769 = vpack.c.b16 %v4741, %v4740
      %v4770 = vpack.c.b16 %v4743, %v4742
      %v4771 = vpack.c.b16 %v4745, %v4744
      %v4772 = vpack.c.b16 %v4747, %v4746
      %v4773 = vpack.c.b16 %v4749, %v4748
      %v4774 = vpack.c.b16 %v4751, %v4750
      %v4775 = vpack.c.b16 %v4753, %v4752
      %v4776 = vpack.c.b16 %v4755, %v4754
      %v4777 = vpack.c.b16 %v4757, %v4756
      %v4778 = vpack.c.b16 %v4759, %v4758
      %v4779 = vpack.c.b16 %v4761, %v4760
      %v4780 = vpack.c.b16 %v4763, %v4762
      %v4781 = vpack.c.b16 %v4765, %v4764
      %v4814 = vunpack.c.l.b16 %v4718
      %v4815 = vunpack.c.l.b16 %v4719
      %v4816 = vunpack.c.l.b16 %v4720
      %v4817 = vunpack.c.l.b16 %v4721
      %v4818 = vunpack.c.l.b16 %v4722
      %v4819 = vunpack.c.l.b16 %v4723
      %v4820 = vunpack.c.l.b16 %v4724
      %v4821 = vunpack.c.l.b16 %v4725
      %v4822 = vunpack.c.l.b16 %v4726
      %v4823 = vunpack.c.l.b16 %v4727
      %v4824 = vunpack.c.l.b16 %v4728
      %v4825 = vunpack.c.l.b16 %v4729
      %v4826 = vunpack.c.l.b16 %v4730
      %v4827 = vunpack.c.l.b16 %v4731
      %v4828 = vunpack.c.l.b16 %v4732
      %v4829 = vunpack.c.l.b16 %v4733
      %v4830 = vpack.c.b16 %v4815, %v4814
      %v4831 = vpack.c.b16 %v4817, %v4816
      %v4832 = vpack.c.b16 %v4819, %v4818
      %v4833 = vpack.c.b16 %v4821, %v4820
      %v4834 = vpack.c.b16 %v4823, %v4822
      %v4835 = vpack.c.b16 %v4825, %v4824
      %v4836 = vpack.c.b16 %v4827, %v4826
      %v4837 = vpack.c.b16 %v4829, %v4828
      %4846 = vmatprep.subr.bf16.mxu0 0
      %4847 = vmatpush1.bf16.msra.mxu0 %v4830
      %4848 = vmatprep.subr.bf16.mxu0 0
      %4849 = vmatpush1.bf16.msra.mxu0 %v4831
      %4850 = vmatprep.subr.bf16.mxu0 0
      %4851 = vmatpush1.bf16.msra.mxu0 %v4832
      %4852 = vmatprep.subr.bf16.mxu0 0
      %4853 = vmatpush1.bf16.msra.mxu0 %v4833
      %4854 = vmatprep.subr.bf16.mxu0 0
      %4855 = vmatpush1.bf16.msra.mxu0 %v4834
      %4856 = vmatprep.subr.bf16.mxu0 0
      %4857 = vmatpush1.bf16.msra.mxu0 %v4835
      %4858 = vmatprep.subr.bf16.mxu0 0
      %4859 = vmatpush1.bf16.msra.mxu0 %v4836
      %4860 = vmatprep.subr.bf16.mxu0 0
      %4861 = vmatpush1.bf16.msra.mxu0 %v4837
      %4862 = vmatprep.subr.bf16.mxu0 0
      %4863 = vmatpush1.bf16.msra.mxu0 0
      %4864 = vmatprep.subr.bf16.mxu0 0
      %4865 = vmatpush1.bf16.msra.mxu0 0
      %4866 = vmatprep.subr.bf16.mxu0 0
      %4867 = vmatpush1.bf16.msra.mxu0 0
      %4868 = vmatprep.subr.bf16.mxu0 0
      %4869 = vmatpush1.bf16.msra.mxu0 0
      %4870 = vmatprep.subr.bf16.mxu0 0
      %4871 = vmatpush1.bf16.msra.mxu0 0
      %4872 = vmatprep.subr.bf16.mxu0 0
      %4873 = vmatpush1.bf16.msra.mxu0 0
      %4874 = vmatprep.subr.bf16.mxu0 0
      %4875 = vmatpush1.bf16.msra.mxu0 0
      %4876 = vmatprep.subr.bf16.mxu0 0
      %4877 = vmatpush1.bf16.msra.mxu0 0
      %4878 = vmatprep.mubr.bf16.mxu0 0
      %4879 = vmatmul.mubr.bf16.gmra.mrb[0].mxu0 %v4766
      %v4880 = vpop.f32.mrb[0].mxu0
      %v4881 = vadd.f32 0.0, %v4880
      %v4882 = vpop.f32.mrb[0].mxu0
      %v4883 = vpop.f32.mrb[0].mxu0
      %v4884 = vadd.f32 0.0, %v4883
      %v4885 = vpop.f32.mrb[0].mxu0
      %4886 = vmatprep.mubr.bf16.mxu0 0
      %4887 = vmatmul.mubr.bf16.gmra.mrb[0].mxu0 %v4767
      %v4888 = vpop.f32.mrb[0].mxu0
      %v4889 = vadd.f32 0.0, %v4888
      %v4890 = vpop.f32.mrb[0].mxu0
      %v4891 = vpop.f32.mrb[0].mxu0
      %v4892 = vadd.f32 0.0, %v4891
      %v4893 = vpop.f32.mrb[0].mxu0
      %4894 = vmatprep.mubr.bf16.mxu0 0
      %4895 = vmatmul.mubr.bf16.gmra.mrb[0].mxu0 %v4768
      %v4896 = vpop.f32.mrb[0].mxu0
      %v4897 = vadd.f32 0.0, %v4896
      %v4898 = vpop.f32.mrb[0].mxu0
      %v4899 = vpop.f32.mrb[0].mxu0
      %v4900 = vadd.f32 0.0, %v4899
      %v4901 = vpop.f32.mrb[0].mxu0
      %4902 = vmatprep.mubr.bf16.mxu0 0
      %4903 = vmatmul.mubr.bf16.gmra.mrb[0].mxu0 %v4769
      %v4904 = vpop.f32.mrb[0].mxu0
      %v4905 = vadd.f32 0.0, %v4904
      %v4906 = vpop.f32.mrb[0].mxu0
      %v4907 = vpop.f32.mrb[0].mxu0
      %v4908 = vadd.f32 0.0, %v4907
      %v4909 = vpop.f32.mrb[0].mxu0
      %4910 = vmatprep.mubr.bf16.mxu0 0
      %4911 = vmatmul.mubr.bf16.gmra.mrb[0].mxu0 %v4770
      %v4912 = vpop.f32.mrb[0].mxu0
      %v4913 = vadd.f32 0.0, %v4912
      %v4914 = vpop.f32.mrb[0].mxu0
      %v4915 = vpop.f32.mrb[0].mxu0
      %v4916 = vadd.f32 0.0, %v4915
      %v4917 = vpop.f32.mrb[0].mxu0
      %4918 = vmatprep.mubr.bf16.mxu0 0
      %4919 = vmatmul.mubr.bf16.gmra.mrb[0].mxu0 %v4771
      %v4920 = vpop.f32.mrb[0].mxu0
      %v4921 = vadd.f32 0.0, %v4920
      %v4922 = vpop.f32.mrb[0].mxu0
      %v4923 = vpop.f32.mrb[0].mxu0
      %v4924 = vadd.f32 0.0, %v4923
      %v4925 = vpop.f32.mrb[0].mxu0
      %4926 = vmatprep.mubr.bf16.mxu0 0
      %4927 = vmatmul.mubr.bf16.gmra.mrb[0].mxu0 %v4772
      %v4928 = vpop.f32.mrb[0].mxu0
      %v4929 = vadd.f32 0.0, %v4928
      %v4930 = vpop.f32.mrb[0].mxu0
      %v4931 = vpop.f32.mrb[0].mxu0
      %v4932 = vadd.f32 0.0, %v4931
      %v4933 = vpop.f32.mrb[0].mxu0
      %4934 = vmatprep.mubr.bf16.mxu0 0
      %4935 = vmatmul.mubr.bf16.gmra.mrb[0].mxu0 %v4773
      %v4936 = vpop.f32.mrb[0].mxu0
      %v4937 = vadd.f32 0.0, %v4936
      %v4938 = vpop.f32.mrb[0].mxu0
      %v4939 = vpop.f32.mrb[0].mxu0
      %v4940 = vadd.f32 0.0, %v4939
      %v4941 = vpop.f32.mrb[0].mxu0
      %4942 = vmatprep.mubr.bf16.mxu0 0
      %4943 = vmatmul.mubr.bf16.gmra.mrb[0].mxu0 %v4774
      %v4944 = vpop.f32.mrb[0].mxu0
      %v4945 = vadd.f32 0.0, %v4944
      %v4946 = vpop.f32.mrb[0].mxu0
      %v4947 = vpop.f32.mrb[0].mxu0
      %v4948 = vadd.f32 0.0, %v4947
      %v4949 = vpop.f32.mrb[0].mxu0
      %4950 = vmatprep.mubr.bf16.mxu0 0
      %4951 = vmatmul.mubr.bf16.gmra.mrb[0].mxu0 %v4775
      %v4952 = vpop.f32.mrb[0].mxu0
      %v4953 = vadd.f32 0.0, %v4952
      %v4954 = vpop.f32.mrb[0].mxu0
      %v4955 = vpop.f32.mrb[0].mxu0
      %v4956 = vadd.f32 0.0, %v4955
      %v4957 = vpop.f32.mrb[0].mxu0
      %4958 = vmatprep.mubr.bf16.mxu0 0
      %4959 = vmatmul.mubr.bf16.gmra.mrb[0].mxu0 %v4776
      %v4960 = vpop.f32.mrb[0].mxu0
      %v4961 = vadd.f32 0.0, %v4960
      %v4962 = vpop.f32.mrb[0].mxu0
      %v4963 = vpop.f32.mrb[0].mxu0
      %v4964 = vadd.f32 0.0, %v4963
      %v4965 = vpop.f32.mrb[0].mxu0
      %4966 = vmatprep.mubr.bf16.mxu0 0
      %4967 = vmatmul.mubr.bf16.gmra.mrb[0].mxu0 %v4777
      %v4968 = vpop.f32.mrb[0].mxu0
      %v4969 = vadd.f32 0.0, %v4968
      %v4970 = vpop.f32.mrb[0].mxu0
      %v4971 = vpop.f32.mrb[0].mxu0
      %v4972 = vadd.f32 0.0, %v4971
      %v4973 = vpop.f32.mrb[0].mxu0
      %4974 = vmatprep.mubr.bf16.mxu0 0
      %4975 = vmatmul.mubr.bf16.gmra.mrb[0].mxu0 %v4778
      %v4976 = vpop.f32.mrb[0].mxu0
      %v4977 = vadd.f32 0.0, %v4976
      %v4978 = vpop.f32.mrb[0].mxu0
      %v4979 = vpop.f32.mrb[0].mxu0
      %v4980 = vadd.f32 0.0, %v4979
      %v4981 = vpop.f32.mrb[0].mxu0
      %4982 = vmatprep.mubr.bf16.mxu0 0
      %4983 = vmatmul.mubr.bf16.gmra.mrb[0].mxu0 %v4779
      %v4984 = vpop.f32.mrb[0].mxu0
      %v4985 = vadd.f32 0.0, %v4984
      %v4986 = vpop.f32.mrb[0].mxu0
      %v4987 = vpop.f32.mrb[0].mxu0
      %v4988 = vadd.f32 0.0, %v4987
      %v4989 = vpop.f32.mrb[0].mxu0
      %4990 = vmatprep.mubr.bf16.mxu0 0
      %4991 = vmatmul.mubr.bf16.gmra.mrb[0].mxu0 %v4780
      %v4992 = vpop.f32.mrb[0].mxu0
      %v4993 = vadd.f32 0.0, %v4992
      %v4994 = vpop.f32.mrb[0].mxu0
      %v4995 = vpop.f32.mrb[0].mxu0
      %v4996 = vadd.f32 0.0, %v4995
      %v4997 = vpop.f32.mrb[0].mxu0
      %4998 = vmatprep.mubr.bf16.mxu0 0
      %4999 = vmatmul.mubr.bf16.gmra.mrb[0].mxu0 %v4781
      %v5000 = vpop.f32.mrb[0].mxu0
      %v5001 = vadd.f32 0.0, %v5000
      %v5002 = vpop.f32.mrb[0].mxu0
      %v5003 = vpop.f32.mrb[0].mxu0
      %v5004 = vadd.f32 0.0, %v5003
      %v5005 = vpop.f32.mrb[0].mxu0
      %5006 = vdwg.mxu0
      %v5007 = vadd.f32 %v4284, %v4881
      %v5008 = vadd.f32 %v4285, %v4884
      %v5009 = vadd.f32 %v4286, %v4889
      %v5010 = vadd.f32 %v4287, %v4892
      %v5011 = vadd.f32 %v4288, %v4897
      %v5012 = vadd.f32 %v4289, %v4900
      %v5013 = vadd.f32 %v4290, %v4905
      %v5014 = vadd.f32 %v4291, %v4908
      %v5015 = vadd.f32 %v4292, %v4913
      %v5016 = vadd.f32 %v4293, %v4916
      %v5017 = vadd.f32 %v4294, %v4921
      %v5018 = vadd.f32 %v4295, %v4924
      %v5019 = vadd.f32 %v4296, %v4929
      %v5020 = vadd.f32 %v4297, %v4932
      %v5021 = vadd.f32 %v4298, %v4937
      %v5022 = vadd.f32 %v4299, %v4940
      %v5023 = vadd.f32 %v4300, %v4945
      %v5024 = vadd.f32 %v4301, %v4948
      %v5025 = vadd.f32 %v4302, %v4953
      %v5026 = vadd.f32 %v4303, %v4956
      %v5027 = vadd.f32 %v4304, %v4961
      %v5028 = vadd.f32 %v4305, %v4964
      %v5029 = vadd.f32 %v4306, %v4969
      %v5030 = vadd.f32 %v4307, %v4972
      %v5031 = vadd.f32 %v4308, %v4977
      %v5032 = vadd.f32 %v4309, %v4980
      %v5033 = vadd.f32 %v4310, %v4985
      %v5034 = vadd.f32 %v4311, %v4988
      %v5035 = vadd.f32 %v4312, %v4993
      %v5036 = vadd.f32 %v4313, %v4996
      %v5037 = vadd.f32 %v4314, %v5001
      %v5038 = vadd.f32 %v4315, %v5004
      %s5039 = scalar_lea.vmem %s3, 448
      %v5040 = vld [vmem:[%s5039] sm:$0xf]
      %v5041 = vld [vmem:[%s5039 + $0x4] sm:$0xf]
      %v5042 = vld [vmem:[%s5039 + $0x8] sm:$0xf]
      %v5043 = vld [vmem:[%s5039 + $0xc] sm:$0xf]
      %v5044 = vld [vmem:[%s5039 + $0x10] sm:$0xf]
      %v5045 = vld [vmem:[%s5039 + $0x14] sm:$0xf]
      %v5046 = vld [vmem:[%s5039 + $0x18] sm:$0xf]
      %v5047 = vld [vmem:[%s5039 + $0x1c] sm:$0xf]
      %v5048 = vld [vmem:[%s5039 + $0x20] sm:$0xf]
      %v5049 = vld [vmem:[%s5039 + $0x24] sm:$0xf]
      %v5050 = vld [vmem:[%s5039 + $0x28] sm:$0xf]
      %v5051 = vld [vmem:[%s5039 + $0x2c] sm:$0xf]
      %v5052 = vld [vmem:[%s5039 + $0x30] sm:$0xf]
      %v5053 = vld [vmem:[%s5039 + $0x34] sm:$0xf]
      %v5054 = vld [vmem:[%s5039 + $0x38] sm:$0xf]
      %v5055 = vld [vmem:[%s5039 + $0x3c] sm:$0xf]
      %v5088 = vunpack.c.l.b16 %v4318
      %v5089 = vunpack.c.l.b16 %v4319
      %v5090 = vunpack.c.l.b16 %v4321
      %v5091 = vunpack.c.l.b16 %v4322
      %v5092 = vunpack.c.l.b16 %v4324
      %v5093 = vunpack.c.l.b16 %v4325
      %v5094 = vunpack.c.l.b16 %v4327
      %v5095 = vunpack.c.l.b16 %v4328
      %v5096 = vunpack.c.l.b16 %v4330
      %v5097 = vunpack.c.l.b16 %v4331
      %v5098 = vunpack.c.l.b16 %v4333
      %v5099 = vunpack.c.l.b16 %v4334
      %v5100 = vunpack.c.l.b16 %v4336
      %v5101 = vunpack.c.l.b16 %v4337
      %v5102 = vunpack.c.l.b16 %v4339
      %v5103 = vunpack.c.l.b16 %v4340
      %v5104 = vunpack.c.l.b16 %v4342
      %v5105 = vunpack.c.l.b16 %v4343
      %v5106 = vunpack.c.l.b16 %v4345
      %v5107 = vunpack.c.l.b16 %v4346
      %v5108 = vunpack.c.l.b16 %v4348
      %v5109 = vunpack.c.l.b16 %v4349
      %v5110 = vunpack.c.l.b16 %v4351
      %v5111 = vunpack.c.l.b16 %v4352
      %v5112 = vunpack.c.l.b16 %v4354
      %v5113 = vunpack.c.l.b16 %v4355
      %v5114 = vunpack.c.l.b16 %v4357
      %v5115 = vunpack.c.l.b16 %v4358
      %v5116 = vunpack.c.l.b16 %v4360
      %v5117 = vunpack.c.l.b16 %v4361
      %v5118 = vunpack.c.l.b16 %v4363
      %v5119 = vunpack.c.l.b16 %v4364
      %v5120 = vpack.c.b16 %v5089, %v5088
      %v5121 = vpack.c.b16 %v5091, %v5090
      %v5122 = vpack.c.b16 %v5093, %v5092
      %v5123 = vpack.c.b16 %v5095, %v5094
      %v5124 = vpack.c.b16 %v5097, %v5096
      %v5125 = vpack.c.b16 %v5099, %v5098
      %v5126 = vpack.c.b16 %v5101, %v5100
      %v5127 = vpack.c.b16 %v5103, %v5102
      %v5128 = vpack.c.b16 %v5105, %v5104
      %v5129 = vpack.c.b16 %v5107, %v5106
      %v5130 = vpack.c.b16 %v5109, %v5108
      %v5131 = vpack.c.b16 %v5111, %v5110
      %v5132 = vpack.c.b16 %v5113, %v5112
      %v5133 = vpack.c.b16 %v5115, %v5114
      %v5134 = vpack.c.b16 %v5117, %v5116
      %v5135 = vpack.c.b16 %v5119, %v5118
      %v5168 = vunpack.c.l.b16 %v5040
      %v5169 = vunpack.c.l.b16 %v5041
      %v5170 = vunpack.c.l.b16 %v5042
      %v5171 = vunpack.c.l.b16 %v5043
      %v5172 = vunpack.c.l.b16 %v5044
      %v5173 = vunpack.c.l.b16 %v5045
      %v5174 = vunpack.c.l.b16 %v5046
      %v5175 = vunpack.c.l.b16 %v5047
      %v5176 = vunpack.c.l.b16 %v5048
      %v5177 = vunpack.c.l.b16 %v5049
      %v5178 = vunpack.c.l.b16 %v5050
      %v5179 = vunpack.c.l.b16 %v5051
      %v5180 = vunpack.c.l.b16 %v5052
      %v5181 = vunpack.c.l.b16 %v5053
      %v5182 = vunpack.c.l.b16 %v5054
      %v5183 = vunpack.c.l.b16 %v5055
      %v5184 = vpack.c.b16 %v5169, %v5168
      %v5185 = vpack.c.b16 %v5171, %v5170
      %v5186 = vpack.c.b16 %v5173, %v5172
      %v5187 = vpack.c.b16 %v5175, %v5174
      %v5188 = vpack.c.b16 %v5177, %v5176
      %v5189 = vpack.c.b16 %v5179, %v5178
      %v5190 = vpack.c.b16 %v5181, %v5180
      %v5191 = vpack.c.b16 %v5183, %v5182
      %5200 = vmatprep.subr.bf16.mxu0 0
      %5201 = vmatpush1.bf16.msra.mxu0 %v5184
      %5202 = vmatprep.subr.bf16.mxu0 0
      %5203 = vmatpush1.bf16.msra.mxu0 %v5185
      %5204 = vmatprep.subr.bf16.mxu0 0
      %5205 = vmatpush1.bf16.msra.mxu0 %v5186
      %5206 = vmatprep.subr.bf16.mxu0 0
      %5207 = vmatpush1.bf16.msra.mxu0 %v5187
      %5208 = vmatprep.subr.bf16.mxu0 0
      %5209 = vmatpush1.bf16.msra.mxu0 %v5188
      %5210 = vmatprep.subr.bf16.mxu0 0
      %5211 = vmatpush1.bf16.msra.mxu0 %v5189
      %5212 = vmatprep.subr.bf16.mxu0 0
      %5213 = vmatpush1.bf16.msra.mxu0 %v5190
      %5214 = vmatprep.subr.bf16.mxu0 0
      %5215 = vmatpush1.bf16.msra.mxu0 %v5191
      %5216 = vmatprep.subr.bf16.mxu0 0
      %5217 = vmatpush1.bf16.msra.mxu0 0
      %5218 = vmatprep.subr.bf16.mxu0 0
      %5219 = vmatpush1.bf16.msra.mxu0 0
      %5220 = vmatprep.subr.bf16.mxu0 0
      %5221 = vmatpush1.bf16.msra.mxu0 0
      %5222 = vmatprep.subr.bf16.mxu0 0
      %5223 = vmatpush1.bf16.msra.mxu0 0
      %5224 = vmatprep.subr.bf16.mxu0 0
      %5225 = vmatpush1.bf16.msra.mxu0 0
      %5226 = vmatprep.subr.bf16.mxu0 0
      %5227 = vmatpush1.bf16.msra.mxu0 0
      %5228 = vmatprep.subr.bf16.mxu0 0
      %5229 = vmatpush1.bf16.msra.mxu0 0
      %5230 = vmatprep.subr.bf16.mxu0 0
      %5231 = vmatpush1.bf16.msra.mxu0 0
      %5232 = vmatprep.mubr.bf16.mxu0 0
      %5233 = vmatmul.mubr.bf16.gmra.mrb[0].mxu0 %v5120
      %v5234 = vpop.f32.mrb[0].mxu0
      %v5235 = vadd.f32 0.0, %v5234
      %v5236 = vpop.f32.mrb[0].mxu0
      %v5237 = vpop.f32.mrb[0].mxu0
      %v5238 = vadd.f32 0.0, %v5237
      %v5239 = vpop.f32.mrb[0].mxu0
      %5240 = vmatprep.mubr.bf16.mxu0 0
      %5241 = vmatmul.mubr.bf16.gmra.mrb[0].mxu0 %v5121
      %v5242 = vpop.f32.mrb[0].mxu0
      %v5243 = vadd.f32 0.0, %v5242
      %v5244 = vpop.f32.mrb[0].mxu0
      %v5245 = vpop.f32.mrb[0].mxu0
      %v5246 = vadd.f32 0.0, %v5245
      %v5247 = vpop.f32.mrb[0].mxu0
      %5248 = vmatprep.mubr.bf16.mxu0 0
      %5249 = vmatmul.mubr.bf16.gmra.mrb[0].mxu0 %v5122
      %v5250 = vpop.f32.mrb[0].mxu0
      %v5251 = vadd.f32 0.0, %v5250
      %v5252 = vpop.f32.mrb[0].mxu0
      %v5253 = vpop.f32.mrb[0].mxu0
      %v5254 = vadd.f32 0.0, %v5253
      %v5255 = vpop.f32.mrb[0].mxu0
      %5256 = vmatprep.mubr.bf16.mxu0 0
      %5257 = vmatmul.mubr.bf16.gmra.mrb[0].mxu0 %v5123
      %v5258 = vpop.f32.mrb[0].mxu0
      %v5259 = vadd.f32 0.0, %v5258
      %v5260 = vpop.f32.mrb[0].mxu0
      %v5261 = vpop.f32.mrb[0].mxu0
      %v5262 = vadd.f32 0.0, %v5261
      %v5263 = vpop.f32.mrb[0].mxu0
      %5264 = vmatprep.mubr.bf16.mxu0 0
      %5265 = vmatmul.mubr.bf16.gmra.mrb[0].mxu0 %v5124
      %v5266 = vpop.f32.mrb[0].mxu0
      %v5267 = vadd.f32 0.0, %v5266
      %v5268 = vpop.f32.mrb[0].mxu0
      %v5269 = vpop.f32.mrb[0].mxu0
      %v5270 = vadd.f32 0.0, %v5269
      %v5271 = vpop.f32.mrb[0].mxu0
      %5272 = vmatprep.mubr.bf16.mxu0 0
      %5273 = vmatmul.mubr.bf16.gmra.mrb[0].mxu0 %v5125
      %v5274 = vpop.f32.mrb[0].mxu0
      %v5275 = vadd.f32 0.0, %v5274
      %v5276 = vpop.f32.mrb[0].mxu0
      %v5277 = vpop.f32.mrb[0].mxu0
      %v5278 = vadd.f32 0.0, %v5277
      %v5279 = vpop.f32.mrb[0].mxu0
      %5280 = vmatprep.mubr.bf16.mxu0 0
      %5281 = vmatmul.mubr.bf16.gmra.mrb[0].mxu0 %v5126
      %v5282 = vpop.f32.mrb[0].mxu0
      %v5283 = vadd.f32 0.0, %v5282
      %v5284 = vpop.f32.mrb[0].mxu0
      %v5285 = vpop.f32.mrb[0].mxu0
      %v5286 = vadd.f32 0.0, %v5285
      %v5287 = vpop.f32.mrb[0].mxu0
      %5288 = vmatprep.mubr.bf16.mxu0 0
      %5289 = vmatmul.mubr.bf16.gmra.mrb[0].mxu0 %v5127
      %v5290 = vpop.f32.mrb[0].mxu0
      %v5291 = vadd.f32 0.0, %v5290
      %v5292 = vpop.f32.mrb[0].mxu0
      %v5293 = vpop.f32.mrb[0].mxu0
      %v5294 = vadd.f32 0.0, %v5293
      %v5295 = vpop.f32.mrb[0].mxu0
      %5296 = vmatprep.mubr.bf16.mxu0 0
      %5297 = vmatmul.mubr.bf16.gmra.mrb[0].mxu0 %v5128
      %v5298 = vpop.f32.mrb[0].mxu0
      %v5299 = vadd.f32 0.0, %v5298
      %v5300 = vpop.f32.mrb[0].mxu0
      %v5301 = vpop.f32.mrb[0].mxu0
      %v5302 = vadd.f32 0.0, %v5301
      %v5303 = vpop.f32.mrb[0].mxu0
      %5304 = vmatprep.mubr.bf16.mxu0 0
      %5305 = vmatmul.mubr.bf16.gmra.mrb[0].mxu0 %v5129
      %v5306 = vpop.f32.mrb[0].mxu0
      %v5307 = vadd.f32 0.0, %v5306
      %v5308 = vpop.f32.mrb[0].mxu0
      %v5309 = vpop.f32.mrb[0].mxu0
      %v5310 = vadd.f32 0.0, %v5309
      %v5311 = vpop.f32.mrb[0].mxu0
      %5312 = vmatprep.mubr.bf16.mxu0 0
      %5313 = vmatmul.mubr.bf16.gmra.mrb[0].mxu0 %v5130
      %v5314 = vpop.f32.mrb[0].mxu0
      %v5315 = vadd.f32 0.0, %v5314
      %v5316 = vpop.f32.mrb[0].mxu0
      %v5317 = vpop.f32.mrb[0].mxu0
      %v5318 = vadd.f32 0.0, %v5317
      %v5319 = vpop.f32.mrb[0].mxu0
      %5320 = vmatprep.mubr.bf16.mxu0 0
      %5321 = vmatmul.mubr.bf16.gmra.mrb[0].mxu0 %v5131
      %v5322 = vpop.f32.mrb[0].mxu0
      %v5323 = vadd.f32 0.0, %v5322
      %v5324 = vpop.f32.mrb[0].mxu0
      %v5325 = vpop.f32.mrb[0].mxu0
      %v5326 = vadd.f32 0.0, %v5325
      %v5327 = vpop.f32.mrb[0].mxu0
      %5328 = vmatprep.mubr.bf16.mxu0 0
      %5329 = vmatmul.mubr.bf16.gmra.mrb[0].mxu0 %v5132
      %v5330 = vpop.f32.mrb[0].mxu0
      %v5331 = vadd.f32 0.0, %v5330
      %v5332 = vpop.f32.mrb[0].mxu0
      %v5333 = vpop.f32.mrb[0].mxu0
      %v5334 = vadd.f32 0.0, %v5333
      %v5335 = vpop.f32.mrb[0].mxu0
      %5336 = vmatprep.mubr.bf16.mxu0 0
      %5337 = vmatmul.mubr.bf16.gmra.mrb[0].mxu0 %v5133
      %v5338 = vpop.f32.mrb[0].mxu0
      %v5339 = vadd.f32 0.0, %v5338
      %v5340 = vpop.f32.mrb[0].mxu0
      %v5341 = vpop.f32.mrb[0].mxu0
      %v5342 = vadd.f32 0.0, %v5341
      %v5343 = vpop.f32.mrb[0].mxu0
      %5344 = vmatprep.mubr.bf16.mxu0 0
      %5345 = vmatmul.mubr.bf16.gmra.mrb[0].mxu0 %v5134
      %v5346 = vpop.f32.mrb[0].mxu0
      %v5347 = vadd.f32 0.0, %v5346
      %v5348 = vpop.f32.mrb[0].mxu0
      %v5349 = vpop.f32.mrb[0].mxu0
      %v5350 = vadd.f32 0.0, %v5349
      %v5351 = vpop.f32.mrb[0].mxu0
      %5352 = vmatprep.mubr.bf16.mxu0 0
      %5353 = vmatmul.mubr.bf16.gmra.mrb[0].mxu0 %v5135
      %v5354 = vpop.f32.mrb[0].mxu0
      %v5355 = vadd.f32 0.0, %v5354
      %v5356 = vpop.f32.mrb[0].mxu0
      %v5357 = vpop.f32.mrb[0].mxu0
      %v5358 = vadd.f32 0.0, %v5357
      %v5359 = vpop.f32.mrb[0].mxu0
      %5360 = vdwg.mxu0
      %v5361 = vadd.f32 %v5007, %v5235
      %v5362 = vadd.f32 %v5008, %v5238
      %v5363 = vadd.f32 %v5009, %v5243
      %v5364 = vadd.f32 %v5010, %v5246
      %v5365 = vadd.f32 %v5011, %v5251
      %v5366 = vadd.f32 %v5012, %v5254
      %v5367 = vadd.f32 %v5013, %v5259
      %v5368 = vadd.f32 %v5014, %v5262
      %v5369 = vadd.f32 %v5015, %v5267
      %v5370 = vadd.f32 %v5016, %v5270
      %v5371 = vadd.f32 %v5017, %v5275
      %v5372 = vadd.f32 %v5018, %v5278
      %v5373 = vadd.f32 %v5019, %v5283
      %v5374 = vadd.f32 %v5020, %v5286
      %v5375 = vadd.f32 %v5021, %v5291
      %v5376 = vadd.f32 %v5022, %v5294
      %v5377 = vadd.f32 %v5023, %v5299
      %v5378 = vadd.f32 %v5024, %v5302
      %v5379 = vadd.f32 %v5025, %v5307
      %v5380 = vadd.f32 %v5026, %v5310
      %v5381 = vadd.f32 %v5027, %v5315
      %v5382 = vadd.f32 %v5028, %v5318
      %v5383 = vadd.f32 %v5029, %v5323
      %v5384 = vadd.f32 %v5030, %v5326
      %v5385 = vadd.f32 %v5031, %v5331
      %v5386 = vadd.f32 %v5032, %v5334
      %v5387 = vadd.f32 %v5033, %v5339
      %v5388 = vadd.f32 %v5034, %v5342
      %v5389 = vadd.f32 %v5035, %v5347
      %v5390 = vadd.f32 %v5036, %v5350
      %v5391 = vadd.f32 %v5037, %v5355
      %v5392 = vadd.f32 %v5038, %v5358
      %v5393 = vld [vmem:[%s4316 + $0x4] sm:$0xf]
      %v5394 = vld [vmem:[%s4316 + $0x8] sm:$0xf]
      %v5395 = vld [vmem:[%s4316 + $0xc] sm:$0x1]
      %v5396 = vld [vmem:[%s4316 + $0x14] sm:$0xf]
      %v5397 = vld [vmem:[%s4316 + $0x18] sm:$0xf]
      %v5398 = vld [vmem:[%s4316 + $0x1c] sm:$0x1]
      %v5399 = vld [vmem:[%s4316 + $0x24] sm:$0xf]
      %v5400 = vld [vmem:[%s4316 + $0x28] sm:$0xf]
      %v5401 = vld [vmem:[%s4316 + $0x2c] sm:$0x1]
      %v5402 = vld [vmem:[%s4316 + $0x34] sm:$0xf]
      %v5403 = vld [vmem:[%s4316 + $0x38] sm:$0xf]
      %v5404 = vld [vmem:[%s4316 + $0x3c] sm:$0x1]
      %v5405 = vld [vmem:[%s4316 + $0x44] sm:$0xf]
      %v5406 = vld [vmem:[%s4316 + $0x48] sm:$0xf]
      %v5407 = vld [vmem:[%s4316 + $0x4c] sm:$0x1]
      %v5408 = vld [vmem:[%s4316 + $0x54] sm:$0xf]
      %v5409 = vld [vmem:[%s4316 + $0x58] sm:$0xf]
      %v5410 = vld [vmem:[%s4316 + $0x5c] sm:$0x1]
      %v5411 = vld [vmem:[%s4316 + $0x64] sm:$0xf]
      %v5412 = vld [vmem:[%s4316 + $0x68] sm:$0xf]
      %v5413 = vld [vmem:[%s4316 + $0x6c] sm:$0x1]
      %v5414 = vld [vmem:[%s4316 + $0x74] sm:$0xf]
      %v5415 = vld [vmem:[%s4316 + $0x78] sm:$0xf]
      %v5416 = vld [vmem:[%s4316 + $0x7c] sm:$0x1]
      %v5417 = vld [vmem:[%s4316 + $0x84] sm:$0xf]
      %v5418 = vld [vmem:[%s4316 + $0x88] sm:$0xf]
      %v5419 = vld [vmem:[%s4316 + $0x8c] sm:$0x1]
      %v5420 = vld [vmem:[%s4316 + $0x94] sm:$0xf]
      %v5421 = vld [vmem:[%s4316 + $0x98] sm:$0xf]
      %v5422 = vld [vmem:[%s4316 + $0x9c] sm:$0x1]
      %v5423 = vld [vmem:[%s4316 + $0xa4] sm:$0xf]
      %v5424 = vld [vmem:[%s4316 + $0xa8] sm:$0xf]
      %v5425 = vld [vmem:[%s4316 + $0xac] sm:$0x1]
      %v5426 = vld [vmem:[%s4316 + $0xb4] sm:$0xf]
      %v5427 = vld [vmem:[%s4316 + $0xb8] sm:$0xf]
      %v5428 = vld [vmem:[%s4316 + $0xbc] sm:$0x1]
      %v5429 = vld [vmem:[%s4316 + $0xc4] sm:$0xf]
      %v5430 = vld [vmem:[%s4316 + $0xc8] sm:$0xf]
      %v5431 = vld [vmem:[%s4316 + $0xcc] sm:$0x1]
      %v5432 = vld [vmem:[%s4316 + $0xd4] sm:$0xf]
      %v5433 = vld [vmem:[%s4316 + $0xd8] sm:$0xf]
      %v5434 = vld [vmem:[%s4316 + $0xdc] sm:$0x1]
      %v5435 = vld [vmem:[%s4316 + $0xe4] sm:$0xf]
      %v5436 = vld [vmem:[%s4316 + $0xe8] sm:$0xf]
      %v5437 = vld [vmem:[%s4316 + $0xec] sm:$0x1]
      %v5438 = vld [vmem:[%s4316 + $0xf4] sm:$0xf]
      %v5439 = vld [vmem:[%s4316 + $0xf8] sm:$0xf]
      %v5440 = vld [vmem:[%s4316 + $0xfc] sm:$0x1]
      %v5442 = vshrl.u32 %v5393, 16
      %v5444 = vrot.slane %v5442, 4
      %v5445 = vshll.u32 %v5393, 16
      %v5447 = vrot.slane %v5445, 5
      %v5448 = vor.u32 %v5444, %v5447
      %v5449 = vrot.slane %v5448, 4
      %v5451 = vshll.u32 %v5394, 16
      %v5453 = vrot.slane %v5451, 5
      %v5454 = vsel %vm1779, %v5449, %v5453
      %v5455 = vshrl.u32 %v5394, 16
      %v5457 = vrot.slane %v5455, 4
      %v5458 = vor.u32 %v5457, %v5453
      %v5459 = vrot.slane %v5458, 4
      %v5461 = vshll.u32 %v5395, 16
      %v5463 = vrot.slane %v5461, 5
      %v5464 = vsel %vm1779, %v5459, %v5463
      %v5466 = vshrl.u32 %v5396, 16
      %v5468 = vrot.slane %v5466, 4
      %v5469 = vshll.u32 %v5396, 16
      %v5471 = vrot.slane %v5469, 5
      %v5472 = vor.u32 %v5468, %v5471
      %v5473 = vrot.slane %v5472, 4
      %v5475 = vshll.u32 %v5397, 16
      %v5477 = vrot.slane %v5475, 5
      %v5478 = vsel %vm1779, %v5473, %v5477
      %v5479 = vshrl.u32 %v5397, 16
      %v5481 = vrot.slane %v5479, 4
      %v5482 = vor.u32 %v5481, %v5477
      %v5483 = vrot.slane %v5482, 4
      %v5485 = vshll.u32 %v5398, 16
      %v5487 = vrot.slane %v5485, 5
      %v5488 = vsel %vm1779, %v5483, %v5487
      %v5490 = vshrl.u32 %v5399, 16
      %v5492 = vrot.slane %v5490, 4
      %v5493 = vshll.u32 %v5399, 16
      %v5495 = vrot.slane %v5493, 5
      %v5496 = vor.u32 %v5492, %v5495
      %v5497 = vrot.slane %v5496, 4
      %v5499 = vshll.u32 %v5400, 16
      %v5501 = vrot.slane %v5499, 5
      %v5502 = vsel %vm1779, %v5497, %v5501
      %v5503 = vshrl.u32 %v5400, 16
      %v5505 = vrot.slane %v5503, 4
      %v5506 = vor.u32 %v5505, %v5501
      %v5507 = vrot.slane %v5506, 4
      %v5509 = vshll.u32 %v5401, 16
      %v5511 = vrot.slane %v5509, 5
      %v5512 = vsel %vm1779, %v5507, %v5511
      %v5514 = vshrl.u32 %v5402, 16
      %v5516 = vrot.slane %v5514, 4
      %v5517 = vshll.u32 %v5402, 16
      %v5519 = vrot.slane %v5517, 5
      %v5520 = vor.u32 %v5516, %v5519
      %v5521 = vrot.slane %v5520, 4
      %v5523 = vshll.u32 %v5403, 16
      %v5525 = vrot.slane %v5523, 5
      %v5526 = vsel %vm1779, %v5521, %v5525
      %v5527 = vshrl.u32 %v5403, 16
      %v5529 = vrot.slane %v5527, 4
      %v5530 = vor.u32 %v5529, %v5525
      %v5531 = vrot.slane %v5530, 4
      %v5533 = vshll.u32 %v5404, 16
      %v5535 = vrot.slane %v5533, 5
      %v5536 = vsel %vm1779, %v5531, %v5535
      %v5538 = vshrl.u32 %v5405, 16
      %v5540 = vrot.slane %v5538, 4
      %v5541 = vshll.u32 %v5405, 16
      %v5543 = vrot.slane %v5541, 5
      %v5544 = vor.u32 %v5540, %v5543
      %v5545 = vrot.slane %v5544, 4
      %v5547 = vshll.u32 %v5406, 16
      %v5549 = vrot.slane %v5547, 5
      %v5550 = vsel %vm1779, %v5545, %v5549
      %v5551 = vshrl.u32 %v5406, 16
      %v5553 = vrot.slane %v5551, 4
      %v5554 = vor.u32 %v5553, %v5549
      %v5555 = vrot.slane %v5554, 4
      %v5557 = vshll.u32 %v5407, 16
      %v5559 = vrot.slane %v5557, 5
      %v5560 = vsel %vm1779, %v5555, %v5559
      %v5562 = vshrl.u32 %v5408, 16
      %v5564 = vrot.slane %v5562, 4
      %v5565 = vshll.u32 %v5408, 16
      %v5567 = vrot.slane %v5565, 5
      %v5568 = vor.u32 %v5564, %v5567
      %v5569 = vrot.slane %v5568, 4
      %v5571 = vshll.u32 %v5409, 16
      %v5573 = vrot.slane %v5571, 5
      %v5574 = vsel %vm1779, %v5569, %v5573
      %v5575 = vshrl.u32 %v5409, 16
      %v5577 = vrot.slane %v5575, 4
      %v5578 = vor.u32 %v5577, %v5573
      %v5579 = vrot.slane %v5578, 4
      %v5581 = vshll.u32 %v5410, 16
      %v5583 = vrot.slane %v5581, 5
      %v5584 = vsel %vm1779, %v5579, %v5583
      %v5586 = vshrl.u32 %v5411, 16
      %v5588 = vrot.slane %v5586, 4
      %v5589 = vshll.u32 %v5411, 16
      %v5591 = vrot.slane %v5589, 5
      %v5592 = vor.u32 %v5588, %v5591
      %v5593 = vrot.slane %v5592, 4
      %v5595 = vshll.u32 %v5412, 16
      %v5597 = vrot.slane %v5595, 5
      %v5598 = vsel %vm1779, %v5593, %v5597
      %v5599 = vshrl.u32 %v5412, 16
      %v5601 = vrot.slane %v5599, 4
      %v5602 = vor.u32 %v5601, %v5597
      %v5603 = vrot.slane %v5602, 4
      %v5605 = vshll.u32 %v5413, 16
      %v5607 = vrot.slane %v5605, 5
      %v5608 = vsel %vm1779, %v5603, %v5607
      %v5610 = vshrl.u32 %v5414, 16
      %v5612 = vrot.slane %v5610, 4
      %v5613 = vshll.u32 %v5414, 16
      %v5615 = vrot.slane %v5613, 5
      %v5616 = vor.u32 %v5612, %v5615
      %v5617 = vrot.slane %v5616, 4
      %v5619 = vshll.u32 %v5415, 16
      %v5621 = vrot.slane %v5619, 5
      %v5622 = vsel %vm1779, %v5617, %v5621
      %v5623 = vshrl.u32 %v5415, 16
      %v5625 = vrot.slane %v5623, 4
      %v5626 = vor.u32 %v5625, %v5621
      %v5627 = vrot.slane %v5626, 4
      %v5629 = vshll.u32 %v5416, 16
      %v5631 = vrot.slane %v5629, 5
      %v5632 = vsel %vm1779, %v5627, %v5631
      %v5634 = vshrl.u32 %v5417, 16
      %v5636 = vrot.slane %v5634, 4
      %v5637 = vshll.u32 %v5417, 16
      %v5639 = vrot.slane %v5637, 5
      %v5640 = vor.u32 %v5636, %v5639
      %v5641 = vrot.slane %v5640, 4
      %v5643 = vshll.u32 %v5418, 16
      %v5645 = vrot.slane %v5643, 5
      %v5646 = vsel %vm1779, %v5641, %v5645
      %v5647 = vshrl.u32 %v5418, 16
      %v5649 = vrot.slane %v5647, 4
      %v5650 = vor.u32 %v5649, %v5645
      %v5651 = vrot.slane %v5650, 4
      %v5653 = vshll.u32 %v5419, 16
      %v5655 = vrot.slane %v5653, 5
      %v5656 = vsel %vm1779, %v5651, %v5655
      %v5658 = vshrl.u32 %v5420, 16
      %v5660 = vrot.slane %v5658, 4
      %v5661 = vshll.u32 %v5420, 16
      %v5663 = vrot.slane %v5661, 5
      %v5664 = vor.u32 %v5660, %v5663
      %v5665 = vrot.slane %v5664, 4
      %v5667 = vshll.u32 %v5421, 16
      %v5669 = vrot.slane %v5667, 5
      %v5670 = vsel %vm1779, %v5665, %v5669
      %v5671 = vshrl.u32 %v5421, 16
      %v5673 = vrot.slane %v5671, 4
      %v5674 = vor.u32 %v5673, %v5669
      %v5675 = vrot.slane %v5674, 4
      %v5677 = vshll.u32 %v5422, 16
      %v5679 = vrot.slane %v5677, 5
      %v5680 = vsel %vm1779, %v5675, %v5679
      %v5682 = vshrl.u32 %v5423, 16
      %v5684 = vrot.slane %v5682, 4
      %v5685 = vshll.u32 %v5423, 16
      %v5687 = vrot.slane %v5685, 5
      %v5688 = vor.u32 %v5684, %v5687
      %v5689 = vrot.slane %v5688, 4
      %v5691 = vshll.u32 %v5424, 16
      %v5693 = vrot.slane %v5691, 5
      %v5694 = vsel %vm1779, %v5689, %v5693
      %v5695 = vshrl.u32 %v5424, 16
      %v5697 = vrot.slane %v5695, 4
      %v5698 = vor.u32 %v5697, %v5693
      %v5699 = vrot.slane %v5698, 4
      %v5701 = vshll.u32 %v5425, 16
      %v5703 = vrot.slane %v5701, 5
      %v5704 = vsel %vm1779, %v5699, %v5703
      %v5706 = vshrl.u32 %v5426, 16
      %v5708 = vrot.slane %v5706, 4
      %v5709 = vshll.u32 %v5426, 16
      %v5711 = vrot.slane %v5709, 5
      %v5712 = vor.u32 %v5708, %v5711
      %v5713 = vrot.slane %v5712, 4
      %v5715 = vshll.u32 %v5427, 16
      %v5717 = vrot.slane %v5715, 5
      %v5718 = vsel %vm1779, %v5713, %v5717
      %v5719 = vshrl.u32 %v5427, 16
      %v5721 = vrot.slane %v5719, 4
      %v5722 = vor.u32 %v5721, %v5717
      %v5723 = vrot.slane %v5722, 4
      %v5725 = vshll.u32 %v5428, 16
      %v5727 = vrot.slane %v5725, 5
      %v5728 = vsel %vm1779, %v5723, %v5727
      %v5730 = vshrl.u32 %v5429, 16
      %v5732 = vrot.slane %v5730, 4
      %v5733 = vshll.u32 %v5429, 16
      %v5735 = vrot.slane %v5733, 5
      %v5736 = vor.u32 %v5732, %v5735
      %v5737 = vrot.slane %v5736, 4
      %v5739 = vshll.u32 %v5430, 16
      %v5741 = vrot.slane %v5739, 5
      %v5742 = vsel %vm1779, %v5737, %v5741
      %v5743 = vshrl.u32 %v5430, 16
      %v5745 = vrot.slane %v5743, 4
      %v5746 = vor.u32 %v5745, %v5741
      %v5747 = vrot.slane %v5746, 4
      %v5749 = vshll.u32 %v5431, 16
      %v5751 = vrot.slane %v5749, 5
      %v5752 = vsel %vm1779, %v5747, %v5751
      %v5754 = vshrl.u32 %v5432, 16
      %v5756 = vrot.slane %v5754, 4
      %v5757 = vshll.u32 %v5432, 16
      %v5759 = vrot.slane %v5757, 5
      %v5760 = vor.u32 %v5756, %v5759
      %v5761 = vrot.slane %v5760, 4
      %v5763 = vshll.u32 %v5433, 16
      %v5765 = vrot.slane %v5763, 5
      %v5766 = vsel %vm1779, %v5761, %v5765
      %v5767 = vshrl.u32 %v5433, 16
      %v5769 = vrot.slane %v5767, 4
      %v5770 = vor.u32 %v5769, %v5765
      %v5771 = vrot.slane %v5770, 4
      %v5773 = vshll.u32 %v5434, 16
      %v5775 = vrot.slane %v5773, 5
      %v5776 = vsel %vm1779, %v5771, %v5775
      %v5778 = vshrl.u32 %v5435, 16
      %v5780 = vrot.slane %v5778, 4
      %v5781 = vshll.u32 %v5435, 16
      %v5783 = vrot.slane %v5781, 5
      %v5784 = vor.u32 %v5780, %v5783
      %v5785 = vrot.slane %v5784, 4
      %v5787 = vshll.u32 %v5436, 16
      %v5789 = vrot.slane %v5787, 5
      %v5790 = vsel %vm1779, %v5785, %v5789
      %v5791 = vshrl.u32 %v5436, 16
      %v5793 = vrot.slane %v5791, 4
      %v5794 = vor.u32 %v5793, %v5789
      %v5795 = vrot.slane %v5794, 4
      %v5797 = vshll.u32 %v5437, 16
      %v5799 = vrot.slane %v5797, 5
      %v5800 = vsel %vm1779, %v5795, %v5799
      %v5802 = vshrl.u32 %v5438, 16
      %v5804 = vrot.slane %v5802, 4
      %v5805 = vshll.u32 %v5438, 16
      %v5807 = vrot.slane %v5805, 5
      %v5808 = vor.u32 %v5804, %v5807
      %v5809 = vrot.slane %v5808, 4
      %v5811 = vshll.u32 %v5439, 16
      %v5813 = vrot.slane %v5811, 5
      %v5814 = vsel %vm1779, %v5809, %v5813
      %v5815 = vshrl.u32 %v5439, 16
      %v5817 = vrot.slane %v5815, 4
      %v5818 = vor.u32 %v5817, %v5813
      %v5819 = vrot.slane %v5818, 4
      %v5821 = vshll.u32 %v5440, 16
      %v5823 = vrot.slane %v5821, 5
      %v5824 = vsel %vm1779, %v5819, %v5823
      %s5825 = scalar_lea.vmem %s3, 512
      %v5826 = vld [vmem:[%s5825] sm:$0xf]
      %v5827 = vld [vmem:[%s5825 + $0x4] sm:$0xf]
      %v5828 = vld [vmem:[%s5825 + $0x8] sm:$0xf]
      %v5829 = vld [vmem:[%s5825 + $0xc] sm:$0xf]
      %v5830 = vld [vmem:[%s5825 + $0x10] sm:$0xf]
      %v5831 = vld [vmem:[%s5825 + $0x14] sm:$0xf]
      %v5832 = vld [vmem:[%s5825 + $0x18] sm:$0xf]
      %v5833 = vld [vmem:[%s5825 + $0x1c] sm:$0xf]
      %v5834 = vld [vmem:[%s5825 + $0x20] sm:$0xf]
      %v5835 = vld [vmem:[%s5825 + $0x24] sm:$0xf]
      %v5836 = vld [vmem:[%s5825 + $0x28] sm:$0xf]
      %v5837 = vld [vmem:[%s5825 + $0x2c] sm:$0xf]
      %v5838 = vld [vmem:[%s5825 + $0x30] sm:$0xf]
      %v5839 = vld [vmem:[%s5825 + $0x34] sm:$0xf]
      %v5840 = vld [vmem:[%s5825 + $0x38] sm:$0xf]
      %v5841 = vld [vmem:[%s5825 + $0x3c] sm:$0xf]
      %v5842 = vunpack.c.l.b16 %v5454
      %v5843 = vunpack.c.l.b16 %v5464
      %v5844 = vunpack.c.l.b16 %v5478
      %v5845 = vunpack.c.l.b16 %v5488
      %v5846 = vunpack.c.l.b16 %v5502
      %v5847 = vunpack.c.l.b16 %v5512
      %v5848 = vunpack.c.l.b16 %v5526
      %v5849 = vunpack.c.l.b16 %v5536
      %v5850 = vunpack.c.l.b16 %v5550
      %v5851 = vunpack.c.l.b16 %v5560
      %v5852 = vunpack.c.l.b16 %v5574
      %v5853 = vunpack.c.l.b16 %v5584
      %v5854 = vunpack.c.l.b16 %v5598
      %v5855 = vunpack.c.l.b16 %v5608
      %v5856 = vunpack.c.l.b16 %v5622
      %v5857 = vunpack.c.l.b16 %v5632
      %v5858 = vunpack.c.l.b16 %v5646
      %v5859 = vunpack.c.l.b16 %v5656
      %v5860 = vunpack.c.l.b16 %v5670
      %v5861 = vunpack.c.l.b16 %v5680
      %v5862 = vunpack.c.l.b16 %v5694
      %v5863 = vunpack.c.l.b16 %v5704
      %v5864 = vunpack.c.l.b16 %v5718
      %v5865 = vunpack.c.l.b16 %v5728
      %v5866 = vunpack.c.l.b16 %v5742
      %v5867 = vunpack.c.l.b16 %v5752
      %v5868 = vunpack.c.l.b16 %v5766
      %v5869 = vunpack.c.l.b16 %v5776
      %v5870 = vunpack.c.l.b16 %v5790
      %v5871 = vunpack.c.l.b16 %v5800
      %v5872 = vunpack.c.l.b16 %v5814
      %v5873 = vunpack.c.l.b16 %v5824
      %v5874 = vpack.c.b16 %v5843, %v5842
      %v5875 = vpack.c.b16 %v5845, %v5844
      %v5876 = vpack.c.b16 %v5847, %v5846
      %v5877 = vpack.c.b16 %v5849, %v5848
      %v5878 = vpack.c.b16 %v5851, %v5850
      %v5879 = vpack.c.b16 %v5853, %v5852
      %v5880 = vpack.c.b16 %v5855, %v5854
      %v5881 = vpack.c.b16 %v5857, %v5856
      %v5882 = vpack.c.b16 %v5859, %v5858
      %v5883 = vpack.c.b16 %v5861, %v5860
      %v5884 = vpack.c.b16 %v5863, %v5862
      %v5885 = vpack.c.b16 %v5865, %v5864
      %v5886 = vpack.c.b16 %v5867, %v5866
      %v5887 = vpack.c.b16 %v5869, %v5868
      %v5888 = vpack.c.b16 %v5871, %v5870
      %v5889 = vpack.c.b16 %v5873, %v5872
      %v5922 = vunpack.c.l.b16 %v5826
      %v5923 = vunpack.c.l.b16 %v5827
      %v5924 = vunpack.c.l.b16 %v5828
      %v5925 = vunpack.c.l.b16 %v5829
      %v5926 = vunpack.c.l.b16 %v5830
      %v5927 = vunpack.c.l.b16 %v5831
      %v5928 = vunpack.c.l.b16 %v5832
      %v5929 = vunpack.c.l.b16 %v5833
      %v5930 = vunpack.c.l.b16 %v5834
      %v5931 = vunpack.c.l.b16 %v5835
      %v5932 = vunpack.c.l.b16 %v5836
      %v5933 = vunpack.c.l.b16 %v5837
      %v5934 = vunpack.c.l.b16 %v5838
      %v5935 = vunpack.c.l.b16 %v5839
      %v5936 = vunpack.c.l.b16 %v5840
      %v5937 = vunpack.c.l.b16 %v5841
      %v5938 = vpack.c.b16 %v5923, %v5922
      %v5939 = vpack.c.b16 %v5925, %v5924
      %v5940 = vpack.c.b16 %v5927, %v5926
      %v5941 = vpack.c.b16 %v5929, %v5928
      %v5942 = vpack.c.b16 %v5931, %v5930
      %v5943 = vpack.c.b16 %v5933, %v5932
      %v5944 = vpack.c.b16 %v5935, %v5934
      %v5945 = vpack.c.b16 %v5937, %v5936
      %5954 = vmatprep.subr.bf16.mxu0 0
      %5955 = vmatpush1.bf16.msra.mxu0 %v5938
      %5956 = vmatprep.subr.bf16.mxu0 0
      %5957 = vmatpush1.bf16.msra.mxu0 %v5939
      %5958 = vmatprep.subr.bf16.mxu0 0
      %5959 = vmatpush1.bf16.msra.mxu0 %v5940
      %5960 = vmatprep.subr.bf16.mxu0 0
      %5961 = vmatpush1.bf16.msra.mxu0 %v5941
      %5962 = vmatprep.subr.bf16.mxu0 0
      %5963 = vmatpush1.bf16.msra.mxu0 %v5942
      %5964 = vmatprep.subr.bf16.mxu0 0
      %5965 = vmatpush1.bf16.msra.mxu0 %v5943
      %5966 = vmatprep.subr.bf16.mxu0 0
      %5967 = vmatpush1.bf16.msra.mxu0 %v5944
      %5968 = vmatprep.subr.bf16.mxu0 0
      %5969 = vmatpush1.bf16.msra.mxu0 %v5945
      %5970 = vmatprep.subr.bf16.mxu0 0
      %5971 = vmatpush1.bf16.msra.mxu0 0
      %5972 = vmatprep.subr.bf16.mxu0 0
      %5973 = vmatpush1.bf16.msra.mxu0 0
      %5974 = vmatprep.subr.bf16.mxu0 0
      %5975 = vmatpush1.bf16.msra.mxu0 0
      %5976 = vmatprep.subr.bf16.mxu0 0
      %5977 = vmatpush1.bf16.msra.mxu0 0
      %5978 = vmatprep.subr.bf16.mxu0 0
      %5979 = vmatpush1.bf16.msra.mxu0 0
      %5980 = vmatprep.subr.bf16.mxu0 0
      %5981 = vmatpush1.bf16.msra.mxu0 0
      %5982 = vmatprep.subr.bf16.mxu0 0
      %5983 = vmatpush1.bf16.msra.mxu0 0
      %5984 = vmatprep.subr.bf16.mxu0 0
      %5985 = vmatpush1.bf16.msra.mxu0 0
      %5986 = vmatprep.mubr.bf16.mxu0 0
      %5987 = vmatmul.mubr.bf16.gmra.mrb[0].mxu0 %v5874
      %v5988 = vpop.f32.mrb[0].mxu0
      %v5989 = vadd.f32 0.0, %v5988
      %v5990 = vpop.f32.mrb[0].mxu0
      %v5991 = vpop.f32.mrb[0].mxu0
      %v5992 = vadd.f32 0.0, %v5991
      %v5993 = vpop.f32.mrb[0].mxu0
      %5994 = vmatprep.mubr.bf16.mxu0 0
      %5995 = vmatmul.mubr.bf16.gmra.mrb[0].mxu0 %v5875
      %v5996 = vpop.f32.mrb[0].mxu0
      %v5997 = vadd.f32 0.0, %v5996
      %v5998 = vpop.f32.mrb[0].mxu0
      %v5999 = vpop.f32.mrb[0].mxu0
      %v6000 = vadd.f32 0.0, %v5999
      %v6001 = vpop.f32.mrb[0].mxu0
      %6002 = vmatprep.mubr.bf16.mxu0 0
      %6003 = vmatmul.mubr.bf16.gmra.mrb[0].mxu0 %v5876
      %v6004 = vpop.f32.mrb[0].mxu0
      %v6005 = vadd.f32 0.0, %v6004
      %v6006 = vpop.f32.mrb[0].mxu0
      %v6007 = vpop.f32.mrb[0].mxu0
      %v6008 = vadd.f32 0.0, %v6007
      %v6009 = vpop.f32.mrb[0].mxu0
      %6010 = vmatprep.mubr.bf16.mxu0 0
      %6011 = vmatmul.mubr.bf16.gmra.mrb[0].mxu0 %v5877
      %v6012 = vpop.f32.mrb[0].mxu0
      %v6013 = vadd.f32 0.0, %v6012
      %v6014 = vpop.f32.mrb[0].mxu0
      %v6015 = vpop.f32.mrb[0].mxu0
      %v6016 = vadd.f32 0.0, %v6015
      %v6017 = vpop.f32.mrb[0].mxu0
      %6018 = vmatprep.mubr.bf16.mxu0 0
      %6019 = vmatmul.mubr.bf16.gmra.mrb[0].mxu0 %v5878
      %v6020 = vpop.f32.mrb[0].mxu0
      %v6021 = vadd.f32 0.0, %v6020
      %v6022 = vpop.f32.mrb[0].mxu0
      %v6023 = vpop.f32.mrb[0].mxu0
      %v6024 = vadd.f32 0.0, %v6023
      %v6025 = vpop.f32.mrb[0].mxu0
      %6026 = vmatprep.mubr.bf16.mxu0 0
      %6027 = vmatmul.mubr.bf16.gmra.mrb[0].mxu0 %v5879
      %v6028 = vpop.f32.mrb[0].mxu0
      %v6029 = vadd.f32 0.0, %v6028
      %v6030 = vpop.f32.mrb[0].mxu0
      %v6031 = vpop.f32.mrb[0].mxu0
      %v6032 = vadd.f32 0.0, %v6031
      %v6033 = vpop.f32.mrb[0].mxu0
      %6034 = vmatprep.mubr.bf16.mxu0 0
      %6035 = vmatmul.mubr.bf16.gmra.mrb[0].mxu0 %v5880
      %v6036 = vpop.f32.mrb[0].mxu0
      %v6037 = vadd.f32 0.0, %v6036
      %v6038 = vpop.f32.mrb[0].mxu0
      %v6039 = vpop.f32.mrb[0].mxu0
      %v6040 = vadd.f32 0.0, %v6039
      %v6041 = vpop.f32.mrb[0].mxu0
      %6042 = vmatprep.mubr.bf16.mxu0 0
      %6043 = vmatmul.mubr.bf16.gmra.mrb[0].mxu0 %v5881
      %v6044 = vpop.f32.mrb[0].mxu0
      %v6045 = vadd.f32 0.0, %v6044
      %v6046 = vpop.f32.mrb[0].mxu0
      %v6047 = vpop.f32.mrb[0].mxu0
      %v6048 = vadd.f32 0.0, %v6047
      %v6049 = vpop.f32.mrb[0].mxu0
      %6050 = vmatprep.mubr.bf16.mxu0 0
      %6051 = vmatmul.mubr.bf16.gmra.mrb[0].mxu0 %v5882
      %v6052 = vpop.f32.mrb[0].mxu0
      %v6053 = vadd.f32 0.0, %v6052
      %v6054 = vpop.f32.mrb[0].mxu0
      %v6055 = vpop.f32.mrb[0].mxu0
      %v6056 = vadd.f32 0.0, %v6055
      %v6057 = vpop.f32.mrb[0].mxu0
      %6058 = vmatprep.mubr.bf16.mxu0 0
      %6059 = vmatmul.mubr.bf16.gmra.mrb[0].mxu0 %v5883
      %v6060 = vpop.f32.mrb[0].mxu0
      %v6061 = vadd.f32 0.0, %v6060
      %v6062 = vpop.f32.mrb[0].mxu0
      %v6063 = vpop.f32.mrb[0].mxu0
      %v6064 = vadd.f32 0.0, %v6063
      %v6065 = vpop.f32.mrb[0].mxu0
      %6066 = vmatprep.mubr.bf16.mxu0 0
      %6067 = vmatmul.mubr.bf16.gmra.mrb[0].mxu0 %v5884
      %v6068 = vpop.f32.mrb[0].mxu0
      %v6069 = vadd.f32 0.0, %v6068
      %v6070 = vpop.f32.mrb[0].mxu0
      %v6071 = vpop.f32.mrb[0].mxu0
      %v6072 = vadd.f32 0.0, %v6071
      %v6073 = vpop.f32.mrb[0].mxu0
      %6074 = vmatprep.mubr.bf16.mxu0 0
      %6075 = vmatmul.mubr.bf16.gmra.mrb[0].mxu0 %v5885
      %v6076 = vpop.f32.mrb[0].mxu0
      %v6077 = vadd.f32 0.0, %v6076
      %v6078 = vpop.f32.mrb[0].mxu0
      %v6079 = vpop.f32.mrb[0].mxu0
      %v6080 = vadd.f32 0.0, %v6079
      %v6081 = vpop.f32.mrb[0].mxu0
      %6082 = vmatprep.mubr.bf16.mxu0 0
      %6083 = vmatmul.mubr.bf16.gmra.mrb[0].mxu0 %v5886
      %v6084 = vpop.f32.mrb[0].mxu0
      %v6085 = vadd.f32 0.0, %v6084
      %v6086 = vpop.f32.mrb[0].mxu0
      %v6087 = vpop.f32.mrb[0].mxu0
      %v6088 = vadd.f32 0.0, %v6087
      %v6089 = vpop.f32.mrb[0].mxu0
      %6090 = vmatprep.mubr.bf16.mxu0 0
      %6091 = vmatmul.mubr.bf16.gmra.mrb[0].mxu0 %v5887
      %v6092 = vpop.f32.mrb[0].mxu0
      %v6093 = vadd.f32 0.0, %v6092
      %v6094 = vpop.f32.mrb[0].mxu0
      %v6095 = vpop.f32.mrb[0].mxu0
      %v6096 = vadd.f32 0.0, %v6095
      %v6097 = vpop.f32.mrb[0].mxu0
      %6098 = vmatprep.mubr.bf16.mxu0 0
      %6099 = vmatmul.mubr.bf16.gmra.mrb[0].mxu0 %v5888
      %v6100 = vpop.f32.mrb[0].mxu0
      %v6101 = vadd.f32 0.0, %v6100
      %v6102 = vpop.f32.mrb[0].mxu0
      %v6103 = vpop.f32.mrb[0].mxu0
      %v6104 = vadd.f32 0.0, %v6103
      %v6105 = vpop.f32.mrb[0].mxu0
      %6106 = vmatprep.mubr.bf16.mxu0 0
      %6107 = vmatmul.mubr.bf16.gmra.mrb[0].mxu0 %v5889
      %v6108 = vpop.f32.mrb[0].mxu0
      %v6109 = vadd.f32 0.0, %v6108
      %v6110 = vpop.f32.mrb[0].mxu0
      %v6111 = vpop.f32.mrb[0].mxu0
      %v6112 = vadd.f32 0.0, %v6111
      %v6113 = vpop.f32.mrb[0].mxu0
      %6114 = vdwg.mxu0
      %v6115 = vadd.f32 %v5361, %v5989
      %v6116 = vadd.f32 %v5362, %v5992
      %v6117 = vadd.f32 %v5363, %v5997
      %v6118 = vadd.f32 %v5364, %v6000
      %v6119 = vadd.f32 %v5365, %v6005
      %v6120 = vadd.f32 %v5366, %v6008
      %v6121 = vadd.f32 %v5367, %v6013
      %v6122 = vadd.f32 %v5368, %v6016
      %v6123 = vadd.f32 %v5369, %v6021
      %v6124 = vadd.f32 %v5370, %v6024
      %v6125 = vadd.f32 %v5371, %v6029
      %v6126 = vadd.f32 %v5372, %v6032
      %v6127 = vadd.f32 %v5373, %v6037
      %v6128 = vadd.f32 %v5374, %v6040
      %v6129 = vadd.f32 %v5375, %v6045
      %v6130 = vadd.f32 %v5376, %v6048
      %v6131 = vadd.f32 %v5377, %v6053
      %v6132 = vadd.f32 %v5378, %v6056
      %v6133 = vadd.f32 %v5379, %v6061
      %v6134 = vadd.f32 %v5380, %v6064
      %v6135 = vadd.f32 %v5381, %v6069
      %v6136 = vadd.f32 %v5382, %v6072
      %v6137 = vadd.f32 %v5383, %v6077
      %v6138 = vadd.f32 %v5384, %v6080
      %v6139 = vadd.f32 %v5385, %v6085
      %v6140 = vadd.f32 %v5386, %v6088
      %v6141 = vadd.f32 %v5387, %v6093
      %v6142 = vadd.f32 %v5388, %v6096
      %v6143 = vadd.f32 %v5389, %v6101
      %v6144 = vadd.f32 %v5390, %v6104
      %v6145 = vadd.f32 %v5391, %v6109
      %v6146 = vadd.f32 %v5392, %v6112
      %v6147 = vpack.c.bf16 %v6116, %v6115
      %v6148 = vpack.c.bf16 %v6118, %v6117
      %v6149 = vpack.c.bf16 %v6120, %v6119
      %v6150 = vpack.c.bf16 %v6122, %v6121
      %v6151 = vpack.c.bf16 %v6124, %v6123
      %v6152 = vpack.c.bf16 %v6126, %v6125
      %v6153 = vpack.c.bf16 %v6128, %v6127
      %v6154 = vpack.c.bf16 %v6130, %v6129
      %v6155 = vpack.c.bf16 %v6132, %v6131
      %v6156 = vpack.c.bf16 %v6134, %v6133
      %v6157 = vpack.c.bf16 %v6136, %v6135
      %v6158 = vpack.c.bf16 %v6138, %v6137
      %v6159 = vpack.c.bf16 %v6140, %v6139
      %v6160 = vpack.c.bf16 %v6142, %v6141
      %v6161 = vpack.c.bf16 %v6144, %v6143
      %v6162 = vpack.c.bf16 %v6146, %v6145
      %v6179 = vunpack.c.l.b16 %v6147
      %v6180 = vunpack.c.h.b16 %v6147
      %v6181 = vunpack.c.l.b16 %v6148
      %v6182 = vunpack.c.h.b16 %v6148
      %v6183 = vunpack.c.l.b16 %v6149
      %v6184 = vunpack.c.h.b16 %v6149
      %v6185 = vunpack.c.l.b16 %v6150
      %v6186 = vunpack.c.h.b16 %v6150
      %v6187 = vunpack.c.l.b16 %v6151
      %v6188 = vunpack.c.h.b16 %v6151
      %v6189 = vunpack.c.l.b16 %v6152
      %v6190 = vunpack.c.h.b16 %v6152
      %v6191 = vunpack.c.l.b16 %v6153
      %v6192 = vunpack.c.h.b16 %v6153
      %v6193 = vunpack.c.l.b16 %v6154
      %v6194 = vunpack.c.h.b16 %v6154
      %v6195 = vunpack.c.l.b16 %v6155
      %v6196 = vunpack.c.h.b16 %v6155
      %v6197 = vunpack.c.l.b16 %v6156
      %v6198 = vunpack.c.h.b16 %v6156
      %v6199 = vunpack.c.l.b16 %v6157
      %v6200 = vunpack.c.h.b16 %v6157
      %v6201 = vunpack.c.l.b16 %v6158
      %v6202 = vunpack.c.h.b16 %v6158
      %v6203 = vunpack.c.l.b16 %v6159
      %v6204 = vunpack.c.h.b16 %v6159
      %v6205 = vunpack.c.l.b16 %v6160
      %v6206 = vunpack.c.h.b16 %v6160
      %v6207 = vunpack.c.l.b16 %v6161
      %v6208 = vunpack.c.h.b16 %v6161
      %v6209 = vunpack.c.l.b16 %v6162
      %v6210 = vunpack.c.h.b16 %v6162
      %v6211 = vpack.c.b16 %v6179, %v6179
      %v6212 = vpack.c.b16 %v6180, %v6180
      %v6213 = vpack.c.b16 %v6181, %v6181
      %v6214 = vpack.c.b16 %v6182, %v6182
      %v6215 = vpack.c.b16 %v6183, %v6183
      %v6216 = vpack.c.b16 %v6184, %v6184
      %v6217 = vpack.c.b16 %v6185, %v6185
      %v6218 = vpack.c.b16 %v6186, %v6186
      %v6219 = vpack.c.b16 %v6187, %v6187
      %v6220 = vpack.c.b16 %v6188, %v6188
      %v6221 = vpack.c.b16 %v6189, %v6189
      %v6222 = vpack.c.b16 %v6190, %v6190
      %v6223 = vpack.c.b16 %v6191, %v6191
      %v6224 = vpack.c.b16 %v6192, %v6192
      %v6225 = vpack.c.b16 %v6193, %v6193
      %v6226 = vpack.c.b16 %v6194, %v6194
      %v6227 = vpack.c.b16 %v6195, %v6195
      %v6228 = vpack.c.b16 %v6196, %v6196
      %v6229 = vpack.c.b16 %v6197, %v6197
      %v6230 = vpack.c.b16 %v6198, %v6198
      %v6231 = vpack.c.b16 %v6199, %v6199
      %v6232 = vpack.c.b16 %v6200, %v6200
      %v6233 = vpack.c.b16 %v6201, %v6201
      %v6234 = vpack.c.b16 %v6202, %v6202
      %v6235 = vpack.c.b16 %v6203, %v6203
      %v6236 = vpack.c.b16 %v6204, %v6204
      %v6237 = vpack.c.b16 %v6205, %v6205
      %v6238 = vpack.c.b16 %v6206, %v6206
      %v6239 = vpack.c.b16 %v6207, %v6207
      %v6240 = vpack.c.b16 %v6208, %v6208
      %v6241 = vpack.c.b16 %v6209, %v6209
      %v6242 = vpack.c.b16 %v6210, %v6210
      %6275 = vst [vmem:[%s262] sm:$0xf] %v6211
      %6276 = vst [vmem:[%s262 + $0x4] sm:$0xf] %v6212
      %6277 = vst [vmem:[%s262 + $0x8] sm:$0xf] %v6213
      %6278 = vst [vmem:[%s262 + $0xc] sm:$0xf] %v6214
      %6279 = vst [vmem:[%s262 + $0x10] sm:$0xf] %v6215
      %6280 = vst [vmem:[%s262 + $0x14] sm:$0xf] %v6216
      %6281 = vst [vmem:[%s262 + $0x18] sm:$0xf] %v6217
      %6282 = vst [vmem:[%s262 + $0x1c] sm:$0xf] %v6218
      %6283 = vst [vmem:[%s262 + $0x20] sm:$0xf] %v6219
      %6284 = vst [vmem:[%s262 + $0x24] sm:$0xf] %v6220
      %6285 = vst [vmem:[%s262 + $0x28] sm:$0xf] %v6221
      %6286 = vst [vmem:[%s262 + $0x2c] sm:$0xf] %v6222
      %6287 = vst [vmem:[%s262 + $0x30] sm:$0xf] %v6223
      %6288 = vst [vmem:[%s262 + $0x34] sm:$0xf] %v6224
      %6289 = vst [vmem:[%s262 + $0x38] sm:$0xf] %v6225
      %6290 = vst [vmem:[%s262 + $0x3c] sm:$0xf] %v6226
      %6291 = vst [vmem:[%s262 + $0x40] sm:$0xf] %v6227
      %6292 = vst [vmem:[%s262 + $0x44] sm:$0xf] %v6228
      %6293 = vst [vmem:[%s262 + $0x48] sm:$0xf] %v6229
      %6294 = vst [vmem:[%s262 + $0x4c] sm:$0xf] %v6230
      %6295 = vst [vmem:[%s262 + $0x50] sm:$0xf] %v6231
      %6296 = vst [vmem:[%s262 + $0x54] sm:$0xf] %v6232
      %6297 = vst [vmem:[%s262 + $0x58] sm:$0xf] %v6233
      %6298 = vst [vmem:[%s262 + $0x5c] sm:$0xf] %v6234
      %6299 = vst [vmem:[%s262 + $0x60] sm:$0xf] %v6235
      %6300 = vst [vmem:[%s262 + $0x64] sm:$0xf] %v6236
      %6301 = vst [vmem:[%s262 + $0x68] sm:$0xf] %v6237
      %6302 = vst [vmem:[%s262 + $0x6c] sm:$0xf] %v6238
      %6303 = vst [vmem:[%s262 + $0x70] sm:$0xf] %v6239
      %6304 = vst [vmem:[%s262 + $0x74] sm:$0xf] %v6240
      %6305 = vst [vmem:[%s262 + $0x78] sm:$0xf] %v6241
      %6306 = vst [vmem:[%s262 + $0x7c] sm:$0xf] %v6242
      %v6307 = vadd.f32 %v6115, %v6116
      %v6308 = vadd.f32 %v6307, %v6117
      %v6309 = vadd.f32 %v6308, %v6118
      %v6310 = vadd.f32 %v6309, %v6119
      %v6311 = vadd.f32 %v6310, %v6120
      %v6312 = vadd.f32 %v6311, %v6121
      %v6313 = vadd.f32 %v6312, %v6122
      %v6314 = vadd.f32 %v6313, %v6123
      %v6315 = vadd.f32 %v6314, %v6124
      %v6316 = vadd.f32 %v6315, %v6125
      %v6317 = vadd.f32 %v6316, %v6126
      %v6318 = vadd.f32 %v6317, %v6127
      %v6319 = vadd.f32 %v6318, %v6128
      %v6320 = vadd.f32 %v6319, %v6129
      %v6321 = vadd.f32 %v6320, %v6130
      %v6322 = vadd.f32 %v6321, %v6131
      %v6323 = vadd.f32 %v6322, %v6132
      %v6324 = vadd.f32 %v6323, %v6133
      %v6325 = vadd.f32 %v6324, %v6134
      %v6326 = vadd.f32 %v6325, %v6135
      %v6327 = vadd.f32 %v6326, %v6136
      %v6328 = vadd.f32 %v6327, %v6137
      %v6329 = vadd.f32 %v6328, %v6138
      %v6330 = vadd.f32 %v6329, %v6139
      %v6331 = vadd.f32 %v6330, %v6140
      %v6332 = vadd.f32 %v6331, %v6141
      %v6333 = vadd.f32 %v6332, %v6142
      %v6334 = vadd.f32 %v6333, %v6143
      %v6335 = vadd.f32 %v6334, %v6144
      %v6336 = vadd.f32 %v6335, %v6145
      %v6337 = vadd.f32 %v6336, %v6146
      %v6338 = vrot.slane %v6337, 4
      %v6339 = vadd.f32 %v6337, %v6338
      %v6340 = vrot.slane %v6339, 2
      %v6341 = vadd.f32 %v6339, %v6340
      %v6342 = vrot.slane %v6341, 1
      %v6343 = vadd.f32 %v6341, %v6342
      %6344 = vst [vmem:[%s265] sm:$0x1] %v6343
      %v6345 = vmul.f32 %v6115, %v6115
      %v6346 = vmul.f32 %v6116, %v6116
      %v6347 = vmul.f32 %v6117, %v6117
      %v6348 = vmul.f32 %v6118, %v6118
      %v6349 = vmul.f32 %v6119, %v6119
      %v6350 = vmul.f32 %v6120, %v6120
      %v6351 = vmul.f32 %v6121, %v6121
      %v6352 = vmul.f32 %v6122, %v6122
      %v6353 = vmul.f32 %v6123, %v6123
      %v6354 = vmul.f32 %v6124, %v6124
      %v6355 = vmul.f32 %v6125, %v6125
      %v6356 = vmul.f32 %v6126, %v6126
      %v6357 = vmul.f32 %v6127, %v6127
      %v6358 = vmul.f32 %v6128, %v6128
      %v6359 = vmul.f32 %v6129, %v6129
      %v6360 = vmul.f32 %v6130, %v6130
      %v6361 = vmul.f32 %v6131, %v6131
      %v6362 = vmul.f32 %v6132, %v6132
      %v6363 = vmul.f32 %v6133, %v6133
      %v6364 = vmul.f32 %v6134, %v6134
      %v6365 = vmul.f32 %v6135, %v6135
      %v6366 = vmul.f32 %v6136, %v6136
      %v6367 = vmul.f32 %v6137, %v6137
      %v6368 = vmul.f32 %v6138, %v6138
      %v6369 = vmul.f32 %v6139, %v6139
      %v6370 = vmul.f32 %v6140, %v6140
      %v6371 = vmul.f32 %v6141, %v6141
      %v6372 = vmul.f32 %v6142, %v6142
      %v6373 = vmul.f32 %v6143, %v6143
      %v6374 = vmul.f32 %v6144, %v6144
      %v6375 = vmul.f32 %v6145, %v6145
      %v6376 = vmul.f32 %v6146, %v6146
      %v6377 = vadd.f32 %v6345, %v6346
      %v6378 = vadd.f32 %v6377, %v6347
      %v6379 = vadd.f32 %v6378, %v6348
      %v6380 = vadd.f32 %v6379, %v6349
      %v6381 = vadd.f32 %v6380, %v6350
      %v6382 = vadd.f32 %v6381, %v6351
      %v6383 = vadd.f32 %v6382, %v6352
      %v6384 = vadd.f32 %v6383, %v6353
      %v6385 = vadd.f32 %v6384, %v6354
      %v6386 = vadd.f32 %v6385, %v6355
      %v6387 = vadd.f32 %v6386, %v6356
      %v6388 = vadd.f32 %v6387, %v6357
      %v6389 = vadd.f32 %v6388, %v6358
      %v6390 = vadd.f32 %v6389, %v6359
      %v6391 = vadd.f32 %v6390, %v6360
      %v6392 = vadd.f32 %v6391, %v6361
      %v6393 = vadd.f32 %v6392, %v6362
      %v6394 = vadd.f32 %v6393, %v6363
      %v6395 = vadd.f32 %v6394, %v6364
      %v6396 = vadd.f32 %v6395, %v6365
      %v6397 = vadd.f32 %v6396, %v6366
      %v6398 = vadd.f32 %v6397, %v6367
      %v6399 = vadd.f32 %v6398, %v6368
      %v6400 = vadd.f32 %v6399, %v6369
      %v6401 = vadd.f32 %v6400, %v6370
      %v6402 = vadd.f32 %v6401, %v6371
      %v6403 = vadd.f32 %v6402, %v6372
      %v6404 = vadd.f32 %v6403, %v6373
      %v6405 = vadd.f32 %v6404, %v6374
      %v6406 = vadd.f32 %v6405, %v6375
      %v6407 = vadd.f32 %v6406, %v6376
      %v6408 = vrot.slane %v6407, 4
      %v6409 = vadd.f32 %v6407, %v6408
      %v6410 = vrot.slane %v6409, 2
      %v6411 = vadd.f32 %v6409, %v6410
      %v6412 = vrot.slane %v6411, 1
      %v6413 = vadd.f32 %v6411, %v6412
      %6414 = vst [vmem:[%s268] sm:$0x1] %v6413
      %p6415 = scmp.lt.s32.totalorder %s18, 1
      %s6416 = scalar_select %p6415, %s18, 1
      %s6417 = smul.addr %s6416, 32
      %s6418 = smul.addr %s6417, 4
      %s6419 = scalar_lea.vmem %s4, %s6418
      %p6420 = scmp.lt.s32.totalorder %s18, 1
      %s6421 = scalar_select %p6420, %s18, 1
      %s6422 = scalar_lea.vmem %s5, %s6421
      %p6423 = scmp.lt.s32.totalorder %s18, 1
      %s6424 = scalar_select %p6423, %s18, 1
      %s6425 = scalar_lea.vmem %s6, %s6424
      // Predicated region
      $region37: #{basic_block_forward.4} parent=35 // pred_check
        %p6426 = pneg %p125
      $region38: #{basic_block_forward.4} parent=35 // pred_check_branch
        %6428 = sbr.rel (%p6426) target = $region40
      $region39: #{basic_block_forward.4} parent=35 // pred_region
        _
      $region40: #{basic_block_forward.4} parent=35 // pred_fallthru
        _
      // Predicated region
      $region41: #{basic_block_forward.4} parent=35 // pred_check
        %p6429 = pneg %p151
      $region42: #{basic_block_forward.4} parent=35 // pred_check_branch
        %6431 = sbr.rel (%p6429) target = $region44
      $region43: #{basic_block_forward.4} parent=35 // pred_region
        _
      $region44: #{basic_block_forward.4} parent=35 // pred_fallthru
        _
      // Predicated region
      $region45: #{basic_block_forward.4} parent=35 // pred_check
        %p6432 = pneg %p177
      $region46: #{basic_block_forward.4} parent=35 // pred_check_branch
        %6434 = sbr.rel (%p6432) target = $region48
      $region47: #{basic_block_forward.4} parent=35 // pred_region
        _
      $region48: #{basic_block_forward.4} parent=35 // pred_fallthru
        _
    $region36: #{basic_block_forward.4} parent=5 // pred_fallthru
      _
    %p6435 = scmp.le.s32.totalorder 2, %s13
    // Predicated region
    $region49: #{basic_block_forward.4} parent=5 // pred_check
      %p6436 = pneg %p6435
    $region50: #{basic_block_forward.4} parent=5 // pred_check_branch
      %6438 = sbr.rel (%p6436) target = $region52
    $region51: #{basic_block_forward.4} parent=5 // pred_region
      %s6439 = ssub.s32 %s13, 2
      // Predicated region
      $region53: #{basic_block_forward.4} parent=51 // pred_check
        %p6440 = pneg %p131
      $region54: #{basic_block_forward.4} parent=51 // pred_check_branch
        %6442 = sbr.rel (%p6440) target = $region56
      $region55: #{basic_block_forward.4} parent=51 // pred_region
        %p6443 = scmp.lt.s32.totalorder %s19, 1
        %s6444 = scalar_select %p6443, %s19, 1
        %s6445 = smul.addr %s6444, 32
        %s6446 = smul.addr %s6445, 4
        %s6447 = scalar_lea.vmem %s4, %s6446
      $region56: #{basic_block_forward.4} parent=51 // pred_fallthru
        _
      // Predicated region
      $region57: #{basic_block_forward.4} parent=51 // pred_check
        %p6448 = pneg %p157
      $region58: #{basic_block_forward.4} parent=51 // pred_check_branch
        %6450 = sbr.rel (%p6448) target = $region60
      $region59: #{basic_block_forward.4} parent=51 // pred_region
        %p6451 = scmp.lt.s32.totalorder %s19, 1
        %s6452 = scalar_select %p6451, %s19, 1
        %s6453 = scalar_lea.vmem %s5, %s6452
      $region60: #{basic_block_forward.4} parent=51 // pred_fallthru
        _
      // Predicated region
      $region61: #{basic_block_forward.4} parent=51 // pred_check
        %p6454 = pneg %p183
      $region62: #{basic_block_forward.4} parent=51 // pred_check_branch
        %6456 = sbr.rel (%p6454) target = $region64
      $region63: #{basic_block_forward.4} parent=51 // pred_region
        %p6457 = scmp.lt.s32.totalorder %s19, 1
        %s6458 = scalar_select %p6457, %s19, 1
        %s6459 = scalar_lea.vmem %s6, %s6458
      $region64: #{basic_block_forward.4} parent=51 // pred_fallthru
        _
    $region52: #{basic_block_forward.4} parent=5 // pred_fallthru
      _
  $region6: #{basic_block_forward.4} parent=0 // loop_footer
    %s17 = sadd.s32 1, %s13
  $region7: #{basic_block_forward.4} parent=0 // loop_footer_branch
    %12 = sbr.rel target = $region3
  $region8: #{basic_block_forward.4} parent=0 // loop_exit
    _

</llo_original>
